<compile_context>
chip_gen: v6e
topology: v6e:2x2x1
jax: 0.10.0
libtpu: 0.0.40
codegen_flags: <defaults>
</compile_context>

<pallas_src>
import functools

import jax
import jax.numpy as jnp
from jax.experimental import pallas as pl
from jax.experimental.pallas import tpu as pltpu


LANES = 128
VMEM_LIMIT = 48 * 1024 * 1024

# conv1: im2col rows use q = 32*h + w (28 real cols + 4 zero cols)
_CONV1_OH = 14
_CONV1_STRIDE = 32
# conv2: zero-bordered 16x16 image flattened with row stride 16
_CONV2_OH = 7
_CONV2_STRIDE = 16
_CONV2_OFFSETS = tuple(ky * _CONV2_STRIDE + kx for ky in range(3) for kx in range(3))


def _cparams(n_parallel_axes):
    return pltpu.CompilerParams(
        dimension_semantics=("parallel",) * n_parallel_axes,
        vmem_limit_bytes=VMEM_LIMIT,
    )


# --------------------------------------------------------------------------- #
# fused conv (+bias+ReLU) + 2x2/2 max-pool kernel (one image per grid step)
# --------------------------------------------------------------------------- #
def _conv_relu_pool_kernel(x_ref, w_ref, b_ref, o_ref, buf_ref, *,
                           tap_offsets, rows, oh, ow, row_stride):
    """x_ref : (1, R, K)        flattened input rows (image row stride = row_stride)
       w_ref : (T, K, 128)      per-tap weights, cout zero-padded to 128 lanes
       b_ref : (1, 128)
       o_ref : (1, oh, ow, 128) pooled output
       buf_ref: (oh, row_stride, 128) VMEM scratch for the width-direction pool
    """
    acc = jnp.zeros((rows, LANES), jnp.float32)
    for t, off in enumerate(tap_offsets):
        acc = acc + jnp.dot(x_ref[0, off:off + rows, :], w_ref[t],
                            preferred_element_type=jnp.float32)
    acc = jnp.maximum(acc + b_ref[...], 0.0)
    # rows are q = row_stride*h + w  ->  tile-aligned reshape (row_stride % 8 == 0)
    y = acc.reshape(2 * oh, row_stride, LANES)
    # pool over H: leading-dim split + VPU max (free layout-wise)
    y = jnp.max(y.reshape(oh, 2, row_stride, LANES), axis=1)      # (oh, row_stride, 128)
    # pool over W: strided even/odd column reads from VMEM scratch
    buf_ref[...] = y
    o_ref[0] = jnp.maximum(buf_ref[:, pl.ds(0, ow, stride=2), :],
                           buf_ref[:, pl.ds(1, ow, stride=2), :])


def conv_relu_pool(x_rows, w_taps, bias, *, tap_offsets, oh, ow, row_stride):
    B, R, K = x_rows.shape
    T = w_taps.shape[0]
    rows = 2 * oh * row_stride
    kernel = functools.partial(
        _conv_relu_pool_kernel, tap_offsets=tuple(tap_offsets), rows=rows,
        oh=oh, ow=ow, row_stride=row_stride)
    return pl.pallas_call(
        kernel,
        out_shape=jax.ShapeDtypeStruct((B, oh, ow, LANES), jnp.float32),
        grid=(B,),
        in_specs=[
            pl.BlockSpec((1, R, K), lambda b: (b, 0, 0)),
            pl.BlockSpec((T, K, LANES), lambda b: (0, 0, 0)),
            pl.BlockSpec((1, LANES), lambda b: (0, 0)),
        ],
        out_specs=pl.BlockSpec((1, oh, ow, LANES), lambda b: (b, 0, 0, 0)),
        scratch_shapes=[pltpu.VMEM((oh, row_stride, LANES), jnp.float32)],
        compiler_params=_cparams(1),
    )(x_rows, w_taps, bias)


# --------------------------------------------------------------------------- #
# fused fc1 -> relu -> fc2 -> relu -> fc3 kernel (batch-tiled)
# --------------------------------------------------------------------------- #
def _fc_kernel(x_ref, w1_ref, b1_ref, w2_ref, b2_ref, w3_ref, b3_ref, o_ref):
    h = jnp.dot(x_ref[...], w1_ref[...], preferred_element_type=jnp.float32)
    h = jnp.maximum(h + b1_ref[...], 0.0)
    h = jnp.dot(h, w2_ref[...], preferred_element_type=jnp.float32)
    h = jnp.maximum(h + b2_ref[...], 0.0)
    h = jnp.dot(h, w3_ref[...], preferred_element_type=jnp.float32) + b3_ref[...]
    o_ref[...] = h.astype(o_ref.dtype)


def fc_stack(x, w1, b1, w2, b2, w3, b3):
    B, K1 = x.shape
    N1, N2, N3 = w1.shape[1], w2.shape[1], w3.shape[1]
    if B <= 128:
        tb, bp = B, B
    else:
        tb = 128
        bp = (B + tb - 1) // tb * tb
        if bp != B:
            x = jnp.pad(x, ((0, bp - B), (0, 0)))
    out = pl.pallas_call(
        _fc_kernel,
        out_shape=jax.ShapeDtypeStruct((bp, N3), jnp.float32),
        grid=(bp // tb,),
        in_specs=[
            pl.BlockSpec((tb, K1), lambda i: (i, 0)),
            pl.BlockSpec((K1, N1), lambda i: (0, 0)),
            pl.BlockSpec((1, N1), lambda i: (0, 0)),
            pl.BlockSpec((N1, N2), lambda i: (0, 0)),
            pl.BlockSpec((1, N2), lambda i: (0, 0)),
            pl.BlockSpec((N2, N3), lambda i: (0, 0)),
            pl.BlockSpec((1, N3), lambda i: (0, 0)),
        ],
        out_specs=pl.BlockSpec((tb, N3), lambda i: (i, 0)),
        compiler_params=_cparams(1),
    )(x, w1, b1, w2, b2, w3, b3)
    return out[:B]


# --------------------------------------------------------------------------- #
# parameters / glue / forward
# --------------------------------------------------------------------------- #
def init_params(key):
    ks = jax.random.split(key, 10)

    def u(k, shape, fan_in):
        bound = 1.0 / jnp.sqrt(jnp.float32(fan_in))
        return jax.random.uniform(k, shape, jnp.float32, -bound, bound)

    return {
        "conv1_w": u(ks[0], (3, 3, 1, 32), 9 * 1),        # HWIO
        "conv1_b": u(ks[1], (32,), 9 * 1),
        "conv2_w": u(ks[2], (3, 3, 32, 64), 9 * 32),      # HWIO
        "conv2_b": u(ks[3], (64,), 9 * 32),
        "fc1_w":   u(ks[4], (64 * 7 * 7, 256), 64 * 7 * 7),
        "fc1_b":   u(ks[5], (256,), 64 * 7 * 7),
        "fc2_w":   u(ks[6], (256, 256), 256),
        "fc2_b":   u(ks[7], (256,), 256),
        "fc3_w":   u(ks[8], (256, 10), 256),
        "fc3_b":   u(ks[9], (10,), 256),
    }


def _prep_inference_params(params):
    """Repack torch-style parameters into kernel-friendly, lane-dense layouts."""
    # conv1: (3,3,1,32) -> (1, 9, 128); zero-padded cout keeps math exact.
    w1 = params["conv1_w"].reshape(9, 32)
    w1 = jnp.pad(w1, ((0, 0), (0, LANES - 32)))[None, :, :]
    b1 = jnp.pad(params["conv1_b"], (0, LANES - 32)).reshape(1, LANES)

    # conv2: (3,3,32,64) -> (9, 128, 128) with cin/cout zero-padded.
    w2 = jnp.pad(params["conv2_w"],
                 ((0, 0), (0, 0), (0, LANES - 32), (0, LANES - 64)))
    w2 = w2.reshape(9, LANES, LANES)
    b2 = jnp.pad(params["conv2_b"], (0, LANES - 64)).reshape(1, LANES)

    # fc1: fold the torch NCHW flatten (f = c*49 + h*7 + w) into the weight so
    # it consumes the NHWC / 128-channel-padded activation flatten directly.
    f1 = params["fc1_w"].reshape(64, 7, 7, 256)          # (c, h, w, out)
    f1 = jnp.transpose(f1, (1, 2, 0, 3))                 # (h, w, c, out)
    f1 = jnp.pad(f1, ((0, 0), (0, 0), (0, LANES - 64), (0, 0)))
    f1 = f1.reshape(7 * 7 * LANES, 256)
    fb1 = params["fc1_b"].reshape(1, 256)

    f2 = params["fc2_w"]
    fb2 = params["fc2_b"].reshape(1, 256)

    # fc3: pad N=10 -> 128 so the final store is lane-dense; sliced outside.
    f3 = jnp.pad(params["fc3_w"], ((0, 0), (0, LANES - 10)))
    fb3 = jnp.pad(params["fc3_b"], (0, LANES - 10)).reshape(1, LANES)

    return dict(conv1_w=w1, conv1_b=b1, conv2_w=w2, conv2_b=b2,
                fc1_w=f1, fc1_b=fb1, fc2_w=f2, fc2_b=fb2, fc3_w=f3, fc3_b=fb3)


def _conv1_rows(x_nchw):
    """(B,1,28,28) -> (B, 896, 9) im2col patch rows with q = 32*h + w."""
    B = x_nchw.shape[0]
    x = x_nchw[:, 0, :, :]                                   # (B, 28, 28)
    xp = jnp.pad(x, ((0, 0), (1, 1), (1, 1)))                # (B, 30, 30)
    cols = [xp[:, ky:ky + 28, kx:kx + 28]
            for ky in range(3) for kx in range(3)]           # tap order ky*3+kx
    p = jnp.stack(cols, axis=-1)                             # (B, 28, 28, 9)
    p = jnp.pad(p, ((0, 0), (0, 0), (0, 4), (0, 0)))         # (B, 28, 32, 9)
    return p.reshape(B, 28 * 32, 9)


def _conv2_rows(y1):
    """(B,14,14,128) pooled conv1 output -> (B, 272, 128) zero-bordered rows."""
    B = y1.shape[0]
    yp = jnp.pad(y1, ((0, 0), (1, 2), (1, 1), (0, 0)))       # (B, 17, 16, 128)
    return yp.reshape(B, 17 * 16, LANES)


def forward(params, x_nchw):
    """x_nchw: (B, 1, 28, 28) float32, same convention as the PyTorch module."""
    B = x_nchw.shape[0]
    p = _prep_inference_params(params)

    # conv1 + bias + ReLU + 2x2 max-pool (fused), channels padded to 128 lanes
    y = conv_relu_pool(_conv1_rows(x_nchw), p["conv1_w"], p["conv1_b"],
                       tap_offsets=(0,), oh=_CONV1_OH, ow=_CONV1_OH,
                       row_stride=_CONV1_STRIDE)             # (B, 14, 14, 128)

    # conv2 + bias + ReLU + 2x2 max-pool (fused), single read of the activation
    y = conv_relu_pool(_conv2_rows(y), p["conv2_w"], p["conv2_b"],
                       tap_offsets=_CONV2_OFFSETS, oh=_CONV2_OH, ow=_CONV2_OH,
                       row_stride=_CONV2_STRIDE)             # (B, 7, 7, 128)

    # NHWC flatten (the NCHW permutation is folded into fc1's weights)
    y = y.reshape(B, 7 * 7 * LANES)                          # (B, 6272)

    # fused fc1 -> relu -> fc2 -> relu -> fc3 (N padded to 128)
    y = fc_stack(y, p["fc1_w"], p["fc1_b"], p["fc2_w"], p["fc2_b"],
                 p["fc3_w"], p["fc3_b"])                     # (B, 128)
    return y[:, :10]


if __name__ == "__main__":
    key = jax.random.PRNGKey(0)
    k_params, k_x = jax.random.split(key)
    params = init_params(k_params)
    # forward() requires 28x28 single-channel input (fc1 expects 64*7*7 features)
    x = jax.random.normal(k_x, (2, 1, 28, 28), dtype=jnp.float32)

    fwd = jax.jit(forward)
    out = jax.block_until_ready(fwd(params, x))
    assert out.shape == (2, 10), out.shape
    assert bool(jnp.all(jnp.isfinite(out)))
    print("KERNEL_OK")
</pallas_src>

<mosaic_0001>
module attributes {stable_mosaic.version = 11 : i64} {
  func.func @_conv_relu_pool_kernel(%arg0: i32, %arg1: memref<1x896x9xf32, #tpu.memory_space<vmem>>, %arg2: memref<1x9x128xf32, #tpu.memory_space<vmem>>, %arg3: memref<1x128xf32, #tpu.memory_space<vmem>>, %arg4: memref<1x14x14x128xf32, #tpu.memory_space<vmem>>, %arg5: memref<14x32x128xf32, #tpu.memory_space<vmem>>) attributes {dimension_semantics = [#tpu.dimension_semantics<parallel>], iteration_bounds = array<i64: 2>, scalar_prefetch = 0 : i64, scratch_operands = 1 : i64, tpu.core_type = #tpu.core_type<tc>, window_params = [{transform_indices = @transform_0, window_bounds = array<i64: 1, 896, 9>}, {pipeline_mode = #tpu.pipeline_mode<synchronous>, transform_indices = @transform_1, window_bounds = array<i64: 1, 9, 128>}, {pipeline_mode = #tpu.pipeline_mode<synchronous>, transform_indices = @transform_2, window_bounds = array<i64: 1, 128>}, {transform_indices = @transform_3, window_bounds = array<i64: 1, 14, 14, 128>}]} {
    %cst = arith.constant 0.000000e+00 : f32
    %0 = vector.broadcast %cst : f32 to vector<896x128xf32>
    %c0 = arith.constant 0 : index
    %c0_0 = arith.constant 0 : index
    %c0_1 = arith.constant 0 : index
    %1 = vector.load %arg1[%c0, %c0_0, %c0_1] : memref<1x896x9xf32, #tpu.memory_space<vmem>>, vector<1x896x9xf32>
    %2 = vector.shape_cast %1 : vector<1x896x9xf32> to vector<896x9xf32>
    %c0_2 = arith.constant 0 : index
    %c0_3 = arith.constant 0 : index
    %c0_4 = arith.constant 0 : index
    %3 = vector.load %arg2[%c0_2, %c0_3, %c0_4] : memref<1x9x128xf32, #tpu.memory_space<vmem>>, vector<1x9x128xf32>
    %4 = vector.shape_cast %3 : vector<1x9x128xf32> to vector<9x128xf32>
    %cst_5 = arith.constant dense<0.000000e+00> : vector<896x128xf32>
    %5 = tpu.matmul %2, %4, %cst_5 {dimension_numbers = #tpu.dot_dimension_numbers<[1], [0], [0], [1], [0, 0, 1, 1], [], []>} : vector<896x9xf32>, vector<9x128xf32>, vector<896x128xf32> -> vector<896x128xf32>
    %6 = arith.addf %0, %5 : vector<896x128xf32>
    %c0_6 = arith.constant 0 : index
    %c0_7 = arith.constant 0 : index
    %7 = vector.load %arg3[%c0_6, %c0_7] : memref<1x128xf32, #tpu.memory_space<vmem>>, vector<1x128xf32>
    %8 = vector.broadcast %7 : vector<1x128xf32> to vector<896x128xf32>
    %9 = arith.addf %6, %8 : vector<896x128xf32>
    %cst_8 = arith.constant 0.000000e+00 : f32
    %10 = vector.broadcast %cst_8 : f32 to vector<896x128xf32>
    %11 = arith.maximumf %9, %10 : vector<896x128xf32>
    %12 = vector.shape_cast %11 : vector<896x128xf32> to vector<28x32x128xf32>
    %13 = vector.shape_cast %12 : vector<28x32x128xf32> to vector<14x2x32x128xf32>
    %cst_9 = arith.constant dense<0xFF800000> : vector<14x32x128xf32>
    %14 = vector.multi_reduction <maximumf>, %13, %cst_9 [1] : vector<14x2x32x128xf32> to vector<14x32x128xf32>
    %c0_10 = arith.constant 0 : index
    %c0_11 = arith.constant 0 : index
    %c0_12 = arith.constant 0 : index
    %15 = vector.load %arg5[%c0_10, %c0_11, %c0_12] : memref<14x32x128xf32, #tpu.memory_space<vmem>>, vector<14x32x128xf32>
    tpu.vector_store %arg5[%c0_10, %c0_11, %c0_12], %14 {strides = array<i32>} : memref<14x32x128xf32, #tpu.memory_space<vmem>>, vector<14x32x128xf32>,
    %c0_13 = arith.constant 0 : index
    %c0_14 = arith.constant 0 : index
    %c0_15 = arith.constant 0 : index
    %16 = tpu.strided_load %arg5[%c0_13, %c0_14, %c0_15] {strides = array<i32: 1, 2, 1>} : memref<14x32x128xf32, #tpu.memory_space<vmem>>, vector<14x14x128xf32>
    %c0_16 = arith.constant 0 : index
    %c1 = arith.constant 1 : index
    %c0_17 = arith.constant 0 : index
    %17 = tpu.strided_load %arg5[%c0_16, %c1, %c0_17] {strides = array<i32: 1, 2, 1>} : memref<14x32x128xf32, #tpu.memory_space<vmem>>, vector<14x14x128xf32>
    %18 = arith.maximumf %16, %17 : vector<14x14x128xf32>
    %c0_18 = arith.constant 0 : index
    %c0_19 = arith.constant 0 : index
    %c0_20 = arith.constant 0 : index
    %c0_21 = arith.constant 0 : index
    %19 = vector.load %arg4[%c0_18, %c0_19, %c0_20, %c0_21] : memref<1x14x14x128xf32, #tpu.memory_space<vmem>>, vector<1x14x14x128xf32>
    %20 = vector.shape_cast %19 : vector<1x14x14x128xf32> to vector<14x14x128xf32>
    %21 = vector.shape_cast %18 : vector<14x14x128xf32> to vector<1x14x14x128xf32>
    tpu.vector_store %arg4[%c0_18, %c0_19, %c0_20, %c0_21], %21 {strides = array<i32>} : memref<1x14x14x128xf32, #tpu.memory_space<vmem>>, vector<1x14x14x128xf32>,
    return
  }
  func.func @transform_0(%arg0: i32) -> (i32, i32, i32) {
    %c0_i32 = arith.constant 0 : i32
    %c0_i32_0 = arith.constant 0 : i32
    %c0_i32_1 = arith.constant 0 : i32
    return %arg0, %c0_i32, %c0_i32_0 : i32, i32, i32
  }
  func.func @transform_1(%arg0: i32) -> (i32, i32, i32) {
    %c0_i32 = arith.constant 0 : i32
    %c0_i32_0 = arith.constant 0 : i32
    %c0_i32_1 = arith.constant 0 : i32
    %c0_i32_2 = arith.constant 0 : i32
    return %c0_i32, %c0_i32_0, %c0_i32_1 : i32, i32, i32
  }
  func.func @transform_2(%arg0: i32) -> (i32, i32) {
    %c0_i32 = arith.constant 0 : i32
    %c0_i32_0 = arith.constant 0 : i32
    %c0_i32_1 = arith.constant 0 : i32
    return %c0_i32, %c0_i32_0 : i32, i32
  }
  func.func @transform_3(%arg0: i32) -> (i32, i32, i32, i32) {
    %c0_i32 = arith.constant 0 : i32
    %c0_i32_0 = arith.constant 0 : i32
    %c0_i32_1 = arith.constant 0 : i32
    %c0_i32_2 = arith.constant 0 : i32
    return %arg0, %c0_i32, %c0_i32_0, %c0_i32_1 : i32, i32, i32, i32
  }
}

module attributes {stable_mosaic.version = 11 : i64} {
  func.func @_conv_relu_pool_kernel(%arg0: i32, %arg1: memref<1x272x128xf32, #tpu.memory_space<vmem>>, %arg2: memref<9x128x128xf32, #tpu.memory_space<vmem>>, %arg3: memref<1x128xf32, #tpu.memory_space<vmem>>, %arg4: memref<1x7x7x128xf32, #tpu.memory_space<vmem>>, %arg5: memref<7x16x128xf32, #tpu.memory_space<vmem>>) attributes {dimension_semantics = [#tpu.dimension_semantics<parallel>], iteration_bounds = array<i64: 2>, scalar_prefetch = 0 : i64, scratch_operands = 1 : i64, tpu.core_type = #tpu.core_type<tc>, window_params = [{transform_indices = @transform_0, window_bounds = array<i64: 1, 272, 128>}, {pipeline_mode = #tpu.pipeline_mode<synchronous>, transform_indices = @transform_1, window_bounds = array<i64: 9, 128, 128>}, {pipeline_mode = #tpu.pipeline_mode<synchronous>, transform_indices = @transform_2, window_bounds = array<i64: 1, 128>}, {transform_indices = @transform_3, window_bounds = array<i64: 1, 7, 7, 128>}]} {
    %cst = arith.constant 0.000000e+00 : f32
    %0 = vector.broadcast %cst : f32 to vector<224x128xf32>
    %c0 = arith.constant 0 : index
    %c0_0 = arith.constant 0 : index
    %c0_1 = arith.constant 0 : index
    %1 = vector.load %arg1[%c0, %c0_0, %c0_1] : memref<1x272x128xf32, #tpu.memory_space<vmem>>, vector<1x224x128xf32>
    %2 = vector.shape_cast %1 : vector<1x224x128xf32> to vector<224x128xf32>
    %c0_2 = arith.constant 0 : index
    %c0_3 = arith.constant 0 : index
    %c0_4 = arith.constant 0 : index
    %3 = vector.load %arg2[%c0_2, %c0_3, %c0_4] : memref<9x128x128xf32, #tpu.memory_space<vmem>>, vector<1x128x128xf32>
    %4 = vector.shape_cast %3 : vector<1x128x128xf32> to vector<128x128xf32>
    %cst_5 = arith.constant dense<0.000000e+00> : vector<224x128xf32>
    %5 = tpu.matmul %2, %4, %cst_5 {dimension_numbers = #tpu.dot_dimension_numbers<[1], [0], [0], [1], [0, 0, 1, 1], [], []>} : vector<224x128xf32>, vector<128x128xf32>, vector<224x128xf32> -> vector<224x128xf32>
    %6 = arith.addf %0, %5 : vector<224x128xf32>
    %c0_6 = arith.constant 0 : index
    %c1 = arith.constant 1 : index
    %c0_7 = arith.constant 0 : index
    %7 = vector.load %arg1[%c0_6, %c1, %c0_7] : memref<1x272x128xf32, #tpu.memory_space<vmem>>, vector<1x224x128xf32>
    %8 = vector.shape_cast %7 : vector<1x224x128xf32> to vector<224x128xf32>
    %c1_8 = arith.constant 1 : index
    %c0_9 = arith.constant 0 : index
    %c0_10 = arith.constant 0 : index
    %9 = vector.load %arg2[%c1_8, %c0_9, %c0_10] : memref<9x128x128xf32, #tpu.memory_space<vmem>>, vector<1x128x128xf32>
    %10 = vector.shape_cast %9 : vector<1x128x128xf32> to vector<128x128xf32>
    %cst_11 = arith.constant dense<0.000000e+00> : vector<224x128xf32>
    %11 = tpu.matmul %8, %10, %cst_11 {dimension_numbers = #tpu.dot_dimension_numbers<[1], [0], [0], [1], [0, 0, 1, 1], [], []>} : vector<224x128xf32>, vector<128x128xf32>, vector<224x128xf32> -> vector<224x128xf32>
    %12 = arith.addf %6, %11 : vector<224x128xf32>
    %c0_12 = arith.constant 0 : index
    %c2 = arith.constant 2 : index
    %c0_13 = arith.constant 0 : index
    %13 = vector.load %arg1[%c0_12, %c2, %c0_13] : memref<1x272x128xf32, #tpu.memory_space<vmem>>, vector<1x224x128xf32>
    %14 = vector.shape_cast %13 : vector<1x224x128xf32> to vector<224x128xf32>
    %c2_14 = arith.constant 2 : index
    %c0_15 = arith.constant 0 : index
    %c0_16 = arith.constant 0 : index
    %15 = vector.load %arg2[%c2_14, %c0_15, %c0_16] : memref<9x128x128xf32, #tpu.memory_space<vmem>>, vector<1x128x128xf32>
    %16 = vector.shape_cast %15 : vector<1x128x128xf32> to vector<128x128xf32>
    %cst_17 = arith.constant dense<0.000000e+00> : vector<224x128xf32>
    %17 = tpu.matmul %14, %16, %cst_17 {dimension_numbers = #tpu.dot_dimension_numbers<[1], [0], [0], [1], [0, 0, 1, 1], [], []>} : vector<224x128xf32>, vector<128x128xf32>, vector<224x128xf32> -> vector<224x128xf32>
    %18 = arith.addf %12, %17 : vector<224x128xf32>
    %c0_18 = arith.constant 0 : index
    %c16 = arith.constant 16 : index
    %c0_19 = arith.constant 0 : index
    %19 = vector.load %arg1[%c0_18, %c16, %c0_19] : memref<1x272x128xf32, #tpu.memory_space<vmem>>, vector<1x224x128xf32>
    %20 = vector.shape_cast %19 : vector<1x224x128xf32> to vector<224x128xf32>
    %c3 = arith.constant 3 : index
    %c0_20 = arith.constant 0 : index
    %c0_21 = arith.constant 0 : index
    %21 = vector.load %arg2[%c3, %c0_20, %c0_21] : memref<9x128x128xf32, #tpu.memory_space<vmem>>, vector<1x128x128xf32>
    %22 = vector.shape_cast %21 : vector<1x128x128xf32> to vector<128x128xf32>
    %cst_22 = arith.constant dense<0.000000e+00> : vector<224x128xf32>
    %23 = tpu.matmul %20, %22, %cst_22 {dimension_numbers = #tpu.dot_dimension_numbers<[1], [0], [0], [1], [0, 0, 1, 1], [], []>} : vector<224x128xf32>, vector<128x128xf32>, vector<224x128xf32> -> vector<224x128xf32>
    %24 = arith.addf %18, %23 : vector<224x128xf32>
    %c0_23 = arith.constant 0 : index
    %c17 = arith.constant 17 : index
    %c0_24 = arith.constant 0 : index
    %25 = vector.load %arg1[%c0_23, %c17, %c0_24] : memref<1x272x128xf32, #tpu.memory_space<vmem>>, vector<1x224x128xf32>
    %26 = vector.shape_cast %25 : vector<1x224x128xf32> to vector<224x128xf32>
    %c4 = arith.constant 4 : index
    %c0_25 = arith.constant 0 : index
    %c0_26 = arith.constant 0 : index
    %27 = vector.load %arg2[%c4, %c0_25, %c0_26] : memref<9x128x128xf32, #tpu.memory_space<vmem>>, vector<1x128x128xf32>
    %28 = vector.shape_cast %27 : vector<1x128x128xf32> to vector<128x128xf32>
    %cst_27 = arith.constant dense<0.000000e+00> : vector<224x128xf32>
    %29 = tpu.matmul %26, %28, %cst_27 {dimension_numbers = #tpu.dot_dimension_numbers<[1], [0], [0], [1], [0, 0, 1, 1], [], []>} : vector<224x128xf32>, vector<128x128xf32>, vector<224x128xf32> -> vector<224x128xf32>
    %30 = arith.addf %24, %29 : vector<224x128xf32>
    %c0_28 = arith.constant 0 : index
    %c18 = arith.constant 18 : index
    %c0_29 = arith.constant 0 : index
    %31 = vector.load %arg1[%c0_28, %c18, %c0_29] : memref<1x272x128xf32, #tpu.memory_space<vmem>>, vector<1x224x128xf32>
    %32 = vector.shape_cast %31 : vector<1x224x128xf32> to vector<224x128xf32>
    %c5 = arith.constant 5 : index
    %c0_30 = arith.constant 0 : index
    %c0_31 = arith.constant 0 : index
    %33 = vector.load %arg2[%c5, %c0_30, %c0_31] : memref<9x128x128xf32, #tpu.memory_space<vmem>>, vector<1x128x128xf32>
    %34 = vector.shape_cast %33 : vector<1x128x128xf32> to vector<128x128xf32>
    %cst_32 = arith.constant dense<0.000000e+00> : vector<224x128xf32>
    %35 = tpu.matmul %32, %34, %cst_32 {dimension_numbers = #tpu.dot_dimension_numbers<[1], [0], [0], [1], [0, 0, 1, 1], [], []>} : vector<224x128xf32>, vector<128x128xf32>, vector<224x128xf32> -> vector<224x128xf32>
    %36 = arith.addf %30, %35 : vector<224x128xf32>
    %c0_33 = arith.constant 0 : index
    %c32 = arith.constant 32 : index
    %c0_34 = arith.constant 0 : index
    %37 = vector.load %arg1[%c0_33, %c32, %c0_34] : memref<1x272x128xf32, #tpu.memory_space<vmem>>, vector<1x224x128xf32>
    %38 = vector.shape_cast %37 : vector<1x224x128xf32> to vector<224x128xf32>
    %c6 = arith.constant 6 : index
    %c0_35 = arith.constant 0 : index
    %c0_36 = arith.constant 0 : index
    %39 = vector.load %arg2[%c6, %c0_35, %c0_36] : memref<9x128x128xf32, #tpu.memory_space<vmem>>, vector<1x128x128xf32>
    %40 = vector.shape_cast %39 : vector<1x128x128xf32> to vector<128x128xf32>
    %cst_37 = arith.constant dense<0.000000e+00> : vector<224x128xf32>
    %41 = tpu.matmul %38, %40, %cst_37 {dimension_numbers = #tpu.dot_dimension_numbers<[1], [0], [0], [1], [0, 0, 1, 1], [], []>} : vector<224x128xf32>, vector<128x128xf32>, vector<224x128xf32> -> vector<224x128xf32>
    %42 = arith.addf %36, %41 : vector<224x128xf32>
    %c0_38 = arith.constant 0 : index
    %c33 = arith.constant 33 : index
    %c0_39 = arith.constant 0 : index
    %43 = vector.load %arg1[%c0_38, %c33, %c0_39] : memref<1x272x128xf32, #tpu.memory_space<vmem>>, vector<1x224x128xf32>
    %44 = vector.shape_cast %43 : vector<1x224x128xf32> to vector<224x128xf32>
    %c7 = arith.constant 7 : index
    %c0_40 = arith.constant 0 : index
    %c0_41 = arith.constant 0 : index
    %45 = vector.load %arg2[%c7, %c0_40, %c0_41] : memref<9x128x128xf32, #tpu.memory_space<vmem>>, vector<1x128x128xf32>
    %46 = vector.shape_cast %45 : vector<1x128x128xf32> to vector<128x128xf32>
    %cst_42 = arith.constant dense<0.000000e+00> : vector<224x128xf32>
    %47 = tpu.matmul %44, %46, %cst_42 {dimension_numbers = #tpu.dot_dimension_numbers<[1], [0], [0], [1], [0, 0, 1, 1], [], []>} : vector<224x128xf32>, vector<128x128xf32>, vector<224x128xf32> -> vector<224x128xf32>
    %48 = arith.addf %42, %47 : vector<224x128xf32>
    %c0_43 = arith.constant 0 : index
    %c34 = arith.constant 34 : index
    %c0_44 = arith.constant 0 : index
    %49 = vector.load %arg1[%c0_43, %c34, %c0_44] : memref<1x272x128xf32, #tpu.memory_space<vmem>>, vector<1x224x128xf32>
    %50 = vector.shape_cast %49 : vector<1x224x128xf32> to vector<224x128xf32>
    %c8 = arith.constant 8 : index
    %c0_45 = arith.constant 0 : index
    %c0_46 = arith.constant 0 : index
    %51 = vector.load %arg2[%c8, %c0_45, %c0_46] : memref<9x128x128xf32, #tpu.memory_space<vmem>>, vector<1x128x128xf32>
    %52 = vector.shape_cast %51 : vector<1x128x128xf32> to vector<128x128xf32>
    %cst_47 = arith.constant dense<0.000000e+00> : vector<224x128xf32>
    %53 = tpu.matmul %50, %52, %cst_47 {dimension_numbers = #tpu.dot_dimension_numbers<[1], [0], [0], [1], [0, 0, 1, 1], [], []>} : vector<224x128xf32>, vector<128x128xf32>, vector<224x128xf32> -> vector<224x128xf32>
    %54 = arith.addf %48, %53 : vector<224x128xf32>
    %c0_48 = arith.constant 0 : index
    %c0_49 = arith.constant 0 : index
    %55 = vector.load %arg3[%c0_48, %c0_49] : memref<1x128xf32, #tpu.memory_space<vmem>>, vector<1x128xf32>
    %56 = vector.broadcast %55 : vector<1x128xf32> to vector<224x128xf32>
    %57 = arith.addf %54, %56 : vector<224x128xf32>
    %cst_50 = arith.constant 0.000000e+00 : f32
    %58 = vector.broadcast %cst_50 : f32 to vector<224x128xf32>
    %59 = arith.maximumf %57, %58 : vector<224x128xf32>
    %60 = vector.shape_cast %59 : vector<224x128xf32> to vector<14x16x128xf32>
    %61 = vector.shape_cast %60 : vector<14x16x128xf32> to vector<7x2x16x128xf32>
    %cst_51 = arith.constant dense<0xFF800000> : vector<7x16x128xf32>
    %62 = vector.multi_reduction <maximumf>, %61, %cst_51 [1] : vector<7x2x16x128xf32> to vector<7x16x128xf32>
    %c0_52 = arith.constant 0 : index
    %c0_53 = arith.constant 0 : index
    %c0_54 = arith.constant 0 : index
    %63 = vector.load %arg5[%c0_52, %c0_53, %c0_54] : memref<7x16x128xf32, #tpu.memory_space<vmem>>, vector<7x16x128xf32>
    tpu.vector_store %arg5[%c0_52, %c0_53, %c0_54], %62 {strides = array<i32>} : memref<7x16x128xf32, #tpu.memory_space<vmem>>, vector<7x16x128xf32>,
    %c0_55 = arith.constant 0 : index
    %c0_56 = arith.constant 0 : index
    %c0_57 = arith.constant 0 : index
    %64 = tpu.strided_load %arg5[%c0_55, %c0_56, %c0_57] {strides = array<i32: 1, 2, 1>} : memref<7x16x128xf32, #tpu.memory_space<vmem>>, vector<7x7x128xf32>
    %c0_58 = arith.constant 0 : index
    %c1_59 = arith.constant 1 : index
    %c0_60 = arith.constant 0 : index
    %65 = tpu.strided_load %arg5[%c0_58, %c1_59, %c0_60] {strides = array<i32: 1, 2, 1>} : memref<7x16x128xf32, #tpu.memory_space<vmem>>, vector<7x7x128xf32>
    %66 = arith.maximumf %64, %65 : vector<7x7x128xf32>
    %c0_61 = arith.constant 0 : index
    %c0_62 = arith.constant 0 : index
    %c0_63 = arith.constant 0 : index
    %c0_64 = arith.constant 0 : index
    %67 = vector.load %arg4[%c0_61, %c0_62, %c0_63, %c0_64] : memref<1x7x7x128xf32, #tpu.memory_space<vmem>>, vector<1x7x7x128xf32>
    %68 = vector.shape_cast %67 : vector<1x7x7x128xf32> to vector<7x7x128xf32>
    %69 = vector.shape_cast %66 : vector<7x7x128xf32> to vector<1x7x7x128xf32>
    tpu.vector_store %arg4[%c0_61, %c0_62, %c0_63, %c0_64], %69 {strides = array<i32>} : memref<1x7x7x128xf32, #tpu.memory_space<vmem>>, vector<1x7x7x128xf32>,
    return
  }
  func.func @transform_0(%arg0: i32) -> (i32, i32, i32) {
    %c0_i32 = arith.constant 0 : i32
    %c0_i32_0 = arith.constant 0 : i32
    %c0_i32_1 = arith.constant 0 : i32
    return %arg0, %c0_i32, %c0_i32_0 : i32, i32, i32
  }
  func.func @transform_1(%arg0: i32) -> (i32, i32, i32) {
    %c0_i32 = arith.constant 0 : i32
    %c0_i32_0 = arith.constant 0 : i32
    %c0_i32_1 = arith.constant 0 : i32
    %c0_i32_2 = arith.constant 0 : i32
    return %c0_i32, %c0_i32_0, %c0_i32_1 : i32, i32, i32
  }
  func.func @transform_2(%arg0: i32) -> (i32, i32) {
    %c0_i32 = arith.constant 0 : i32
    %c0_i32_0 = arith.constant 0 : i32
    %c0_i32_1 = arith.constant 0 : i32
    return %c0_i32, %c0_i32_0 : i32, i32
  }
  func.func @transform_3(%arg0: i32) -> (i32, i32, i32, i32) {
    %c0_i32 = arith.constant 0 : i32
    %c0_i32_0 = arith.constant 0 : i32
    %c0_i32_1 = arith.constant 0 : i32
    %c0_i32_2 = arith.constant 0 : i32
    return %arg0, %c0_i32, %c0_i32_0, %c0_i32_1 : i32, i32, i32, i32
  }
}

module attributes {stable_mosaic.version = 11 : i64} {
  func.func @_fc_kernel(%arg0: i32, %arg1: memref<2x6272xf32, #tpu.memory_space<vmem>>, %arg2: memref<6272x256xf32, #tpu.memory_space<vmem>>, %arg3: memref<1x256xf32, #tpu.memory_space<vmem>>, %arg4: memref<256x256xf32, #tpu.memory_space<vmem>>, %arg5: memref<1x256xf32, #tpu.memory_space<vmem>>, %arg6: memref<256x128xf32, #tpu.memory_space<vmem>>, %arg7: memref<1x128xf32, #tpu.memory_space<vmem>>, %arg8: memref<2x128xf32, #tpu.memory_space<vmem>>) attributes {dimension_semantics = [#tpu.dimension_semantics<parallel>], iteration_bounds = array<i64: 1>, scalar_prefetch = 0 : i64, scratch_operands = 0 : i64, tpu.core_type = #tpu.core_type<tc>, window_params = [{transform_indices = @transform_0, window_bounds = array<i64: 2, 6272>}, {pipeline_mode = #tpu.pipeline_mode<synchronous>, transform_indices = @transform_1, window_bounds = array<i64: 6272, 256>}, {pipeline_mode = #tpu.pipeline_mode<synchronous>, transform_indices = @transform_2, window_bounds = array<i64: 1, 256>}, {pipeline_mode = #tpu.pipeline_mode<synchronous>, transform_indices = @transform_3, window_bounds = array<i64: 256, 256>}, {pipeline_mode = #tpu.pipeline_mode<synchronous>, transform_indices = @transform_4, window_bounds = array<i64: 1, 256>}, {pipeline_mode = #tpu.pipeline_mode<synchronous>, transform_indices = @transform_5, window_bounds = array<i64: 256, 128>}, {pipeline_mode = #tpu.pipeline_mode<synchronous>, transform_indices = @transform_6, window_bounds = array<i64: 1, 128>}, {transform_indices = @transform_7, window_bounds = array<i64: 2, 128>}]} {
    %c0 = arith.constant 0 : index
    %c0_0 = arith.constant 0 : index
    %0 = vector.load %arg1[%c0, %c0_0] : memref<2x6272xf32, #tpu.memory_space<vmem>>, vector<2x6272xf32>
    %c0_1 = arith.constant 0 : index
    %c0_2 = arith.constant 0 : index
    %1 = vector.load %arg2[%c0_1, %c0_2] : memref<6272x256xf32, #tpu.memory_space<vmem>>, vector<6272x256xf32>
    %cst = arith.constant dense<0.000000e+00> : vector<2x256xf32>
    %2 = tpu.matmul %0, %1, %cst {dimension_numbers = #tpu.dot_dimension_numbers<[1], [0], [0], [1], [0, 0, 1, 1], [], []>} : vector<2x6272xf32>, vector<6272x256xf32>, vector<2x256xf32> -> vector<2x256xf32>
    %c0_3 = arith.constant 0 : index
    %c0_4 = arith.constant 0 : index
    %3 = vector.load %arg3[%c0_3, %c0_4] : memref<1x256xf32, #tpu.memory_space<vmem>>, vector<1x256xf32>
    %4 = vector.broadcast %3 : vector<1x256xf32> to vector<2x256xf32>
    %5 = arith.addf %2, %4 : vector<2x256xf32>
    %cst_5 = arith.constant 0.000000e+00 : f32
    %6 = vector.broadcast %cst_5 : f32 to vector<2x256xf32>
    %7 = arith.maximumf %5, %6 : vector<2x256xf32>
    %c0_6 = arith.constant 0 : index
    %c0_7 = arith.constant 0 : index
    %8 = vector.load %arg4[%c0_6, %c0_7] : memref<256x256xf32, #tpu.memory_space<vmem>>, vector<256x256xf32>
    %cst_8 = arith.constant dense<0.000000e+00> : vector<2x256xf32>
    %9 = tpu.matmul %7, %8, %cst_8 {dimension_numbers = #tpu.dot_dimension_numbers<[1], [0], [0], [1], [0, 0, 1, 1], [], []>} : vector<2x256xf32>, vector<256x256xf32>, vector<2x256xf32> -> vector<2x256xf32>
    %c0_9 = arith.constant 0 : index
    %c0_10 = arith.constant 0 : index
    %10 = vector.load %arg5[%c0_9, %c0_10] : memref<1x256xf32, #tpu.memory_space<vmem>>, vector<1x256xf32>
    %11 = vector.broadcast %10 : vector<1x256xf32> to vector<2x256xf32>
    %12 = arith.addf %9, %11 : vector<2x256xf32>
    %cst_11 = arith.constant 0.000000e+00 : f32
    %13 = vector.broadcast %cst_11 : f32 to vector<2x256xf32>
    %14 = arith.maximumf %12, %13 : vector<2x256xf32>
    %c0_12 = arith.constant 0 : index
    %c0_13 = arith.constant 0 : index
    %15 = vector.load %arg6[%c0_12, %c0_13] : memref<256x128xf32, #tpu.memory_space<vmem>>, vector<256x128xf32>
    %cst_14 = arith.constant dense<0.000000e+00> : vector<2x128xf32>
    %16 = tpu.matmul %14, %15, %cst_14 {dimension_numbers = #tpu.dot_dimension_numbers<[1], [0], [0], [1], [0, 0, 1, 1], [], []>} : vector<2x256xf32>, vector<256x128xf32>, vector<2x128xf32> -> vector<2x128xf32>
    %c0_15 = arith.constant 0 : index
    %c0_16 = arith.constant 0 : index
    %17 = vector.load %arg7[%c0_15, %c0_16] : memref<1x128xf32, #tpu.memory_space<vmem>>, vector<1x128xf32>
    %18 = vector.broadcast %17 : vector<1x128xf32> to vector<2x128xf32>
    %19 = arith.addf %16, %18 : vector<2x128xf32>
    %c0_17 = arith.constant 0 : index
    %c0_18 = arith.constant 0 : index
    %20 = vector.load %arg8[%c0_17, %c0_18] : memref<2x128xf32, #tpu.memory_space<vmem>>, vector<2x128xf32>
    tpu.vector_store %arg8[%c0_17, %c0_18], %19 {strides = array<i32>} : memref<2x128xf32, #tpu.memory_space<vmem>>, vector<2x128xf32>,
    return
  }
  func.func @transform_0(%arg0: i32) -> (i32, i32) {
    %c0_i32 = arith.constant 0 : i32
    %c0_i32_0 = arith.constant 0 : i32
    return %arg0, %c0_i32 : i32, i32
  }
  func.func @transform_1(%arg0: i32) -> (i32, i32) {
    %c0_i32 = arith.constant 0 : i32
    %c0_i32_0 = arith.constant 0 : i32
    %c0_i32_1 = arith.constant 0 : i32
    return %c0_i32, %c0_i32_0 : i32, i32
  }
  func.func @transform_2(%arg0: i32) -> (i32, i32) {
    %c0_i32 = arith.constant 0 : i32
    %c0_i32_0 = arith.constant 0 : i32
    %c0_i32_1 = arith.constant 0 : i32
    return %c0_i32, %c0_i32_0 : i32, i32
  }
  func.func @transform_3(%arg0: i32) -> (i32, i32) {
    %c0_i32 = arith.constant 0 : i32
    %c0_i32_0 = arith.constant 0 : i32
    %c0_i32_1 = arith.constant 0 : i32
    return %c0_i32, %c0_i32_0 : i32, i32
  }
  func.func @transform_4(%arg0: i32) -> (i32, i32) {
    %c0_i32 = arith.constant 0 : i32
    %c0_i32_0 = arith.constant 0 : i32
    %c0_i32_1 = arith.constant 0 : i32
    return %c0_i32, %c0_i32_0 : i32, i32
  }
  func.func @transform_5(%arg0: i32) -> (i32, i32) {
    %c0_i32 = arith.constant 0 : i32
    %c0_i32_0 = arith.constant 0 : i32
    %c0_i32_1 = arith.constant 0 : i32
    return %c0_i32, %c0_i32_0 : i32, i32
  }
  func.func @transform_6(%arg0: i32) -> (i32, i32) {
    %c0_i32 = arith.constant 0 : i32
    %c0_i32_0 = arith.constant 0 : i32
    %c0_i32_1 = arith.constant 0 : i32
    return %c0_i32, %c0_i32_0 : i32, i32
  }
  func.func @transform_7(%arg0: i32) -> (i32, i32) {
    %c0_i32 = arith.constant 0 : i32
    %c0_i32_0 = arith.constant 0 : i32
    return %arg0, %c0_i32 : i32, i32
  }
}

</mosaic_0001>

<llo_original>
// kernel: forward.3
$region0: #{forward.3}
  #allocation0 [shape = 'u32[]', space=smem, size = 0x4, offset = 0x4, fixed_abs, tag = 'smem constant byte address 0x4 - core index']
  #allocation1 [shape = 'u32[144,128]{1,0:T(1,128)}', space=vmem, size = 0x12000, scoped, tag = 'internal scratch']
  #allocation2 [shape = 'f32[14,32,128]{2,1,0:T(8,128)}', space=vmem, size = 0x38000, scoped, tag = 'scratch operand']
  %s0 = inlined_call_operand.vmem [shape: f32[2,896,9], index: 0, kind: input, shape index: {}]
  %s1 = inlined_call_operand.vmem [shape: f32[1,9,128], index: 1, kind: input, shape index: {}]
  %s2 = inlined_call_operand.vmem [shape: f32[1,128], index: 2, kind: input, shape index: {}]
  %s3 = inlined_call_operand.vmem [shape: f32[2,14,14,128], index: 3, kind: output, shape index: {}]
  %s4 = sld [smem:[#allocation0]]
  $region45: #{forward.3} parent=0
    _
  %s6 = ssub.s32 1, %s4
  %s7 = scalar_select 0, %s6, %s4
  loop: start=0, step=1, limit=4
  $region2: #{forward.3} parent=0 // loop_pre_header
    _
  $region3: #{forward.3} parent=0 // loop_header
    %s9 = sphi 0, %s13
    %p10 = scmp.ge.s32.totalorder %s9, 4
    %s19 = sphi 0, %s21
    %s22 = sphi 0, %s19
    %s23 = sphi 0, %s22
    %s39 = sphi 0, %s23
    %s43 = sphi 0, %s43
    %s45 = sphi 0, %s43
    %s46 = sphi 0, %s45
    %s60 = sphi 0, %s46
    %s64 = sphi 0, %s64
    %s66 = sphi 0, %s64
    %s67 = sphi 0, %s66
    %s81 = sphi 0, %s67
    %s87 = sphi 0, %s89
    %s90 = sphi 0, %s87
    %s91 = sphi 0, %s90
    %s107 = sphi 0, %s91
  $region4: #{forward.3} parent=0 // loop_header_branch
    %12 = sbr.rel (%p10) target = $region8
  $region5: #{forward.3} parent=0 // loop_body
    %s14 = ssub.s32 %s9, 1
    %s15 = ssub.s32 %s9, 2
    %s16 = sadd.s32 %s9, 1
    %s17 = ssub.s32 %s9, %s16
    %p18 = scmp.eq.s32.totalorder %s17, 0
    %s20 = sadd.s32 %s19, 1
    %s21 = scalar_select %p18, %s19, %s20
    %p24 = pneg %p18
    %p25 = scmp.eq.s32.totalorder %s9, 1
    %p26 = por %p24, %p25
    %p27 = scmp.ne.s32.totalorder %s19, %s22
    %p28 = scmp.eq.s32.totalorder %s9, 0
    %p29 = por %p27, %p28
    %p30 = scmp.ne.s32.totalorder %s19, %s22
    %p31 = scmp.eq.s32.totalorder %s14, 1
    %p32 = por %p30, %p31
    %p33 = scmp.ne.s32.totalorder %s22, %s23
    %p34 = scmp.eq.s32.totalorder %s14, 0
    %p35 = por %p33, %p34
    %p36 = scmp.ne.s32.totalorder %s22, %s23
    %p37 = scmp.eq.s32.totalorder %s15, 1
    %p38 = por %p36, %p37
    %p40 = scmp.ne.s32.totalorder %s23, %s39
    %p41 = scmp.eq.s32.totalorder %s15, 0
    %p42 = por %p40, %p41
    %s44 = sadd.s32 %s43, 1
    %p47 = scmp.eq.s32.totalorder %s9, 1
    %p48 = scmp.ne.s32.totalorder %s43, %s45
    %p49 = scmp.eq.s32.totalorder %s9, 0
    %p50 = por %p48, %p49
    %p51 = scmp.ne.s32.totalorder %s43, %s45
    %p52 = scmp.eq.s32.totalorder %s14, 1
    %p53 = por %p51, %p52
    %p54 = scmp.ne.s32.totalorder %s45, %s46
    %p55 = scmp.eq.s32.totalorder %s14, 0
    %p56 = por %p54, %p55
    %p57 = scmp.ne.s32.totalorder %s45, %s46
    %p58 = scmp.eq.s32.totalorder %s15, 1
    %p59 = por %p57, %p58
    %p61 = scmp.ne.s32.totalorder %s46, %s60
    %p62 = scmp.eq.s32.totalorder %s15, 0
    %p63 = por %p61, %p62
    %s65 = sadd.s32 %s64, 1
    %p68 = scmp.eq.s32.totalorder %s9, 1
    %p69 = scmp.ne.s32.totalorder %s64, %s66
    %p70 = scmp.eq.s32.totalorder %s9, 0
    %p71 = por %p69, %p70
    %p72 = scmp.ne.s32.totalorder %s64, %s66
    %p73 = scmp.eq.s32.totalorder %s14, 1
    %p74 = por %p72, %p73
    %p75 = scmp.ne.s32.totalorder %s66, %s67
    %p76 = scmp.eq.s32.totalorder %s14, 0
    %p77 = por %p75, %p76
    %p78 = scmp.ne.s32.totalorder %s66, %s67
    %p79 = scmp.eq.s32.totalorder %s15, 1
    %p80 = por %p78, %p79
    %p82 = scmp.ne.s32.totalorder %s67, %s81
    %p83 = scmp.eq.s32.totalorder %s15, 0
    %p84 = por %p82, %p83
    %s85 = ssub.s32 %s9, %s16
    %p86 = scmp.eq.s32.totalorder %s85, 0
    %s88 = sadd.s32 %s87, 1
    %s89 = scalar_select %p86, %s87, %s88
    %p92 = pneg %p86
    %p93 = scmp.eq.s32.totalorder %s9, 1
    %p94 = por %p92, %p93
    %p95 = scmp.ne.s32.totalorder %s87, %s90
    %p96 = scmp.eq.s32.totalorder %s9, 0
    %p97 = por %p95, %p96
    %p98 = scmp.ne.s32.totalorder %s87, %s90
    %p99 = scmp.eq.s32.totalorder %s14, 1
    %p100 = por %p98, %p99
    %p101 = scmp.ne.s32.totalorder %s90, %s91
    %p102 = scmp.eq.s32.totalorder %s14, 0
    %p103 = por %p101, %p102
    %p104 = scmp.ne.s32.totalorder %s90, %s91
    %p105 = scmp.eq.s32.totalorder %s15, 1
    %p106 = por %p104, %p105
    %p108 = scmp.ne.s32.totalorder %s91, %s107
    %p109 = scmp.eq.s32.totalorder %s15, 0
    %p110 = por %p108, %p109
    %p111 = scmp.le.s32.totalorder 1, %s9
    %p112 = scmp.lt.s32.totalorder %s9, 3
    %p113 = pnand %p111, %p112
    %p114 = pneg %p113
    // Predicated region
    $region9: #{forward.3} parent=5 // pred_check
      _
    $region10: #{forward.3} parent=5 // pred_check_branch
      %116 = sbr.rel (%p113) target = $region12
    $region11: #{forward.3} parent=5 // pred_region
      %s117 = ssub.s32 %s9, 1
      // Predicated region
      $region13: #{forward.3} parent=11 // pred_check
        %p118 = pneg %p56
      $region14: #{forward.3} parent=11 // pred_check_branch
        %120 = sbr.rel (%p118) target = $region16
      $region15: #{forward.3} parent=11 // pred_region
        _
      $region16: #{forward.3} parent=11 // pred_fallthru
        _
      // Predicated region
      $region17: #{forward.3} parent=11 // pred_check
        %p121 = pneg %p77
      $region18: #{forward.3} parent=11 // pred_check_branch
        %123 = sbr.rel (%p121) target = $region20
      $region19: #{forward.3} parent=11 // pred_region
        _
      $region20: #{forward.3} parent=11 // pred_fallthru
        _
    $region12: #{forward.3} parent=5 // pred_fallthru
      _
    %p124 = scmp.lt.s32.totalorder %s9, 2
    // Predicated region
    $region21: #{forward.3} parent=5 // pred_check
      %p125 = pneg %p124
    $region22: #{forward.3} parent=5 // pred_check_branch
      %127 = sbr.rel (%p125) target = $region24
    $region23: #{forward.3} parent=5 // pred_region
      // Predicated region
      $region25: #{forward.3} parent=23 // pred_check
        %p128 = pneg %p29
      $region26: #{forward.3} parent=23 // pred_check_branch
        %130 = sbr.rel (%p128) target = $region28
      $region27: #{forward.3} parent=23 // pred_region
        %p131 = scmp.lt.s32.totalorder %s9, 1
        %s132 = scalar_select %p131, %s9, 1
        %s133 = smul.addr %s132, 112
        %s134 = smul.addr %s133, 8
        %s135 = scalar_lea.vmem %s0, %s134
      $region28: #{forward.3} parent=23 // pred_fallthru
        _
    $region24: #{forward.3} parent=5 // pred_fallthru
      _
    %p136 = scmp.le.s32.totalorder 1, %s9
    %p137 = scmp.lt.s32.totalorder %s9, 3
    %p138 = pnand %p136, %p137
    %p139 = pneg %p138
    // Predicated region
    $region29: #{forward.3} parent=5 // pred_check
      _
    $region30: #{forward.3} parent=5 // pred_check_branch
      %141 = sbr.rel (%p138) target = $region32
    $region31: #{forward.3} parent=5 // pred_region
      %s142 = ssub.s32 %s9, 1
      %p143 = scmp.lt.s32.totalorder %s14, 1
      %s144 = scalar_select %p143, %s14, 1
      %s145 = smul.addr %s144, 112
      %s146 = smul.addr %s145, 8
      %s147 = scalar_lea.vmem %s0, %s146
      %p148 = pneg %p35
      %p149 = pneg %p32
      %p150 = pneg %p56
      %p151 = pneg %p53
      %p152 = pneg %p77
      %p153 = pneg %p74
      %p154 = pneg %p103
      %p155 = pneg %p100
      %p156 = scmp.lt.s32.totalorder %s14, 1
      %s157 = scalar_select %p156, %s14, 1
      %s158 = smul.addr %s157, 28
      %s159 = smul.addr %s158, 8
      %s160 = scalar_lea.vmem %s3, %s159
      %p161 = scmp.lt.s32.totalorder %s14, 1
      %s162 = scalar_select %p161, %s14, 1
      %s163 = smul.addr %s162, 112
      %s164 = smul.addr %s163, 8
      %s165 = scalar_lea.vmem %s0, %s164
      %p166 = scmp.lt.s32.totalorder %s14, 1
      %s167 = scalar_select %p166, %s14, 1
      %s168 = smul.addr %s167, 28
      %s169 = smul.addr %s168, 8
      %s170 = scalar_lea.vmem %s3, %s169
      %v171 = vld [vmem:[%s165] sm:$0xff]
      %v172 = vld [vmem:[%s165 + $0x8] sm:$0xff]
      %v173 = vld [vmem:[%s165 + $0x10] sm:$0xff]
      %v174 = vld [vmem:[%s165 + $0x18] sm:$0xff]
      %v175 = vld [vmem:[%s165 + $0x20] sm:$0xff]
      %v176 = vld [vmem:[%s165 + $0x28] sm:$0xff]
      %v177 = vld [vmem:[%s165 + $0x30] sm:$0xff]
      %v178 = vld [vmem:[%s165 + $0x38] sm:$0xff]
      %v179 = vld [vmem:[%s165 + $0x40] sm:$0xff]
      %v180 = vld [vmem:[%s165 + $0x48] sm:$0xff]
      %v181 = vld [vmem:[%s165 + $0x50] sm:$0xff]
      %v182 = vld [vmem:[%s165 + $0x58] sm:$0xff]
      %v183 = vld [vmem:[%s165 + $0x60] sm:$0xff]
      %v184 = vld [vmem:[%s165 + $0x68] sm:$0xff]
      %v185 = vld [vmem:[%s165 + $0x70] sm:$0xff]
      %v186 = vld [vmem:[%s165 + $0x78] sm:$0xff]
      %v187 = vld [vmem:[%s165 + $0x80] sm:$0xff]
      %v188 = vld [vmem:[%s165 + $0x88] sm:$0xff]
      %v189 = vld [vmem:[%s165 + $0x90] sm:$0xff]
      %v190 = vld [vmem:[%s165 + $0x98] sm:$0xff]
      %v191 = vld [vmem:[%s165 + $0xa0] sm:$0xff]
      %v192 = vld [vmem:[%s165 + $0xa8] sm:$0xff]
      %v193 = vld [vmem:[%s165 + $0xb0] sm:$0xff]
      %v194 = vld [vmem:[%s165 + $0xb8] sm:$0xff]
      %v195 = vld [vmem:[%s165 + $0xc0] sm:$0xff]
      %v196 = vld [vmem:[%s165 + $0xc8] sm:$0xff]
      %v197 = vld [vmem:[%s165 + $0xd0] sm:$0xff]
      %v198 = vld [vmem:[%s165 + $0xd8] sm:$0xff]
      %v199 = vld [vmem:[%s165 + $0xe0] sm:$0xff]
      %v200 = vld [vmem:[%s165 + $0xe8] sm:$0xff]
      %v201 = vld [vmem:[%s165 + $0xf0] sm:$0xff]
      %v202 = vld [vmem:[%s165 + $0xf8] sm:$0xff]
      %v203 = vld [vmem:[%s165 + $0x100] sm:$0xff]
      %v204 = vld [vmem:[%s165 + $0x108] sm:$0xff]
      %v205 = vld [vmem:[%s165 + $0x110] sm:$0xff]
      %v206 = vld [vmem:[%s165 + $0x118] sm:$0xff]
      %v207 = vld [vmem:[%s165 + $0x120] sm:$0xff]
      %v208 = vld [vmem:[%s165 + $0x128] sm:$0xff]
      %v209 = vld [vmem:[%s165 + $0x130] sm:$0xff]
      %v210 = vld [vmem:[%s165 + $0x138] sm:$0xff]
      %v211 = vld [vmem:[%s165 + $0x140] sm:$0xff]
      %v212 = vld [vmem:[%s165 + $0x148] sm:$0xff]
      %v213 = vld [vmem:[%s165 + $0x150] sm:$0xff]
      %v214 = vld [vmem:[%s165 + $0x158] sm:$0xff]
      %v215 = vld [vmem:[%s165 + $0x160] sm:$0xff]
      %v216 = vld [vmem:[%s165 + $0x168] sm:$0xff]
      %v217 = vld [vmem:[%s165 + $0x170] sm:$0xff]
      %v218 = vld [vmem:[%s165 + $0x178] sm:$0xff]
      %v219 = vld [vmem:[%s165 + $0x180] sm:$0xff]
      %v220 = vld [vmem:[%s165 + $0x188] sm:$0xff]
      %v221 = vld [vmem:[%s165 + $0x190] sm:$0xff]
      %v222 = vld [vmem:[%s165 + $0x198] sm:$0xff]
      %v223 = vld [vmem:[%s165 + $0x1a0] sm:$0xff]
      %v224 = vld [vmem:[%s165 + $0x1a8] sm:$0xff]
      %v225 = vld [vmem:[%s165 + $0x1b0] sm:$0xff]
      %v226 = vld [vmem:[%s165 + $0x1b8] sm:$0xff]
      %v227 = vld [vmem:[%s165 + $0x1c0] sm:$0xff]
      %v228 = vld [vmem:[%s165 + $0x1c8] sm:$0xff]
      %v229 = vld [vmem:[%s165 + $0x1d0] sm:$0xff]
      %v230 = vld [vmem:[%s165 + $0x1d8] sm:$0xff]
      %v231 = vld [vmem:[%s165 + $0x1e0] sm:$0xff]
      %v232 = vld [vmem:[%s165 + $0x1e8] sm:$0xff]
      %v233 = vld [vmem:[%s165 + $0x1f0] sm:$0xff]
      %v234 = vld [vmem:[%s165 + $0x1f8] sm:$0xff]
      %v235 = vld [vmem:[%s165 + $0x200] sm:$0xff]
      %v236 = vld [vmem:[%s165 + $0x208] sm:$0xff]
      %v237 = vld [vmem:[%s165 + $0x210] sm:$0xff]
      %v238 = vld [vmem:[%s165 + $0x218] sm:$0xff]
      %v239 = vld [vmem:[%s165 + $0x220] sm:$0xff]
      %v240 = vld [vmem:[%s165 + $0x228] sm:$0xff]
      %v241 = vld [vmem:[%s165 + $0x230] sm:$0xff]
      %v242 = vld [vmem:[%s165 + $0x238] sm:$0xff]
      %v243 = vld [vmem:[%s165 + $0x240] sm:$0xff]
      %v244 = vld [vmem:[%s165 + $0x248] sm:$0xff]
      %v245 = vld [vmem:[%s165 + $0x250] sm:$0xff]
      %v246 = vld [vmem:[%s165 + $0x258] sm:$0xff]
      %v247 = vld [vmem:[%s165 + $0x260] sm:$0xff]
      %v248 = vld [vmem:[%s165 + $0x268] sm:$0xff]
      %v249 = vld [vmem:[%s165 + $0x270] sm:$0xff]
      %v250 = vld [vmem:[%s165 + $0x278] sm:$0xff]
      %v251 = vld [vmem:[%s165 + $0x280] sm:$0xff]
      %v252 = vld [vmem:[%s165 + $0x288] sm:$0xff]
      %v253 = vld [vmem:[%s165 + $0x290] sm:$0xff]
      %v254 = vld [vmem:[%s165 + $0x298] sm:$0xff]
      %v255 = vld [vmem:[%s165 + $0x2a0] sm:$0xff]
      %v256 = vld [vmem:[%s165 + $0x2a8] sm:$0xff]
      %v257 = vld [vmem:[%s165 + $0x2b0] sm:$0xff]
      %v258 = vld [vmem:[%s165 + $0x2b8] sm:$0xff]
      %v259 = vld [vmem:[%s165 + $0x2c0] sm:$0xff]
      %v260 = vld [vmem:[%s165 + $0x2c8] sm:$0xff]
      %v261 = vld [vmem:[%s165 + $0x2d0] sm:$0xff]
      %v262 = vld [vmem:[%s165 + $0x2d8] sm:$0xff]
      %v263 = vld [vmem:[%s165 + $0x2e0] sm:$0xff]
      %v264 = vld [vmem:[%s165 + $0x2e8] sm:$0xff]
      %v265 = vld [vmem:[%s165 + $0x2f0] sm:$0xff]
      %v266 = vld [vmem:[%s165 + $0x2f8] sm:$0xff]
      %v267 = vld [vmem:[%s165 + $0x300] sm:$0xff]
      %v268 = vld [vmem:[%s165 + $0x308] sm:$0xff]
      %v269 = vld [vmem:[%s165 + $0x310] sm:$0xff]
      %v270 = vld [vmem:[%s165 + $0x318] sm:$0xff]
      %v271 = vld [vmem:[%s165 + $0x320] sm:$0xff]
      %v272 = vld [vmem:[%s165 + $0x328] sm:$0xff]
      %v273 = vld [vmem:[%s165 + $0x330] sm:$0xff]
      %v274 = vld [vmem:[%s165 + $0x338] sm:$0xff]
      %v275 = vld [vmem:[%s165 + $0x340] sm:$0xff]
      %v276 = vld [vmem:[%s165 + $0x348] sm:$0xff]
      %v277 = vld [vmem:[%s165 + $0x350] sm:$0xff]
      %v278 = vld [vmem:[%s165 + $0x358] sm:$0xff]
      %v279 = vld [vmem:[%s165 + $0x360] sm:$0xff]
      %v280 = vld [vmem:[%s165 + $0x368] sm:$0xff]
      %v281 = vld [vmem:[%s165 + $0x370] sm:$0xff]
      %v282 = vld [vmem:[%s165 + $0x378] sm:$0xff]
      %v283 = vld [vmem:[%s1] sm:$0xff]
      %v284 = vld [vmem:[%s1 + $0x8] sm:$0x1]
      %v285 = vld [vmem:[%s2] sm:$0x1]
      %v287 = vlaneseq
      %v288 = vshrl.u32 %v287, 7
      %v289 = vsub.s32 0, %v288
      %v290 = vrot.slane %v285, %v289
      %vm292 = vcmask 72704
      %v294 = vsel %vm292, %v171, 0
      %v297 = vsel %vm292, %v172, 0
      %v300 = vsel %vm292, %v173, 0
      %v303 = vsel %vm292, %v174, 0
      %v306 = vsel %vm292, %v175, 0
      %v309 = vsel %vm292, %v176, 0
      %v312 = vsel %vm292, %v177, 0
      %v315 = vsel %vm292, %v178, 0
      %v318 = vsel %vm292, %v179, 0
      %v321 = vsel %vm292, %v180, 0
      %v324 = vsel %vm292, %v181, 0
      %v327 = vsel %vm292, %v182, 0
      %v330 = vsel %vm292, %v183, 0
      %v333 = vsel %vm292, %v184, 0
      %v336 = vsel %vm292, %v185, 0
      %v339 = vsel %vm292, %v186, 0
      %v342 = vsel %vm292, %v187, 0
      %v345 = vsel %vm292, %v188, 0
      %v348 = vsel %vm292, %v189, 0
      %v351 = vsel %vm292, %v190, 0
      %v354 = vsel %vm292, %v191, 0
      %v357 = vsel %vm292, %v192, 0
      %v360 = vsel %vm292, %v193, 0
      %v363 = vsel %vm292, %v194, 0
      %v366 = vsel %vm292, %v195, 0
      %v369 = vsel %vm292, %v196, 0
      %v372 = vsel %vm292, %v197, 0
      %v375 = vsel %vm292, %v198, 0
      %v378 = vsel %vm292, %v199, 0
      %v381 = vsel %vm292, %v200, 0
      %v384 = vsel %vm292, %v201, 0
      %v387 = vsel %vm292, %v202, 0
      %v390 = vsel %vm292, %v203, 0
      %v393 = vsel %vm292, %v204, 0
      %v396 = vsel %vm292, %v205, 0
      %v399 = vsel %vm292, %v206, 0
      %v402 = vsel %vm292, %v207, 0
      %v405 = vsel %vm292, %v208, 0
      %v408 = vsel %vm292, %v209, 0
      %v411 = vsel %vm292, %v210, 0
      %v414 = vsel %vm292, %v211, 0
      %v417 = vsel %vm292, %v212, 0
      %v420 = vsel %vm292, %v213, 0
      %v423 = vsel %vm292, %v214, 0
      %v426 = vsel %vm292, %v215, 0
      %v429 = vsel %vm292, %v216, 0
      %v432 = vsel %vm292, %v217, 0
      %v435 = vsel %vm292, %v218, 0
      %v438 = vsel %vm292, %v219, 0
      %v441 = vsel %vm292, %v220, 0
      %v444 = vsel %vm292, %v221, 0
      %v447 = vsel %vm292, %v222, 0
      %v450 = vsel %vm292, %v223, 0
      %v453 = vsel %vm292, %v224, 0
      %v456 = vsel %vm292, %v225, 0
      %v459 = vsel %vm292, %v226, 0
      %v462 = vsel %vm292, %v227, 0
      %v465 = vsel %vm292, %v228, 0
      %v468 = vsel %vm292, %v229, 0
      %v471 = vsel %vm292, %v230, 0
      %v474 = vsel %vm292, %v231, 0
      %v477 = vsel %vm292, %v232, 0
      %v480 = vsel %vm292, %v233, 0
      %v483 = vsel %vm292, %v234, 0
      %v486 = vsel %vm292, %v235, 0
      %v489 = vsel %vm292, %v236, 0
      %v492 = vsel %vm292, %v237, 0
      %v495 = vsel %vm292, %v238, 0
      %v498 = vsel %vm292, %v239, 0
      %v501 = vsel %vm292, %v240, 0
      %v504 = vsel %vm292, %v241, 0
      %v507 = vsel %vm292, %v242, 0
      %v510 = vsel %vm292, %v243, 0
      %v513 = vsel %vm292, %v244, 0
      %v516 = vsel %vm292, %v245, 0
      %v519 = vsel %vm292, %v246, 0
      %v522 = vsel %vm292, %v247, 0
      %v525 = vsel %vm292, %v248, 0
      %v528 = vsel %vm292, %v249, 0
      %v531 = vsel %vm292, %v250, 0
      %v534 = vsel %vm292, %v251, 0
      %v537 = vsel %vm292, %v252, 0
      %v540 = vsel %vm292, %v253, 0
      %v543 = vsel %vm292, %v254, 0
      %v546 = vsel %vm292, %v255, 0
      %v549 = vsel %vm292, %v256, 0
      %v552 = vsel %vm292, %v257, 0
      %v555 = vsel %vm292, %v258, 0
      %v558 = vsel %vm292, %v259, 0
      %v561 = vsel %vm292, %v260, 0
      %v564 = vsel %vm292, %v261, 0
      %v567 = vsel %vm292, %v262, 0
      %v570 = vsel %vm292, %v263, 0
      %v573 = vsel %vm292, %v264, 0
      %v576 = vsel %vm292, %v265, 0
      %v579 = vsel %vm292, %v266, 0
      %v582 = vsel %vm292, %v267, 0
      %v585 = vsel %vm292, %v268, 0
      %v588 = vsel %vm292, %v269, 0
      %v591 = vsel %vm292, %v270, 0
      %v594 = vsel %vm292, %v271, 0
      %v597 = vsel %vm292, %v272, 0
      %v600 = vsel %vm292, %v273, 0
      %v603 = vsel %vm292, %v274, 0
      %v606 = vsel %vm292, %v275, 0
      %v609 = vsel %vm292, %v276, 0
      %v612 = vsel %vm292, %v277, 0
      %v615 = vsel %vm292, %v278, 0
      %v618 = vsel %vm292, %v279, 0
      %v621 = vsel %vm292, %v280, 0
      %v624 = vsel %vm292, %v281, 0
      %v627 = vsel %vm292, %v282, 0
      %vm629 = vcmask 1040384
      %v631 = vsel %vm629, %v284, 0
      %633 = vmatprep.subr.mxu0 0.0
      %634 = vmatpush1.msra.mxu0 0.0
      %635 = vmatprep.subr.mxu0 0.0
      %636 = vmatpush1.msra.mxu0 0.0
      %637 = vmatprep.subr.mxu0 0.0
      %638 = vmatpush1.msra.mxu0 0.0
      %639 = vmatprep.subr.mxu0 0.0
      %640 = vmatpush1.msra.mxu0 0.0
      %641 = vmatprep.subr.mxu0 0.0
      %642 = vmatpush1.msra.mxu0 0.0
      %643 = vmatprep.subr.mxu0 0.0
      %644 = vmatpush1.msra.mxu0 0.0
      %645 = vmatprep.subr.mxu0 0.0
      %646 = vmatpush1.msra.mxu0 0.0
      %647 = vmatprep.subr.mxu0 0.0
      %648 = vmatpush1.msra.mxu0 0.0
      %649 = vmatprep.subr.mxu0 0.0
      %650 = vmatpush1.msra.mxu0 0.0
      %651 = vmatprep.subr.mxu0 0.0
      %652 = vmatpush1.msra.mxu0 0.0
      %653 = vmatprep.subr.mxu0 0.0
      %654 = vmatpush1.msra.mxu0 0.0
      %655 = vmatprep.subr.mxu0 0.0
      %656 = vmatpush1.msra.mxu0 0.0
      %657 = vmatprep.subr.mxu0 0.0
      %658 = vmatpush1.msra.mxu0 0.0
      %659 = vmatprep.subr.mxu0 0.0
      %660 = vmatpush1.msra.mxu0 0.0
      %661 = vmatprep.subr.mxu0 0.0
      %662 = vmatpush1.msra.mxu0 %v631
      %663 = vmatprep.subr.mxu0 0.0
      %664 = vmatpush1.msra.mxu0 %v283
      %665 = vmatprep.subr.mxu0 0.0
      %666 = vmatpush2.msra.mxu0 0.0
      %667 = vmatprep.subr.mxu0 0.0
      %668 = vmatpush2.msra.mxu0 0.0
      %669 = vmatprep.subr.mxu0 0.0
      %670 = vmatpush2.msra.mxu0 0.0
      %671 = vmatprep.subr.mxu0 0.0
      %672 = vmatpush2.msra.mxu0 0.0
      %673 = vmatprep.subr.mxu0 0.0
      %674 = vmatpush2.msra.mxu0 0.0
      %675 = vmatprep.subr.mxu0 0.0
      %676 = vmatpush2.msra.mxu0 0.0
      %677 = vmatprep.subr.mxu0 0.0
      %678 = vmatpush2.msra.mxu0 0.0
      %679 = vmatprep.subr.mxu0 0.0
      %680 = vmatpush2.msra.mxu0 0.0
      %681 = vmatprep.subr.mxu0 0.0
      %682 = vmatpush2.msra.mxu0 0.0
      %683 = vmatprep.subr.mxu0 0.0
      %684 = vmatpush2.msra.mxu0 0.0
      %685 = vmatprep.subr.mxu0 0.0
      %686 = vmatpush2.msra.mxu0 0.0
      %687 = vmatprep.subr.mxu0 0.0
      %688 = vmatpush2.msra.mxu0 0.0
      %689 = vmatprep.subr.mxu0 0.0
      %690 = vmatpush2.msra.mxu0 0.0
      %691 = vmatprep.subr.mxu0 0.0
      %692 = vmatpush2.msra.mxu0 0.0
      %693 = vmatprep.subr.mxu0 0.0
      %694 = vmatpush2.msra.mxu0 0.0
      %695 = vmatprep.subr.mxu0 0.0
      %696 = vmatpush2.msra.mxu0 0.0
      %697 = vmatprep.mubr.f32.mxu0 0.0
      %698 = vmatmul.mubr.f32.gmra.mxu0 %v294
      %v699 = vpop.f32.mrf.mxu0
      %v700 = vadd.f32 %v290, %v699
      %v701 = vpop.f32.mrf.mxu0
      %702 = vmatprep.mubr.f32.mxu0 0.0
      %703 = vmatmul.mubr.f32.gmra.mxu0 %v297
      %v704 = vpop.f32.mrf.mxu0
      %v705 = vadd.f32 %v290, %v704
      %v706 = vpop.f32.mrf.mxu0
      %707 = vmatprep.mubr.f32.mxu0 0.0
      %708 = vmatmul.mubr.f32.gmra.mxu0 %v300
      %v709 = vpop.f32.mrf.mxu0
      %v710 = vadd.f32 %v290, %v709
      %v711 = vpop.f32.mrf.mxu0
      %712 = vmatprep.mubr.f32.mxu0 0.0
      %713 = vmatmul.mubr.f32.gmra.mxu0 %v303
      %v714 = vpop.f32.mrf.mxu0
      %v715 = vadd.f32 %v290, %v714
      %v716 = vpop.f32.mrf.mxu0
      %717 = vmatprep.mubr.f32.mxu0 0.0
      %718 = vmatmul.mubr.f32.gmra.mxu0 %v306
      %v719 = vpop.f32.mrf.mxu0
      %v720 = vadd.f32 %v290, %v719
      %v721 = vpop.f32.mrf.mxu0
      %722 = vmatprep.mubr.f32.mxu0 0.0
      %723 = vmatmul.mubr.f32.gmra.mxu0 %v309
      %v724 = vpop.f32.mrf.mxu0
      %v725 = vadd.f32 %v290, %v724
      %v726 = vpop.f32.mrf.mxu0
      %727 = vmatprep.mubr.f32.mxu0 0.0
      %728 = vmatmul.mubr.f32.gmra.mxu0 %v312
      %v729 = vpop.f32.mrf.mxu0
      %v730 = vadd.f32 %v290, %v729
      %v731 = vpop.f32.mrf.mxu0
      %732 = vmatprep.mubr.f32.mxu0 0.0
      %733 = vmatmul.mubr.f32.gmra.mxu0 %v315
      %v734 = vpop.f32.mrf.mxu0
      %v735 = vadd.f32 %v290, %v734
      %v736 = vpop.f32.mrf.mxu0
      %737 = vmatprep.mubr.f32.mxu0 0.0
      %738 = vmatmul.mubr.f32.gmra.mxu0 %v318
      %v739 = vpop.f32.mrf.mxu0
      %v740 = vadd.f32 %v290, %v739
      %v741 = vpop.f32.mrf.mxu0
      %742 = vmatprep.mubr.f32.mxu0 0.0
      %743 = vmatmul.mubr.f32.gmra.mxu0 %v321
      %v744 = vpop.f32.mrf.mxu0
      %v745 = vadd.f32 %v290, %v744
      %v746 = vpop.f32.mrf.mxu0
      %747 = vmatprep.mubr.f32.mxu0 0.0
      %748 = vmatmul.mubr.f32.gmra.mxu0 %v324
      %v749 = vpop.f32.mrf.mxu0
      %v750 = vadd.f32 %v290, %v749
      %v751 = vpop.f32.mrf.mxu0
      %752 = vmatprep.mubr.f32.mxu0 0.0
      %753 = vmatmul.mubr.f32.gmra.mxu0 %v327
      %v754 = vpop.f32.mrf.mxu0
      %v755 = vadd.f32 %v290, %v754
      %v756 = vpop.f32.mrf.mxu0
      %757 = vmatprep.mubr.f32.mxu0 0.0
      %758 = vmatmul.mubr.f32.gmra.mxu0 %v330
      %v759 = vpop.f32.mrf.mxu0
      %v760 = vadd.f32 %v290, %v759
      %v761 = vpop.f32.mrf.mxu0
      %762 = vmatprep.mubr.f32.mxu0 0.0
      %763 = vmatmul.mubr.f32.gmra.mxu0 %v333
      %v764 = vpop.f32.mrf.mxu0
      %v765 = vadd.f32 %v290, %v764
      %v766 = vpop.f32.mrf.mxu0
      %767 = vmatprep.mubr.f32.mxu0 0.0
      %768 = vmatmul.mubr.f32.gmra.mxu0 %v336
      %v769 = vpop.f32.mrf.mxu0
      %v770 = vadd.f32 %v290, %v769
      %v771 = vpop.f32.mrf.mxu0
      %772 = vmatprep.mubr.f32.mxu0 0.0
      %773 = vmatmul.mubr.f32.gmra.mxu0 %v339
      %v774 = vpop.f32.mrf.mxu0
      %v775 = vadd.f32 %v290, %v774
      %v776 = vpop.f32.mrf.mxu0
      %777 = vmatprep.mubr.f32.mxu0 0.0
      %778 = vmatmul.mubr.f32.gmra.mxu0 %v342
      %v779 = vpop.f32.mrf.mxu0
      %v780 = vadd.f32 %v290, %v779
      %v781 = vpop.f32.mrf.mxu0
      %782 = vmatprep.mubr.f32.mxu0 0.0
      %783 = vmatmul.mubr.f32.gmra.mxu0 %v345
      %v784 = vpop.f32.mrf.mxu0
      %v785 = vadd.f32 %v290, %v784
      %v786 = vpop.f32.mrf.mxu0
      %787 = vmatprep.mubr.f32.mxu0 0.0
      %788 = vmatmul.mubr.f32.gmra.mxu0 %v348
      %v789 = vpop.f32.mrf.mxu0
      %v790 = vadd.f32 %v290, %v789
      %v791 = vpop.f32.mrf.mxu0
      %792 = vmatprep.mubr.f32.mxu0 0.0
      %793 = vmatmul.mubr.f32.gmra.mxu0 %v351
      %v794 = vpop.f32.mrf.mxu0
      %v795 = vadd.f32 %v290, %v794
      %v796 = vpop.f32.mrf.mxu0
      %797 = vmatprep.mubr.f32.mxu0 0.0
      %798 = vmatmul.mubr.f32.gmra.mxu0 %v354
      %v799 = vpop.f32.mrf.mxu0
      %v800 = vadd.f32 %v290, %v799
      %v801 = vpop.f32.mrf.mxu0
      %802 = vmatprep.mubr.f32.mxu0 0.0
      %803 = vmatmul.mubr.f32.gmra.mxu0 %v357
      %v804 = vpop.f32.mrf.mxu0
      %v805 = vadd.f32 %v290, %v804
      %v806 = vpop.f32.mrf.mxu0
      %807 = vmatprep.mubr.f32.mxu0 0.0
      %808 = vmatmul.mubr.f32.gmra.mxu0 %v360
      %v809 = vpop.f32.mrf.mxu0
      %v810 = vadd.f32 %v290, %v809
      %v811 = vpop.f32.mrf.mxu0
      %812 = vmatprep.mubr.f32.mxu0 0.0
      %813 = vmatmul.mubr.f32.gmra.mxu0 %v363
      %v814 = vpop.f32.mrf.mxu0
      %v815 = vadd.f32 %v290, %v814
      %v816 = vpop.f32.mrf.mxu0
      %817 = vmatprep.mubr.f32.mxu0 0.0
      %818 = vmatmul.mubr.f32.gmra.mxu0 %v366
      %v819 = vpop.f32.mrf.mxu0
      %v820 = vadd.f32 %v290, %v819
      %v821 = vpop.f32.mrf.mxu0
      %822 = vmatprep.mubr.f32.mxu0 0.0
      %823 = vmatmul.mubr.f32.gmra.mxu0 %v369
      %v824 = vpop.f32.mrf.mxu0
      %v825 = vadd.f32 %v290, %v824
      %v826 = vpop.f32.mrf.mxu0
      %827 = vmatprep.mubr.f32.mxu0 0.0
      %828 = vmatmul.mubr.f32.gmra.mxu0 %v372
      %v829 = vpop.f32.mrf.mxu0
      %v830 = vadd.f32 %v290, %v829
      %v831 = vpop.f32.mrf.mxu0
      %832 = vmatprep.mubr.f32.mxu0 0.0
      %833 = vmatmul.mubr.f32.gmra.mxu0 %v375
      %v834 = vpop.f32.mrf.mxu0
      %v835 = vadd.f32 %v290, %v834
      %v836 = vpop.f32.mrf.mxu0
      %837 = vmatprep.mubr.f32.mxu0 0.0
      %838 = vmatmul.mubr.f32.gmra.mxu0 %v378
      %v839 = vpop.f32.mrf.mxu0
      %v840 = vadd.f32 %v290, %v839
      %v841 = vpop.f32.mrf.mxu0
      %842 = vmatprep.mubr.f32.mxu0 0.0
      %843 = vmatmul.mubr.f32.gmra.mxu0 %v381
      %v844 = vpop.f32.mrf.mxu0
      %v845 = vadd.f32 %v290, %v844
      %v846 = vpop.f32.mrf.mxu0
      %847 = vmatprep.mubr.f32.mxu0 0.0
      %848 = vmatmul.mubr.f32.gmra.mxu0 %v384
      %v849 = vpop.f32.mrf.mxu0
      %v850 = vadd.f32 %v290, %v849
      %v851 = vpop.f32.mrf.mxu0
      %852 = vmatprep.mubr.f32.mxu0 0.0
      %853 = vmatmul.mubr.f32.gmra.mxu0 %v387
      %v854 = vpop.f32.mrf.mxu0
      %v855 = vadd.f32 %v290, %v854
      %v856 = vpop.f32.mrf.mxu0
      %857 = vmatprep.mubr.f32.mxu0 0.0
      %858 = vmatmul.mubr.f32.gmra.mxu0 %v390
      %v859 = vpop.f32.mrf.mxu0
      %v860 = vadd.f32 %v290, %v859
      %v861 = vpop.f32.mrf.mxu0
      %862 = vmatprep.mubr.f32.mxu0 0.0
      %863 = vmatmul.mubr.f32.gmra.mxu0 %v393
      %v864 = vpop.f32.mrf.mxu0
      %v865 = vadd.f32 %v290, %v864
      %v866 = vpop.f32.mrf.mxu0
      %867 = vmatprep.mubr.f32.mxu0 0.0
      %868 = vmatmul.mubr.f32.gmra.mxu0 %v396
      %v869 = vpop.f32.mrf.mxu0
      %v870 = vadd.f32 %v290, %v869
      %v871 = vpop.f32.mrf.mxu0
      %872 = vmatprep.mubr.f32.mxu0 0.0
      %873 = vmatmul.mubr.f32.gmra.mxu0 %v399
      %v874 = vpop.f32.mrf.mxu0
      %v875 = vadd.f32 %v290, %v874
      %v876 = vpop.f32.mrf.mxu0
      %877 = vmatprep.mubr.f32.mxu0 0.0
      %878 = vmatmul.mubr.f32.gmra.mxu0 %v402
      %v879 = vpop.f32.mrf.mxu0
      %v880 = vadd.f32 %v290, %v879
      %v881 = vpop.f32.mrf.mxu0
      %882 = vmatprep.mubr.f32.mxu0 0.0
      %883 = vmatmul.mubr.f32.gmra.mxu0 %v405
      %v884 = vpop.f32.mrf.mxu0
      %v885 = vadd.f32 %v290, %v884
      %v886 = vpop.f32.mrf.mxu0
      %887 = vmatprep.mubr.f32.mxu0 0.0
      %888 = vmatmul.mubr.f32.gmra.mxu0 %v408
      %v889 = vpop.f32.mrf.mxu0
      %v890 = vadd.f32 %v290, %v889
      %v891 = vpop.f32.mrf.mxu0
      %892 = vmatprep.mubr.f32.mxu0 0.0
      %893 = vmatmul.mubr.f32.gmra.mxu0 %v411
      %v894 = vpop.f32.mrf.mxu0
      %v895 = vadd.f32 %v290, %v894
      %v896 = vpop.f32.mrf.mxu0
      %897 = vmatprep.mubr.f32.mxu0 0.0
      %898 = vmatmul.mubr.f32.gmra.mxu0 %v414
      %v899 = vpop.f32.mrf.mxu0
      %v900 = vadd.f32 %v290, %v899
      %v901 = vpop.f32.mrf.mxu0
      %902 = vmatprep.mubr.f32.mxu0 0.0
      %903 = vmatmul.mubr.f32.gmra.mxu0 %v417
      %v904 = vpop.f32.mrf.mxu0
      %v905 = vadd.f32 %v290, %v904
      %v906 = vpop.f32.mrf.mxu0
      %907 = vmatprep.mubr.f32.mxu0 0.0
      %908 = vmatmul.mubr.f32.gmra.mxu0 %v420
      %v909 = vpop.f32.mrf.mxu0
      %v910 = vadd.f32 %v290, %v909
      %v911 = vpop.f32.mrf.mxu0
      %912 = vmatprep.mubr.f32.mxu0 0.0
      %913 = vmatmul.mubr.f32.gmra.mxu0 %v423
      %v914 = vpop.f32.mrf.mxu0
      %v915 = vadd.f32 %v290, %v914
      %v916 = vpop.f32.mrf.mxu0
      %917 = vmatprep.mubr.f32.mxu0 0.0
      %918 = vmatmul.mubr.f32.gmra.mxu0 %v426
      %v919 = vpop.f32.mrf.mxu0
      %v920 = vadd.f32 %v290, %v919
      %v921 = vpop.f32.mrf.mxu0
      %922 = vmatprep.mubr.f32.mxu0 0.0
      %923 = vmatmul.mubr.f32.gmra.mxu0 %v429
      %v924 = vpop.f32.mrf.mxu0
      %v925 = vadd.f32 %v290, %v924
      %v926 = vpop.f32.mrf.mxu0
      %927 = vmatprep.mubr.f32.mxu0 0.0
      %928 = vmatmul.mubr.f32.gmra.mxu0 %v432
      %v929 = vpop.f32.mrf.mxu0
      %v930 = vadd.f32 %v290, %v929
      %v931 = vpop.f32.mrf.mxu0
      %932 = vmatprep.mubr.f32.mxu0 0.0
      %933 = vmatmul.mubr.f32.gmra.mxu0 %v435
      %v934 = vpop.f32.mrf.mxu0
      %v935 = vadd.f32 %v290, %v934
      %v936 = vpop.f32.mrf.mxu0
      %937 = vmatprep.mubr.f32.mxu0 0.0
      %938 = vmatmul.mubr.f32.gmra.mxu0 %v438
      %v939 = vpop.f32.mrf.mxu0
      %v940 = vadd.f32 %v290, %v939
      %v941 = vpop.f32.mrf.mxu0
      %942 = vmatprep.mubr.f32.mxu0 0.0
      %943 = vmatmul.mubr.f32.gmra.mxu0 %v441
      %v944 = vpop.f32.mrf.mxu0
      %v945 = vadd.f32 %v290, %v944
      %v946 = vpop.f32.mrf.mxu0
      %947 = vmatprep.mubr.f32.mxu0 0.0
      %948 = vmatmul.mubr.f32.gmra.mxu0 %v444
      %v949 = vpop.f32.mrf.mxu0
      %v950 = vadd.f32 %v290, %v949
      %v951 = vpop.f32.mrf.mxu0
      %952 = vmatprep.mubr.f32.mxu0 0.0
      %953 = vmatmul.mubr.f32.gmra.mxu0 %v447
      %v954 = vpop.f32.mrf.mxu0
      %v955 = vadd.f32 %v290, %v954
      %v956 = vpop.f32.mrf.mxu0
      %957 = vmatprep.mubr.f32.mxu0 0.0
      %958 = vmatmul.mubr.f32.gmra.mxu0 %v450
      %v959 = vpop.f32.mrf.mxu0
      %v960 = vadd.f32 %v290, %v959
      %v961 = vpop.f32.mrf.mxu0
      %962 = vmatprep.mubr.f32.mxu0 0.0
      %963 = vmatmul.mubr.f32.gmra.mxu0 %v453
      %v964 = vpop.f32.mrf.mxu0
      %v965 = vadd.f32 %v290, %v964
      %v966 = vpop.f32.mrf.mxu0
      %967 = vmatprep.mubr.f32.mxu0 0.0
      %968 = vmatmul.mubr.f32.gmra.mxu0 %v456
      %v969 = vpop.f32.mrf.mxu0
      %v970 = vadd.f32 %v290, %v969
      %v971 = vpop.f32.mrf.mxu0
      %972 = vmatprep.mubr.f32.mxu0 0.0
      %973 = vmatmul.mubr.f32.gmra.mxu0 %v459
      %v974 = vpop.f32.mrf.mxu0
      %v975 = vadd.f32 %v290, %v974
      %v976 = vpop.f32.mrf.mxu0
      %977 = vmatprep.mubr.f32.mxu0 0.0
      %978 = vmatmul.mubr.f32.gmra.mxu0 %v462
      %v979 = vpop.f32.mrf.mxu0
      %v980 = vadd.f32 %v290, %v979
      %v981 = vpop.f32.mrf.mxu0
      %982 = vmatprep.mubr.f32.mxu0 0.0
      %983 = vmatmul.mubr.f32.gmra.mxu0 %v465
      %v984 = vpop.f32.mrf.mxu0
      %v985 = vadd.f32 %v290, %v984
      %v986 = vpop.f32.mrf.mxu0
      %987 = vmatprep.mubr.f32.mxu0 0.0
      %988 = vmatmul.mubr.f32.gmra.mxu0 %v468
      %v989 = vpop.f32.mrf.mxu0
      %v990 = vadd.f32 %v290, %v989
      %v991 = vpop.f32.mrf.mxu0
      %992 = vmatprep.mubr.f32.mxu0 0.0
      %993 = vmatmul.mubr.f32.gmra.mxu0 %v471
      %v994 = vpop.f32.mrf.mxu0
      %v995 = vadd.f32 %v290, %v994
      %v996 = vpop.f32.mrf.mxu0
      %997 = vmatprep.mubr.f32.mxu0 0.0
      %998 = vmatmul.mubr.f32.gmra.mxu0 %v474
      %v999 = vpop.f32.mrf.mxu0
      %v1000 = vadd.f32 %v290, %v999
      %v1001 = vpop.f32.mrf.mxu0
      %1002 = vmatprep.mubr.f32.mxu0 0.0
      %1003 = vmatmul.mubr.f32.gmra.mxu0 %v477
      %v1004 = vpop.f32.mrf.mxu0
      %v1005 = vadd.f32 %v290, %v1004
      %v1006 = vpop.f32.mrf.mxu0
      %1007 = vmatprep.mubr.f32.mxu0 0.0
      %1008 = vmatmul.mubr.f32.gmra.mxu0 %v480
      %v1009 = vpop.f32.mrf.mxu0
      %v1010 = vadd.f32 %v290, %v1009
      %v1011 = vpop.f32.mrf.mxu0
      %1012 = vmatprep.mubr.f32.mxu0 0.0
      %1013 = vmatmul.mubr.f32.gmra.mxu0 %v483
      %v1014 = vpop.f32.mrf.mxu0
      %v1015 = vadd.f32 %v290, %v1014
      %v1016 = vpop.f32.mrf.mxu0
      %1017 = vmatprep.mubr.f32.mxu0 0.0
      %1018 = vmatmul.mubr.f32.gmra.mxu0 %v486
      %v1019 = vpop.f32.mrf.mxu0
      %v1020 = vadd.f32 %v290, %v1019
      %v1021 = vpop.f32.mrf.mxu0
      %1022 = vmatprep.mubr.f32.mxu0 0.0
      %1023 = vmatmul.mubr.f32.gmra.mxu0 %v489
      %v1024 = vpop.f32.mrf.mxu0
      %v1025 = vadd.f32 %v290, %v1024
      %v1026 = vpop.f32.mrf.mxu0
      %1027 = vmatprep.mubr.f32.mxu0 0.0
      %1028 = vmatmul.mubr.f32.gmra.mxu0 %v492
      %v1029 = vpop.f32.mrf.mxu0
      %v1030 = vadd.f32 %v290, %v1029
      %v1031 = vpop.f32.mrf.mxu0
      %1032 = vmatprep.mubr.f32.mxu0 0.0
      %1033 = vmatmul.mubr.f32.gmra.mxu0 %v495
      %v1034 = vpop.f32.mrf.mxu0
      %v1035 = vadd.f32 %v290, %v1034
      %v1036 = vpop.f32.mrf.mxu0
      %1037 = vmatprep.mubr.f32.mxu0 0.0
      %1038 = vmatmul.mubr.f32.gmra.mxu0 %v498
      %v1039 = vpop.f32.mrf.mxu0
      %v1040 = vadd.f32 %v290, %v1039
      %v1041 = vpop.f32.mrf.mxu0
      %1042 = vmatprep.mubr.f32.mxu0 0.0
      %1043 = vmatmul.mubr.f32.gmra.mxu0 %v501
      %v1044 = vpop.f32.mrf.mxu0
      %v1045 = vadd.f32 %v290, %v1044
      %v1046 = vpop.f32.mrf.mxu0
      %1047 = vmatprep.mubr.f32.mxu0 0.0
      %1048 = vmatmul.mubr.f32.gmra.mxu0 %v504
      %v1049 = vpop.f32.mrf.mxu0
      %v1050 = vadd.f32 %v290, %v1049
      %v1051 = vpop.f32.mrf.mxu0
      %1052 = vmatprep.mubr.f32.mxu0 0.0
      %1053 = vmatmul.mubr.f32.gmra.mxu0 %v507
      %v1054 = vpop.f32.mrf.mxu0
      %v1055 = vadd.f32 %v290, %v1054
      %v1056 = vpop.f32.mrf.mxu0
      %1057 = vmatprep.mubr.f32.mxu0 0.0
      %1058 = vmatmul.mubr.f32.gmra.mxu0 %v510
      %v1059 = vpop.f32.mrf.mxu0
      %v1060 = vadd.f32 %v290, %v1059
      %v1061 = vpop.f32.mrf.mxu0
      %1062 = vmatprep.mubr.f32.mxu0 0.0
      %1063 = vmatmul.mubr.f32.gmra.mxu0 %v513
      %v1064 = vpop.f32.mrf.mxu0
      %v1065 = vadd.f32 %v290, %v1064
      %v1066 = vpop.f32.mrf.mxu0
      %1067 = vmatprep.mubr.f32.mxu0 0.0
      %1068 = vmatmul.mubr.f32.gmra.mxu0 %v516
      %v1069 = vpop.f32.mrf.mxu0
      %v1070 = vadd.f32 %v290, %v1069
      %v1071 = vpop.f32.mrf.mxu0
      %1072 = vmatprep.mubr.f32.mxu0 0.0
      %1073 = vmatmul.mubr.f32.gmra.mxu0 %v519
      %v1074 = vpop.f32.mrf.mxu0
      %v1075 = vadd.f32 %v290, %v1074
      %v1076 = vpop.f32.mrf.mxu0
      %1077 = vmatprep.mubr.f32.mxu0 0.0
      %1078 = vmatmul.mubr.f32.gmra.mxu0 %v522
      %v1079 = vpop.f32.mrf.mxu0
      %v1080 = vadd.f32 %v290, %v1079
      %v1081 = vpop.f32.mrf.mxu0
      %1082 = vmatprep.mubr.f32.mxu0 0.0
      %1083 = vmatmul.mubr.f32.gmra.mxu0 %v525
      %v1084 = vpop.f32.mrf.mxu0
      %v1085 = vadd.f32 %v290, %v1084
      %v1086 = vpop.f32.mrf.mxu0
      %1087 = vmatprep.mubr.f32.mxu0 0.0
      %1088 = vmatmul.mubr.f32.gmra.mxu0 %v528
      %v1089 = vpop.f32.mrf.mxu0
      %v1090 = vadd.f32 %v290, %v1089
      %v1091 = vpop.f32.mrf.mxu0
      %1092 = vmatprep.mubr.f32.mxu0 0.0
      %1093 = vmatmul.mubr.f32.gmra.mxu0 %v531
      %v1094 = vpop.f32.mrf.mxu0
      %v1095 = vadd.f32 %v290, %v1094
      %v1096 = vpop.f32.mrf.mxu0
      %1097 = vmatprep.mubr.f32.mxu0 0.0
      %1098 = vmatmul.mubr.f32.gmra.mxu0 %v534
      %v1099 = vpop.f32.mrf.mxu0
      %v1100 = vadd.f32 %v290, %v1099
      %v1101 = vpop.f32.mrf.mxu0
      %1102 = vmatprep.mubr.f32.mxu0 0.0
      %1103 = vmatmul.mubr.f32.gmra.mxu0 %v537
      %v1104 = vpop.f32.mrf.mxu0
      %v1105 = vadd.f32 %v290, %v1104
      %v1106 = vpop.f32.mrf.mxu0
      %1107 = vmatprep.mubr.f32.mxu0 0.0
      %1108 = vmatmul.mubr.f32.gmra.mxu0 %v540
      %v1109 = vpop.f32.mrf.mxu0
      %v1110 = vadd.f32 %v290, %v1109
      %v1111 = vpop.f32.mrf.mxu0
      %1112 = vmatprep.mubr.f32.mxu0 0.0
      %1113 = vmatmul.mubr.f32.gmra.mxu0 %v543
      %v1114 = vpop.f32.mrf.mxu0
      %v1115 = vadd.f32 %v290, %v1114
      %v1116 = vpop.f32.mrf.mxu0
      %1117 = vmatprep.mubr.f32.mxu0 0.0
      %1118 = vmatmul.mubr.f32.gmra.mxu0 %v546
      %v1119 = vpop.f32.mrf.mxu0
      %v1120 = vadd.f32 %v290, %v1119
      %v1121 = vpop.f32.mrf.mxu0
      %1122 = vmatprep.mubr.f32.mxu0 0.0
      %1123 = vmatmul.mubr.f32.gmra.mxu0 %v549
      %v1124 = vpop.f32.mrf.mxu0
      %v1125 = vadd.f32 %v290, %v1124
      %v1126 = vpop.f32.mrf.mxu0
      %1127 = vmatprep.mubr.f32.mxu0 0.0
      %1128 = vmatmul.mubr.f32.gmra.mxu0 %v552
      %v1129 = vpop.f32.mrf.mxu0
      %v1130 = vadd.f32 %v290, %v1129
      %v1131 = vpop.f32.mrf.mxu0
      %1132 = vmatprep.mubr.f32.mxu0 0.0
      %1133 = vmatmul.mubr.f32.gmra.mxu0 %v555
      %v1134 = vpop.f32.mrf.mxu0
      %v1135 = vadd.f32 %v290, %v1134
      %v1136 = vpop.f32.mrf.mxu0
      %1137 = vmatprep.mubr.f32.mxu0 0.0
      %1138 = vmatmul.mubr.f32.gmra.mxu0 %v558
      %v1139 = vpop.f32.mrf.mxu0
      %v1140 = vadd.f32 %v290, %v1139
      %v1141 = vpop.f32.mrf.mxu0
      %1142 = vmatprep.mubr.f32.mxu0 0.0
      %1143 = vmatmul.mubr.f32.gmra.mxu0 %v561
      %v1144 = vpop.f32.mrf.mxu0
      %v1145 = vadd.f32 %v290, %v1144
      %v1146 = vpop.f32.mrf.mxu0
      %1147 = vmatprep.mubr.f32.mxu0 0.0
      %1148 = vmatmul.mubr.f32.gmra.mxu0 %v564
      %v1149 = vpop.f32.mrf.mxu0
      %v1150 = vadd.f32 %v290, %v1149
      %v1151 = vpop.f32.mrf.mxu0
      %1152 = vmatprep.mubr.f32.mxu0 0.0
      %1153 = vmatmul.mubr.f32.gmra.mxu0 %v567
      %v1154 = vpop.f32.mrf.mxu0
      %v1155 = vadd.f32 %v290, %v1154
      %v1156 = vpop.f32.mrf.mxu0
      %1157 = vmatprep.mubr.f32.mxu0 0.0
      %1158 = vmatmul.mubr.f32.gmra.mxu0 %v570
      %v1159 = vpop.f32.mrf.mxu0
      %v1160 = vadd.f32 %v290, %v1159
      %v1161 = vpop.f32.mrf.mxu0
      %1162 = vmatprep.mubr.f32.mxu0 0.0
      %1163 = vmatmul.mubr.f32.gmra.mxu0 %v573
      %v1164 = vpop.f32.mrf.mxu0
      %v1165 = vadd.f32 %v290, %v1164
      %v1166 = vpop.f32.mrf.mxu0
      %1167 = vmatprep.mubr.f32.mxu0 0.0
      %1168 = vmatmul.mubr.f32.gmra.mxu0 %v576
      %v1169 = vpop.f32.mrf.mxu0
      %v1170 = vadd.f32 %v290, %v1169
      %v1171 = vpop.f32.mrf.mxu0
      %1172 = vmatprep.mubr.f32.mxu0 0.0
      %1173 = vmatmul.mubr.f32.gmra.mxu0 %v579
      %v1174 = vpop.f32.mrf.mxu0
      %v1175 = vadd.f32 %v290, %v1174
      %v1176 = vpop.f32.mrf.mxu0
      %1177 = vmatprep.mubr.f32.mxu0 0.0
      %1178 = vmatmul.mubr.f32.gmra.mxu0 %v582
      %v1179 = vpop.f32.mrf.mxu0
      %v1180 = vadd.f32 %v290, %v1179
      %v1181 = vpop.f32.mrf.mxu0
      %1182 = vmatprep.mubr.f32.mxu0 0.0
      %1183 = vmatmul.mubr.f32.gmra.mxu0 %v585
      %v1184 = vpop.f32.mrf.mxu0
      %v1185 = vadd.f32 %v290, %v1184
      %v1186 = vpop.f32.mrf.mxu0
      %1187 = vmatprep.mubr.f32.mxu0 0.0
      %1188 = vmatmul.mubr.f32.gmra.mxu0 %v588
      %v1189 = vpop.f32.mrf.mxu0
      %v1190 = vadd.f32 %v290, %v1189
      %v1191 = vpop.f32.mrf.mxu0
      %1192 = vmatprep.mubr.f32.mxu0 0.0
      %1193 = vmatmul.mubr.f32.gmra.mxu0 %v591
      %v1194 = vpop.f32.mrf.mxu0
      %v1195 = vadd.f32 %v290, %v1194
      %v1196 = vpop.f32.mrf.mxu0
      %1197 = vmatprep.mubr.f32.mxu0 0.0
      %1198 = vmatmul.mubr.f32.gmra.mxu0 %v594
      %v1199 = vpop.f32.mrf.mxu0
      %v1200 = vadd.f32 %v290, %v1199
      %v1201 = vpop.f32.mrf.mxu0
      %1202 = vmatprep.mubr.f32.mxu0 0.0
      %1203 = vmatmul.mubr.f32.gmra.mxu0 %v597
      %v1204 = vpop.f32.mrf.mxu0
      %v1205 = vadd.f32 %v290, %v1204
      %v1206 = vpop.f32.mrf.mxu0
      %1207 = vmatprep.mubr.f32.mxu0 0.0
      %1208 = vmatmul.mubr.f32.gmra.mxu0 %v600
      %v1209 = vpop.f32.mrf.mxu0
      %v1210 = vadd.f32 %v290, %v1209
      %v1211 = vpop.f32.mrf.mxu0
      %1212 = vmatprep.mubr.f32.mxu0 0.0
      %1213 = vmatmul.mubr.f32.gmra.mxu0 %v603
      %v1214 = vpop.f32.mrf.mxu0
      %v1215 = vadd.f32 %v290, %v1214
      %v1216 = vpop.f32.mrf.mxu0
      %1217 = vmatprep.mubr.f32.mxu0 0.0
      %1218 = vmatmul.mubr.f32.gmra.mxu0 %v606
      %v1219 = vpop.f32.mrf.mxu0
      %v1220 = vadd.f32 %v290, %v1219
      %v1221 = vpop.f32.mrf.mxu0
      %1222 = vmatprep.mubr.f32.mxu0 0.0
      %1223 = vmatmul.mubr.f32.gmra.mxu0 %v609
      %v1224 = vpop.f32.mrf.mxu0
      %v1225 = vadd.f32 %v290, %v1224
      %v1226 = vpop.f32.mrf.mxu0
      %1227 = vmatprep.mubr.f32.mxu0 0.0
      %1228 = vmatmul.mubr.f32.gmra.mxu0 %v612
      %v1229 = vpop.f32.mrf.mxu0
      %v1230 = vadd.f32 %v290, %v1229
      %v1231 = vpop.f32.mrf.mxu0
      %1232 = vmatprep.mubr.f32.mxu0 0.0
      %1233 = vmatmul.mubr.f32.gmra.mxu0 %v615
      %v1234 = vpop.f32.mrf.mxu0
      %v1235 = vadd.f32 %v290, %v1234
      %v1236 = vpop.f32.mrf.mxu0
      %1237 = vmatprep.mubr.f32.mxu0 0.0
      %1238 = vmatmul.mubr.f32.gmra.mxu0 %v618
      %v1239 = vpop.f32.mrf.mxu0
      %v1240 = vadd.f32 %v290, %v1239
      %v1241 = vpop.f32.mrf.mxu0
      %1242 = vmatprep.mubr.f32.mxu0 0.0
      %1243 = vmatmul.mubr.f32.gmra.mxu0 %v621
      %v1244 = vpop.f32.mrf.mxu0
      %v1245 = vadd.f32 %v290, %v1244
      %v1246 = vpop.f32.mrf.mxu0
      %1247 = vmatprep.mubr.f32.mxu0 0.0
      %1248 = vmatmul.mubr.f32.gmra.mxu0 %v624
      %v1249 = vpop.f32.mrf.mxu0
      %v1250 = vadd.f32 %v290, %v1249
      %v1251 = vpop.f32.mrf.mxu0
      %1252 = vmatprep.mubr.f32.mxu0 0.0
      %1253 = vmatmul.mubr.f32.gmra.mxu0 %v627
      %v1254 = vpop.f32.mrf.mxu0
      %v1255 = vadd.f32 %v290, %v1254
      %v1256 = vpop.f32.mrf.mxu0
      %1257 = vdwg.mxu0
      %v1258 = vmax.f32 %v700, 0.0
      %v1259 = vmax.f32 %v705, 0.0
      %v1260 = vmax.f32 %v710, 0.0
      %v1261 = vmax.f32 %v715, 0.0
      %v1262 = vmax.f32 %v720, 0.0
      %v1263 = vmax.f32 %v725, 0.0
      %v1264 = vmax.f32 %v730, 0.0
      %v1265 = vmax.f32 %v735, 0.0
      %v1266 = vmax.f32 %v740, 0.0
      %v1267 = vmax.f32 %v745, 0.0
      %v1268 = vmax.f32 %v750, 0.0
      %v1269 = vmax.f32 %v755, 0.0
      %v1270 = vmax.f32 %v760, 0.0
      %v1271 = vmax.f32 %v765, 0.0
      %v1272 = vmax.f32 %v770, 0.0
      %v1273 = vmax.f32 %v775, 0.0
      %v1274 = vmax.f32 %v780, 0.0
      %v1275 = vmax.f32 %v785, 0.0
      %v1276 = vmax.f32 %v790, 0.0
      %v1277 = vmax.f32 %v795, 0.0
      %v1278 = vmax.f32 %v800, 0.0
      %v1279 = vmax.f32 %v805, 0.0
      %v1280 = vmax.f32 %v810, 0.0
      %v1281 = vmax.f32 %v815, 0.0
      %v1282 = vmax.f32 %v820, 0.0
      %v1283 = vmax.f32 %v825, 0.0
      %v1284 = vmax.f32 %v830, 0.0
      %v1285 = vmax.f32 %v835, 0.0
      %v1286 = vmax.f32 %v840, 0.0
      %v1287 = vmax.f32 %v845, 0.0
      %v1288 = vmax.f32 %v850, 0.0
      %v1289 = vmax.f32 %v855, 0.0
      %v1290 = vmax.f32 %v860, 0.0
      %v1291 = vmax.f32 %v865, 0.0
      %v1292 = vmax.f32 %v870, 0.0
      %v1293 = vmax.f32 %v875, 0.0
      %v1294 = vmax.f32 %v880, 0.0
      %v1295 = vmax.f32 %v885, 0.0
      %v1296 = vmax.f32 %v890, 0.0
      %v1297 = vmax.f32 %v895, 0.0
      %v1298 = vmax.f32 %v900, 0.0
      %v1299 = vmax.f32 %v905, 0.0
      %v1300 = vmax.f32 %v910, 0.0
      %v1301 = vmax.f32 %v915, 0.0
      %v1302 = vmax.f32 %v920, 0.0
      %v1303 = vmax.f32 %v925, 0.0
      %v1304 = vmax.f32 %v930, 0.0
      %v1305 = vmax.f32 %v935, 0.0
      %v1306 = vmax.f32 %v940, 0.0
      %v1307 = vmax.f32 %v945, 0.0
      %v1308 = vmax.f32 %v950, 0.0
      %v1309 = vmax.f32 %v955, 0.0
      %v1310 = vmax.f32 %v960, 0.0
      %v1311 = vmax.f32 %v965, 0.0
      %v1312 = vmax.f32 %v970, 0.0
      %v1313 = vmax.f32 %v975, 0.0
      %v1314 = vmax.f32 %v980, 0.0
      %v1315 = vmax.f32 %v985, 0.0
      %v1316 = vmax.f32 %v990, 0.0
      %v1317 = vmax.f32 %v995, 0.0
      %v1318 = vmax.f32 %v1000, 0.0
      %v1319 = vmax.f32 %v1005, 0.0
      %v1320 = vmax.f32 %v1010, 0.0
      %v1321 = vmax.f32 %v1015, 0.0
      %v1322 = vmax.f32 %v1020, 0.0
      %v1323 = vmax.f32 %v1025, 0.0
      %v1324 = vmax.f32 %v1030, 0.0
      %v1325 = vmax.f32 %v1035, 0.0
      %v1326 = vmax.f32 %v1040, 0.0
      %v1327 = vmax.f32 %v1045, 0.0
      %v1328 = vmax.f32 %v1050, 0.0
      %v1329 = vmax.f32 %v1055, 0.0
      %v1330 = vmax.f32 %v1060, 0.0
      %v1331 = vmax.f32 %v1065, 0.0
      %v1332 = vmax.f32 %v1070, 0.0
      %v1333 = vmax.f32 %v1075, 0.0
      %v1334 = vmax.f32 %v1080, 0.0
      %v1335 = vmax.f32 %v1085, 0.0
      %v1336 = vmax.f32 %v1090, 0.0
      %v1337 = vmax.f32 %v1095, 0.0
      %v1338 = vmax.f32 %v1100, 0.0
      %v1339 = vmax.f32 %v1105, 0.0
      %v1340 = vmax.f32 %v1110, 0.0
      %v1341 = vmax.f32 %v1115, 0.0
      %v1342 = vmax.f32 %v1120, 0.0
      %v1343 = vmax.f32 %v1125, 0.0
      %v1344 = vmax.f32 %v1130, 0.0
      %v1345 = vmax.f32 %v1135, 0.0
      %v1346 = vmax.f32 %v1140, 0.0
      %v1347 = vmax.f32 %v1145, 0.0
      %v1348 = vmax.f32 %v1150, 0.0
      %v1349 = vmax.f32 %v1155, 0.0
      %v1350 = vmax.f32 %v1160, 0.0
      %v1351 = vmax.f32 %v1165, 0.0
      %v1352 = vmax.f32 %v1170, 0.0
      %v1353 = vmax.f32 %v1175, 0.0
      %v1354 = vmax.f32 %v1180, 0.0
      %v1355 = vmax.f32 %v1185, 0.0
      %v1356 = vmax.f32 %v1190, 0.0
      %v1357 = vmax.f32 %v1195, 0.0
      %v1358 = vmax.f32 %v1200, 0.0
      %v1359 = vmax.f32 %v1205, 0.0
      %v1360 = vmax.f32 %v1210, 0.0
      %v1361 = vmax.f32 %v1215, 0.0
      %v1362 = vmax.f32 %v1220, 0.0
      %v1363 = vmax.f32 %v1225, 0.0
      %v1364 = vmax.f32 %v1230, 0.0
      %v1365 = vmax.f32 %v1235, 0.0
      %v1366 = vmax.f32 %v1240, 0.0
      %v1367 = vmax.f32 %v1245, 0.0
      %v1368 = vmax.f32 %v1250, 0.0
      %v1369 = vmax.f32 %v1255, 0.0
      %v1370 = vmax.f32 %v1258, %v1262
      %v1371 = vmax.f32 %v1259, %v1263
      %v1372 = vmax.f32 %v1260, %v1264
      %v1373 = vmax.f32 %v1261, %v1265
      %v1374 = vmax.f32 %v1266, %v1270
      %v1375 = vmax.f32 %v1267, %v1271
      %v1376 = vmax.f32 %v1268, %v1272
      %v1377 = vmax.f32 %v1269, %v1273
      %v1378 = vmax.f32 %v1274, %v1278
      %v1379 = vmax.f32 %v1275, %v1279
      %v1380 = vmax.f32 %v1276, %v1280
      %v1381 = vmax.f32 %v1277, %v1281
      %v1382 = vmax.f32 %v1282, %v1286
      %v1383 = vmax.f32 %v1283, %v1287
      %v1384 = vmax.f32 %v1284, %v1288
      %v1385 = vmax.f32 %v1285, %v1289
      %v1386 = vmax.f32 %v1290, %v1294
      %v1387 = vmax.f32 %v1291, %v1295
      %v1388 = vmax.f32 %v1292, %v1296
      %v1389 = vmax.f32 %v1293, %v1297
      %v1390 = vmax.f32 %v1298, %v1302
      %v1391 = vmax.f32 %v1299, %v1303
      %v1392 = vmax.f32 %v1300, %v1304
      %v1393 = vmax.f32 %v1301, %v1305
      %v1394 = vmax.f32 %v1306, %v1310
      %v1395 = vmax.f32 %v1307, %v1311
      %v1396 = vmax.f32 %v1308, %v1312
      %v1397 = vmax.f32 %v1309, %v1313
      %v1398 = vmax.f32 %v1314, %v1318
      %v1399 = vmax.f32 %v1315, %v1319
      %v1400 = vmax.f32 %v1316, %v1320
      %v1401 = vmax.f32 %v1317, %v1321
      %v1402 = vmax.f32 %v1322, %v1326
      %v1403 = vmax.f32 %v1323, %v1327
      %v1404 = vmax.f32 %v1324, %v1328
      %v1405 = vmax.f32 %v1325, %v1329
      %v1406 = vmax.f32 %v1330, %v1334
      %v1407 = vmax.f32 %v1331, %v1335
      %v1408 = vmax.f32 %v1332, %v1336
      %v1409 = vmax.f32 %v1333, %v1337
      %v1410 = vmax.f32 %v1338, %v1342
      %v1411 = vmax.f32 %v1339, %v1343
      %v1412 = vmax.f32 %v1340, %v1344
      %v1413 = vmax.f32 %v1341, %v1345
      %v1414 = vmax.f32 %v1346, %v1350
      %v1415 = vmax.f32 %v1347, %v1351
      %v1416 = vmax.f32 %v1348, %v1352
      %v1417 = vmax.f32 %v1349, %v1353
      %v1418 = vmax.f32 %v1354, %v1358
      %v1419 = vmax.f32 %v1355, %v1359
      %v1420 = vmax.f32 %v1356, %v1360
      %v1421 = vmax.f32 %v1357, %v1361
      %v1422 = vmax.f32 %v1362, %v1366
      %v1423 = vmax.f32 %v1363, %v1367
      %v1424 = vmax.f32 %v1364, %v1368
      %v1425 = vmax.f32 %v1365, %v1369
      %1426 = vst [vmem:[#allocation2] sm:$0xff] %v1370
      %1427 = vst [vmem:[#allocation2 + $0x8] sm:$0xff] %v1371
      %1428 = vst [vmem:[#allocation2 + $0x10] sm:$0xff] %v1372
      %1429 = vst [vmem:[#allocation2 + $0x18] sm:$0xff] %v1373
      %1430 = vst [vmem:[#allocation2 + $0x20] sm:$0xff] %v1374
      %1431 = vst [vmem:[#allocation2 + $0x28] sm:$0xff] %v1375
      %1432 = vst [vmem:[#allocation2 + $0x30] sm:$0xff] %v1376
      %1433 = vst [vmem:[#allocation2 + $0x38] sm:$0xff] %v1377
      %1434 = vst [vmem:[#allocation2 + $0x40] sm:$0xff] %v1378
      %1435 = vst [vmem:[#allocation2 + $0x48] sm:$0xff] %v1379
      %1436 = vst [vmem:[#allocation2 + $0x50] sm:$0xff] %v1380
      %1437 = vst [vmem:[#allocation2 + $0x58] sm:$0xff] %v1381
      %1438 = vst [vmem:[#allocation2 + $0x60] sm:$0xff] %v1382
      %1439 = vst [vmem:[#allocation2 + $0x68] sm:$0xff] %v1383
      %1440 = vst [vmem:[#allocation2 + $0x70] sm:$0xff] %v1384
      %1441 = vst [vmem:[#allocation2 + $0x78] sm:$0xff] %v1385
      %1442 = vst [vmem:[#allocation2 + $0x80] sm:$0xff] %v1386
      %1443 = vst [vmem:[#allocation2 + $0x88] sm:$0xff] %v1387
      %1444 = vst [vmem:[#allocation2 + $0x90] sm:$0xff] %v1388
      %1445 = vst [vmem:[#allocation2 + $0x98] sm:$0xff] %v1389
      %1446 = vst [vmem:[#allocation2 + $0xa0] sm:$0xff] %v1390
      %1447 = vst [vmem:[#allocation2 + $0xa8] sm:$0xff] %v1391
      %1448 = vst [vmem:[#allocation2 + $0xb0] sm:$0xff] %v1392
      %1449 = vst [vmem:[#allocation2 + $0xb8] sm:$0xff] %v1393
      %1450 = vst [vmem:[#allocation2 + $0xc0] sm:$0xff] %v1394
      %1451 = vst [vmem:[#allocation2 + $0xc8] sm:$0xff] %v1395
      %1452 = vst [vmem:[#allocation2 + $0xd0] sm:$0xff] %v1396
      %1453 = vst [vmem:[#allocation2 + $0xd8] sm:$0xff] %v1397
      %1454 = vst [vmem:[#allocation2 + $0xe0] sm:$0xff] %v1398
      %1455 = vst [vmem:[#allocation2 + $0xe8] sm:$0xff] %v1399
      %1456 = vst [vmem:[#allocation2 + $0xf0] sm:$0xff] %v1400
      %1457 = vst [vmem:[#allocation2 + $0xf8] sm:$0xff] %v1401
      %1458 = vst [vmem:[#allocation2 + $0x100] sm:$0xff] %v1402
      %1459 = vst [vmem:[#allocation2 + $0x108] sm:$0xff] %v1403
      %1460 = vst [vmem:[#allocation2 + $0x110] sm:$0xff] %v1404
      %1461 = vst [vmem:[#allocation2 + $0x118] sm:$0xff] %v1405
      %1462 = vst [vmem:[#allocation2 + $0x120] sm:$0xff] %v1406
      %1463 = vst [vmem:[#allocation2 + $0x128] sm:$0xff] %v1407
      %1464 = vst [vmem:[#allocation2 + $0x130] sm:$0xff] %v1408
      %1465 = vst [vmem:[#allocation2 + $0x138] sm:$0xff] %v1409
      %1466 = vst [vmem:[#allocation2 + $0x140] sm:$0xff] %v1410
      %1467 = vst [vmem:[#allocation2 + $0x148] sm:$0xff] %v1411
      %1468 = vst [vmem:[#allocation2 + $0x150] sm:$0xff] %v1412
      %1469 = vst [vmem:[#allocation2 + $0x158] sm:$0xff] %v1413
      %1470 = vst [vmem:[#allocation2 + $0x160] sm:$0xff] %v1414
      %1471 = vst [vmem:[#allocation2 + $0x168] sm:$0xff] %v1415
      %1472 = vst [vmem:[#allocation2 + $0x170] sm:$0xff] %v1416
      %1473 = vst [vmem:[#allocation2 + $0x178] sm:$0xff] %v1417
      %1474 = vst [vmem:[#allocation2 + $0x180] sm:$0xff] %v1418
      %1475 = vst [vmem:[#allocation2 + $0x188] sm:$0xff] %v1419
      %1476 = vst [vmem:[#allocation2 + $0x190] sm:$0xff] %v1420
      %1477 = vst [vmem:[#allocation2 + $0x198] sm:$0xff] %v1421
      %1478 = vst [vmem:[#allocation2 + $0x1a0] sm:$0xff] %v1422
      %1479 = vst [vmem:[#allocation2 + $0x1a8] sm:$0xff] %v1423
      %1480 = vst [vmem:[#allocation2 + $0x1b0] sm:$0xff] %v1424
      %1481 = vst [vmem:[#allocation2 + $0x1b8] sm:$0xff] %v1425
      %v1482 = vld [vmem:[#allocation2] ss:$2 sm:$0xff]
      %s1483 = scalar_lea.vmem [#allocation2], 16
      %v1484 = vld [vmem:[%s1483] ss:$2 sm:$0x3f]
      %s1485 = scalar_lea.vmem [#allocation2], 32
      %v1486 = vld [vmem:[%s1485] ss:$2 sm:$0xff]
      %s1487 = scalar_lea.vmem [#allocation2], 48
      %v1488 = vld [vmem:[%s1487] ss:$2 sm:$0x3f]
      %s1489 = scalar_lea.vmem [#allocation2], 64
      %v1490 = vld [vmem:[%s1489] ss:$2 sm:$0xff]
      %s1491 = scalar_lea.vmem [#allocation2], 80
      %v1492 = vld [vmem:[%s1491] ss:$2 sm:$0x3f]
      %s1493 = scalar_lea.vmem [#allocation2], 96
      %v1494 = vld [vmem:[%s1493] ss:$2 sm:$0xff]
      %s1495 = scalar_lea.vmem [#allocation2], 112
      %v1496 = vld [vmem:[%s1495] ss:$2 sm:$0x3f]
      %s1497 = scalar_lea.vmem [#allocation2], 128
      %v1498 = vld [vmem:[%s1497] ss:$2 sm:$0xff]
      %s1499 = scalar_lea.vmem [#allocation2], 144
      %v1500 = vld [vmem:[%s1499] ss:$2 sm:$0x3f]
      %s1501 = scalar_lea.vmem [#allocation2], 160
      %v1502 = vld [vmem:[%s1501] ss:$2 sm:$0xff]
      %s1503 = scalar_lea.vmem [#allocation2], 176
      %v1504 = vld [vmem:[%s1503] ss:$2 sm:$0x3f]
      %s1505 = scalar_lea.vmem [#allocation2], 192
      %v1506 = vld [vmem:[%s1505] ss:$2 sm:$0xff]
      %s1507 = scalar_lea.vmem [#allocation2], 208
      %v1508 = vld [vmem:[%s1507] ss:$2 sm:$0x3f]
      %s1509 = scalar_lea.vmem [#allocation2], 224
      %v1510 = vld [vmem:[%s1509] ss:$2 sm:$0xff]
      %s1511 = scalar_lea.vmem [#allocation2], 240
      %v1512 = vld [vmem:[%s1511] ss:$2 sm:$0x3f]
      %s1513 = scalar_lea.vmem [#allocation2], 256
      %v1514 = vld [vmem:[%s1513] ss:$2 sm:$0xff]
      %s1515 = scalar_lea.vmem [#allocation2], 272
      %v1516 = vld [vmem:[%s1515] ss:$2 sm:$0x3f]
      %s1517 = scalar_lea.vmem [#allocation2], 288
      %v1518 = vld [vmem:[%s1517] ss:$2 sm:$0xff]
      %s1519 = scalar_lea.vmem [#allocation2], 304
      %v1520 = vld [vmem:[%s1519] ss:$2 sm:$0x3f]
      %s1521 = scalar_lea.vmem [#allocation2], 320
      %v1522 = vld [vmem:[%s1521] ss:$2 sm:$0xff]
      %s1523 = scalar_lea.vmem [#allocation2], 336
      %v1524 = vld [vmem:[%s1523] ss:$2 sm:$0x3f]
      %s1525 = scalar_lea.vmem [#allocation2], 352
      %v1526 = vld [vmem:[%s1525] ss:$2 sm:$0xff]
      %s1527 = scalar_lea.vmem [#allocation2], 368
      %v1528 = vld [vmem:[%s1527] ss:$2 sm:$0x3f]
      %s1529 = scalar_lea.vmem [#allocation2], 384
      %v1530 = vld [vmem:[%s1529] ss:$2 sm:$0xff]
      %s1531 = scalar_lea.vmem [#allocation2], 400
      %v1532 = vld [vmem:[%s1531] ss:$2 sm:$0x3f]
      %s1533 = scalar_lea.vmem [#allocation2], 416
      %v1534 = vld [vmem:[%s1533] ss:$2 sm:$0xff]
      %s1535 = scalar_lea.vmem [#allocation2], 432
      %v1536 = vld [vmem:[%s1535] ss:$2 sm:$0x3f]
      %s1537 = scalar_lea.vmem [#allocation2], 1
      %v1538 = vld [vmem:[%s1537] ss:$2 sm:$0xff]
      %s1539 = scalar_lea.vmem [#allocation2], 17
      %v1540 = vld [vmem:[%s1539] ss:$2 sm:$0x3f]
      %s1541 = scalar_lea.vmem [#allocation2], 33
      %v1542 = vld [vmem:[%s1541] ss:$2 sm:$0xff]
      %s1543 = scalar_lea.vmem [#allocation2], 49
      %v1544 = vld [vmem:[%s1543] ss:$2 sm:$0x3f]
      %s1545 = scalar_lea.vmem [#allocation2], 65
      %v1546 = vld [vmem:[%s1545] ss:$2 sm:$0xff]
      %s1547 = scalar_lea.vmem [#allocation2], 81
      %v1548 = vld [vmem:[%s1547] ss:$2 sm:$0x3f]
      %s1549 = scalar_lea.vmem [#allocation2], 97
      %v1550 = vld [vmem:[%s1549] ss:$2 sm:$0xff]
      %s1551 = scalar_lea.vmem [#allocation2], 113
      %v1552 = vld [vmem:[%s1551] ss:$2 sm:$0x3f]
      %s1553 = scalar_lea.vmem [#allocation2], 129
      %v1554 = vld [vmem:[%s1553] ss:$2 sm:$0xff]
      %s1555 = scalar_lea.vmem [#allocation2], 145
      %v1556 = vld [vmem:[%s1555] ss:$2 sm:$0x3f]
      %s1557 = scalar_lea.vmem [#allocation2], 161
      %v1558 = vld [vmem:[%s1557] ss:$2 sm:$0xff]
      %s1559 = scalar_lea.vmem [#allocation2], 177
      %v1560 = vld [vmem:[%s1559] ss:$2 sm:$0x3f]
      %s1561 = scalar_lea.vmem [#allocation2], 193
      %v1562 = vld [vmem:[%s1561] ss:$2 sm:$0xff]
      %s1563 = scalar_lea.vmem [#allocation2], 209
      %v1564 = vld [vmem:[%s1563] ss:$2 sm:$0x3f]
      %s1565 = scalar_lea.vmem [#allocation2], 225
      %v1566 = vld [vmem:[%s1565] ss:$2 sm:$0xff]
      %s1567 = scalar_lea.vmem [#allocation2], 241
      %v1568 = vld [vmem:[%s1567] ss:$2 sm:$0x3f]
      %s1569 = scalar_lea.vmem [#allocation2], 257
      %v1570 = vld [vmem:[%s1569] ss:$2 sm:$0xff]
      %s1571 = scalar_lea.vmem [#allocation2], 273
      %v1572 = vld [vmem:[%s1571] ss:$2 sm:$0x3f]
      %s1573 = scalar_lea.vmem [#allocation2], 289
      %v1574 = vld [vmem:[%s1573] ss:$2 sm:$0xff]
      %s1575 = scalar_lea.vmem [#allocation2], 305
      %v1576 = vld [vmem:[%s1575] ss:$2 sm:$0x3f]
      %s1577 = scalar_lea.vmem [#allocation2], 321
      %v1578 = vld [vmem:[%s1577] ss:$2 sm:$0xff]
      %s1579 = scalar_lea.vmem [#allocation2], 337
      %v1580 = vld [vmem:[%s1579] ss:$2 sm:$0x3f]
      %s1581 = scalar_lea.vmem [#allocation2], 353
      %v1582 = vld [vmem:[%s1581] ss:$2 sm:$0xff]
      %s1583 = scalar_lea.vmem [#allocation2], 369
      %v1584 = vld [vmem:[%s1583] ss:$2 sm:$0x3f]
      %s1585 = scalar_lea.vmem [#allocation2], 385
      %v1586 = vld [vmem:[%s1585] ss:$2 sm:$0xff]
      %s1587 = scalar_lea.vmem [#allocation2], 401
      %v1588 = vld [vmem:[%s1587] ss:$2 sm:$0x3f]
      %s1589 = scalar_lea.vmem [#allocation2], 417
      %v1590 = vld [vmem:[%s1589] ss:$2 sm:$0xff]
      %s1591 = scalar_lea.vmem [#allocation2], 433
      %v1592 = vld [vmem:[%s1591] ss:$2 sm:$0x3f]
      %v1593 = vmax.f32 %v1482, %v1538
      %v1594 = vmax.f32 %v1484, %v1540
      %v1595 = vmax.f32 %v1486, %v1542
      %v1596 = vmax.f32 %v1488, %v1544
      %v1597 = vmax.f32 %v1490, %v1546
      %v1598 = vmax.f32 %v1492, %v1548
      %v1599 = vmax.f32 %v1494, %v1550
      %v1600 = vmax.f32 %v1496, %v1552
      %v1601 = vmax.f32 %v1498, %v1554
      %v1602 = vmax.f32 %v1500, %v1556
      %v1603 = vmax.f32 %v1502, %v1558
      %v1604 = vmax.f32 %v1504, %v1560
      %v1605 = vmax.f32 %v1506, %v1562
      %v1606 = vmax.f32 %v1508, %v1564
      %v1607 = vmax.f32 %v1510, %v1566
      %v1608 = vmax.f32 %v1512, %v1568
      %v1609 = vmax.f32 %v1514, %v1570
      %v1610 = vmax.f32 %v1516, %v1572
      %v1611 = vmax.f32 %v1518, %v1574
      %v1612 = vmax.f32 %v1520, %v1576
      %v1613 = vmax.f32 %v1522, %v1578
      %v1614 = vmax.f32 %v1524, %v1580
      %v1615 = vmax.f32 %v1526, %v1582
      %v1616 = vmax.f32 %v1528, %v1584
      %v1617 = vmax.f32 %v1530, %v1586
      %v1618 = vmax.f32 %v1532, %v1588
      %v1619 = vmax.f32 %v1534, %v1590
      %v1620 = vmax.f32 %v1536, %v1592
      %1621 = vst [vmem:[%s170] sm:$0xff] %v1593
      %1622 = vst [vmem:[%s170 + $0x8] sm:$0x3f] %v1594
      %1623 = vst [vmem:[%s170 + $0x10] sm:$0xff] %v1595
      %1624 = vst [vmem:[%s170 + $0x18] sm:$0x3f] %v1596
      %1625 = vst [vmem:[%s170 + $0x20] sm:$0xff] %v1597
      %1626 = vst [vmem:[%s170 + $0x28] sm:$0x3f] %v1598
      %1627 = vst [vmem:[%s170 + $0x30] sm:$0xff] %v1599
      %1628 = vst [vmem:[%s170 + $0x38] sm:$0x3f] %v1600
      %1629 = vst [vmem:[%s170 + $0x40] sm:$0xff] %v1601
      %1630 = vst [vmem:[%s170 + $0x48] sm:$0x3f] %v1602
      %1631 = vst [vmem:[%s170 + $0x50] sm:$0xff] %v1603
      %1632 = vst [vmem:[%s170 + $0x58] sm:$0x3f] %v1604
      %1633 = vst [vmem:[%s170 + $0x60] sm:$0xff] %v1605
      %1634 = vst [vmem:[%s170 + $0x68] sm:$0x3f] %v1606
      %1635 = vst [vmem:[%s170 + $0x70] sm:$0xff] %v1607
      %1636 = vst [vmem:[%s170 + $0x78] sm:$0x3f] %v1608
      %1637 = vst [vmem:[%s170 + $0x80] sm:$0xff] %v1609
      %1638 = vst [vmem:[%s170 + $0x88] sm:$0x3f] %v1610
      %1639 = vst [vmem:[%s170 + $0x90] sm:$0xff] %v1611
      %1640 = vst [vmem:[%s170 + $0x98] sm:$0x3f] %v1612
      %1641 = vst [vmem:[%s170 + $0xa0] sm:$0xff] %v1613
      %1642 = vst [vmem:[%s170 + $0xa8] sm:$0x3f] %v1614
      %1643 = vst [vmem:[%s170 + $0xb0] sm:$0xff] %v1615
      %1644 = vst [vmem:[%s170 + $0xb8] sm:$0x3f] %v1616
      %1645 = vst [vmem:[%s170 + $0xc0] sm:$0xff] %v1617
      %1646 = vst [vmem:[%s170 + $0xc8] sm:$0x3f] %v1618
      %1647 = vst [vmem:[%s170 + $0xd0] sm:$0xff] %v1619
      %1648 = vst [vmem:[%s170 + $0xd8] sm:$0x3f] %v1620
      %p1649 = scmp.lt.s32.totalorder %s14, 1
      %s1650 = scalar_select %p1649, %s14, 1
      %s1651 = smul.addr %s1650, 28
      %s1652 = smul.addr %s1651, 8
      %s1653 = scalar_lea.vmem %s3, %s1652
      // Predicated region
      $region33: #{forward.3} parent=31 // pred_check
        %p1654 = pneg %p100
      $region34: #{forward.3} parent=31 // pred_check_branch
        %1656 = sbr.rel (%p1654) target = $region36
      $region35: #{forward.3} parent=31 // pred_region
        _
      $region36: #{forward.3} parent=31 // pred_fallthru
        _
    $region32: #{forward.3} parent=5 // pred_fallthru
      _
    %p1657 = scmp.le.s32.totalorder 2, %s9
    // Predicated region
    $region37: #{forward.3} parent=5 // pred_check
      %p1658 = pneg %p1657
    $region38: #{forward.3} parent=5 // pred_check_branch
      %1660 = sbr.rel (%p1658) target = $region40
    $region39: #{forward.3} parent=5 // pred_region
      %s1661 = ssub.s32 %s9, 2
      // Predicated region
      $region41: #{forward.3} parent=39 // pred_check
        %p1662 = pneg %p106
      $region42: #{forward.3} parent=39 // pred_check_branch
        %1664 = sbr.rel (%p1662) target = $region44
      $region43: #{forward.3} parent=39 // pred_region
        %p1665 = scmp.lt.s32.totalorder %s15, 1
        %s1666 = scalar_select %p1665, %s15, 1
        %s1667 = smul.addr %s1666, 28
        %s1668 = smul.addr %s1667, 8
        %s1669 = scalar_lea.vmem %s3, %s1668
      $region44: #{forward.3} parent=39 // pred_fallthru
        _
    $region40: #{forward.3} parent=5 // pred_fallthru
      _
  $region6: #{forward.3} parent=0 // loop_footer
    %s13 = sadd.s32 1, %s9
  $region7: #{forward.3} parent=0 // loop_footer_branch
    %8 = sbr.rel target = $region3
  $region8: #{forward.3} parent=0 // loop_exit
    _

// kernel: forward.4
$region0: #{forward.4}
  #allocation0 [shape = 'u32[]', space=smem, size = 0x4, offset = 0x4, fixed_abs, tag = 'smem constant byte address 0x4 - core index']
  #allocation1 [shape = 'u32[144,128]{1,0:T(1,128)}', space=vmem, size = 0x12000, scoped, tag = 'internal scratch']
  #allocation2 [shape = 'f32[7,16,128]{2,1,0:T(8,128)}', space=vmem, size = 0xe000, scoped, tag = 'scratch operand']
  %s0 = inlined_call_operand.vmem [shape: f32[2,272,128], index: 0, kind: input, shape index: {}]
  %s1 = inlined_call_operand.vmem [shape: f32[9,128,128], index: 1, kind: input, shape index: {}]
  %s2 = inlined_call_operand.vmem [shape: f32[1,128], index: 2, kind: input, shape index: {}]
  %s3 = inlined_call_operand.vmem [shape: f32[2,7,7,128], index: 3, kind: output, shape index: {}]
  %s4 = sld [smem:[#allocation0]]
  $region45: #{forward.4} parent=0
    _
  %s6 = ssub.s32 1, %s4
  %s7 = scalar_select 0, %s6, %s4
  loop: start=0, step=1, limit=4
  $region2: #{forward.4} parent=0 // loop_pre_header
    _
  $region3: #{forward.4} parent=0 // loop_header
    %s9 = sphi 0, %s13
    %p10 = scmp.ge.s32.totalorder %s9, 4
    %s19 = sphi 0, %s21
    %s22 = sphi 0, %s19
    %s23 = sphi 0, %s22
    %s39 = sphi 0, %s23
    %s43 = sphi 0, %s43
    %s45 = sphi 0, %s43
    %s46 = sphi 0, %s45
    %s60 = sphi 0, %s46
    %s64 = sphi 0, %s64
    %s66 = sphi 0, %s64
    %s67 = sphi 0, %s66
    %s81 = sphi 0, %s67
    %s87 = sphi 0, %s89
    %s90 = sphi 0, %s87
    %s91 = sphi 0, %s90
    %s107 = sphi 0, %s91
  $region4: #{forward.4} parent=0 // loop_header_branch
    %12 = sbr.rel (%p10) target = $region8
  $region5: #{forward.4} parent=0 // loop_body
    %s14 = ssub.s32 %s9, 1
    %s15 = ssub.s32 %s9, 2
    %s16 = sadd.s32 %s9, 1
    %s17 = ssub.s32 %s9, %s16
    %p18 = scmp.eq.s32.totalorder %s17, 0
    %s20 = sadd.s32 %s19, 1
    %s21 = scalar_select %p18, %s19, %s20
    %p24 = pneg %p18
    %p25 = scmp.eq.s32.totalorder %s9, 1
    %p26 = por %p24, %p25
    %p27 = scmp.ne.s32.totalorder %s19, %s22
    %p28 = scmp.eq.s32.totalorder %s9, 0
    %p29 = por %p27, %p28
    %p30 = scmp.ne.s32.totalorder %s19, %s22
    %p31 = scmp.eq.s32.totalorder %s14, 1
    %p32 = por %p30, %p31
    %p33 = scmp.ne.s32.totalorder %s22, %s23
    %p34 = scmp.eq.s32.totalorder %s14, 0
    %p35 = por %p33, %p34
    %p36 = scmp.ne.s32.totalorder %s22, %s23
    %p37 = scmp.eq.s32.totalorder %s15, 1
    %p38 = por %p36, %p37
    %p40 = scmp.ne.s32.totalorder %s23, %s39
    %p41 = scmp.eq.s32.totalorder %s15, 0
    %p42 = por %p40, %p41
    %s44 = sadd.s32 %s43, 1
    %p47 = scmp.eq.s32.totalorder %s9, 1
    %p48 = scmp.ne.s32.totalorder %s43, %s45
    %p49 = scmp.eq.s32.totalorder %s9, 0
    %p50 = por %p48, %p49
    %p51 = scmp.ne.s32.totalorder %s43, %s45
    %p52 = scmp.eq.s32.totalorder %s14, 1
    %p53 = por %p51, %p52
    %p54 = scmp.ne.s32.totalorder %s45, %s46
    %p55 = scmp.eq.s32.totalorder %s14, 0
    %p56 = por %p54, %p55
    %p57 = scmp.ne.s32.totalorder %s45, %s46
    %p58 = scmp.eq.s32.totalorder %s15, 1
    %p59 = por %p57, %p58
    %p61 = scmp.ne.s32.totalorder %s46, %s60
    %p62 = scmp.eq.s32.totalorder %s15, 0
    %p63 = por %p61, %p62
    %s65 = sadd.s32 %s64, 1
    %p68 = scmp.eq.s32.totalorder %s9, 1
    %p69 = scmp.ne.s32.totalorder %s64, %s66
    %p70 = scmp.eq.s32.totalorder %s9, 0
    %p71 = por %p69, %p70
    %p72 = scmp.ne.s32.totalorder %s64, %s66
    %p73 = scmp.eq.s32.totalorder %s14, 1
    %p74 = por %p72, %p73
    %p75 = scmp.ne.s32.totalorder %s66, %s67
    %p76 = scmp.eq.s32.totalorder %s14, 0
    %p77 = por %p75, %p76
    %p78 = scmp.ne.s32.totalorder %s66, %s67
    %p79 = scmp.eq.s32.totalorder %s15, 1
    %p80 = por %p78, %p79
    %p82 = scmp.ne.s32.totalorder %s67, %s81
    %p83 = scmp.eq.s32.totalorder %s15, 0
    %p84 = por %p82, %p83
    %s85 = ssub.s32 %s9, %s16
    %p86 = scmp.eq.s32.totalorder %s85, 0
    %s88 = sadd.s32 %s87, 1
    %s89 = scalar_select %p86, %s87, %s88
    %p92 = pneg %p86
    %p93 = scmp.eq.s32.totalorder %s9, 1
    %p94 = por %p92, %p93
    %p95 = scmp.ne.s32.totalorder %s87, %s90
    %p96 = scmp.eq.s32.totalorder %s9, 0
    %p97 = por %p95, %p96
    %p98 = scmp.ne.s32.totalorder %s87, %s90
    %p99 = scmp.eq.s32.totalorder %s14, 1
    %p100 = por %p98, %p99
    %p101 = scmp.ne.s32.totalorder %s90, %s91
    %p102 = scmp.eq.s32.totalorder %s14, 0
    %p103 = por %p101, %p102
    %p104 = scmp.ne.s32.totalorder %s90, %s91
    %p105 = scmp.eq.s32.totalorder %s15, 1
    %p106 = por %p104, %p105
    %p108 = scmp.ne.s32.totalorder %s91, %s107
    %p109 = scmp.eq.s32.totalorder %s15, 0
    %p110 = por %p108, %p109
    %p111 = scmp.le.s32.totalorder 1, %s9
    %p112 = scmp.lt.s32.totalorder %s9, 3
    %p113 = pnand %p111, %p112
    %p114 = pneg %p113
    // Predicated region
    $region9: #{forward.4} parent=5 // pred_check
      _
    $region10: #{forward.4} parent=5 // pred_check_branch
      %116 = sbr.rel (%p113) target = $region12
    $region11: #{forward.4} parent=5 // pred_region
      %s117 = ssub.s32 %s9, 1
      // Predicated region
      $region13: #{forward.4} parent=11 // pred_check
        %p118 = pneg %p56
      $region14: #{forward.4} parent=11 // pred_check_branch
        %120 = sbr.rel (%p118) target = $region16
      $region15: #{forward.4} parent=11 // pred_region
        _
      $region16: #{forward.4} parent=11 // pred_fallthru
        _
      // Predicated region
      $region17: #{forward.4} parent=11 // pred_check
        %p121 = pneg %p77
      $region18: #{forward.4} parent=11 // pred_check_branch
        %123 = sbr.rel (%p121) target = $region20
      $region19: #{forward.4} parent=11 // pred_region
        _
      $region20: #{forward.4} parent=11 // pred_fallthru
        _
    $region12: #{forward.4} parent=5 // pred_fallthru
      _
    %p124 = scmp.lt.s32.totalorder %s9, 2
    // Predicated region
    $region21: #{forward.4} parent=5 // pred_check
      %p125 = pneg %p124
    $region22: #{forward.4} parent=5 // pred_check_branch
      %127 = sbr.rel (%p125) target = $region24
    $region23: #{forward.4} parent=5 // pred_region
      // Predicated region
      $region25: #{forward.4} parent=23 // pred_check
        %p128 = pneg %p29
      $region26: #{forward.4} parent=23 // pred_check_branch
        %130 = sbr.rel (%p128) target = $region28
      $region27: #{forward.4} parent=23 // pred_region
        %p131 = scmp.lt.s32.totalorder %s9, 1
        %s132 = scalar_select %p131, %s9, 1
        %s133 = smul.addr %s132, 34
        %s134 = smul.addr %s133, 8
        %s135 = scalar_lea.vmem %s0, %s134
      $region28: #{forward.4} parent=23 // pred_fallthru
        _
    $region24: #{forward.4} parent=5 // pred_fallthru
      _
    %p136 = scmp.le.s32.totalorder 1, %s9
    %p137 = scmp.lt.s32.totalorder %s9, 3
    %p138 = pnand %p136, %p137
    %p139 = pneg %p138
    // Predicated region
    $region29: #{forward.4} parent=5 // pred_check
      _
    $region30: #{forward.4} parent=5 // pred_check_branch
      %141 = sbr.rel (%p138) target = $region32
    $region31: #{forward.4} parent=5 // pred_region
      %s142 = ssub.s32 %s9, 1
      %p143 = scmp.lt.s32.totalorder %s14, 1
      %s144 = scalar_select %p143, %s14, 1
      %s145 = smul.addr %s144, 34
      %s146 = smul.addr %s145, 8
      %s147 = scalar_lea.vmem %s0, %s146
      %p148 = pneg %p35
      %p149 = pneg %p32
      %p150 = pneg %p56
      %p151 = pneg %p53
      %p152 = pneg %p77
      %p153 = pneg %p74
      %p154 = pneg %p103
      %p155 = pneg %p100
      %p156 = scmp.lt.s32.totalorder %s14, 1
      %s157 = scalar_select %p156, %s14, 1
      %s158 = smul.addr %s157, 7
      %s159 = smul.addr %s158, 8
      %s160 = scalar_lea.vmem %s3, %s159
      %p161 = scmp.lt.s32.totalorder %s14, 1
      %s162 = scalar_select %p161, %s14, 1
      %s163 = smul.addr %s162, 34
      %s164 = smul.addr %s163, 8
      %s165 = scalar_lea.vmem %s0, %s164
      %p166 = scmp.lt.s32.totalorder %s14, 1
      %s167 = scalar_select %p166, %s14, 1
      %s168 = smul.addr %s167, 7
      %s169 = smul.addr %s168, 8
      %s170 = scalar_lea.vmem %s3, %s169
      %v171 = vld [vmem:[%s165] sm:$0xff]
      %v172 = vld [vmem:[%s165 + $0x8] sm:$0xff]
      %v173 = vld [vmem:[%s165 + $0x10] sm:$0xff]
      %v174 = vld [vmem:[%s165 + $0x18] sm:$0xff]
      %v175 = vld [vmem:[%s165 + $0x20] sm:$0xff]
      %v176 = vld [vmem:[%s165 + $0x28] sm:$0xff]
      %v177 = vld [vmem:[%s165 + $0x30] sm:$0xff]
      %v178 = vld [vmem:[%s165 + $0x38] sm:$0xff]
      %v179 = vld [vmem:[%s165 + $0x40] sm:$0xff]
      %v180 = vld [vmem:[%s165 + $0x48] sm:$0xff]
      %v181 = vld [vmem:[%s165 + $0x50] sm:$0xff]
      %v182 = vld [vmem:[%s165 + $0x58] sm:$0xff]
      %v183 = vld [vmem:[%s165 + $0x60] sm:$0xff]
      %v184 = vld [vmem:[%s165 + $0x68] sm:$0xff]
      %v185 = vld [vmem:[%s165 + $0x70] sm:$0xff]
      %v186 = vld [vmem:[%s165 + $0x78] sm:$0xff]
      %v187 = vld [vmem:[%s165 + $0x80] sm:$0xff]
      %v188 = vld [vmem:[%s165 + $0x88] sm:$0xff]
      %v189 = vld [vmem:[%s165 + $0x90] sm:$0xff]
      %v190 = vld [vmem:[%s165 + $0x98] sm:$0xff]
      %v191 = vld [vmem:[%s165 + $0xa0] sm:$0xff]
      %v192 = vld [vmem:[%s165 + $0xa8] sm:$0xff]
      %v193 = vld [vmem:[%s165 + $0xb0] sm:$0xff]
      %v194 = vld [vmem:[%s165 + $0xb8] sm:$0xff]
      %v195 = vld [vmem:[%s165 + $0xc0] sm:$0xff]
      %v196 = vld [vmem:[%s165 + $0xc8] sm:$0xff]
      %v197 = vld [vmem:[%s165 + $0xd0] sm:$0xff]
      %v198 = vld [vmem:[%s165 + $0xd8] sm:$0xff]
      %v199 = vld [vmem:[%s1] sm:$0xff]
      %v200 = vld [vmem:[%s1 + $0x8] sm:$0xff]
      %v201 = vld [vmem:[%s1 + $0x10] sm:$0xff]
      %v202 = vld [vmem:[%s1 + $0x18] sm:$0xff]
      %v203 = vld [vmem:[%s1 + $0x20] sm:$0xff]
      %v204 = vld [vmem:[%s1 + $0x28] sm:$0xff]
      %v205 = vld [vmem:[%s1 + $0x30] sm:$0xff]
      %v206 = vld [vmem:[%s1 + $0x38] sm:$0xff]
      %v207 = vld [vmem:[%s1 + $0x40] sm:$0xff]
      %v208 = vld [vmem:[%s1 + $0x48] sm:$0xff]
      %v209 = vld [vmem:[%s1 + $0x50] sm:$0xff]
      %v210 = vld [vmem:[%s1 + $0x58] sm:$0xff]
      %v211 = vld [vmem:[%s1 + $0x60] sm:$0xff]
      %v212 = vld [vmem:[%s1 + $0x68] sm:$0xff]
      %v213 = vld [vmem:[%s1 + $0x70] sm:$0xff]
      %v214 = vld [vmem:[%s1 + $0x78] sm:$0xff]
      %v215 = vld [vmem:[%s165 + $0x1] sm:$0xff]
      %v216 = vld [vmem:[%s165 + $0x9] sm:$0xff]
      %v217 = vld [vmem:[%s165 + $0x11] sm:$0xff]
      %v218 = vld [vmem:[%s165 + $0x19] sm:$0xff]
      %v219 = vld [vmem:[%s165 + $0x21] sm:$0xff]
      %v220 = vld [vmem:[%s165 + $0x29] sm:$0xff]
      %v221 = vld [vmem:[%s165 + $0x31] sm:$0xff]
      %v222 = vld [vmem:[%s165 + $0x39] sm:$0xff]
      %v223 = vld [vmem:[%s165 + $0x41] sm:$0xff]
      %v224 = vld [vmem:[%s165 + $0x49] sm:$0xff]
      %v225 = vld [vmem:[%s165 + $0x51] sm:$0xff]
      %v226 = vld [vmem:[%s165 + $0x59] sm:$0xff]
      %v227 = vld [vmem:[%s165 + $0x61] sm:$0xff]
      %v228 = vld [vmem:[%s165 + $0x69] sm:$0xff]
      %v229 = vld [vmem:[%s165 + $0x71] sm:$0xff]
      %v230 = vld [vmem:[%s165 + $0x79] sm:$0xff]
      %v231 = vld [vmem:[%s165 + $0x81] sm:$0xff]
      %v232 = vld [vmem:[%s165 + $0x89] sm:$0xff]
      %v233 = vld [vmem:[%s165 + $0x91] sm:$0xff]
      %v234 = vld [vmem:[%s165 + $0x99] sm:$0xff]
      %v235 = vld [vmem:[%s165 + $0xa1] sm:$0xff]
      %v236 = vld [vmem:[%s165 + $0xa9] sm:$0xff]
      %v237 = vld [vmem:[%s165 + $0xb1] sm:$0xff]
      %v238 = vld [vmem:[%s165 + $0xb9] sm:$0xff]
      %v239 = vld [vmem:[%s165 + $0xc1] sm:$0xff]
      %v240 = vld [vmem:[%s165 + $0xc9] sm:$0xff]
      %v241 = vld [vmem:[%s165 + $0xd1] sm:$0xff]
      %v242 = vld [vmem:[%s165 + $0xd9] sm:$0xff]
      %s243 = scalar_lea.vmem %s1, 128
      %v244 = vld [vmem:[%s243] sm:$0xff]
      %v245 = vld [vmem:[%s243 + $0x8] sm:$0xff]
      %v246 = vld [vmem:[%s243 + $0x10] sm:$0xff]
      %v247 = vld [vmem:[%s243 + $0x18] sm:$0xff]
      %v248 = vld [vmem:[%s243 + $0x20] sm:$0xff]
      %v249 = vld [vmem:[%s243 + $0x28] sm:$0xff]
      %v250 = vld [vmem:[%s243 + $0x30] sm:$0xff]
      %v251 = vld [vmem:[%s243 + $0x38] sm:$0xff]
      %v252 = vld [vmem:[%s243 + $0x40] sm:$0xff]
      %v253 = vld [vmem:[%s243 + $0x48] sm:$0xff]
      %v254 = vld [vmem:[%s243 + $0x50] sm:$0xff]
      %v255 = vld [vmem:[%s243 + $0x58] sm:$0xff]
      %v256 = vld [vmem:[%s243 + $0x60] sm:$0xff]
      %v257 = vld [vmem:[%s243 + $0x68] sm:$0xff]
      %v258 = vld [vmem:[%s243 + $0x70] sm:$0xff]
      %v259 = vld [vmem:[%s243 + $0x78] sm:$0xff]
      %260 = vmatprep.subr.mxu0 0.0
      %261 = vmatpush1.msra.mxu0 %v259
      %262 = vmatprep.subr.mxu0 0.0
      %263 = vmatpush1.msra.mxu0 %v258
      %264 = vmatprep.subr.mxu0 0.0
      %265 = vmatpush1.msra.mxu0 %v257
      %266 = vmatprep.subr.mxu0 0.0
      %267 = vmatpush1.msra.mxu0 %v256
      %268 = vmatprep.subr.mxu0 0.0
      %269 = vmatpush1.msra.mxu0 %v255
      %270 = vmatprep.subr.mxu0 0.0
      %271 = vmatpush1.msra.mxu0 %v254
      %272 = vmatprep.subr.mxu0 0.0
      %273 = vmatpush1.msra.mxu0 %v253
      %274 = vmatprep.subr.mxu0 0.0
      %275 = vmatpush1.msra.mxu0 %v252
      %276 = vmatprep.subr.mxu0 0.0
      %277 = vmatpush1.msra.mxu0 %v251
      %278 = vmatprep.subr.mxu0 0.0
      %279 = vmatpush1.msra.mxu0 %v250
      %280 = vmatprep.subr.mxu0 0.0
      %281 = vmatpush1.msra.mxu0 %v249
      %282 = vmatprep.subr.mxu0 0.0
      %283 = vmatpush1.msra.mxu0 %v248
      %284 = vmatprep.subr.mxu0 0.0
      %285 = vmatpush1.msra.mxu0 %v247
      %286 = vmatprep.subr.mxu0 0.0
      %287 = vmatpush1.msra.mxu0 %v246
      %288 = vmatprep.subr.mxu0 0.0
      %289 = vmatpush1.msra.mxu0 %v245
      %290 = vmatprep.subr.mxu0 0.0
      %291 = vmatpush1.msra.mxu0 %v244
      %292 = vmatprep.subr.mxu0 0.0
      %293 = vmatpush2.msra.mxu0 0.0
      %294 = vmatprep.subr.mxu0 0.0
      %295 = vmatpush2.msra.mxu0 0.0
      %296 = vmatprep.subr.mxu0 0.0
      %297 = vmatpush2.msra.mxu0 0.0
      %298 = vmatprep.subr.mxu0 0.0
      %299 = vmatpush2.msra.mxu0 0.0
      %300 = vmatprep.subr.mxu0 0.0
      %301 = vmatpush2.msra.mxu0 0.0
      %302 = vmatprep.subr.mxu0 0.0
      %303 = vmatpush2.msra.mxu0 0.0
      %304 = vmatprep.subr.mxu0 0.0
      %305 = vmatpush2.msra.mxu0 0.0
      %306 = vmatprep.subr.mxu0 0.0
      %307 = vmatpush2.msra.mxu0 0.0
      %308 = vmatprep.subr.mxu0 0.0
      %309 = vmatpush2.msra.mxu0 0.0
      %310 = vmatprep.subr.mxu0 0.0
      %311 = vmatpush2.msra.mxu0 0.0
      %312 = vmatprep.subr.mxu0 0.0
      %313 = vmatpush2.msra.mxu0 0.0
      %314 = vmatprep.subr.mxu0 0.0
      %315 = vmatpush2.msra.mxu0 0.0
      %316 = vmatprep.subr.mxu0 0.0
      %317 = vmatpush2.msra.mxu0 0.0
      %318 = vmatprep.subr.mxu0 0.0
      %319 = vmatpush2.msra.mxu0 0.0
      %320 = vmatprep.subr.mxu0 0.0
      %321 = vmatpush2.msra.mxu0 0.0
      %322 = vmatprep.subr.mxu0 0.0
      %323 = vmatpush2.msra.mxu0 0.0
      %324 = vmatprep.mubr.f32.mxu0 0.0
      %325 = vmatmul.mubr.f32.gmra.mxu0 %v215
      %v326 = vpop.f32.mrf.mxu0
      %v327 = vadd.f32 0.0, %v326
      %v328 = vpop.f32.mrf.mxu0
      %329 = vmatprep.mubr.f32.mxu0 0.0
      %330 = vmatmul.mubr.f32.gmra.mxu0 %v216
      %v331 = vpop.f32.mrf.mxu0
      %v332 = vadd.f32 0.0, %v331
      %v333 = vpop.f32.mrf.mxu0
      %334 = vmatprep.mubr.f32.mxu0 0.0
      %335 = vmatmul.mubr.f32.gmra.mxu0 %v217
      %v336 = vpop.f32.mrf.mxu0
      %v337 = vadd.f32 0.0, %v336
      %v338 = vpop.f32.mrf.mxu0
      %339 = vmatprep.mubr.f32.mxu0 0.0
      %340 = vmatmul.mubr.f32.gmra.mxu0 %v218
      %v341 = vpop.f32.mrf.mxu0
      %v342 = vadd.f32 0.0, %v341
      %v343 = vpop.f32.mrf.mxu0
      %344 = vmatprep.mubr.f32.mxu0 0.0
      %345 = vmatmul.mubr.f32.gmra.mxu0 %v219
      %v346 = vpop.f32.mrf.mxu0
      %v347 = vadd.f32 0.0, %v346
      %v348 = vpop.f32.mrf.mxu0
      %349 = vmatprep.mubr.f32.mxu0 0.0
      %350 = vmatmul.mubr.f32.gmra.mxu0 %v220
      %v351 = vpop.f32.mrf.mxu0
      %v352 = vadd.f32 0.0, %v351
      %v353 = vpop.f32.mrf.mxu0
      %354 = vmatprep.mubr.f32.mxu0 0.0
      %355 = vmatmul.mubr.f32.gmra.mxu0 %v221
      %v356 = vpop.f32.mrf.mxu0
      %v357 = vadd.f32 0.0, %v356
      %v358 = vpop.f32.mrf.mxu0
      %359 = vmatprep.mubr.f32.mxu0 0.0
      %360 = vmatmul.mubr.f32.gmra.mxu0 %v222
      %v361 = vpop.f32.mrf.mxu0
      %v362 = vadd.f32 0.0, %v361
      %v363 = vpop.f32.mrf.mxu0
      %364 = vmatprep.mubr.f32.mxu0 0.0
      %365 = vmatmul.mubr.f32.gmra.mxu0 %v223
      %v366 = vpop.f32.mrf.mxu0
      %v367 = vadd.f32 0.0, %v366
      %v368 = vpop.f32.mrf.mxu0
      %369 = vmatprep.mubr.f32.mxu0 0.0
      %370 = vmatmul.mubr.f32.gmra.mxu0 %v224
      %v371 = vpop.f32.mrf.mxu0
      %v372 = vadd.f32 0.0, %v371
      %v373 = vpop.f32.mrf.mxu0
      %374 = vmatprep.mubr.f32.mxu0 0.0
      %375 = vmatmul.mubr.f32.gmra.mxu0 %v225
      %v376 = vpop.f32.mrf.mxu0
      %v377 = vadd.f32 0.0, %v376
      %v378 = vpop.f32.mrf.mxu0
      %379 = vmatprep.mubr.f32.mxu0 0.0
      %380 = vmatmul.mubr.f32.gmra.mxu0 %v226
      %v381 = vpop.f32.mrf.mxu0
      %v382 = vadd.f32 0.0, %v381
      %v383 = vpop.f32.mrf.mxu0
      %384 = vmatprep.mubr.f32.mxu0 0.0
      %385 = vmatmul.mubr.f32.gmra.mxu0 %v227
      %v386 = vpop.f32.mrf.mxu0
      %v387 = vadd.f32 0.0, %v386
      %v388 = vpop.f32.mrf.mxu0
      %389 = vmatprep.mubr.f32.mxu0 0.0
      %390 = vmatmul.mubr.f32.gmra.mxu0 %v228
      %v391 = vpop.f32.mrf.mxu0
      %v392 = vadd.f32 0.0, %v391
      %v393 = vpop.f32.mrf.mxu0
      %394 = vmatprep.mubr.f32.mxu0 0.0
      %395 = vmatmul.mubr.f32.gmra.mxu0 %v229
      %v396 = vpop.f32.mrf.mxu0
      %v397 = vadd.f32 0.0, %v396
      %v398 = vpop.f32.mrf.mxu0
      %399 = vmatprep.mubr.f32.mxu0 0.0
      %400 = vmatmul.mubr.f32.gmra.mxu0 %v230
      %v401 = vpop.f32.mrf.mxu0
      %v402 = vadd.f32 0.0, %v401
      %v403 = vpop.f32.mrf.mxu0
      %404 = vmatprep.mubr.f32.mxu0 0.0
      %405 = vmatmul.mubr.f32.gmra.mxu0 %v231
      %v406 = vpop.f32.mrf.mxu0
      %v407 = vadd.f32 0.0, %v406
      %v408 = vpop.f32.mrf.mxu0
      %409 = vmatprep.mubr.f32.mxu0 0.0
      %410 = vmatmul.mubr.f32.gmra.mxu0 %v232
      %v411 = vpop.f32.mrf.mxu0
      %v412 = vadd.f32 0.0, %v411
      %v413 = vpop.f32.mrf.mxu0
      %414 = vmatprep.mubr.f32.mxu0 0.0
      %415 = vmatmul.mubr.f32.gmra.mxu0 %v233
      %v416 = vpop.f32.mrf.mxu0
      %v417 = vadd.f32 0.0, %v416
      %v418 = vpop.f32.mrf.mxu0
      %419 = vmatprep.mubr.f32.mxu0 0.0
      %420 = vmatmul.mubr.f32.gmra.mxu0 %v234
      %v421 = vpop.f32.mrf.mxu0
      %v422 = vadd.f32 0.0, %v421
      %v423 = vpop.f32.mrf.mxu0
      %424 = vmatprep.mubr.f32.mxu0 0.0
      %425 = vmatmul.mubr.f32.gmra.mxu0 %v235
      %v426 = vpop.f32.mrf.mxu0
      %v427 = vadd.f32 0.0, %v426
      %v428 = vpop.f32.mrf.mxu0
      %429 = vmatprep.mubr.f32.mxu0 0.0
      %430 = vmatmul.mubr.f32.gmra.mxu0 %v236
      %v431 = vpop.f32.mrf.mxu0
      %v432 = vadd.f32 0.0, %v431
      %v433 = vpop.f32.mrf.mxu0
      %434 = vmatprep.mubr.f32.mxu0 0.0
      %435 = vmatmul.mubr.f32.gmra.mxu0 %v237
      %v436 = vpop.f32.mrf.mxu0
      %v437 = vadd.f32 0.0, %v436
      %v438 = vpop.f32.mrf.mxu0
      %439 = vmatprep.mubr.f32.mxu0 0.0
      %440 = vmatmul.mubr.f32.gmra.mxu0 %v238
      %v441 = vpop.f32.mrf.mxu0
      %v442 = vadd.f32 0.0, %v441
      %v443 = vpop.f32.mrf.mxu0
      %444 = vmatprep.mubr.f32.mxu0 0.0
      %445 = vmatmul.mubr.f32.gmra.mxu0 %v239
      %v446 = vpop.f32.mrf.mxu0
      %v447 = vadd.f32 0.0, %v446
      %v448 = vpop.f32.mrf.mxu0
      %449 = vmatprep.mubr.f32.mxu0 0.0
      %450 = vmatmul.mubr.f32.gmra.mxu0 %v240
      %v451 = vpop.f32.mrf.mxu0
      %v452 = vadd.f32 0.0, %v451
      %v453 = vpop.f32.mrf.mxu0
      %454 = vmatprep.mubr.f32.mxu0 0.0
      %455 = vmatmul.mubr.f32.gmra.mxu0 %v241
      %v456 = vpop.f32.mrf.mxu0
      %v457 = vadd.f32 0.0, %v456
      %v458 = vpop.f32.mrf.mxu0
      %459 = vmatprep.mubr.f32.mxu0 0.0
      %460 = vmatmul.mubr.f32.gmra.mxu0 %v242
      %v461 = vpop.f32.mrf.mxu0
      %v462 = vadd.f32 0.0, %v461
      %v463 = vpop.f32.mrf.mxu0
      %464 = vdwg.mxu0
      %465 = vmatprep.subr.mxu0 0.0
      %466 = vmatpush1.msra.mxu0 %v214
      %467 = vmatprep.subr.mxu0 0.0
      %468 = vmatpush1.msra.mxu0 %v213
      %469 = vmatprep.subr.mxu0 0.0
      %470 = vmatpush1.msra.mxu0 %v212
      %471 = vmatprep.subr.mxu0 0.0
      %472 = vmatpush1.msra.mxu0 %v211
      %473 = vmatprep.subr.mxu0 0.0
      %474 = vmatpush1.msra.mxu0 %v210
      %475 = vmatprep.subr.mxu0 0.0
      %476 = vmatpush1.msra.mxu0 %v209
      %477 = vmatprep.subr.mxu0 0.0
      %478 = vmatpush1.msra.mxu0 %v208
      %479 = vmatprep.subr.mxu0 0.0
      %480 = vmatpush1.msra.mxu0 %v207
      %481 = vmatprep.subr.mxu0 0.0
      %482 = vmatpush1.msra.mxu0 %v206
      %483 = vmatprep.subr.mxu0 0.0
      %484 = vmatpush1.msra.mxu0 %v205
      %485 = vmatprep.subr.mxu0 0.0
      %486 = vmatpush1.msra.mxu0 %v204
      %487 = vmatprep.subr.mxu0 0.0
      %488 = vmatpush1.msra.mxu0 %v203
      %489 = vmatprep.subr.mxu0 0.0
      %490 = vmatpush1.msra.mxu0 %v202
      %491 = vmatprep.subr.mxu0 0.0
      %492 = vmatpush1.msra.mxu0 %v201
      %493 = vmatprep.subr.mxu0 0.0
      %494 = vmatpush1.msra.mxu0 %v200
      %495 = vmatprep.subr.mxu0 0.0
      %496 = vmatpush1.msra.mxu0 %v199
      %497 = vmatprep.subr.mxu0 0.0
      %498 = vmatpush2.msra.mxu0 0.0
      %499 = vmatprep.subr.mxu0 0.0
      %500 = vmatpush2.msra.mxu0 0.0
      %501 = vmatprep.subr.mxu0 0.0
      %502 = vmatpush2.msra.mxu0 0.0
      %503 = vmatprep.subr.mxu0 0.0
      %504 = vmatpush2.msra.mxu0 0.0
      %505 = vmatprep.subr.mxu0 0.0
      %506 = vmatpush2.msra.mxu0 0.0
      %507 = vmatprep.subr.mxu0 0.0
      %508 = vmatpush2.msra.mxu0 0.0
      %509 = vmatprep.subr.mxu0 0.0
      %510 = vmatpush2.msra.mxu0 0.0
      %511 = vmatprep.subr.mxu0 0.0
      %512 = vmatpush2.msra.mxu0 0.0
      %513 = vmatprep.subr.mxu0 0.0
      %514 = vmatpush2.msra.mxu0 0.0
      %515 = vmatprep.subr.mxu0 0.0
      %516 = vmatpush2.msra.mxu0 0.0
      %517 = vmatprep.subr.mxu0 0.0
      %518 = vmatpush2.msra.mxu0 0.0
      %519 = vmatprep.subr.mxu0 0.0
      %520 = vmatpush2.msra.mxu0 0.0
      %521 = vmatprep.subr.mxu0 0.0
      %522 = vmatpush2.msra.mxu0 0.0
      %523 = vmatprep.subr.mxu0 0.0
      %524 = vmatpush2.msra.mxu0 0.0
      %525 = vmatprep.subr.mxu0 0.0
      %526 = vmatpush2.msra.mxu0 0.0
      %527 = vmatprep.subr.mxu0 0.0
      %528 = vmatpush2.msra.mxu0 0.0
      %529 = vmatprep.mubr.f32.mxu0 0.0
      %530 = vmatmul.mubr.f32.gmra.mxu0 %v171
      %v531 = vpop.f32.mrf.mxu0
      %v532 = vadd.f32 %v327, %v531
      %v533 = vpop.f32.mrf.mxu0
      %534 = vmatprep.mubr.f32.mxu0 0.0
      %535 = vmatmul.mubr.f32.gmra.mxu0 %v172
      %v536 = vpop.f32.mrf.mxu0
      %v537 = vadd.f32 %v332, %v536
      %v538 = vpop.f32.mrf.mxu0
      %539 = vmatprep.mubr.f32.mxu0 0.0
      %540 = vmatmul.mubr.f32.gmra.mxu0 %v173
      %v541 = vpop.f32.mrf.mxu0
      %v542 = vadd.f32 %v337, %v541
      %v543 = vpop.f32.mrf.mxu0
      %544 = vmatprep.mubr.f32.mxu0 0.0
      %545 = vmatmul.mubr.f32.gmra.mxu0 %v174
      %v546 = vpop.f32.mrf.mxu0
      %v547 = vadd.f32 %v342, %v546
      %v548 = vpop.f32.mrf.mxu0
      %549 = vmatprep.mubr.f32.mxu0 0.0
      %550 = vmatmul.mubr.f32.gmra.mxu0 %v175
      %v551 = vpop.f32.mrf.mxu0
      %v552 = vadd.f32 %v347, %v551
      %v553 = vpop.f32.mrf.mxu0
      %554 = vmatprep.mubr.f32.mxu0 0.0
      %555 = vmatmul.mubr.f32.gmra.mxu0 %v176
      %v556 = vpop.f32.mrf.mxu0
      %v557 = vadd.f32 %v352, %v556
      %v558 = vpop.f32.mrf.mxu0
      %559 = vmatprep.mubr.f32.mxu0 0.0
      %560 = vmatmul.mubr.f32.gmra.mxu0 %v177
      %v561 = vpop.f32.mrf.mxu0
      %v562 = vadd.f32 %v357, %v561
      %v563 = vpop.f32.mrf.mxu0
      %564 = vmatprep.mubr.f32.mxu0 0.0
      %565 = vmatmul.mubr.f32.gmra.mxu0 %v178
      %v566 = vpop.f32.mrf.mxu0
      %v567 = vadd.f32 %v362, %v566
      %v568 = vpop.f32.mrf.mxu0
      %569 = vmatprep.mubr.f32.mxu0 0.0
      %570 = vmatmul.mubr.f32.gmra.mxu0 %v179
      %v571 = vpop.f32.mrf.mxu0
      %v572 = vadd.f32 %v367, %v571
      %v573 = vpop.f32.mrf.mxu0
      %574 = vmatprep.mubr.f32.mxu0 0.0
      %575 = vmatmul.mubr.f32.gmra.mxu0 %v180
      %v576 = vpop.f32.mrf.mxu0
      %v577 = vadd.f32 %v372, %v576
      %v578 = vpop.f32.mrf.mxu0
      %579 = vmatprep.mubr.f32.mxu0 0.0
      %580 = vmatmul.mubr.f32.gmra.mxu0 %v181
      %v581 = vpop.f32.mrf.mxu0
      %v582 = vadd.f32 %v377, %v581
      %v583 = vpop.f32.mrf.mxu0
      %584 = vmatprep.mubr.f32.mxu0 0.0
      %585 = vmatmul.mubr.f32.gmra.mxu0 %v182
      %v586 = vpop.f32.mrf.mxu0
      %v587 = vadd.f32 %v382, %v586
      %v588 = vpop.f32.mrf.mxu0
      %589 = vmatprep.mubr.f32.mxu0 0.0
      %590 = vmatmul.mubr.f32.gmra.mxu0 %v183
      %v591 = vpop.f32.mrf.mxu0
      %v592 = vadd.f32 %v387, %v591
      %v593 = vpop.f32.mrf.mxu0
      %594 = vmatprep.mubr.f32.mxu0 0.0
      %595 = vmatmul.mubr.f32.gmra.mxu0 %v184
      %v596 = vpop.f32.mrf.mxu0
      %v597 = vadd.f32 %v392, %v596
      %v598 = vpop.f32.mrf.mxu0
      %599 = vmatprep.mubr.f32.mxu0 0.0
      %600 = vmatmul.mubr.f32.gmra.mxu0 %v185
      %v601 = vpop.f32.mrf.mxu0
      %v602 = vadd.f32 %v397, %v601
      %v603 = vpop.f32.mrf.mxu0
      %604 = vmatprep.mubr.f32.mxu0 0.0
      %605 = vmatmul.mubr.f32.gmra.mxu0 %v186
      %v606 = vpop.f32.mrf.mxu0
      %v607 = vadd.f32 %v402, %v606
      %v608 = vpop.f32.mrf.mxu0
      %609 = vmatprep.mubr.f32.mxu0 0.0
      %610 = vmatmul.mubr.f32.gmra.mxu0 %v187
      %v611 = vpop.f32.mrf.mxu0
      %v612 = vadd.f32 %v407, %v611
      %v613 = vpop.f32.mrf.mxu0
      %614 = vmatprep.mubr.f32.mxu0 0.0
      %615 = vmatmul.mubr.f32.gmra.mxu0 %v188
      %v616 = vpop.f32.mrf.mxu0
      %v617 = vadd.f32 %v412, %v616
      %v618 = vpop.f32.mrf.mxu0
      %619 = vmatprep.mubr.f32.mxu0 0.0
      %620 = vmatmul.mubr.f32.gmra.mxu0 %v189
      %v621 = vpop.f32.mrf.mxu0
      %v622 = vadd.f32 %v417, %v621
      %v623 = vpop.f32.mrf.mxu0
      %624 = vmatprep.mubr.f32.mxu0 0.0
      %625 = vmatmul.mubr.f32.gmra.mxu0 %v190
      %v626 = vpop.f32.mrf.mxu0
      %v627 = vadd.f32 %v422, %v626
      %v628 = vpop.f32.mrf.mxu0
      %629 = vmatprep.mubr.f32.mxu0 0.0
      %630 = vmatmul.mubr.f32.gmra.mxu0 %v191
      %v631 = vpop.f32.mrf.mxu0
      %v632 = vadd.f32 %v427, %v631
      %v633 = vpop.f32.mrf.mxu0
      %634 = vmatprep.mubr.f32.mxu0 0.0
      %635 = vmatmul.mubr.f32.gmra.mxu0 %v192
      %v636 = vpop.f32.mrf.mxu0
      %v637 = vadd.f32 %v432, %v636
      %v638 = vpop.f32.mrf.mxu0
      %639 = vmatprep.mubr.f32.mxu0 0.0
      %640 = vmatmul.mubr.f32.gmra.mxu0 %v193
      %v641 = vpop.f32.mrf.mxu0
      %v642 = vadd.f32 %v437, %v641
      %v643 = vpop.f32.mrf.mxu0
      %644 = vmatprep.mubr.f32.mxu0 0.0
      %645 = vmatmul.mubr.f32.gmra.mxu0 %v194
      %v646 = vpop.f32.mrf.mxu0
      %v647 = vadd.f32 %v442, %v646
      %v648 = vpop.f32.mrf.mxu0
      %649 = vmatprep.mubr.f32.mxu0 0.0
      %650 = vmatmul.mubr.f32.gmra.mxu0 %v195
      %v651 = vpop.f32.mrf.mxu0
      %v652 = vadd.f32 %v447, %v651
      %v653 = vpop.f32.mrf.mxu0
      %654 = vmatprep.mubr.f32.mxu0 0.0
      %655 = vmatmul.mubr.f32.gmra.mxu0 %v196
      %v656 = vpop.f32.mrf.mxu0
      %v657 = vadd.f32 %v452, %v656
      %v658 = vpop.f32.mrf.mxu0
      %659 = vmatprep.mubr.f32.mxu0 0.0
      %660 = vmatmul.mubr.f32.gmra.mxu0 %v197
      %v661 = vpop.f32.mrf.mxu0
      %v662 = vadd.f32 %v457, %v661
      %v663 = vpop.f32.mrf.mxu0
      %664 = vmatprep.mubr.f32.mxu0 0.0
      %665 = vmatmul.mubr.f32.gmra.mxu0 %v198
      %v666 = vpop.f32.mrf.mxu0
      %v667 = vadd.f32 %v462, %v666
      %v668 = vpop.f32.mrf.mxu0
      %669 = vdwg.mxu0
      %v670 = vld [vmem:[%s165 + $0x2] sm:$0xff]
      %v671 = vld [vmem:[%s165 + $0xa] sm:$0xff]
      %v672 = vld [vmem:[%s165 + $0x12] sm:$0xff]
      %v673 = vld [vmem:[%s165 + $0x1a] sm:$0xff]
      %v674 = vld [vmem:[%s165 + $0x22] sm:$0xff]
      %v675 = vld [vmem:[%s165 + $0x2a] sm:$0xff]
      %v676 = vld [vmem:[%s165 + $0x32] sm:$0xff]
      %v677 = vld [vmem:[%s165 + $0x3a] sm:$0xff]
      %v678 = vld [vmem:[%s165 + $0x42] sm:$0xff]
      %v679 = vld [vmem:[%s165 + $0x4a] sm:$0xff]
      %v680 = vld [vmem:[%s165 + $0x52] sm:$0xff]
      %v681 = vld [vmem:[%s165 + $0x5a] sm:$0xff]
      %v682 = vld [vmem:[%s165 + $0x62] sm:$0xff]
      %v683 = vld [vmem:[%s165 + $0x6a] sm:$0xff]
      %v684 = vld [vmem:[%s165 + $0x72] sm:$0xff]
      %v685 = vld [vmem:[%s165 + $0x7a] sm:$0xff]
      %v686 = vld [vmem:[%s165 + $0x82] sm:$0xff]
      %v687 = vld [vmem:[%s165 + $0x8a] sm:$0xff]
      %v688 = vld [vmem:[%s165 + $0x92] sm:$0xff]
      %v689 = vld [vmem:[%s165 + $0x9a] sm:$0xff]
      %v690 = vld [vmem:[%s165 + $0xa2] sm:$0xff]
      %v691 = vld [vmem:[%s165 + $0xaa] sm:$0xff]
      %v692 = vld [vmem:[%s165 + $0xb2] sm:$0xff]
      %v693 = vld [vmem:[%s165 + $0xba] sm:$0xff]
      %v694 = vld [vmem:[%s165 + $0xc2] sm:$0xff]
      %v695 = vld [vmem:[%s165 + $0xca] sm:$0xff]
      %v696 = vld [vmem:[%s165 + $0xd2] sm:$0xff]
      %v697 = vld [vmem:[%s165 + $0xda] sm:$0xff]
      %s698 = scalar_lea.vmem %s1, 256
      %v699 = vld [vmem:[%s698] sm:$0xff]
      %v700 = vld [vmem:[%s698 + $0x8] sm:$0xff]
      %v701 = vld [vmem:[%s698 + $0x10] sm:$0xff]
      %v702 = vld [vmem:[%s698 + $0x18] sm:$0xff]
      %v703 = vld [vmem:[%s698 + $0x20] sm:$0xff]
      %v704 = vld [vmem:[%s698 + $0x28] sm:$0xff]
      %v705 = vld [vmem:[%s698 + $0x30] sm:$0xff]
      %v706 = vld [vmem:[%s698 + $0x38] sm:$0xff]
      %v707 = vld [vmem:[%s698 + $0x40] sm:$0xff]
      %v708 = vld [vmem:[%s698 + $0x48] sm:$0xff]
      %v709 = vld [vmem:[%s698 + $0x50] sm:$0xff]
      %v710 = vld [vmem:[%s698 + $0x58] sm:$0xff]
      %v711 = vld [vmem:[%s698 + $0x60] sm:$0xff]
      %v712 = vld [vmem:[%s698 + $0x68] sm:$0xff]
      %v713 = vld [vmem:[%s698 + $0x70] sm:$0xff]
      %v714 = vld [vmem:[%s698 + $0x78] sm:$0xff]
      %715 = vmatprep.subr.mxu0 0.0
      %716 = vmatpush1.msra.mxu0 %v714
      %717 = vmatprep.subr.mxu0 0.0
      %718 = vmatpush1.msra.mxu0 %v713
      %719 = vmatprep.subr.mxu0 0.0
      %720 = vmatpush1.msra.mxu0 %v712
      %721 = vmatprep.subr.mxu0 0.0
      %722 = vmatpush1.msra.mxu0 %v711
      %723 = vmatprep.subr.mxu0 0.0
      %724 = vmatpush1.msra.mxu0 %v710
      %725 = vmatprep.subr.mxu0 0.0
      %726 = vmatpush1.msra.mxu0 %v709
      %727 = vmatprep.subr.mxu0 0.0
      %728 = vmatpush1.msra.mxu0 %v708
      %729 = vmatprep.subr.mxu0 0.0
      %730 = vmatpush1.msra.mxu0 %v707
      %731 = vmatprep.subr.mxu0 0.0
      %732 = vmatpush1.msra.mxu0 %v706
      %733 = vmatprep.subr.mxu0 0.0
      %734 = vmatpush1.msra.mxu0 %v705
      %735 = vmatprep.subr.mxu0 0.0
      %736 = vmatpush1.msra.mxu0 %v704
      %737 = vmatprep.subr.mxu0 0.0
      %738 = vmatpush1.msra.mxu0 %v703
      %739 = vmatprep.subr.mxu0 0.0
      %740 = vmatpush1.msra.mxu0 %v702
      %741 = vmatprep.subr.mxu0 0.0
      %742 = vmatpush1.msra.mxu0 %v701
      %743 = vmatprep.subr.mxu0 0.0
      %744 = vmatpush1.msra.mxu0 %v700
      %745 = vmatprep.subr.mxu0 0.0
      %746 = vmatpush1.msra.mxu0 %v699
      %747 = vmatprep.subr.mxu0 0.0
      %748 = vmatpush2.msra.mxu0 0.0
      %749 = vmatprep.subr.mxu0 0.0
      %750 = vmatpush2.msra.mxu0 0.0
      %751 = vmatprep.subr.mxu0 0.0
      %752 = vmatpush2.msra.mxu0 0.0
      %753 = vmatprep.subr.mxu0 0.0
      %754 = vmatpush2.msra.mxu0 0.0
      %755 = vmatprep.subr.mxu0 0.0
      %756 = vmatpush2.msra.mxu0 0.0
      %757 = vmatprep.subr.mxu0 0.0
      %758 = vmatpush2.msra.mxu0 0.0
      %759 = vmatprep.subr.mxu0 0.0
      %760 = vmatpush2.msra.mxu0 0.0
      %761 = vmatprep.subr.mxu0 0.0
      %762 = vmatpush2.msra.mxu0 0.0
      %763 = vmatprep.subr.mxu0 0.0
      %764 = vmatpush2.msra.mxu0 0.0
      %765 = vmatprep.subr.mxu0 0.0
      %766 = vmatpush2.msra.mxu0 0.0
      %767 = vmatprep.subr.mxu0 0.0
      %768 = vmatpush2.msra.mxu0 0.0
      %769 = vmatprep.subr.mxu0 0.0
      %770 = vmatpush2.msra.mxu0 0.0
      %771 = vmatprep.subr.mxu0 0.0
      %772 = vmatpush2.msra.mxu0 0.0
      %773 = vmatprep.subr.mxu0 0.0
      %774 = vmatpush2.msra.mxu0 0.0
      %775 = vmatprep.subr.mxu0 0.0
      %776 = vmatpush2.msra.mxu0 0.0
      %777 = vmatprep.subr.mxu0 0.0
      %778 = vmatpush2.msra.mxu0 0.0
      %779 = vmatprep.mubr.f32.mxu0 0.0
      %780 = vmatmul.mubr.f32.gmra.mxu0 %v670
      %v781 = vpop.f32.mrf.mxu0
      %v782 = vadd.f32 0.0, %v781
      %v783 = vpop.f32.mrf.mxu0
      %784 = vmatprep.mubr.f32.mxu0 0.0
      %785 = vmatmul.mubr.f32.gmra.mxu0 %v671
      %v786 = vpop.f32.mrf.mxu0
      %v787 = vadd.f32 0.0, %v786
      %v788 = vpop.f32.mrf.mxu0
      %789 = vmatprep.mubr.f32.mxu0 0.0
      %790 = vmatmul.mubr.f32.gmra.mxu0 %v672
      %v791 = vpop.f32.mrf.mxu0
      %v792 = vadd.f32 0.0, %v791
      %v793 = vpop.f32.mrf.mxu0
      %794 = vmatprep.mubr.f32.mxu0 0.0
      %795 = vmatmul.mubr.f32.gmra.mxu0 %v673
      %v796 = vpop.f32.mrf.mxu0
      %v797 = vadd.f32 0.0, %v796
      %v798 = vpop.f32.mrf.mxu0
      %799 = vmatprep.mubr.f32.mxu0 0.0
      %800 = vmatmul.mubr.f32.gmra.mxu0 %v674
      %v801 = vpop.f32.mrf.mxu0
      %v802 = vadd.f32 0.0, %v801
      %v803 = vpop.f32.mrf.mxu0
      %804 = vmatprep.mubr.f32.mxu0 0.0
      %805 = vmatmul.mubr.f32.gmra.mxu0 %v675
      %v806 = vpop.f32.mrf.mxu0
      %v807 = vadd.f32 0.0, %v806
      %v808 = vpop.f32.mrf.mxu0
      %809 = vmatprep.mubr.f32.mxu0 0.0
      %810 = vmatmul.mubr.f32.gmra.mxu0 %v676
      %v811 = vpop.f32.mrf.mxu0
      %v812 = vadd.f32 0.0, %v811
      %v813 = vpop.f32.mrf.mxu0
      %814 = vmatprep.mubr.f32.mxu0 0.0
      %815 = vmatmul.mubr.f32.gmra.mxu0 %v677
      %v816 = vpop.f32.mrf.mxu0
      %v817 = vadd.f32 0.0, %v816
      %v818 = vpop.f32.mrf.mxu0
      %819 = vmatprep.mubr.f32.mxu0 0.0
      %820 = vmatmul.mubr.f32.gmra.mxu0 %v678
      %v821 = vpop.f32.mrf.mxu0
      %v822 = vadd.f32 0.0, %v821
      %v823 = vpop.f32.mrf.mxu0
      %824 = vmatprep.mubr.f32.mxu0 0.0
      %825 = vmatmul.mubr.f32.gmra.mxu0 %v679
      %v826 = vpop.f32.mrf.mxu0
      %v827 = vadd.f32 0.0, %v826
      %v828 = vpop.f32.mrf.mxu0
      %829 = vmatprep.mubr.f32.mxu0 0.0
      %830 = vmatmul.mubr.f32.gmra.mxu0 %v680
      %v831 = vpop.f32.mrf.mxu0
      %v832 = vadd.f32 0.0, %v831
      %v833 = vpop.f32.mrf.mxu0
      %834 = vmatprep.mubr.f32.mxu0 0.0
      %835 = vmatmul.mubr.f32.gmra.mxu0 %v681
      %v836 = vpop.f32.mrf.mxu0
      %v837 = vadd.f32 0.0, %v836
      %v838 = vpop.f32.mrf.mxu0
      %839 = vmatprep.mubr.f32.mxu0 0.0
      %840 = vmatmul.mubr.f32.gmra.mxu0 %v682
      %v841 = vpop.f32.mrf.mxu0
      %v842 = vadd.f32 0.0, %v841
      %v843 = vpop.f32.mrf.mxu0
      %844 = vmatprep.mubr.f32.mxu0 0.0
      %845 = vmatmul.mubr.f32.gmra.mxu0 %v683
      %v846 = vpop.f32.mrf.mxu0
      %v847 = vadd.f32 0.0, %v846
      %v848 = vpop.f32.mrf.mxu0
      %849 = vmatprep.mubr.f32.mxu0 0.0
      %850 = vmatmul.mubr.f32.gmra.mxu0 %v684
      %v851 = vpop.f32.mrf.mxu0
      %v852 = vadd.f32 0.0, %v851
      %v853 = vpop.f32.mrf.mxu0
      %854 = vmatprep.mubr.f32.mxu0 0.0
      %855 = vmatmul.mubr.f32.gmra.mxu0 %v685
      %v856 = vpop.f32.mrf.mxu0
      %v857 = vadd.f32 0.0, %v856
      %v858 = vpop.f32.mrf.mxu0
      %859 = vmatprep.mubr.f32.mxu0 0.0
      %860 = vmatmul.mubr.f32.gmra.mxu0 %v686
      %v861 = vpop.f32.mrf.mxu0
      %v862 = vadd.f32 0.0, %v861
      %v863 = vpop.f32.mrf.mxu0
      %864 = vmatprep.mubr.f32.mxu0 0.0
      %865 = vmatmul.mubr.f32.gmra.mxu0 %v687
      %v866 = vpop.f32.mrf.mxu0
      %v867 = vadd.f32 0.0, %v866
      %v868 = vpop.f32.mrf.mxu0
      %869 = vmatprep.mubr.f32.mxu0 0.0
      %870 = vmatmul.mubr.f32.gmra.mxu0 %v688
      %v871 = vpop.f32.mrf.mxu0
      %v872 = vadd.f32 0.0, %v871
      %v873 = vpop.f32.mrf.mxu0
      %874 = vmatprep.mubr.f32.mxu0 0.0
      %875 = vmatmul.mubr.f32.gmra.mxu0 %v689
      %v876 = vpop.f32.mrf.mxu0
      %v877 = vadd.f32 0.0, %v876
      %v878 = vpop.f32.mrf.mxu0
      %879 = vmatprep.mubr.f32.mxu0 0.0
      %880 = vmatmul.mubr.f32.gmra.mxu0 %v690
      %v881 = vpop.f32.mrf.mxu0
      %v882 = vadd.f32 0.0, %v881
      %v883 = vpop.f32.mrf.mxu0
      %884 = vmatprep.mubr.f32.mxu0 0.0
      %885 = vmatmul.mubr.f32.gmra.mxu0 %v691
      %v886 = vpop.f32.mrf.mxu0
      %v887 = vadd.f32 0.0, %v886
      %v888 = vpop.f32.mrf.mxu0
      %889 = vmatprep.mubr.f32.mxu0 0.0
      %890 = vmatmul.mubr.f32.gmra.mxu0 %v692
      %v891 = vpop.f32.mrf.mxu0
      %v892 = vadd.f32 0.0, %v891
      %v893 = vpop.f32.mrf.mxu0
      %894 = vmatprep.mubr.f32.mxu0 0.0
      %895 = vmatmul.mubr.f32.gmra.mxu0 %v693
      %v896 = vpop.f32.mrf.mxu0
      %v897 = vadd.f32 0.0, %v896
      %v898 = vpop.f32.mrf.mxu0
      %899 = vmatprep.mubr.f32.mxu0 0.0
      %900 = vmatmul.mubr.f32.gmra.mxu0 %v694
      %v901 = vpop.f32.mrf.mxu0
      %v902 = vadd.f32 0.0, %v901
      %v903 = vpop.f32.mrf.mxu0
      %904 = vmatprep.mubr.f32.mxu0 0.0
      %905 = vmatmul.mubr.f32.gmra.mxu0 %v695
      %v906 = vpop.f32.mrf.mxu0
      %v907 = vadd.f32 0.0, %v906
      %v908 = vpop.f32.mrf.mxu0
      %909 = vmatprep.mubr.f32.mxu0 0.0
      %910 = vmatmul.mubr.f32.gmra.mxu0 %v696
      %v911 = vpop.f32.mrf.mxu0
      %v912 = vadd.f32 0.0, %v911
      %v913 = vpop.f32.mrf.mxu0
      %914 = vmatprep.mubr.f32.mxu0 0.0
      %915 = vmatmul.mubr.f32.gmra.mxu0 %v697
      %v916 = vpop.f32.mrf.mxu0
      %v917 = vadd.f32 0.0, %v916
      %v918 = vpop.f32.mrf.mxu0
      %919 = vdwg.mxu0
      %v920 = vadd.f32 %v532, %v782
      %v921 = vadd.f32 %v537, %v787
      %v922 = vadd.f32 %v542, %v792
      %v923 = vadd.f32 %v547, %v797
      %v924 = vadd.f32 %v552, %v802
      %v925 = vadd.f32 %v557, %v807
      %v926 = vadd.f32 %v562, %v812
      %v927 = vadd.f32 %v567, %v817
      %v928 = vadd.f32 %v572, %v822
      %v929 = vadd.f32 %v577, %v827
      %v930 = vadd.f32 %v582, %v832
      %v931 = vadd.f32 %v587, %v837
      %v932 = vadd.f32 %v592, %v842
      %v933 = vadd.f32 %v597, %v847
      %v934 = vadd.f32 %v602, %v852
      %v935 = vadd.f32 %v607, %v857
      %v936 = vadd.f32 %v612, %v862
      %v937 = vadd.f32 %v617, %v867
      %v938 = vadd.f32 %v622, %v872
      %v939 = vadd.f32 %v627, %v877
      %v940 = vadd.f32 %v632, %v882
      %v941 = vadd.f32 %v637, %v887
      %v942 = vadd.f32 %v642, %v892
      %v943 = vadd.f32 %v647, %v897
      %v944 = vadd.f32 %v652, %v902
      %v945 = vadd.f32 %v657, %v907
      %v946 = vadd.f32 %v662, %v912
      %v947 = vadd.f32 %v667, %v917
      %v948 = vld [vmem:[%s165 + $0x10] sm:$0xff]
      %v949 = vld [vmem:[%s165 + $0x18] sm:$0xff]
      %v950 = vld [vmem:[%s165 + $0x20] sm:$0xff]
      %v951 = vld [vmem:[%s165 + $0x28] sm:$0xff]
      %v952 = vld [vmem:[%s165 + $0x30] sm:$0xff]
      %v953 = vld [vmem:[%s165 + $0x38] sm:$0xff]
      %v954 = vld [vmem:[%s165 + $0x40] sm:$0xff]
      %v955 = vld [vmem:[%s165 + $0x48] sm:$0xff]
      %v956 = vld [vmem:[%s165 + $0x50] sm:$0xff]
      %v957 = vld [vmem:[%s165 + $0x58] sm:$0xff]
      %v958 = vld [vmem:[%s165 + $0x60] sm:$0xff]
      %v959 = vld [vmem:[%s165 + $0x68] sm:$0xff]
      %v960 = vld [vmem:[%s165 + $0x70] sm:$0xff]
      %v961 = vld [vmem:[%s165 + $0x78] sm:$0xff]
      %v962 = vld [vmem:[%s165 + $0x80] sm:$0xff]
      %v963 = vld [vmem:[%s165 + $0x88] sm:$0xff]
      %v964 = vld [vmem:[%s165 + $0x90] sm:$0xff]
      %v965 = vld [vmem:[%s165 + $0x98] sm:$0xff]
      %v966 = vld [vmem:[%s165 + $0xa0] sm:$0xff]
      %v967 = vld [vmem:[%s165 + $0xa8] sm:$0xff]
      %v968 = vld [vmem:[%s165 + $0xb0] sm:$0xff]
      %v969 = vld [vmem:[%s165 + $0xb8] sm:$0xff]
      %v970 = vld [vmem:[%s165 + $0xc0] sm:$0xff]
      %v971 = vld [vmem:[%s165 + $0xc8] sm:$0xff]
      %v972 = vld [vmem:[%s165 + $0xd0] sm:$0xff]
      %v973 = vld [vmem:[%s165 + $0xd8] sm:$0xff]
      %v974 = vld [vmem:[%s165 + $0xe0] sm:$0xff]
      %v975 = vld [vmem:[%s165 + $0xe8] sm:$0xff]
      %s976 = scalar_lea.vmem %s1, 384
      %v977 = vld [vmem:[%s976] sm:$0xff]
      %v978 = vld [vmem:[%s976 + $0x8] sm:$0xff]
      %v979 = vld [vmem:[%s976 + $0x10] sm:$0xff]
      %v980 = vld [vmem:[%s976 + $0x18] sm:$0xff]
      %v981 = vld [vmem:[%s976 + $0x20] sm:$0xff]
      %v982 = vld [vmem:[%s976 + $0x28] sm:$0xff]
      %v983 = vld [vmem:[%s976 + $0x30] sm:$0xff]
      %v984 = vld [vmem:[%s976 + $0x38] sm:$0xff]
      %v985 = vld [vmem:[%s976 + $0x40] sm:$0xff]
      %v986 = vld [vmem:[%s976 + $0x48] sm:$0xff]
      %v987 = vld [vmem:[%s976 + $0x50] sm:$0xff]
      %v988 = vld [vmem:[%s976 + $0x58] sm:$0xff]
      %v989 = vld [vmem:[%s976 + $0x60] sm:$0xff]
      %v990 = vld [vmem:[%s976 + $0x68] sm:$0xff]
      %v991 = vld [vmem:[%s976 + $0x70] sm:$0xff]
      %v992 = vld [vmem:[%s976 + $0x78] sm:$0xff]
      %993 = vmatprep.subr.mxu0 0.0
      %994 = vmatpush1.msra.mxu0 %v992
      %995 = vmatprep.subr.mxu0 0.0
      %996 = vmatpush1.msra.mxu0 %v991
      %997 = vmatprep.subr.mxu0 0.0
      %998 = vmatpush1.msra.mxu0 %v990
      %999 = vmatprep.subr.mxu0 0.0
      %1000 = vmatpush1.msra.mxu0 %v989
      %1001 = vmatprep.subr.mxu0 0.0
      %1002 = vmatpush1.msra.mxu0 %v988
      %1003 = vmatprep.subr.mxu0 0.0
      %1004 = vmatpush1.msra.mxu0 %v987
      %1005 = vmatprep.subr.mxu0 0.0
      %1006 = vmatpush1.msra.mxu0 %v986
      %1007 = vmatprep.subr.mxu0 0.0
      %1008 = vmatpush1.msra.mxu0 %v985
      %1009 = vmatprep.subr.mxu0 0.0
      %1010 = vmatpush1.msra.mxu0 %v984
      %1011 = vmatprep.subr.mxu0 0.0
      %1012 = vmatpush1.msra.mxu0 %v983
      %1013 = vmatprep.subr.mxu0 0.0
      %1014 = vmatpush1.msra.mxu0 %v982
      %1015 = vmatprep.subr.mxu0 0.0
      %1016 = vmatpush1.msra.mxu0 %v981
      %1017 = vmatprep.subr.mxu0 0.0
      %1018 = vmatpush1.msra.mxu0 %v980
      %1019 = vmatprep.subr.mxu0 0.0
      %1020 = vmatpush1.msra.mxu0 %v979
      %1021 = vmatprep.subr.mxu0 0.0
      %1022 = vmatpush1.msra.mxu0 %v978
      %1023 = vmatprep.subr.mxu0 0.0
      %1024 = vmatpush1.msra.mxu0 %v977
      %1025 = vmatprep.subr.mxu0 0.0
      %1026 = vmatpush2.msra.mxu0 0.0
      %1027 = vmatprep.subr.mxu0 0.0
      %1028 = vmatpush2.msra.mxu0 0.0
      %1029 = vmatprep.subr.mxu0 0.0
      %1030 = vmatpush2.msra.mxu0 0.0
      %1031 = vmatprep.subr.mxu0 0.0
      %1032 = vmatpush2.msra.mxu0 0.0
      %1033 = vmatprep.subr.mxu0 0.0
      %1034 = vmatpush2.msra.mxu0 0.0
      %1035 = vmatprep.subr.mxu0 0.0
      %1036 = vmatpush2.msra.mxu0 0.0
      %1037 = vmatprep.subr.mxu0 0.0
      %1038 = vmatpush2.msra.mxu0 0.0
      %1039 = vmatprep.subr.mxu0 0.0
      %1040 = vmatpush2.msra.mxu0 0.0
      %1041 = vmatprep.subr.mxu0 0.0
      %1042 = vmatpush2.msra.mxu0 0.0
      %1043 = vmatprep.subr.mxu0 0.0
      %1044 = vmatpush2.msra.mxu0 0.0
      %1045 = vmatprep.subr.mxu0 0.0
      %1046 = vmatpush2.msra.mxu0 0.0
      %1047 = vmatprep.subr.mxu0 0.0
      %1048 = vmatpush2.msra.mxu0 0.0
      %1049 = vmatprep.subr.mxu0 0.0
      %1050 = vmatpush2.msra.mxu0 0.0
      %1051 = vmatprep.subr.mxu0 0.0
      %1052 = vmatpush2.msra.mxu0 0.0
      %1053 = vmatprep.subr.mxu0 0.0
      %1054 = vmatpush2.msra.mxu0 0.0
      %1055 = vmatprep.subr.mxu0 0.0
      %1056 = vmatpush2.msra.mxu0 0.0
      %1057 = vmatprep.mubr.f32.mxu0 0.0
      %1058 = vmatmul.mubr.f32.gmra.mxu0 %v948
      %v1059 = vpop.f32.mrf.mxu0
      %v1060 = vadd.f32 0.0, %v1059
      %v1061 = vpop.f32.mrf.mxu0
      %1062 = vmatprep.mubr.f32.mxu0 0.0
      %1063 = vmatmul.mubr.f32.gmra.mxu0 %v949
      %v1064 = vpop.f32.mrf.mxu0
      %v1065 = vadd.f32 0.0, %v1064
      %v1066 = vpop.f32.mrf.mxu0
      %1067 = vmatprep.mubr.f32.mxu0 0.0
      %1068 = vmatmul.mubr.f32.gmra.mxu0 %v950
      %v1069 = vpop.f32.mrf.mxu0
      %v1070 = vadd.f32 0.0, %v1069
      %v1071 = vpop.f32.mrf.mxu0
      %1072 = vmatprep.mubr.f32.mxu0 0.0
      %1073 = vmatmul.mubr.f32.gmra.mxu0 %v951
      %v1074 = vpop.f32.mrf.mxu0
      %v1075 = vadd.f32 0.0, %v1074
      %v1076 = vpop.f32.mrf.mxu0
      %1077 = vmatprep.mubr.f32.mxu0 0.0
      %1078 = vmatmul.mubr.f32.gmra.mxu0 %v952
      %v1079 = vpop.f32.mrf.mxu0
      %v1080 = vadd.f32 0.0, %v1079
      %v1081 = vpop.f32.mrf.mxu0
      %1082 = vmatprep.mubr.f32.mxu0 0.0
      %1083 = vmatmul.mubr.f32.gmra.mxu0 %v953
      %v1084 = vpop.f32.mrf.mxu0
      %v1085 = vadd.f32 0.0, %v1084
      %v1086 = vpop.f32.mrf.mxu0
      %1087 = vmatprep.mubr.f32.mxu0 0.0
      %1088 = vmatmul.mubr.f32.gmra.mxu0 %v954
      %v1089 = vpop.f32.mrf.mxu0
      %v1090 = vadd.f32 0.0, %v1089
      %v1091 = vpop.f32.mrf.mxu0
      %1092 = vmatprep.mubr.f32.mxu0 0.0
      %1093 = vmatmul.mubr.f32.gmra.mxu0 %v955
      %v1094 = vpop.f32.mrf.mxu0
      %v1095 = vadd.f32 0.0, %v1094
      %v1096 = vpop.f32.mrf.mxu0
      %1097 = vmatprep.mubr.f32.mxu0 0.0
      %1098 = vmatmul.mubr.f32.gmra.mxu0 %v956
      %v1099 = vpop.f32.mrf.mxu0
      %v1100 = vadd.f32 0.0, %v1099
      %v1101 = vpop.f32.mrf.mxu0
      %1102 = vmatprep.mubr.f32.mxu0 0.0
      %1103 = vmatmul.mubr.f32.gmra.mxu0 %v957
      %v1104 = vpop.f32.mrf.mxu0
      %v1105 = vadd.f32 0.0, %v1104
      %v1106 = vpop.f32.mrf.mxu0
      %1107 = vmatprep.mubr.f32.mxu0 0.0
      %1108 = vmatmul.mubr.f32.gmra.mxu0 %v958
      %v1109 = vpop.f32.mrf.mxu0
      %v1110 = vadd.f32 0.0, %v1109
      %v1111 = vpop.f32.mrf.mxu0
      %1112 = vmatprep.mubr.f32.mxu0 0.0
      %1113 = vmatmul.mubr.f32.gmra.mxu0 %v959
      %v1114 = vpop.f32.mrf.mxu0
      %v1115 = vadd.f32 0.0, %v1114
      %v1116 = vpop.f32.mrf.mxu0
      %1117 = vmatprep.mubr.f32.mxu0 0.0
      %1118 = vmatmul.mubr.f32.gmra.mxu0 %v960
      %v1119 = vpop.f32.mrf.mxu0
      %v1120 = vadd.f32 0.0, %v1119
      %v1121 = vpop.f32.mrf.mxu0
      %1122 = vmatprep.mubr.f32.mxu0 0.0
      %1123 = vmatmul.mubr.f32.gmra.mxu0 %v961
      %v1124 = vpop.f32.mrf.mxu0
      %v1125 = vadd.f32 0.0, %v1124
      %v1126 = vpop.f32.mrf.mxu0
      %1127 = vmatprep.mubr.f32.mxu0 0.0
      %1128 = vmatmul.mubr.f32.gmra.mxu0 %v962
      %v1129 = vpop.f32.mrf.mxu0
      %v1130 = vadd.f32 0.0, %v1129
      %v1131 = vpop.f32.mrf.mxu0
      %1132 = vmatprep.mubr.f32.mxu0 0.0
      %1133 = vmatmul.mubr.f32.gmra.mxu0 %v963
      %v1134 = vpop.f32.mrf.mxu0
      %v1135 = vadd.f32 0.0, %v1134
      %v1136 = vpop.f32.mrf.mxu0
      %1137 = vmatprep.mubr.f32.mxu0 0.0
      %1138 = vmatmul.mubr.f32.gmra.mxu0 %v964
      %v1139 = vpop.f32.mrf.mxu0
      %v1140 = vadd.f32 0.0, %v1139
      %v1141 = vpop.f32.mrf.mxu0
      %1142 = vmatprep.mubr.f32.mxu0 0.0
      %1143 = vmatmul.mubr.f32.gmra.mxu0 %v965
      %v1144 = vpop.f32.mrf.mxu0
      %v1145 = vadd.f32 0.0, %v1144
      %v1146 = vpop.f32.mrf.mxu0
      %1147 = vmatprep.mubr.f32.mxu0 0.0
      %1148 = vmatmul.mubr.f32.gmra.mxu0 %v966
      %v1149 = vpop.f32.mrf.mxu0
      %v1150 = vadd.f32 0.0, %v1149
      %v1151 = vpop.f32.mrf.mxu0
      %1152 = vmatprep.mubr.f32.mxu0 0.0
      %1153 = vmatmul.mubr.f32.gmra.mxu0 %v967
      %v1154 = vpop.f32.mrf.mxu0
      %v1155 = vadd.f32 0.0, %v1154
      %v1156 = vpop.f32.mrf.mxu0
      %1157 = vmatprep.mubr.f32.mxu0 0.0
      %1158 = vmatmul.mubr.f32.gmra.mxu0 %v968
      %v1159 = vpop.f32.mrf.mxu0
      %v1160 = vadd.f32 0.0, %v1159
      %v1161 = vpop.f32.mrf.mxu0
      %1162 = vmatprep.mubr.f32.mxu0 0.0
      %1163 = vmatmul.mubr.f32.gmra.mxu0 %v969
      %v1164 = vpop.f32.mrf.mxu0
      %v1165 = vadd.f32 0.0, %v1164
      %v1166 = vpop.f32.mrf.mxu0
      %1167 = vmatprep.mubr.f32.mxu0 0.0
      %1168 = vmatmul.mubr.f32.gmra.mxu0 %v970
      %v1169 = vpop.f32.mrf.mxu0
      %v1170 = vadd.f32 0.0, %v1169
      %v1171 = vpop.f32.mrf.mxu0
      %1172 = vmatprep.mubr.f32.mxu0 0.0
      %1173 = vmatmul.mubr.f32.gmra.mxu0 %v971
      %v1174 = vpop.f32.mrf.mxu0
      %v1175 = vadd.f32 0.0, %v1174
      %v1176 = vpop.f32.mrf.mxu0
      %1177 = vmatprep.mubr.f32.mxu0 0.0
      %1178 = vmatmul.mubr.f32.gmra.mxu0 %v972
      %v1179 = vpop.f32.mrf.mxu0
      %v1180 = vadd.f32 0.0, %v1179
      %v1181 = vpop.f32.mrf.mxu0
      %1182 = vmatprep.mubr.f32.mxu0 0.0
      %1183 = vmatmul.mubr.f32.gmra.mxu0 %v973
      %v1184 = vpop.f32.mrf.mxu0
      %v1185 = vadd.f32 0.0, %v1184
      %v1186 = vpop.f32.mrf.mxu0
      %1187 = vmatprep.mubr.f32.mxu0 0.0
      %1188 = vmatmul.mubr.f32.gmra.mxu0 %v974
      %v1189 = vpop.f32.mrf.mxu0
      %v1190 = vadd.f32 0.0, %v1189
      %v1191 = vpop.f32.mrf.mxu0
      %1192 = vmatprep.mubr.f32.mxu0 0.0
      %1193 = vmatmul.mubr.f32.gmra.mxu0 %v975
      %v1194 = vpop.f32.mrf.mxu0
      %v1195 = vadd.f32 0.0, %v1194
      %v1196 = vpop.f32.mrf.mxu0
      %1197 = vdwg.mxu0
      %v1198 = vadd.f32 %v920, %v1060
      %v1199 = vadd.f32 %v921, %v1065
      %v1200 = vadd.f32 %v922, %v1070
      %v1201 = vadd.f32 %v923, %v1075
      %v1202 = vadd.f32 %v924, %v1080
      %v1203 = vadd.f32 %v925, %v1085
      %v1204 = vadd.f32 %v926, %v1090
      %v1205 = vadd.f32 %v927, %v1095
      %v1206 = vadd.f32 %v928, %v1100
      %v1207 = vadd.f32 %v929, %v1105
      %v1208 = vadd.f32 %v930, %v1110
      %v1209 = vadd.f32 %v931, %v1115
      %v1210 = vadd.f32 %v932, %v1120
      %v1211 = vadd.f32 %v933, %v1125
      %v1212 = vadd.f32 %v934, %v1130
      %v1213 = vadd.f32 %v935, %v1135
      %v1214 = vadd.f32 %v936, %v1140
      %v1215 = vadd.f32 %v937, %v1145
      %v1216 = vadd.f32 %v938, %v1150
      %v1217 = vadd.f32 %v939, %v1155
      %v1218 = vadd.f32 %v940, %v1160
      %v1219 = vadd.f32 %v941, %v1165
      %v1220 = vadd.f32 %v942, %v1170
      %v1221 = vadd.f32 %v943, %v1175
      %v1222 = vadd.f32 %v944, %v1180
      %v1223 = vadd.f32 %v945, %v1185
      %v1224 = vadd.f32 %v946, %v1190
      %v1225 = vadd.f32 %v947, %v1195
      %v1226 = vld [vmem:[%s165 + $0x11] sm:$0xff]
      %v1227 = vld [vmem:[%s165 + $0x19] sm:$0xff]
      %v1228 = vld [vmem:[%s165 + $0x21] sm:$0xff]
      %v1229 = vld [vmem:[%s165 + $0x29] sm:$0xff]
      %v1230 = vld [vmem:[%s165 + $0x31] sm:$0xff]
      %v1231 = vld [vmem:[%s165 + $0x39] sm:$0xff]
      %v1232 = vld [vmem:[%s165 + $0x41] sm:$0xff]
      %v1233 = vld [vmem:[%s165 + $0x49] sm:$0xff]
      %v1234 = vld [vmem:[%s165 + $0x51] sm:$0xff]
      %v1235 = vld [vmem:[%s165 + $0x59] sm:$0xff]
      %v1236 = vld [vmem:[%s165 + $0x61] sm:$0xff]
      %v1237 = vld [vmem:[%s165 + $0x69] sm:$0xff]
      %v1238 = vld [vmem:[%s165 + $0x71] sm:$0xff]
      %v1239 = vld [vmem:[%s165 + $0x79] sm:$0xff]
      %v1240 = vld [vmem:[%s165 + $0x81] sm:$0xff]
      %v1241 = vld [vmem:[%s165 + $0x89] sm:$0xff]
      %v1242 = vld [vmem:[%s165 + $0x91] sm:$0xff]
      %v1243 = vld [vmem:[%s165 + $0x99] sm:$0xff]
      %v1244 = vld [vmem:[%s165 + $0xa1] sm:$0xff]
      %v1245 = vld [vmem:[%s165 + $0xa9] sm:$0xff]
      %v1246 = vld [vmem:[%s165 + $0xb1] sm:$0xff]
      %v1247 = vld [vmem:[%s165 + $0xb9] sm:$0xff]
      %v1248 = vld [vmem:[%s165 + $0xc1] sm:$0xff]
      %v1249 = vld [vmem:[%s165 + $0xc9] sm:$0xff]
      %v1250 = vld [vmem:[%s165 + $0xd1] sm:$0xff]
      %v1251 = vld [vmem:[%s165 + $0xd9] sm:$0xff]
      %v1252 = vld [vmem:[%s165 + $0xe1] sm:$0xff]
      %v1253 = vld [vmem:[%s165 + $0xe9] sm:$0xff]
      %s1254 = scalar_lea.vmem %s1, 512
      %v1255 = vld [vmem:[%s1254] sm:$0xff]
      %v1256 = vld [vmem:[%s1254 + $0x8] sm:$0xff]
      %v1257 = vld [vmem:[%s1254 + $0x10] sm:$0xff]
      %v1258 = vld [vmem:[%s1254 + $0x18] sm:$0xff]
      %v1259 = vld [vmem:[%s1254 + $0x20] sm:$0xff]
      %v1260 = vld [vmem:[%s1254 + $0x28] sm:$0xff]
      %v1261 = vld [vmem:[%s1254 + $0x30] sm:$0xff]
      %v1262 = vld [vmem:[%s1254 + $0x38] sm:$0xff]
      %v1263 = vld [vmem:[%s1254 + $0x40] sm:$0xff]
      %v1264 = vld [vmem:[%s1254 + $0x48] sm:$0xff]
      %v1265 = vld [vmem:[%s1254 + $0x50] sm:$0xff]
      %v1266 = vld [vmem:[%s1254 + $0x58] sm:$0xff]
      %v1267 = vld [vmem:[%s1254 + $0x60] sm:$0xff]
      %v1268 = vld [vmem:[%s1254 + $0x68] sm:$0xff]
      %v1269 = vld [vmem:[%s1254 + $0x70] sm:$0xff]
      %v1270 = vld [vmem:[%s1254 + $0x78] sm:$0xff]
      %1271 = vmatprep.subr.mxu0 0.0
      %1272 = vmatpush1.msra.mxu0 %v1270
      %1273 = vmatprep.subr.mxu0 0.0
      %1274 = vmatpush1.msra.mxu0 %v1269
      %1275 = vmatprep.subr.mxu0 0.0
      %1276 = vmatpush1.msra.mxu0 %v1268
      %1277 = vmatprep.subr.mxu0 0.0
      %1278 = vmatpush1.msra.mxu0 %v1267
      %1279 = vmatprep.subr.mxu0 0.0
      %1280 = vmatpush1.msra.mxu0 %v1266
      %1281 = vmatprep.subr.mxu0 0.0
      %1282 = vmatpush1.msra.mxu0 %v1265
      %1283 = vmatprep.subr.mxu0 0.0
      %1284 = vmatpush1.msra.mxu0 %v1264
      %1285 = vmatprep.subr.mxu0 0.0
      %1286 = vmatpush1.msra.mxu0 %v1263
      %1287 = vmatprep.subr.mxu0 0.0
      %1288 = vmatpush1.msra.mxu0 %v1262
      %1289 = vmatprep.subr.mxu0 0.0
      %1290 = vmatpush1.msra.mxu0 %v1261
      %1291 = vmatprep.subr.mxu0 0.0
      %1292 = vmatpush1.msra.mxu0 %v1260
      %1293 = vmatprep.subr.mxu0 0.0
      %1294 = vmatpush1.msra.mxu0 %v1259
      %1295 = vmatprep.subr.mxu0 0.0
      %1296 = vmatpush1.msra.mxu0 %v1258
      %1297 = vmatprep.subr.mxu0 0.0
      %1298 = vmatpush1.msra.mxu0 %v1257
      %1299 = vmatprep.subr.mxu0 0.0
      %1300 = vmatpush1.msra.mxu0 %v1256
      %1301 = vmatprep.subr.mxu0 0.0
      %1302 = vmatpush1.msra.mxu0 %v1255
      %1303 = vmatprep.subr.mxu0 0.0
      %1304 = vmatpush2.msra.mxu0 0.0
      %1305 = vmatprep.subr.mxu0 0.0
      %1306 = vmatpush2.msra.mxu0 0.0
      %1307 = vmatprep.subr.mxu0 0.0
      %1308 = vmatpush2.msra.mxu0 0.0
      %1309 = vmatprep.subr.mxu0 0.0
      %1310 = vmatpush2.msra.mxu0 0.0
      %1311 = vmatprep.subr.mxu0 0.0
      %1312 = vmatpush2.msra.mxu0 0.0
      %1313 = vmatprep.subr.mxu0 0.0
      %1314 = vmatpush2.msra.mxu0 0.0
      %1315 = vmatprep.subr.mxu0 0.0
      %1316 = vmatpush2.msra.mxu0 0.0
      %1317 = vmatprep.subr.mxu0 0.0
      %1318 = vmatpush2.msra.mxu0 0.0
      %1319 = vmatprep.subr.mxu0 0.0
      %1320 = vmatpush2.msra.mxu0 0.0
      %1321 = vmatprep.subr.mxu0 0.0
      %1322 = vmatpush2.msra.mxu0 0.0
      %1323 = vmatprep.subr.mxu0 0.0
      %1324 = vmatpush2.msra.mxu0 0.0
      %1325 = vmatprep.subr.mxu0 0.0
      %1326 = vmatpush2.msra.mxu0 0.0
      %1327 = vmatprep.subr.mxu0 0.0
      %1328 = vmatpush2.msra.mxu0 0.0
      %1329 = vmatprep.subr.mxu0 0.0
      %1330 = vmatpush2.msra.mxu0 0.0
      %1331 = vmatprep.subr.mxu0 0.0
      %1332 = vmatpush2.msra.mxu0 0.0
      %1333 = vmatprep.subr.mxu0 0.0
      %1334 = vmatpush2.msra.mxu0 0.0
      %1335 = vmatprep.mubr.f32.mxu0 0.0
      %1336 = vmatmul.mubr.f32.gmra.mxu0 %v1226
      %v1337 = vpop.f32.mrf.mxu0
      %v1338 = vadd.f32 0.0, %v1337
      %v1339 = vpop.f32.mrf.mxu0
      %1340 = vmatprep.mubr.f32.mxu0 0.0
      %1341 = vmatmul.mubr.f32.gmra.mxu0 %v1227
      %v1342 = vpop.f32.mrf.mxu0
      %v1343 = vadd.f32 0.0, %v1342
      %v1344 = vpop.f32.mrf.mxu0
      %1345 = vmatprep.mubr.f32.mxu0 0.0
      %1346 = vmatmul.mubr.f32.gmra.mxu0 %v1228
      %v1347 = vpop.f32.mrf.mxu0
      %v1348 = vadd.f32 0.0, %v1347
      %v1349 = vpop.f32.mrf.mxu0
      %1350 = vmatprep.mubr.f32.mxu0 0.0
      %1351 = vmatmul.mubr.f32.gmra.mxu0 %v1229
      %v1352 = vpop.f32.mrf.mxu0
      %v1353 = vadd.f32 0.0, %v1352
      %v1354 = vpop.f32.mrf.mxu0
      %1355 = vmatprep.mubr.f32.mxu0 0.0
      %1356 = vmatmul.mubr.f32.gmra.mxu0 %v1230
      %v1357 = vpop.f32.mrf.mxu0
      %v1358 = vadd.f32 0.0, %v1357
      %v1359 = vpop.f32.mrf.mxu0
      %1360 = vmatprep.mubr.f32.mxu0 0.0
      %1361 = vmatmul.mubr.f32.gmra.mxu0 %v1231
      %v1362 = vpop.f32.mrf.mxu0
      %v1363 = vadd.f32 0.0, %v1362
      %v1364 = vpop.f32.mrf.mxu0
      %1365 = vmatprep.mubr.f32.mxu0 0.0
      %1366 = vmatmul.mubr.f32.gmra.mxu0 %v1232
      %v1367 = vpop.f32.mrf.mxu0
      %v1368 = vadd.f32 0.0, %v1367
      %v1369 = vpop.f32.mrf.mxu0
      %1370 = vmatprep.mubr.f32.mxu0 0.0
      %1371 = vmatmul.mubr.f32.gmra.mxu0 %v1233
      %v1372 = vpop.f32.mrf.mxu0
      %v1373 = vadd.f32 0.0, %v1372
      %v1374 = vpop.f32.mrf.mxu0
      %1375 = vmatprep.mubr.f32.mxu0 0.0
      %1376 = vmatmul.mubr.f32.gmra.mxu0 %v1234
      %v1377 = vpop.f32.mrf.mxu0
      %v1378 = vadd.f32 0.0, %v1377
      %v1379 = vpop.f32.mrf.mxu0
      %1380 = vmatprep.mubr.f32.mxu0 0.0
      %1381 = vmatmul.mubr.f32.gmra.mxu0 %v1235
      %v1382 = vpop.f32.mrf.mxu0
      %v1383 = vadd.f32 0.0, %v1382
      %v1384 = vpop.f32.mrf.mxu0
      %1385 = vmatprep.mubr.f32.mxu0 0.0
      %1386 = vmatmul.mubr.f32.gmra.mxu0 %v1236
      %v1387 = vpop.f32.mrf.mxu0
      %v1388 = vadd.f32 0.0, %v1387
      %v1389 = vpop.f32.mrf.mxu0
      %1390 = vmatprep.mubr.f32.mxu0 0.0
      %1391 = vmatmul.mubr.f32.gmra.mxu0 %v1237
      %v1392 = vpop.f32.mrf.mxu0
      %v1393 = vadd.f32 0.0, %v1392
      %v1394 = vpop.f32.mrf.mxu0
      %1395 = vmatprep.mubr.f32.mxu0 0.0
      %1396 = vmatmul.mubr.f32.gmra.mxu0 %v1238
      %v1397 = vpop.f32.mrf.mxu0
      %v1398 = vadd.f32 0.0, %v1397
      %v1399 = vpop.f32.mrf.mxu0
      %1400 = vmatprep.mubr.f32.mxu0 0.0
      %1401 = vmatmul.mubr.f32.gmra.mxu0 %v1239
      %v1402 = vpop.f32.mrf.mxu0
      %v1403 = vadd.f32 0.0, %v1402
      %v1404 = vpop.f32.mrf.mxu0
      %1405 = vmatprep.mubr.f32.mxu0 0.0
      %1406 = vmatmul.mubr.f32.gmra.mxu0 %v1240
      %v1407 = vpop.f32.mrf.mxu0
      %v1408 = vadd.f32 0.0, %v1407
      %v1409 = vpop.f32.mrf.mxu0
      %1410 = vmatprep.mubr.f32.mxu0 0.0
      %1411 = vmatmul.mubr.f32.gmra.mxu0 %v1241
      %v1412 = vpop.f32.mrf.mxu0
      %v1413 = vadd.f32 0.0, %v1412
      %v1414 = vpop.f32.mrf.mxu0
      %1415 = vmatprep.mubr.f32.mxu0 0.0
      %1416 = vmatmul.mubr.f32.gmra.mxu0 %v1242
      %v1417 = vpop.f32.mrf.mxu0
      %v1418 = vadd.f32 0.0, %v1417
      %v1419 = vpop.f32.mrf.mxu0
      %1420 = vmatprep.mubr.f32.mxu0 0.0
      %1421 = vmatmul.mubr.f32.gmra.mxu0 %v1243
      %v1422 = vpop.f32.mrf.mxu0
      %v1423 = vadd.f32 0.0, %v1422
      %v1424 = vpop.f32.mrf.mxu0
      %1425 = vmatprep.mubr.f32.mxu0 0.0
      %1426 = vmatmul.mubr.f32.gmra.mxu0 %v1244
      %v1427 = vpop.f32.mrf.mxu0
      %v1428 = vadd.f32 0.0, %v1427
      %v1429 = vpop.f32.mrf.mxu0
      %1430 = vmatprep.mubr.f32.mxu0 0.0
      %1431 = vmatmul.mubr.f32.gmra.mxu0 %v1245
      %v1432 = vpop.f32.mrf.mxu0
      %v1433 = vadd.f32 0.0, %v1432
      %v1434 = vpop.f32.mrf.mxu0
      %1435 = vmatprep.mubr.f32.mxu0 0.0
      %1436 = vmatmul.mubr.f32.gmra.mxu0 %v1246
      %v1437 = vpop.f32.mrf.mxu0
      %v1438 = vadd.f32 0.0, %v1437
      %v1439 = vpop.f32.mrf.mxu0
      %1440 = vmatprep.mubr.f32.mxu0 0.0
      %1441 = vmatmul.mubr.f32.gmra.mxu0 %v1247
      %v1442 = vpop.f32.mrf.mxu0
      %v1443 = vadd.f32 0.0, %v1442
      %v1444 = vpop.f32.mrf.mxu0
      %1445 = vmatprep.mubr.f32.mxu0 0.0
      %1446 = vmatmul.mubr.f32.gmra.mxu0 %v1248
      %v1447 = vpop.f32.mrf.mxu0
      %v1448 = vadd.f32 0.0, %v1447
      %v1449 = vpop.f32.mrf.mxu0
      %1450 = vmatprep.mubr.f32.mxu0 0.0
      %1451 = vmatmul.mubr.f32.gmra.mxu0 %v1249
      %v1452 = vpop.f32.mrf.mxu0
      %v1453 = vadd.f32 0.0, %v1452
      %v1454 = vpop.f32.mrf.mxu0
      %1455 = vmatprep.mubr.f32.mxu0 0.0
      %1456 = vmatmul.mubr.f32.gmra.mxu0 %v1250
      %v1457 = vpop.f32.mrf.mxu0
      %v1458 = vadd.f32 0.0, %v1457
      %v1459 = vpop.f32.mrf.mxu0
      %1460 = vmatprep.mubr.f32.mxu0 0.0
      %1461 = vmatmul.mubr.f32.gmra.mxu0 %v1251
      %v1462 = vpop.f32.mrf.mxu0
      %v1463 = vadd.f32 0.0, %v1462
      %v1464 = vpop.f32.mrf.mxu0
      %1465 = vmatprep.mubr.f32.mxu0 0.0
      %1466 = vmatmul.mubr.f32.gmra.mxu0 %v1252
      %v1467 = vpop.f32.mrf.mxu0
      %v1468 = vadd.f32 0.0, %v1467
      %v1469 = vpop.f32.mrf.mxu0
      %1470 = vmatprep.mubr.f32.mxu0 0.0
      %1471 = vmatmul.mubr.f32.gmra.mxu0 %v1253
      %v1472 = vpop.f32.mrf.mxu0
      %v1473 = vadd.f32 0.0, %v1472
      %v1474 = vpop.f32.mrf.mxu0
      %1475 = vdwg.mxu0
      %v1476 = vadd.f32 %v1198, %v1338
      %v1477 = vadd.f32 %v1199, %v1343
      %v1478 = vadd.f32 %v1200, %v1348
      %v1479 = vadd.f32 %v1201, %v1353
      %v1480 = vadd.f32 %v1202, %v1358
      %v1481 = vadd.f32 %v1203, %v1363
      %v1482 = vadd.f32 %v1204, %v1368
      %v1483 = vadd.f32 %v1205, %v1373
      %v1484 = vadd.f32 %v1206, %v1378
      %v1485 = vadd.f32 %v1207, %v1383
      %v1486 = vadd.f32 %v1208, %v1388
      %v1487 = vadd.f32 %v1209, %v1393
      %v1488 = vadd.f32 %v1210, %v1398
      %v1489 = vadd.f32 %v1211, %v1403
      %v1490 = vadd.f32 %v1212, %v1408
      %v1491 = vadd.f32 %v1213, %v1413
      %v1492 = vadd.f32 %v1214, %v1418
      %v1493 = vadd.f32 %v1215, %v1423
      %v1494 = vadd.f32 %v1216, %v1428
      %v1495 = vadd.f32 %v1217, %v1433
      %v1496 = vadd.f32 %v1218, %v1438
      %v1497 = vadd.f32 %v1219, %v1443
      %v1498 = vadd.f32 %v1220, %v1448
      %v1499 = vadd.f32 %v1221, %v1453
      %v1500 = vadd.f32 %v1222, %v1458
      %v1501 = vadd.f32 %v1223, %v1463
      %v1502 = vadd.f32 %v1224, %v1468
      %v1503 = vadd.f32 %v1225, %v1473
      %v1504 = vld [vmem:[%s165 + $0x12] sm:$0xff]
      %v1505 = vld [vmem:[%s165 + $0x1a] sm:$0xff]
      %v1506 = vld [vmem:[%s165 + $0x22] sm:$0xff]
      %v1507 = vld [vmem:[%s165 + $0x2a] sm:$0xff]
      %v1508 = vld [vmem:[%s165 + $0x32] sm:$0xff]
      %v1509 = vld [vmem:[%s165 + $0x3a] sm:$0xff]
      %v1510 = vld [vmem:[%s165 + $0x42] sm:$0xff]
      %v1511 = vld [vmem:[%s165 + $0x4a] sm:$0xff]
      %v1512 = vld [vmem:[%s165 + $0x52] sm:$0xff]
      %v1513 = vld [vmem:[%s165 + $0x5a] sm:$0xff]
      %v1514 = vld [vmem:[%s165 + $0x62] sm:$0xff]
      %v1515 = vld [vmem:[%s165 + $0x6a] sm:$0xff]
      %v1516 = vld [vmem:[%s165 + $0x72] sm:$0xff]
      %v1517 = vld [vmem:[%s165 + $0x7a] sm:$0xff]
      %v1518 = vld [vmem:[%s165 + $0x82] sm:$0xff]
      %v1519 = vld [vmem:[%s165 + $0x8a] sm:$0xff]
      %v1520 = vld [vmem:[%s165 + $0x92] sm:$0xff]
      %v1521 = vld [vmem:[%s165 + $0x9a] sm:$0xff]
      %v1522 = vld [vmem:[%s165 + $0xa2] sm:$0xff]
      %v1523 = vld [vmem:[%s165 + $0xaa] sm:$0xff]
      %v1524 = vld [vmem:[%s165 + $0xb2] sm:$0xff]
      %v1525 = vld [vmem:[%s165 + $0xba] sm:$0xff]
      %v1526 = vld [vmem:[%s165 + $0xc2] sm:$0xff]
      %v1527 = vld [vmem:[%s165 + $0xca] sm:$0xff]
      %v1528 = vld [vmem:[%s165 + $0xd2] sm:$0xff]
      %v1529 = vld [vmem:[%s165 + $0xda] sm:$0xff]
      %v1530 = vld [vmem:[%s165 + $0xe2] sm:$0xff]
      %v1531 = vld [vmem:[%s165 + $0xea] sm:$0xff]
      %s1532 = scalar_lea.vmem %s1, 640
      %v1533 = vld [vmem:[%s1532] sm:$0xff]
      %v1534 = vld [vmem:[%s1532 + $0x8] sm:$0xff]
      %v1535 = vld [vmem:[%s1532 + $0x10] sm:$0xff]
      %v1536 = vld [vmem:[%s1532 + $0x18] sm:$0xff]
      %v1537 = vld [vmem:[%s1532 + $0x20] sm:$0xff]
      %v1538 = vld [vmem:[%s1532 + $0x28] sm:$0xff]
      %v1539 = vld [vmem:[%s1532 + $0x30] sm:$0xff]
      %v1540 = vld [vmem:[%s1532 + $0x38] sm:$0xff]
      %v1541 = vld [vmem:[%s1532 + $0x40] sm:$0xff]
      %v1542 = vld [vmem:[%s1532 + $0x48] sm:$0xff]
      %v1543 = vld [vmem:[%s1532 + $0x50] sm:$0xff]
      %v1544 = vld [vmem:[%s1532 + $0x58] sm:$0xff]
      %v1545 = vld [vmem:[%s1532 + $0x60] sm:$0xff]
      %v1546 = vld [vmem:[%s1532 + $0x68] sm:$0xff]
      %v1547 = vld [vmem:[%s1532 + $0x70] sm:$0xff]
      %v1548 = vld [vmem:[%s1532 + $0x78] sm:$0xff]
      %1549 = vmatprep.subr.mxu0 0.0
      %1550 = vmatpush1.msra.mxu0 %v1548
      %1551 = vmatprep.subr.mxu0 0.0
      %1552 = vmatpush1.msra.mxu0 %v1547
      %1553 = vmatprep.subr.mxu0 0.0
      %1554 = vmatpush1.msra.mxu0 %v1546
      %1555 = vmatprep.subr.mxu0 0.0
      %1556 = vmatpush1.msra.mxu0 %v1545
      %1557 = vmatprep.subr.mxu0 0.0
      %1558 = vmatpush1.msra.mxu0 %v1544
      %1559 = vmatprep.subr.mxu0 0.0
      %1560 = vmatpush1.msra.mxu0 %v1543
      %1561 = vmatprep.subr.mxu0 0.0
      %1562 = vmatpush1.msra.mxu0 %v1542
      %1563 = vmatprep.subr.mxu0 0.0
      %1564 = vmatpush1.msra.mxu0 %v1541
      %1565 = vmatprep.subr.mxu0 0.0
      %1566 = vmatpush1.msra.mxu0 %v1540
      %1567 = vmatprep.subr.mxu0 0.0
      %1568 = vmatpush1.msra.mxu0 %v1539
      %1569 = vmatprep.subr.mxu0 0.0
      %1570 = vmatpush1.msra.mxu0 %v1538
      %1571 = vmatprep.subr.mxu0 0.0
      %1572 = vmatpush1.msra.mxu0 %v1537
      %1573 = vmatprep.subr.mxu0 0.0
      %1574 = vmatpush1.msra.mxu0 %v1536
      %1575 = vmatprep.subr.mxu0 0.0
      %1576 = vmatpush1.msra.mxu0 %v1535
      %1577 = vmatprep.subr.mxu0 0.0
      %1578 = vmatpush1.msra.mxu0 %v1534
      %1579 = vmatprep.subr.mxu0 0.0
      %1580 = vmatpush1.msra.mxu0 %v1533
      %1581 = vmatprep.subr.mxu0 0.0
      %1582 = vmatpush2.msra.mxu0 0.0
      %1583 = vmatprep.subr.mxu0 0.0
      %1584 = vmatpush2.msra.mxu0 0.0
      %1585 = vmatprep.subr.mxu0 0.0
      %1586 = vmatpush2.msra.mxu0 0.0
      %1587 = vmatprep.subr.mxu0 0.0
      %1588 = vmatpush2.msra.mxu0 0.0
      %1589 = vmatprep.subr.mxu0 0.0
      %1590 = vmatpush2.msra.mxu0 0.0
      %1591 = vmatprep.subr.mxu0 0.0
      %1592 = vmatpush2.msra.mxu0 0.0
      %1593 = vmatprep.subr.mxu0 0.0
      %1594 = vmatpush2.msra.mxu0 0.0
      %1595 = vmatprep.subr.mxu0 0.0
      %1596 = vmatpush2.msra.mxu0 0.0
      %1597 = vmatprep.subr.mxu0 0.0
      %1598 = vmatpush2.msra.mxu0 0.0
      %1599 = vmatprep.subr.mxu0 0.0
      %1600 = vmatpush2.msra.mxu0 0.0
      %1601 = vmatprep.subr.mxu0 0.0
      %1602 = vmatpush2.msra.mxu0 0.0
      %1603 = vmatprep.subr.mxu0 0.0
      %1604 = vmatpush2.msra.mxu0 0.0
      %1605 = vmatprep.subr.mxu0 0.0
      %1606 = vmatpush2.msra.mxu0 0.0
      %1607 = vmatprep.subr.mxu0 0.0
      %1608 = vmatpush2.msra.mxu0 0.0
      %1609 = vmatprep.subr.mxu0 0.0
      %1610 = vmatpush2.msra.mxu0 0.0
      %1611 = vmatprep.subr.mxu0 0.0
      %1612 = vmatpush2.msra.mxu0 0.0
      %1613 = vmatprep.mubr.f32.mxu0 0.0
      %1614 = vmatmul.mubr.f32.gmra.mxu0 %v1504
      %v1615 = vpop.f32.mrf.mxu0
      %v1616 = vadd.f32 0.0, %v1615
      %v1617 = vpop.f32.mrf.mxu0
      %1618 = vmatprep.mubr.f32.mxu0 0.0
      %1619 = vmatmul.mubr.f32.gmra.mxu0 %v1505
      %v1620 = vpop.f32.mrf.mxu0
      %v1621 = vadd.f32 0.0, %v1620
      %v1622 = vpop.f32.mrf.mxu0
      %1623 = vmatprep.mubr.f32.mxu0 0.0
      %1624 = vmatmul.mubr.f32.gmra.mxu0 %v1506
      %v1625 = vpop.f32.mrf.mxu0
      %v1626 = vadd.f32 0.0, %v1625
      %v1627 = vpop.f32.mrf.mxu0
      %1628 = vmatprep.mubr.f32.mxu0 0.0
      %1629 = vmatmul.mubr.f32.gmra.mxu0 %v1507
      %v1630 = vpop.f32.mrf.mxu0
      %v1631 = vadd.f32 0.0, %v1630
      %v1632 = vpop.f32.mrf.mxu0
      %1633 = vmatprep.mubr.f32.mxu0 0.0
      %1634 = vmatmul.mubr.f32.gmra.mxu0 %v1508
      %v1635 = vpop.f32.mrf.mxu0
      %v1636 = vadd.f32 0.0, %v1635
      %v1637 = vpop.f32.mrf.mxu0
      %1638 = vmatprep.mubr.f32.mxu0 0.0
      %1639 = vmatmul.mubr.f32.gmra.mxu0 %v1509
      %v1640 = vpop.f32.mrf.mxu0
      %v1641 = vadd.f32 0.0, %v1640
      %v1642 = vpop.f32.mrf.mxu0
      %1643 = vmatprep.mubr.f32.mxu0 0.0
      %1644 = vmatmul.mubr.f32.gmra.mxu0 %v1510
      %v1645 = vpop.f32.mrf.mxu0
      %v1646 = vadd.f32 0.0, %v1645
      %v1647 = vpop.f32.mrf.mxu0
      %1648 = vmatprep.mubr.f32.mxu0 0.0
      %1649 = vmatmul.mubr.f32.gmra.mxu0 %v1511
      %v1650 = vpop.f32.mrf.mxu0
      %v1651 = vadd.f32 0.0, %v1650
      %v1652 = vpop.f32.mrf.mxu0
      %1653 = vmatprep.mubr.f32.mxu0 0.0
      %1654 = vmatmul.mubr.f32.gmra.mxu0 %v1512
      %v1655 = vpop.f32.mrf.mxu0
      %v1656 = vadd.f32 0.0, %v1655
      %v1657 = vpop.f32.mrf.mxu0
      %1658 = vmatprep.mubr.f32.mxu0 0.0
      %1659 = vmatmul.mubr.f32.gmra.mxu0 %v1513
      %v1660 = vpop.f32.mrf.mxu0
      %v1661 = vadd.f32 0.0, %v1660
      %v1662 = vpop.f32.mrf.mxu0
      %1663 = vmatprep.mubr.f32.mxu0 0.0
      %1664 = vmatmul.mubr.f32.gmra.mxu0 %v1514
      %v1665 = vpop.f32.mrf.mxu0
      %v1666 = vadd.f32 0.0, %v1665
      %v1667 = vpop.f32.mrf.mxu0
      %1668 = vmatprep.mubr.f32.mxu0 0.0
      %1669 = vmatmul.mubr.f32.gmra.mxu0 %v1515
      %v1670 = vpop.f32.mrf.mxu0
      %v1671 = vadd.f32 0.0, %v1670
      %v1672 = vpop.f32.mrf.mxu0
      %1673 = vmatprep.mubr.f32.mxu0 0.0
      %1674 = vmatmul.mubr.f32.gmra.mxu0 %v1516
      %v1675 = vpop.f32.mrf.mxu0
      %v1676 = vadd.f32 0.0, %v1675
      %v1677 = vpop.f32.mrf.mxu0
      %1678 = vmatprep.mubr.f32.mxu0 0.0
      %1679 = vmatmul.mubr.f32.gmra.mxu0 %v1517
      %v1680 = vpop.f32.mrf.mxu0
      %v1681 = vadd.f32 0.0, %v1680
      %v1682 = vpop.f32.mrf.mxu0
      %1683 = vmatprep.mubr.f32.mxu0 0.0
      %1684 = vmatmul.mubr.f32.gmra.mxu0 %v1518
      %v1685 = vpop.f32.mrf.mxu0
      %v1686 = vadd.f32 0.0, %v1685
      %v1687 = vpop.f32.mrf.mxu0
      %1688 = vmatprep.mubr.f32.mxu0 0.0
      %1689 = vmatmul.mubr.f32.gmra.mxu0 %v1519
      %v1690 = vpop.f32.mrf.mxu0
      %v1691 = vadd.f32 0.0, %v1690
      %v1692 = vpop.f32.mrf.mxu0
      %1693 = vmatprep.mubr.f32.mxu0 0.0
      %1694 = vmatmul.mubr.f32.gmra.mxu0 %v1520
      %v1695 = vpop.f32.mrf.mxu0
      %v1696 = vadd.f32 0.0, %v1695
      %v1697 = vpop.f32.mrf.mxu0
      %1698 = vmatprep.mubr.f32.mxu0 0.0
      %1699 = vmatmul.mubr.f32.gmra.mxu0 %v1521
      %v1700 = vpop.f32.mrf.mxu0
      %v1701 = vadd.f32 0.0, %v1700
      %v1702 = vpop.f32.mrf.mxu0
      %1703 = vmatprep.mubr.f32.mxu0 0.0
      %1704 = vmatmul.mubr.f32.gmra.mxu0 %v1522
      %v1705 = vpop.f32.mrf.mxu0
      %v1706 = vadd.f32 0.0, %v1705
      %v1707 = vpop.f32.mrf.mxu0
      %1708 = vmatprep.mubr.f32.mxu0 0.0
      %1709 = vmatmul.mubr.f32.gmra.mxu0 %v1523
      %v1710 = vpop.f32.mrf.mxu0
      %v1711 = vadd.f32 0.0, %v1710
      %v1712 = vpop.f32.mrf.mxu0
      %1713 = vmatprep.mubr.f32.mxu0 0.0
      %1714 = vmatmul.mubr.f32.gmra.mxu0 %v1524
      %v1715 = vpop.f32.mrf.mxu0
      %v1716 = vadd.f32 0.0, %v1715
      %v1717 = vpop.f32.mrf.mxu0
      %1718 = vmatprep.mubr.f32.mxu0 0.0
      %1719 = vmatmul.mubr.f32.gmra.mxu0 %v1525
      %v1720 = vpop.f32.mrf.mxu0
      %v1721 = vadd.f32 0.0, %v1720
      %v1722 = vpop.f32.mrf.mxu0
      %1723 = vmatprep.mubr.f32.mxu0 0.0
      %1724 = vmatmul.mubr.f32.gmra.mxu0 %v1526
      %v1725 = vpop.f32.mrf.mxu0
      %v1726 = vadd.f32 0.0, %v1725
      %v1727 = vpop.f32.mrf.mxu0
      %1728 = vmatprep.mubr.f32.mxu0 0.0
      %1729 = vmatmul.mubr.f32.gmra.mxu0 %v1527
      %v1730 = vpop.f32.mrf.mxu0
      %v1731 = vadd.f32 0.0, %v1730
      %v1732 = vpop.f32.mrf.mxu0
      %1733 = vmatprep.mubr.f32.mxu0 0.0
      %1734 = vmatmul.mubr.f32.gmra.mxu0 %v1528
      %v1735 = vpop.f32.mrf.mxu0
      %v1736 = vadd.f32 0.0, %v1735
      %v1737 = vpop.f32.mrf.mxu0
      %1738 = vmatprep.mubr.f32.mxu0 0.0
      %1739 = vmatmul.mubr.f32.gmra.mxu0 %v1529
      %v1740 = vpop.f32.mrf.mxu0
      %v1741 = vadd.f32 0.0, %v1740
      %v1742 = vpop.f32.mrf.mxu0
      %1743 = vmatprep.mubr.f32.mxu0 0.0
      %1744 = vmatmul.mubr.f32.gmra.mxu0 %v1530
      %v1745 = vpop.f32.mrf.mxu0
      %v1746 = vadd.f32 0.0, %v1745
      %v1747 = vpop.f32.mrf.mxu0
      %1748 = vmatprep.mubr.f32.mxu0 0.0
      %1749 = vmatmul.mubr.f32.gmra.mxu0 %v1531
      %v1750 = vpop.f32.mrf.mxu0
      %v1751 = vadd.f32 0.0, %v1750
      %v1752 = vpop.f32.mrf.mxu0
      %1753 = vdwg.mxu0
      %v1754 = vadd.f32 %v1476, %v1616
      %v1755 = vadd.f32 %v1477, %v1621
      %v1756 = vadd.f32 %v1478, %v1626
      %v1757 = vadd.f32 %v1479, %v1631
      %v1758 = vadd.f32 %v1480, %v1636
      %v1759 = vadd.f32 %v1481, %v1641
      %v1760 = vadd.f32 %v1482, %v1646
      %v1761 = vadd.f32 %v1483, %v1651
      %v1762 = vadd.f32 %v1484, %v1656
      %v1763 = vadd.f32 %v1485, %v1661
      %v1764 = vadd.f32 %v1486, %v1666
      %v1765 = vadd.f32 %v1487, %v1671
      %v1766 = vadd.f32 %v1488, %v1676
      %v1767 = vadd.f32 %v1489, %v1681
      %v1768 = vadd.f32 %v1490, %v1686
      %v1769 = vadd.f32 %v1491, %v1691
      %v1770 = vadd.f32 %v1492, %v1696
      %v1771 = vadd.f32 %v1493, %v1701
      %v1772 = vadd.f32 %v1494, %v1706
      %v1773 = vadd.f32 %v1495, %v1711
      %v1774 = vadd.f32 %v1496, %v1716
      %v1775 = vadd.f32 %v1497, %v1721
      %v1776 = vadd.f32 %v1498, %v1726
      %v1777 = vadd.f32 %v1499, %v1731
      %v1778 = vadd.f32 %v1500, %v1736
      %v1779 = vadd.f32 %v1501, %v1741
      %v1780 = vadd.f32 %v1502, %v1746
      %v1781 = vadd.f32 %v1503, %v1751
      %v1782 = vld [vmem:[%s165 + $0x20] sm:$0xff]
      %v1783 = vld [vmem:[%s165 + $0x28] sm:$0xff]
      %v1784 = vld [vmem:[%s165 + $0x30] sm:$0xff]
      %v1785 = vld [vmem:[%s165 + $0x38] sm:$0xff]
      %v1786 = vld [vmem:[%s165 + $0x40] sm:$0xff]
      %v1787 = vld [vmem:[%s165 + $0x48] sm:$0xff]
      %v1788 = vld [vmem:[%s165 + $0x50] sm:$0xff]
      %v1789 = vld [vmem:[%s165 + $0x58] sm:$0xff]
      %v1790 = vld [vmem:[%s165 + $0x60] sm:$0xff]
      %v1791 = vld [vmem:[%s165 + $0x68] sm:$0xff]
      %v1792 = vld [vmem:[%s165 + $0x70] sm:$0xff]
      %v1793 = vld [vmem:[%s165 + $0x78] sm:$0xff]
      %v1794 = vld [vmem:[%s165 + $0x80] sm:$0xff]
      %v1795 = vld [vmem:[%s165 + $0x88] sm:$0xff]
      %v1796 = vld [vmem:[%s165 + $0x90] sm:$0xff]
      %v1797 = vld [vmem:[%s165 + $0x98] sm:$0xff]
      %v1798 = vld [vmem:[%s165 + $0xa0] sm:$0xff]
      %v1799 = vld [vmem:[%s165 + $0xa8] sm:$0xff]
      %v1800 = vld [vmem:[%s165 + $0xb0] sm:$0xff]
      %v1801 = vld [vmem:[%s165 + $0xb8] sm:$0xff]
      %v1802 = vld [vmem:[%s165 + $0xc0] sm:$0xff]
      %v1803 = vld [vmem:[%s165 + $0xc8] sm:$0xff]
      %v1804 = vld [vmem:[%s165 + $0xd0] sm:$0xff]
      %v1805 = vld [vmem:[%s165 + $0xd8] sm:$0xff]
      %v1806 = vld [vmem:[%s165 + $0xe0] sm:$0xff]
      %v1807 = vld [vmem:[%s165 + $0xe8] sm:$0xff]
      %v1808 = vld [vmem:[%s165 + $0xf0] sm:$0xff]
      %v1809 = vld [vmem:[%s165 + $0xf8] sm:$0xff]
      %s1810 = scalar_lea.vmem %s1, 768
      %v1811 = vld [vmem:[%s1810] sm:$0xff]
      %v1812 = vld [vmem:[%s1810 + $0x8] sm:$0xff]
      %v1813 = vld [vmem:[%s1810 + $0x10] sm:$0xff]
      %v1814 = vld [vmem:[%s1810 + $0x18] sm:$0xff]
      %v1815 = vld [vmem:[%s1810 + $0x20] sm:$0xff]
      %v1816 = vld [vmem:[%s1810 + $0x28] sm:$0xff]
      %v1817 = vld [vmem:[%s1810 + $0x30] sm:$0xff]
      %v1818 = vld [vmem:[%s1810 + $0x38] sm:$0xff]
      %v1819 = vld [vmem:[%s1810 + $0x40] sm:$0xff]
      %v1820 = vld [vmem:[%s1810 + $0x48] sm:$0xff]
      %v1821 = vld [vmem:[%s1810 + $0x50] sm:$0xff]
      %v1822 = vld [vmem:[%s1810 + $0x58] sm:$0xff]
      %v1823 = vld [vmem:[%s1810 + $0x60] sm:$0xff]
      %v1824 = vld [vmem:[%s1810 + $0x68] sm:$0xff]
      %v1825 = vld [vmem:[%s1810 + $0x70] sm:$0xff]
      %v1826 = vld [vmem:[%s1810 + $0x78] sm:$0xff]
      %1827 = vmatprep.subr.mxu0 0.0
      %1828 = vmatpush1.msra.mxu0 %v1826
      %1829 = vmatprep.subr.mxu0 0.0
      %1830 = vmatpush1.msra.mxu0 %v1825
      %1831 = vmatprep.subr.mxu0 0.0
      %1832 = vmatpush1.msra.mxu0 %v1824
      %1833 = vmatprep.subr.mxu0 0.0
      %1834 = vmatpush1.msra.mxu0 %v1823
      %1835 = vmatprep.subr.mxu0 0.0
      %1836 = vmatpush1.msra.mxu0 %v1822
      %1837 = vmatprep.subr.mxu0 0.0
      %1838 = vmatpush1.msra.mxu0 %v1821
      %1839 = vmatprep.subr.mxu0 0.0
      %1840 = vmatpush1.msra.mxu0 %v1820
      %1841 = vmatprep.subr.mxu0 0.0
      %1842 = vmatpush1.msra.mxu0 %v1819
      %1843 = vmatprep.subr.mxu0 0.0
      %1844 = vmatpush1.msra.mxu0 %v1818
      %1845 = vmatprep.subr.mxu0 0.0
      %1846 = vmatpush1.msra.mxu0 %v1817
      %1847 = vmatprep.subr.mxu0 0.0
      %1848 = vmatpush1.msra.mxu0 %v1816
      %1849 = vmatprep.subr.mxu0 0.0
      %1850 = vmatpush1.msra.mxu0 %v1815
      %1851 = vmatprep.subr.mxu0 0.0
      %1852 = vmatpush1.msra.mxu0 %v1814
      %1853 = vmatprep.subr.mxu0 0.0
      %1854 = vmatpush1.msra.mxu0 %v1813
      %1855 = vmatprep.subr.mxu0 0.0
      %1856 = vmatpush1.msra.mxu0 %v1812
      %1857 = vmatprep.subr.mxu0 0.0
      %1858 = vmatpush1.msra.mxu0 %v1811
      %1859 = vmatprep.subr.mxu0 0.0
      %1860 = vmatpush2.msra.mxu0 0.0
      %1861 = vmatprep.subr.mxu0 0.0
      %1862 = vmatpush2.msra.mxu0 0.0
      %1863 = vmatprep.subr.mxu0 0.0
      %1864 = vmatpush2.msra.mxu0 0.0
      %1865 = vmatprep.subr.mxu0 0.0
      %1866 = vmatpush2.msra.mxu0 0.0
      %1867 = vmatprep.subr.mxu0 0.0
      %1868 = vmatpush2.msra.mxu0 0.0
      %1869 = vmatprep.subr.mxu0 0.0
      %1870 = vmatpush2.msra.mxu0 0.0
      %1871 = vmatprep.subr.mxu0 0.0
      %1872 = vmatpush2.msra.mxu0 0.0
      %1873 = vmatprep.subr.mxu0 0.0
      %1874 = vmatpush2.msra.mxu0 0.0
      %1875 = vmatprep.subr.mxu0 0.0
      %1876 = vmatpush2.msra.mxu0 0.0
      %1877 = vmatprep.subr.mxu0 0.0
      %1878 = vmatpush2.msra.mxu0 0.0
      %1879 = vmatprep.subr.mxu0 0.0
      %1880 = vmatpush2.msra.mxu0 0.0
      %1881 = vmatprep.subr.mxu0 0.0
      %1882 = vmatpush2.msra.mxu0 0.0
      %1883 = vmatprep.subr.mxu0 0.0
      %1884 = vmatpush2.msra.mxu0 0.0
      %1885 = vmatprep.subr.mxu0 0.0
      %1886 = vmatpush2.msra.mxu0 0.0
      %1887 = vmatprep.subr.mxu0 0.0
      %1888 = vmatpush2.msra.mxu0 0.0
      %1889 = vmatprep.subr.mxu0 0.0
      %1890 = vmatpush2.msra.mxu0 0.0
      %1891 = vmatprep.mubr.f32.mxu0 0.0
      %1892 = vmatmul.mubr.f32.gmra.mxu0 %v1782
      %v1893 = vpop.f32.mrf.mxu0
      %v1894 = vadd.f32 0.0, %v1893
      %v1895 = vpop.f32.mrf.mxu0
      %1896 = vmatprep.mubr.f32.mxu0 0.0
      %1897 = vmatmul.mubr.f32.gmra.mxu0 %v1783
      %v1898 = vpop.f32.mrf.mxu0
      %v1899 = vadd.f32 0.0, %v1898
      %v1900 = vpop.f32.mrf.mxu0
      %1901 = vmatprep.mubr.f32.mxu0 0.0
      %1902 = vmatmul.mubr.f32.gmra.mxu0 %v1784
      %v1903 = vpop.f32.mrf.mxu0
      %v1904 = vadd.f32 0.0, %v1903
      %v1905 = vpop.f32.mrf.mxu0
      %1906 = vmatprep.mubr.f32.mxu0 0.0
      %1907 = vmatmul.mubr.f32.gmra.mxu0 %v1785
      %v1908 = vpop.f32.mrf.mxu0
      %v1909 = vadd.f32 0.0, %v1908
      %v1910 = vpop.f32.mrf.mxu0
      %1911 = vmatprep.mubr.f32.mxu0 0.0
      %1912 = vmatmul.mubr.f32.gmra.mxu0 %v1786
      %v1913 = vpop.f32.mrf.mxu0
      %v1914 = vadd.f32 0.0, %v1913
      %v1915 = vpop.f32.mrf.mxu0
      %1916 = vmatprep.mubr.f32.mxu0 0.0
      %1917 = vmatmul.mubr.f32.gmra.mxu0 %v1787
      %v1918 = vpop.f32.mrf.mxu0
      %v1919 = vadd.f32 0.0, %v1918
      %v1920 = vpop.f32.mrf.mxu0
      %1921 = vmatprep.mubr.f32.mxu0 0.0
      %1922 = vmatmul.mubr.f32.gmra.mxu0 %v1788
      %v1923 = vpop.f32.mrf.mxu0
      %v1924 = vadd.f32 0.0, %v1923
      %v1925 = vpop.f32.mrf.mxu0
      %1926 = vmatprep.mubr.f32.mxu0 0.0
      %1927 = vmatmul.mubr.f32.gmra.mxu0 %v1789
      %v1928 = vpop.f32.mrf.mxu0
      %v1929 = vadd.f32 0.0, %v1928
      %v1930 = vpop.f32.mrf.mxu0
      %1931 = vmatprep.mubr.f32.mxu0 0.0
      %1932 = vmatmul.mubr.f32.gmra.mxu0 %v1790
      %v1933 = vpop.f32.mrf.mxu0
      %v1934 = vadd.f32 0.0, %v1933
      %v1935 = vpop.f32.mrf.mxu0
      %1936 = vmatprep.mubr.f32.mxu0 0.0
      %1937 = vmatmul.mubr.f32.gmra.mxu0 %v1791
      %v1938 = vpop.f32.mrf.mxu0
      %v1939 = vadd.f32 0.0, %v1938
      %v1940 = vpop.f32.mrf.mxu0
      %1941 = vmatprep.mubr.f32.mxu0 0.0
      %1942 = vmatmul.mubr.f32.gmra.mxu0 %v1792
      %v1943 = vpop.f32.mrf.mxu0
      %v1944 = vadd.f32 0.0, %v1943
      %v1945 = vpop.f32.mrf.mxu0
      %1946 = vmatprep.mubr.f32.mxu0 0.0
      %1947 = vmatmul.mubr.f32.gmra.mxu0 %v1793
      %v1948 = vpop.f32.mrf.mxu0
      %v1949 = vadd.f32 0.0, %v1948
      %v1950 = vpop.f32.mrf.mxu0
      %1951 = vmatprep.mubr.f32.mxu0 0.0
      %1952 = vmatmul.mubr.f32.gmra.mxu0 %v1794
      %v1953 = vpop.f32.mrf.mxu0
      %v1954 = vadd.f32 0.0, %v1953
      %v1955 = vpop.f32.mrf.mxu0
      %1956 = vmatprep.mubr.f32.mxu0 0.0
      %1957 = vmatmul.mubr.f32.gmra.mxu0 %v1795
      %v1958 = vpop.f32.mrf.mxu0
      %v1959 = vadd.f32 0.0, %v1958
      %v1960 = vpop.f32.mrf.mxu0
      %1961 = vmatprep.mubr.f32.mxu0 0.0
      %1962 = vmatmul.mubr.f32.gmra.mxu0 %v1796
      %v1963 = vpop.f32.mrf.mxu0
      %v1964 = vadd.f32 0.0, %v1963
      %v1965 = vpop.f32.mrf.mxu0
      %1966 = vmatprep.mubr.f32.mxu0 0.0
      %1967 = vmatmul.mubr.f32.gmra.mxu0 %v1797
      %v1968 = vpop.f32.mrf.mxu0
      %v1969 = vadd.f32 0.0, %v1968
      %v1970 = vpop.f32.mrf.mxu0
      %1971 = vmatprep.mubr.f32.mxu0 0.0
      %1972 = vmatmul.mubr.f32.gmra.mxu0 %v1798
      %v1973 = vpop.f32.mrf.mxu0
      %v1974 = vadd.f32 0.0, %v1973
      %v1975 = vpop.f32.mrf.mxu0
      %1976 = vmatprep.mubr.f32.mxu0 0.0
      %1977 = vmatmul.mubr.f32.gmra.mxu0 %v1799
      %v1978 = vpop.f32.mrf.mxu0
      %v1979 = vadd.f32 0.0, %v1978
      %v1980 = vpop.f32.mrf.mxu0
      %1981 = vmatprep.mubr.f32.mxu0 0.0
      %1982 = vmatmul.mubr.f32.gmra.mxu0 %v1800
      %v1983 = vpop.f32.mrf.mxu0
      %v1984 = vadd.f32 0.0, %v1983
      %v1985 = vpop.f32.mrf.mxu0
      %1986 = vmatprep.mubr.f32.mxu0 0.0
      %1987 = vmatmul.mubr.f32.gmra.mxu0 %v1801
      %v1988 = vpop.f32.mrf.mxu0
      %v1989 = vadd.f32 0.0, %v1988
      %v1990 = vpop.f32.mrf.mxu0
      %1991 = vmatprep.mubr.f32.mxu0 0.0
      %1992 = vmatmul.mubr.f32.gmra.mxu0 %v1802
      %v1993 = vpop.f32.mrf.mxu0
      %v1994 = vadd.f32 0.0, %v1993
      %v1995 = vpop.f32.mrf.mxu0
      %1996 = vmatprep.mubr.f32.mxu0 0.0
      %1997 = vmatmul.mubr.f32.gmra.mxu0 %v1803
      %v1998 = vpop.f32.mrf.mxu0
      %v1999 = vadd.f32 0.0, %v1998
      %v2000 = vpop.f32.mrf.mxu0
      %2001 = vmatprep.mubr.f32.mxu0 0.0
      %2002 = vmatmul.mubr.f32.gmra.mxu0 %v1804
      %v2003 = vpop.f32.mrf.mxu0
      %v2004 = vadd.f32 0.0, %v2003
      %v2005 = vpop.f32.mrf.mxu0
      %2006 = vmatprep.mubr.f32.mxu0 0.0
      %2007 = vmatmul.mubr.f32.gmra.mxu0 %v1805
      %v2008 = vpop.f32.mrf.mxu0
      %v2009 = vadd.f32 0.0, %v2008
      %v2010 = vpop.f32.mrf.mxu0
      %2011 = vmatprep.mubr.f32.mxu0 0.0
      %2012 = vmatmul.mubr.f32.gmra.mxu0 %v1806
      %v2013 = vpop.f32.mrf.mxu0
      %v2014 = vadd.f32 0.0, %v2013
      %v2015 = vpop.f32.mrf.mxu0
      %2016 = vmatprep.mubr.f32.mxu0 0.0
      %2017 = vmatmul.mubr.f32.gmra.mxu0 %v1807
      %v2018 = vpop.f32.mrf.mxu0
      %v2019 = vadd.f32 0.0, %v2018
      %v2020 = vpop.f32.mrf.mxu0
      %2021 = vmatprep.mubr.f32.mxu0 0.0
      %2022 = vmatmul.mubr.f32.gmra.mxu0 %v1808
      %v2023 = vpop.f32.mrf.mxu0
      %v2024 = vadd.f32 0.0, %v2023
      %v2025 = vpop.f32.mrf.mxu0
      %2026 = vmatprep.mubr.f32.mxu0 0.0
      %2027 = vmatmul.mubr.f32.gmra.mxu0 %v1809
      %v2028 = vpop.f32.mrf.mxu0
      %v2029 = vadd.f32 0.0, %v2028
      %v2030 = vpop.f32.mrf.mxu0
      %2031 = vdwg.mxu0
      %v2032 = vadd.f32 %v1754, %v1894
      %v2033 = vadd.f32 %v1755, %v1899
      %v2034 = vadd.f32 %v1756, %v1904
      %v2035 = vadd.f32 %v1757, %v1909
      %v2036 = vadd.f32 %v1758, %v1914
      %v2037 = vadd.f32 %v1759, %v1919
      %v2038 = vadd.f32 %v1760, %v1924
      %v2039 = vadd.f32 %v1761, %v1929
      %v2040 = vadd.f32 %v1762, %v1934
      %v2041 = vadd.f32 %v1763, %v1939
      %v2042 = vadd.f32 %v1764, %v1944
      %v2043 = vadd.f32 %v1765, %v1949
      %v2044 = vadd.f32 %v1766, %v1954
      %v2045 = vadd.f32 %v1767, %v1959
      %v2046 = vadd.f32 %v1768, %v1964
      %v2047 = vadd.f32 %v1769, %v1969
      %v2048 = vadd.f32 %v1770, %v1974
      %v2049 = vadd.f32 %v1771, %v1979
      %v2050 = vadd.f32 %v1772, %v1984
      %v2051 = vadd.f32 %v1773, %v1989
      %v2052 = vadd.f32 %v1774, %v1994
      %v2053 = vadd.f32 %v1775, %v1999
      %v2054 = vadd.f32 %v1776, %v2004
      %v2055 = vadd.f32 %v1777, %v2009
      %v2056 = vadd.f32 %v1778, %v2014
      %v2057 = vadd.f32 %v1779, %v2019
      %v2058 = vadd.f32 %v1780, %v2024
      %v2059 = vadd.f32 %v1781, %v2029
      %v2060 = vld [vmem:[%s165 + $0x21] sm:$0xff]
      %v2061 = vld [vmem:[%s165 + $0x29] sm:$0xff]
      %v2062 = vld [vmem:[%s165 + $0x31] sm:$0xff]
      %v2063 = vld [vmem:[%s165 + $0x39] sm:$0xff]
      %v2064 = vld [vmem:[%s165 + $0x41] sm:$0xff]
      %v2065 = vld [vmem:[%s165 + $0x49] sm:$0xff]
      %v2066 = vld [vmem:[%s165 + $0x51] sm:$0xff]
      %v2067 = vld [vmem:[%s165 + $0x59] sm:$0xff]
      %v2068 = vld [vmem:[%s165 + $0x61] sm:$0xff]
      %v2069 = vld [vmem:[%s165 + $0x69] sm:$0xff]
      %v2070 = vld [vmem:[%s165 + $0x71] sm:$0xff]
      %v2071 = vld [vmem:[%s165 + $0x79] sm:$0xff]
      %v2072 = vld [vmem:[%s165 + $0x81] sm:$0xff]
      %v2073 = vld [vmem:[%s165 + $0x89] sm:$0xff]
      %v2074 = vld [vmem:[%s165 + $0x91] sm:$0xff]
      %v2075 = vld [vmem:[%s165 + $0x99] sm:$0xff]
      %v2076 = vld [vmem:[%s165 + $0xa1] sm:$0xff]
      %v2077 = vld [vmem:[%s165 + $0xa9] sm:$0xff]
      %v2078 = vld [vmem:[%s165 + $0xb1] sm:$0xff]
      %v2079 = vld [vmem:[%s165 + $0xb9] sm:$0xff]
      %v2080 = vld [vmem:[%s165 + $0xc1] sm:$0xff]
      %v2081 = vld [vmem:[%s165 + $0xc9] sm:$0xff]
      %v2082 = vld [vmem:[%s165 + $0xd1] sm:$0xff]
      %v2083 = vld [vmem:[%s165 + $0xd9] sm:$0xff]
      %v2084 = vld [vmem:[%s165 + $0xe1] sm:$0xff]
      %v2085 = vld [vmem:[%s165 + $0xe9] sm:$0xff]
      %v2086 = vld [vmem:[%s165 + $0xf1] sm:$0xff]
      %v2087 = vld [vmem:[%s165 + $0xf9] sm:$0xff]
      %s2088 = scalar_lea.vmem %s1, 896
      %v2089 = vld [vmem:[%s2088] sm:$0xff]
      %v2090 = vld [vmem:[%s2088 + $0x8] sm:$0xff]
      %v2091 = vld [vmem:[%s2088 + $0x10] sm:$0xff]
      %v2092 = vld [vmem:[%s2088 + $0x18] sm:$0xff]
      %v2093 = vld [vmem:[%s2088 + $0x20] sm:$0xff]
      %v2094 = vld [vmem:[%s2088 + $0x28] sm:$0xff]
      %v2095 = vld [vmem:[%s2088 + $0x30] sm:$0xff]
      %v2096 = vld [vmem:[%s2088 + $0x38] sm:$0xff]
      %v2097 = vld [vmem:[%s2088 + $0x40] sm:$0xff]
      %v2098 = vld [vmem:[%s2088 + $0x48] sm:$0xff]
      %v2099 = vld [vmem:[%s2088 + $0x50] sm:$0xff]
      %v2100 = vld [vmem:[%s2088 + $0x58] sm:$0xff]
      %v2101 = vld [vmem:[%s2088 + $0x60] sm:$0xff]
      %v2102 = vld [vmem:[%s2088 + $0x68] sm:$0xff]
      %v2103 = vld [vmem:[%s2088 + $0x70] sm:$0xff]
      %v2104 = vld [vmem:[%s2088 + $0x78] sm:$0xff]
      %2105 = vmatprep.subr.mxu0 0.0
      %2106 = vmatpush1.msra.mxu0 %v2104
      %2107 = vmatprep.subr.mxu0 0.0
      %2108 = vmatpush1.msra.mxu0 %v2103
      %2109 = vmatprep.subr.mxu0 0.0
      %2110 = vmatpush1.msra.mxu0 %v2102
      %2111 = vmatprep.subr.mxu0 0.0
      %2112 = vmatpush1.msra.mxu0 %v2101
      %2113 = vmatprep.subr.mxu0 0.0
      %2114 = vmatpush1.msra.mxu0 %v2100
      %2115 = vmatprep.subr.mxu0 0.0
      %2116 = vmatpush1.msra.mxu0 %v2099
      %2117 = vmatprep.subr.mxu0 0.0
      %2118 = vmatpush1.msra.mxu0 %v2098
      %2119 = vmatprep.subr.mxu0 0.0
      %2120 = vmatpush1.msra.mxu0 %v2097
      %2121 = vmatprep.subr.mxu0 0.0
      %2122 = vmatpush1.msra.mxu0 %v2096
      %2123 = vmatprep.subr.mxu0 0.0
      %2124 = vmatpush1.msra.mxu0 %v2095
      %2125 = vmatprep.subr.mxu0 0.0
      %2126 = vmatpush1.msra.mxu0 %v2094
      %2127 = vmatprep.subr.mxu0 0.0
      %2128 = vmatpush1.msra.mxu0 %v2093
      %2129 = vmatprep.subr.mxu0 0.0
      %2130 = vmatpush1.msra.mxu0 %v2092
      %2131 = vmatprep.subr.mxu0 0.0
      %2132 = vmatpush1.msra.mxu0 %v2091
      %2133 = vmatprep.subr.mxu0 0.0
      %2134 = vmatpush1.msra.mxu0 %v2090
      %2135 = vmatprep.subr.mxu0 0.0
      %2136 = vmatpush1.msra.mxu0 %v2089
      %2137 = vmatprep.subr.mxu0 0.0
      %2138 = vmatpush2.msra.mxu0 0.0
      %2139 = vmatprep.subr.mxu0 0.0
      %2140 = vmatpush2.msra.mxu0 0.0
      %2141 = vmatprep.subr.mxu0 0.0
      %2142 = vmatpush2.msra.mxu0 0.0
      %2143 = vmatprep.subr.mxu0 0.0
      %2144 = vmatpush2.msra.mxu0 0.0
      %2145 = vmatprep.subr.mxu0 0.0
      %2146 = vmatpush2.msra.mxu0 0.0
      %2147 = vmatprep.subr.mxu0 0.0
      %2148 = vmatpush2.msra.mxu0 0.0
      %2149 = vmatprep.subr.mxu0 0.0
      %2150 = vmatpush2.msra.mxu0 0.0
      %2151 = vmatprep.subr.mxu0 0.0
      %2152 = vmatpush2.msra.mxu0 0.0
      %2153 = vmatprep.subr.mxu0 0.0
      %2154 = vmatpush2.msra.mxu0 0.0
      %2155 = vmatprep.subr.mxu0 0.0
      %2156 = vmatpush2.msra.mxu0 0.0
      %2157 = vmatprep.subr.mxu0 0.0
      %2158 = vmatpush2.msra.mxu0 0.0
      %2159 = vmatprep.subr.mxu0 0.0
      %2160 = vmatpush2.msra.mxu0 0.0
      %2161 = vmatprep.subr.mxu0 0.0
      %2162 = vmatpush2.msra.mxu0 0.0
      %2163 = vmatprep.subr.mxu0 0.0
      %2164 = vmatpush2.msra.mxu0 0.0
      %2165 = vmatprep.subr.mxu0 0.0
      %2166 = vmatpush2.msra.mxu0 0.0
      %2167 = vmatprep.subr.mxu0 0.0
      %2168 = vmatpush2.msra.mxu0 0.0
      %2169 = vmatprep.mubr.f32.mxu0 0.0
      %2170 = vmatmul.mubr.f32.gmra.mxu0 %v2060
      %v2171 = vpop.f32.mrf.mxu0
      %v2172 = vadd.f32 0.0, %v2171
      %v2173 = vpop.f32.mrf.mxu0
      %2174 = vmatprep.mubr.f32.mxu0 0.0
      %2175 = vmatmul.mubr.f32.gmra.mxu0 %v2061
      %v2176 = vpop.f32.mrf.mxu0
      %v2177 = vadd.f32 0.0, %v2176
      %v2178 = vpop.f32.mrf.mxu0
      %2179 = vmatprep.mubr.f32.mxu0 0.0
      %2180 = vmatmul.mubr.f32.gmra.mxu0 %v2062
      %v2181 = vpop.f32.mrf.mxu0
      %v2182 = vadd.f32 0.0, %v2181
      %v2183 = vpop.f32.mrf.mxu0
      %2184 = vmatprep.mubr.f32.mxu0 0.0
      %2185 = vmatmul.mubr.f32.gmra.mxu0 %v2063
      %v2186 = vpop.f32.mrf.mxu0
      %v2187 = vadd.f32 0.0, %v2186
      %v2188 = vpop.f32.mrf.mxu0
      %2189 = vmatprep.mubr.f32.mxu0 0.0
      %2190 = vmatmul.mubr.f32.gmra.mxu0 %v2064
      %v2191 = vpop.f32.mrf.mxu0
      %v2192 = vadd.f32 0.0, %v2191
      %v2193 = vpop.f32.mrf.mxu0
      %2194 = vmatprep.mubr.f32.mxu0 0.0
      %2195 = vmatmul.mubr.f32.gmra.mxu0 %v2065
      %v2196 = vpop.f32.mrf.mxu0
      %v2197 = vadd.f32 0.0, %v2196
      %v2198 = vpop.f32.mrf.mxu0
      %2199 = vmatprep.mubr.f32.mxu0 0.0
      %2200 = vmatmul.mubr.f32.gmra.mxu0 %v2066
      %v2201 = vpop.f32.mrf.mxu0
      %v2202 = vadd.f32 0.0, %v2201
      %v2203 = vpop.f32.mrf.mxu0
      %2204 = vmatprep.mubr.f32.mxu0 0.0
      %2205 = vmatmul.mubr.f32.gmra.mxu0 %v2067
      %v2206 = vpop.f32.mrf.mxu0
      %v2207 = vadd.f32 0.0, %v2206
      %v2208 = vpop.f32.mrf.mxu0
      %2209 = vmatprep.mubr.f32.mxu0 0.0
      %2210 = vmatmul.mubr.f32.gmra.mxu0 %v2068
      %v2211 = vpop.f32.mrf.mxu0
      %v2212 = vadd.f32 0.0, %v2211
      %v2213 = vpop.f32.mrf.mxu0
      %2214 = vmatprep.mubr.f32.mxu0 0.0
      %2215 = vmatmul.mubr.f32.gmra.mxu0 %v2069
      %v2216 = vpop.f32.mrf.mxu0
      %v2217 = vadd.f32 0.0, %v2216
      %v2218 = vpop.f32.mrf.mxu0
      %2219 = vmatprep.mubr.f32.mxu0 0.0
      %2220 = vmatmul.mubr.f32.gmra.mxu0 %v2070
      %v2221 = vpop.f32.mrf.mxu0
      %v2222 = vadd.f32 0.0, %v2221
      %v2223 = vpop.f32.mrf.mxu0
      %2224 = vmatprep.mubr.f32.mxu0 0.0
      %2225 = vmatmul.mubr.f32.gmra.mxu0 %v2071
      %v2226 = vpop.f32.mrf.mxu0
      %v2227 = vadd.f32 0.0, %v2226
      %v2228 = vpop.f32.mrf.mxu0
      %2229 = vmatprep.mubr.f32.mxu0 0.0
      %2230 = vmatmul.mubr.f32.gmra.mxu0 %v2072
      %v2231 = vpop.f32.mrf.mxu0
      %v2232 = vadd.f32 0.0, %v2231
      %v2233 = vpop.f32.mrf.mxu0
      %2234 = vmatprep.mubr.f32.mxu0 0.0
      %2235 = vmatmul.mubr.f32.gmra.mxu0 %v2073
      %v2236 = vpop.f32.mrf.mxu0
      %v2237 = vadd.f32 0.0, %v2236
      %v2238 = vpop.f32.mrf.mxu0
      %2239 = vmatprep.mubr.f32.mxu0 0.0
      %2240 = vmatmul.mubr.f32.gmra.mxu0 %v2074
      %v2241 = vpop.f32.mrf.mxu0
      %v2242 = vadd.f32 0.0, %v2241
      %v2243 = vpop.f32.mrf.mxu0
      %2244 = vmatprep.mubr.f32.mxu0 0.0
      %2245 = vmatmul.mubr.f32.gmra.mxu0 %v2075
      %v2246 = vpop.f32.mrf.mxu0
      %v2247 = vadd.f32 0.0, %v2246
      %v2248 = vpop.f32.mrf.mxu0
      %2249 = vmatprep.mubr.f32.mxu0 0.0
      %2250 = vmatmul.mubr.f32.gmra.mxu0 %v2076
      %v2251 = vpop.f32.mrf.mxu0
      %v2252 = vadd.f32 0.0, %v2251
      %v2253 = vpop.f32.mrf.mxu0
      %2254 = vmatprep.mubr.f32.mxu0 0.0
      %2255 = vmatmul.mubr.f32.gmra.mxu0 %v2077
      %v2256 = vpop.f32.mrf.mxu0
      %v2257 = vadd.f32 0.0, %v2256
      %v2258 = vpop.f32.mrf.mxu0
      %2259 = vmatprep.mubr.f32.mxu0 0.0
      %2260 = vmatmul.mubr.f32.gmra.mxu0 %v2078
      %v2261 = vpop.f32.mrf.mxu0
      %v2262 = vadd.f32 0.0, %v2261
      %v2263 = vpop.f32.mrf.mxu0
      %2264 = vmatprep.mubr.f32.mxu0 0.0
      %2265 = vmatmul.mubr.f32.gmra.mxu0 %v2079
      %v2266 = vpop.f32.mrf.mxu0
      %v2267 = vadd.f32 0.0, %v2266
      %v2268 = vpop.f32.mrf.mxu0
      %2269 = vmatprep.mubr.f32.mxu0 0.0
      %2270 = vmatmul.mubr.f32.gmra.mxu0 %v2080
      %v2271 = vpop.f32.mrf.mxu0
      %v2272 = vadd.f32 0.0, %v2271
      %v2273 = vpop.f32.mrf.mxu0
      %2274 = vmatprep.mubr.f32.mxu0 0.0
      %2275 = vmatmul.mubr.f32.gmra.mxu0 %v2081
      %v2276 = vpop.f32.mrf.mxu0
      %v2277 = vadd.f32 0.0, %v2276
      %v2278 = vpop.f32.mrf.mxu0
      %2279 = vmatprep.mubr.f32.mxu0 0.0
      %2280 = vmatmul.mubr.f32.gmra.mxu0 %v2082
      %v2281 = vpop.f32.mrf.mxu0
      %v2282 = vadd.f32 0.0, %v2281
      %v2283 = vpop.f32.mrf.mxu0
      %2284 = vmatprep.mubr.f32.mxu0 0.0
      %2285 = vmatmul.mubr.f32.gmra.mxu0 %v2083
      %v2286 = vpop.f32.mrf.mxu0
      %v2287 = vadd.f32 0.0, %v2286
      %v2288 = vpop.f32.mrf.mxu0
      %2289 = vmatprep.mubr.f32.mxu0 0.0
      %2290 = vmatmul.mubr.f32.gmra.mxu0 %v2084
      %v2291 = vpop.f32.mrf.mxu0
      %v2292 = vadd.f32 0.0, %v2291
      %v2293 = vpop.f32.mrf.mxu0
      %2294 = vmatprep.mubr.f32.mxu0 0.0
      %2295 = vmatmul.mubr.f32.gmra.mxu0 %v2085
      %v2296 = vpop.f32.mrf.mxu0
      %v2297 = vadd.f32 0.0, %v2296
      %v2298 = vpop.f32.mrf.mxu0
      %2299 = vmatprep.mubr.f32.mxu0 0.0
      %2300 = vmatmul.mubr.f32.gmra.mxu0 %v2086
      %v2301 = vpop.f32.mrf.mxu0
      %v2302 = vadd.f32 0.0, %v2301
      %v2303 = vpop.f32.mrf.mxu0
      %2304 = vmatprep.mubr.f32.mxu0 0.0
      %2305 = vmatmul.mubr.f32.gmra.mxu0 %v2087
      %v2306 = vpop.f32.mrf.mxu0
      %v2307 = vadd.f32 0.0, %v2306
      %v2308 = vpop.f32.mrf.mxu0
      %2309 = vdwg.mxu0
      %v2310 = vadd.f32 %v2032, %v2172
      %v2311 = vadd.f32 %v2033, %v2177
      %v2312 = vadd.f32 %v2034, %v2182
      %v2313 = vadd.f32 %v2035, %v2187
      %v2314 = vadd.f32 %v2036, %v2192
      %v2315 = vadd.f32 %v2037, %v2197
      %v2316 = vadd.f32 %v2038, %v2202
      %v2317 = vadd.f32 %v2039, %v2207
      %v2318 = vadd.f32 %v2040, %v2212
      %v2319 = vadd.f32 %v2041, %v2217
      %v2320 = vadd.f32 %v2042, %v2222
      %v2321 = vadd.f32 %v2043, %v2227
      %v2322 = vadd.f32 %v2044, %v2232
      %v2323 = vadd.f32 %v2045, %v2237
      %v2324 = vadd.f32 %v2046, %v2242
      %v2325 = vadd.f32 %v2047, %v2247
      %v2326 = vadd.f32 %v2048, %v2252
      %v2327 = vadd.f32 %v2049, %v2257
      %v2328 = vadd.f32 %v2050, %v2262
      %v2329 = vadd.f32 %v2051, %v2267
      %v2330 = vadd.f32 %v2052, %v2272
      %v2331 = vadd.f32 %v2053, %v2277
      %v2332 = vadd.f32 %v2054, %v2282
      %v2333 = vadd.f32 %v2055, %v2287
      %v2334 = vadd.f32 %v2056, %v2292
      %v2335 = vadd.f32 %v2057, %v2297
      %v2336 = vadd.f32 %v2058, %v2302
      %v2337 = vadd.f32 %v2059, %v2307
      %v2338 = vld [vmem:[%s165 + $0x22] sm:$0xff]
      %v2339 = vld [vmem:[%s165 + $0x2a] sm:$0xff]
      %v2340 = vld [vmem:[%s165 + $0x32] sm:$0xff]
      %v2341 = vld [vmem:[%s165 + $0x3a] sm:$0xff]
      %v2342 = vld [vmem:[%s165 + $0x42] sm:$0xff]
      %v2343 = vld [vmem:[%s165 + $0x4a] sm:$0xff]
      %v2344 = vld [vmem:[%s165 + $0x52] sm:$0xff]
      %v2345 = vld [vmem:[%s165 + $0x5a] sm:$0xff]
      %v2346 = vld [vmem:[%s165 + $0x62] sm:$0xff]
      %v2347 = vld [vmem:[%s165 + $0x6a] sm:$0xff]
      %v2348 = vld [vmem:[%s165 + $0x72] sm:$0xff]
      %v2349 = vld [vmem:[%s165 + $0x7a] sm:$0xff]
      %v2350 = vld [vmem:[%s165 + $0x82] sm:$0xff]
      %v2351 = vld [vmem:[%s165 + $0x8a] sm:$0xff]
      %v2352 = vld [vmem:[%s165 + $0x92] sm:$0xff]
      %v2353 = vld [vmem:[%s165 + $0x9a] sm:$0xff]
      %v2354 = vld [vmem:[%s165 + $0xa2] sm:$0xff]
      %v2355 = vld [vmem:[%s165 + $0xaa] sm:$0xff]
      %v2356 = vld [vmem:[%s165 + $0xb2] sm:$0xff]
      %v2357 = vld [vmem:[%s165 + $0xba] sm:$0xff]
      %v2358 = vld [vmem:[%s165 + $0xc2] sm:$0xff]
      %v2359 = vld [vmem:[%s165 + $0xca] sm:$0xff]
      %v2360 = vld [vmem:[%s165 + $0xd2] sm:$0xff]
      %v2361 = vld [vmem:[%s165 + $0xda] sm:$0xff]
      %v2362 = vld [vmem:[%s165 + $0xe2] sm:$0xff]
      %v2363 = vld [vmem:[%s165 + $0xea] sm:$0xff]
      %v2364 = vld [vmem:[%s165 + $0xf2] sm:$0xff]
      %v2365 = vld [vmem:[%s165 + $0xfa] sm:$0xff]
      %s2366 = scalar_lea.vmem %s1, 1024
      %v2367 = vld [vmem:[%s2366] sm:$0xff]
      %v2368 = vld [vmem:[%s2366 + $0x8] sm:$0xff]
      %v2369 = vld [vmem:[%s2366 + $0x10] sm:$0xff]
      %v2370 = vld [vmem:[%s2366 + $0x18] sm:$0xff]
      %v2371 = vld [vmem:[%s2366 + $0x20] sm:$0xff]
      %v2372 = vld [vmem:[%s2366 + $0x28] sm:$0xff]
      %v2373 = vld [vmem:[%s2366 + $0x30] sm:$0xff]
      %v2374 = vld [vmem:[%s2366 + $0x38] sm:$0xff]
      %v2375 = vld [vmem:[%s2366 + $0x40] sm:$0xff]
      %v2376 = vld [vmem:[%s2366 + $0x48] sm:$0xff]
      %v2377 = vld [vmem:[%s2366 + $0x50] sm:$0xff]
      %v2378 = vld [vmem:[%s2366 + $0x58] sm:$0xff]
      %v2379 = vld [vmem:[%s2366 + $0x60] sm:$0xff]
      %v2380 = vld [vmem:[%s2366 + $0x68] sm:$0xff]
      %v2381 = vld [vmem:[%s2366 + $0x70] sm:$0xff]
      %v2382 = vld [vmem:[%s2366 + $0x78] sm:$0xff]
      %2383 = vmatprep.subr.mxu0 0.0
      %2384 = vmatpush1.msra.mxu0 %v2382
      %2385 = vmatprep.subr.mxu0 0.0
      %2386 = vmatpush1.msra.mxu0 %v2381
      %2387 = vmatprep.subr.mxu0 0.0
      %2388 = vmatpush1.msra.mxu0 %v2380
      %2389 = vmatprep.subr.mxu0 0.0
      %2390 = vmatpush1.msra.mxu0 %v2379
      %2391 = vmatprep.subr.mxu0 0.0
      %2392 = vmatpush1.msra.mxu0 %v2378
      %2393 = vmatprep.subr.mxu0 0.0
      %2394 = vmatpush1.msra.mxu0 %v2377
      %2395 = vmatprep.subr.mxu0 0.0
      %2396 = vmatpush1.msra.mxu0 %v2376
      %2397 = vmatprep.subr.mxu0 0.0
      %2398 = vmatpush1.msra.mxu0 %v2375
      %2399 = vmatprep.subr.mxu0 0.0
      %2400 = vmatpush1.msra.mxu0 %v2374
      %2401 = vmatprep.subr.mxu0 0.0
      %2402 = vmatpush1.msra.mxu0 %v2373
      %2403 = vmatprep.subr.mxu0 0.0
      %2404 = vmatpush1.msra.mxu0 %v2372
      %2405 = vmatprep.subr.mxu0 0.0
      %2406 = vmatpush1.msra.mxu0 %v2371
      %2407 = vmatprep.subr.mxu0 0.0
      %2408 = vmatpush1.msra.mxu0 %v2370
      %2409 = vmatprep.subr.mxu0 0.0
      %2410 = vmatpush1.msra.mxu0 %v2369
      %2411 = vmatprep.subr.mxu0 0.0
      %2412 = vmatpush1.msra.mxu0 %v2368
      %2413 = vmatprep.subr.mxu0 0.0
      %2414 = vmatpush1.msra.mxu0 %v2367
      %2415 = vmatprep.subr.mxu0 0.0
      %2416 = vmatpush2.msra.mxu0 0.0
      %2417 = vmatprep.subr.mxu0 0.0
      %2418 = vmatpush2.msra.mxu0 0.0
      %2419 = vmatprep.subr.mxu0 0.0
      %2420 = vmatpush2.msra.mxu0 0.0
      %2421 = vmatprep.subr.mxu0 0.0
      %2422 = vmatpush2.msra.mxu0 0.0
      %2423 = vmatprep.subr.mxu0 0.0
      %2424 = vmatpush2.msra.mxu0 0.0
      %2425 = vmatprep.subr.mxu0 0.0
      %2426 = vmatpush2.msra.mxu0 0.0
      %2427 = vmatprep.subr.mxu0 0.0
      %2428 = vmatpush2.msra.mxu0 0.0
      %2429 = vmatprep.subr.mxu0 0.0
      %2430 = vmatpush2.msra.mxu0 0.0
      %2431 = vmatprep.subr.mxu0 0.0
      %2432 = vmatpush2.msra.mxu0 0.0
      %2433 = vmatprep.subr.mxu0 0.0
      %2434 = vmatpush2.msra.mxu0 0.0
      %2435 = vmatprep.subr.mxu0 0.0
      %2436 = vmatpush2.msra.mxu0 0.0
      %2437 = vmatprep.subr.mxu0 0.0
      %2438 = vmatpush2.msra.mxu0 0.0
      %2439 = vmatprep.subr.mxu0 0.0
      %2440 = vmatpush2.msra.mxu0 0.0
      %2441 = vmatprep.subr.mxu0 0.0
      %2442 = vmatpush2.msra.mxu0 0.0
      %2443 = vmatprep.subr.mxu0 0.0
      %2444 = vmatpush2.msra.mxu0 0.0
      %2445 = vmatprep.subr.mxu0 0.0
      %2446 = vmatpush2.msra.mxu0 0.0
      %2447 = vmatprep.mubr.f32.mxu0 0.0
      %2448 = vmatmul.mubr.f32.gmra.mxu0 %v2338
      %v2449 = vpop.f32.mrf.mxu0
      %v2450 = vadd.f32 0.0, %v2449
      %v2451 = vpop.f32.mrf.mxu0
      %2452 = vmatprep.mubr.f32.mxu0 0.0
      %2453 = vmatmul.mubr.f32.gmra.mxu0 %v2339
      %v2454 = vpop.f32.mrf.mxu0
      %v2455 = vadd.f32 0.0, %v2454
      %v2456 = vpop.f32.mrf.mxu0
      %2457 = vmatprep.mubr.f32.mxu0 0.0
      %2458 = vmatmul.mubr.f32.gmra.mxu0 %v2340
      %v2459 = vpop.f32.mrf.mxu0
      %v2460 = vadd.f32 0.0, %v2459
      %v2461 = vpop.f32.mrf.mxu0
      %2462 = vmatprep.mubr.f32.mxu0 0.0
      %2463 = vmatmul.mubr.f32.gmra.mxu0 %v2341
      %v2464 = vpop.f32.mrf.mxu0
      %v2465 = vadd.f32 0.0, %v2464
      %v2466 = vpop.f32.mrf.mxu0
      %2467 = vmatprep.mubr.f32.mxu0 0.0
      %2468 = vmatmul.mubr.f32.gmra.mxu0 %v2342
      %v2469 = vpop.f32.mrf.mxu0
      %v2470 = vadd.f32 0.0, %v2469
      %v2471 = vpop.f32.mrf.mxu0
      %2472 = vmatprep.mubr.f32.mxu0 0.0
      %2473 = vmatmul.mubr.f32.gmra.mxu0 %v2343
      %v2474 = vpop.f32.mrf.mxu0
      %v2475 = vadd.f32 0.0, %v2474
      %v2476 = vpop.f32.mrf.mxu0
      %2477 = vmatprep.mubr.f32.mxu0 0.0
      %2478 = vmatmul.mubr.f32.gmra.mxu0 %v2344
      %v2479 = vpop.f32.mrf.mxu0
      %v2480 = vadd.f32 0.0, %v2479
      %v2481 = vpop.f32.mrf.mxu0
      %2482 = vmatprep.mubr.f32.mxu0 0.0
      %2483 = vmatmul.mubr.f32.gmra.mxu0 %v2345
      %v2484 = vpop.f32.mrf.mxu0
      %v2485 = vadd.f32 0.0, %v2484
      %v2486 = vpop.f32.mrf.mxu0
      %2487 = vmatprep.mubr.f32.mxu0 0.0
      %2488 = vmatmul.mubr.f32.gmra.mxu0 %v2346
      %v2489 = vpop.f32.mrf.mxu0
      %v2490 = vadd.f32 0.0, %v2489
      %v2491 = vpop.f32.mrf.mxu0
      %2492 = vmatprep.mubr.f32.mxu0 0.0
      %2493 = vmatmul.mubr.f32.gmra.mxu0 %v2347
      %v2494 = vpop.f32.mrf.mxu0
      %v2495 = vadd.f32 0.0, %v2494
      %v2496 = vpop.f32.mrf.mxu0
      %2497 = vmatprep.mubr.f32.mxu0 0.0
      %2498 = vmatmul.mubr.f32.gmra.mxu0 %v2348
      %v2499 = vpop.f32.mrf.mxu0
      %v2500 = vadd.f32 0.0, %v2499
      %v2501 = vpop.f32.mrf.mxu0
      %2502 = vmatprep.mubr.f32.mxu0 0.0
      %2503 = vmatmul.mubr.f32.gmra.mxu0 %v2349
      %v2504 = vpop.f32.mrf.mxu0
      %v2505 = vadd.f32 0.0, %v2504
      %v2506 = vpop.f32.mrf.mxu0
      %2507 = vmatprep.mubr.f32.mxu0 0.0
      %2508 = vmatmul.mubr.f32.gmra.mxu0 %v2350
      %v2509 = vpop.f32.mrf.mxu0
      %v2510 = vadd.f32 0.0, %v2509
      %v2511 = vpop.f32.mrf.mxu0
      %2512 = vmatprep.mubr.f32.mxu0 0.0
      %2513 = vmatmul.mubr.f32.gmra.mxu0 %v2351
      %v2514 = vpop.f32.mrf.mxu0
      %v2515 = vadd.f32 0.0, %v2514
      %v2516 = vpop.f32.mrf.mxu0
      %2517 = vmatprep.mubr.f32.mxu0 0.0
      %2518 = vmatmul.mubr.f32.gmra.mxu0 %v2352
      %v2519 = vpop.f32.mrf.mxu0
      %v2520 = vadd.f32 0.0, %v2519
      %v2521 = vpop.f32.mrf.mxu0
      %2522 = vmatprep.mubr.f32.mxu0 0.0
      %2523 = vmatmul.mubr.f32.gmra.mxu0 %v2353
      %v2524 = vpop.f32.mrf.mxu0
      %v2525 = vadd.f32 0.0, %v2524
      %v2526 = vpop.f32.mrf.mxu0
      %2527 = vmatprep.mubr.f32.mxu0 0.0
      %2528 = vmatmul.mubr.f32.gmra.mxu0 %v2354
      %v2529 = vpop.f32.mrf.mxu0
      %v2530 = vadd.f32 0.0, %v2529
      %v2531 = vpop.f32.mrf.mxu0
      %2532 = vmatprep.mubr.f32.mxu0 0.0
      %2533 = vmatmul.mubr.f32.gmra.mxu0 %v2355
      %v2534 = vpop.f32.mrf.mxu0
      %v2535 = vadd.f32 0.0, %v2534
      %v2536 = vpop.f32.mrf.mxu0
      %2537 = vmatprep.mubr.f32.mxu0 0.0
      %2538 = vmatmul.mubr.f32.gmra.mxu0 %v2356
      %v2539 = vpop.f32.mrf.mxu0
      %v2540 = vadd.f32 0.0, %v2539
      %v2541 = vpop.f32.mrf.mxu0
      %2542 = vmatprep.mubr.f32.mxu0 0.0
      %2543 = vmatmul.mubr.f32.gmra.mxu0 %v2357
      %v2544 = vpop.f32.mrf.mxu0
      %v2545 = vadd.f32 0.0, %v2544
      %v2546 = vpop.f32.mrf.mxu0
      %2547 = vmatprep.mubr.f32.mxu0 0.0
      %2548 = vmatmul.mubr.f32.gmra.mxu0 %v2358
      %v2549 = vpop.f32.mrf.mxu0
      %v2550 = vadd.f32 0.0, %v2549
      %v2551 = vpop.f32.mrf.mxu0
      %2552 = vmatprep.mubr.f32.mxu0 0.0
      %2553 = vmatmul.mubr.f32.gmra.mxu0 %v2359
      %v2554 = vpop.f32.mrf.mxu0
      %v2555 = vadd.f32 0.0, %v2554
      %v2556 = vpop.f32.mrf.mxu0
      %2557 = vmatprep.mubr.f32.mxu0 0.0
      %2558 = vmatmul.mubr.f32.gmra.mxu0 %v2360
      %v2559 = vpop.f32.mrf.mxu0
      %v2560 = vadd.f32 0.0, %v2559
      %v2561 = vpop.f32.mrf.mxu0
      %2562 = vmatprep.mubr.f32.mxu0 0.0
      %2563 = vmatmul.mubr.f32.gmra.mxu0 %v2361
      %v2564 = vpop.f32.mrf.mxu0
      %v2565 = vadd.f32 0.0, %v2564
      %v2566 = vpop.f32.mrf.mxu0
      %2567 = vmatprep.mubr.f32.mxu0 0.0
      %2568 = vmatmul.mubr.f32.gmra.mxu0 %v2362
      %v2569 = vpop.f32.mrf.mxu0
      %v2570 = vadd.f32 0.0, %v2569
      %v2571 = vpop.f32.mrf.mxu0
      %2572 = vmatprep.mubr.f32.mxu0 0.0
      %2573 = vmatmul.mubr.f32.gmra.mxu0 %v2363
      %v2574 = vpop.f32.mrf.mxu0
      %v2575 = vadd.f32 0.0, %v2574
      %v2576 = vpop.f32.mrf.mxu0
      %2577 = vmatprep.mubr.f32.mxu0 0.0
      %2578 = vmatmul.mubr.f32.gmra.mxu0 %v2364
      %v2579 = vpop.f32.mrf.mxu0
      %v2580 = vadd.f32 0.0, %v2579
      %v2581 = vpop.f32.mrf.mxu0
      %2582 = vmatprep.mubr.f32.mxu0 0.0
      %2583 = vmatmul.mubr.f32.gmra.mxu0 %v2365
      %v2584 = vpop.f32.mrf.mxu0
      %v2585 = vadd.f32 0.0, %v2584
      %v2586 = vpop.f32.mrf.mxu0
      %2587 = vdwg.mxu0
      %v2588 = vadd.f32 %v2310, %v2450
      %v2589 = vadd.f32 %v2311, %v2455
      %v2590 = vadd.f32 %v2312, %v2460
      %v2591 = vadd.f32 %v2313, %v2465
      %v2592 = vadd.f32 %v2314, %v2470
      %v2593 = vadd.f32 %v2315, %v2475
      %v2594 = vadd.f32 %v2316, %v2480
      %v2595 = vadd.f32 %v2317, %v2485
      %v2596 = vadd.f32 %v2318, %v2490
      %v2597 = vadd.f32 %v2319, %v2495
      %v2598 = vadd.f32 %v2320, %v2500
      %v2599 = vadd.f32 %v2321, %v2505
      %v2600 = vadd.f32 %v2322, %v2510
      %v2601 = vadd.f32 %v2323, %v2515
      %v2602 = vadd.f32 %v2324, %v2520
      %v2603 = vadd.f32 %v2325, %v2525
      %v2604 = vadd.f32 %v2326, %v2530
      %v2605 = vadd.f32 %v2327, %v2535
      %v2606 = vadd.f32 %v2328, %v2540
      %v2607 = vadd.f32 %v2329, %v2545
      %v2608 = vadd.f32 %v2330, %v2550
      %v2609 = vadd.f32 %v2331, %v2555
      %v2610 = vadd.f32 %v2332, %v2560
      %v2611 = vadd.f32 %v2333, %v2565
      %v2612 = vadd.f32 %v2334, %v2570
      %v2613 = vadd.f32 %v2335, %v2575
      %v2614 = vadd.f32 %v2336, %v2580
      %v2615 = vadd.f32 %v2337, %v2585
      %v2616 = vld [vmem:[%s2] sm:$0x1]
      %v2618 = vlaneseq
      %v2619 = vshrl.u32 %v2618, 7
      %v2620 = vsub.s32 0, %v2619
      %v2621 = vrot.slane %v2616, %v2620
      %v2623 = vadd.f32 %v2588, %v2621
      %v2624 = vadd.f32 %v2589, %v2621
      %v2625 = vadd.f32 %v2590, %v2621
      %v2626 = vadd.f32 %v2591, %v2621
      %v2627 = vadd.f32 %v2592, %v2621
      %v2628 = vadd.f32 %v2593, %v2621
      %v2629 = vadd.f32 %v2594, %v2621
      %v2630 = vadd.f32 %v2595, %v2621
      %v2631 = vadd.f32 %v2596, %v2621
      %v2632 = vadd.f32 %v2597, %v2621
      %v2633 = vadd.f32 %v2598, %v2621
      %v2634 = vadd.f32 %v2599, %v2621
      %v2635 = vadd.f32 %v2600, %v2621
      %v2636 = vadd.f32 %v2601, %v2621
      %v2637 = vadd.f32 %v2602, %v2621
      %v2638 = vadd.f32 %v2603, %v2621
      %v2639 = vadd.f32 %v2604, %v2621
      %v2640 = vadd.f32 %v2605, %v2621
      %v2641 = vadd.f32 %v2606, %v2621
      %v2642 = vadd.f32 %v2607, %v2621
      %v2643 = vadd.f32 %v2608, %v2621
      %v2644 = vadd.f32 %v2609, %v2621
      %v2645 = vadd.f32 %v2610, %v2621
      %v2646 = vadd.f32 %v2611, %v2621
      %v2647 = vadd.f32 %v2612, %v2621
      %v2648 = vadd.f32 %v2613, %v2621
      %v2649 = vadd.f32 %v2614, %v2621
      %v2650 = vadd.f32 %v2615, %v2621
      %v2651 = vmax.f32 %v2623, 0.0
      %v2652 = vmax.f32 %v2624, 0.0
      %v2653 = vmax.f32 %v2625, 0.0
      %v2654 = vmax.f32 %v2626, 0.0
      %v2655 = vmax.f32 %v2627, 0.0
      %v2656 = vmax.f32 %v2628, 0.0
      %v2657 = vmax.f32 %v2629, 0.0
      %v2658 = vmax.f32 %v2630, 0.0
      %v2659 = vmax.f32 %v2631, 0.0
      %v2660 = vmax.f32 %v2632, 0.0
      %v2661 = vmax.f32 %v2633, 0.0
      %v2662 = vmax.f32 %v2634, 0.0
      %v2663 = vmax.f32 %v2635, 0.0
      %v2664 = vmax.f32 %v2636, 0.0
      %v2665 = vmax.f32 %v2637, 0.0
      %v2666 = vmax.f32 %v2638, 0.0
      %v2667 = vmax.f32 %v2639, 0.0
      %v2668 = vmax.f32 %v2640, 0.0
      %v2669 = vmax.f32 %v2641, 0.0
      %v2670 = vmax.f32 %v2642, 0.0
      %v2671 = vmax.f32 %v2643, 0.0
      %v2672 = vmax.f32 %v2644, 0.0
      %v2673 = vmax.f32 %v2645, 0.0
      %v2674 = vmax.f32 %v2646, 0.0
      %v2675 = vmax.f32 %v2647, 0.0
      %v2676 = vmax.f32 %v2648, 0.0
      %v2677 = vmax.f32 %v2649, 0.0
      %v2678 = vmax.f32 %v2650, 0.0
      %v2679 = vmax.f32 %v2651, %v2653
      %v2680 = vmax.f32 %v2652, %v2654
      %v2681 = vmax.f32 %v2655, %v2657
      %v2682 = vmax.f32 %v2656, %v2658
      %v2683 = vmax.f32 %v2659, %v2661
      %v2684 = vmax.f32 %v2660, %v2662
      %v2685 = vmax.f32 %v2663, %v2665
      %v2686 = vmax.f32 %v2664, %v2666
      %v2687 = vmax.f32 %v2667, %v2669
      %v2688 = vmax.f32 %v2668, %v2670
      %v2689 = vmax.f32 %v2671, %v2673
      %v2690 = vmax.f32 %v2672, %v2674
      %v2691 = vmax.f32 %v2675, %v2677
      %v2692 = vmax.f32 %v2676, %v2678
      %2693 = vst [vmem:[#allocation2] sm:$0xff] %v2679
      %2694 = vst [vmem:[#allocation2 + $0x8] sm:$0xff] %v2680
      %2695 = vst [vmem:[#allocation2 + $0x10] sm:$0xff] %v2681
      %2696 = vst [vmem:[#allocation2 + $0x18] sm:$0xff] %v2682
      %2697 = vst [vmem:[#allocation2 + $0x20] sm:$0xff] %v2683
      %2698 = vst [vmem:[#allocation2 + $0x28] sm:$0xff] %v2684
      %2699 = vst [vmem:[#allocation2 + $0x30] sm:$0xff] %v2685
      %2700 = vst [vmem:[#allocation2 + $0x38] sm:$0xff] %v2686
      %2701 = vst [vmem:[#allocation2 + $0x40] sm:$0xff] %v2687
      %2702 = vst [vmem:[#allocation2 + $0x48] sm:$0xff] %v2688
      %2703 = vst [vmem:[#allocation2 + $0x50] sm:$0xff] %v2689
      %2704 = vst [vmem:[#allocation2 + $0x58] sm:$0xff] %v2690
      %2705 = vst [vmem:[#allocation2 + $0x60] sm:$0xff] %v2691
      %2706 = vst [vmem:[#allocation2 + $0x68] sm:$0xff] %v2692
      %v2707 = vld [vmem:[#allocation2] ss:$2 sm:$0x7f]
      %s2708 = scalar_lea.vmem [#allocation2], 16
      %v2709 = vld [vmem:[%s2708] ss:$2 sm:$0x7f]
      %s2710 = scalar_lea.vmem [#allocation2], 32
      %v2711 = vld [vmem:[%s2710] ss:$2 sm:$0x7f]
      %s2712 = scalar_lea.vmem [#allocation2], 48
      %v2713 = vld [vmem:[%s2712] ss:$2 sm:$0x7f]
      %s2714 = scalar_lea.vmem [#allocation2], 64
      %v2715 = vld [vmem:[%s2714] ss:$2 sm:$0x7f]
      %s2716 = scalar_lea.vmem [#allocation2], 80
      %v2717 = vld [vmem:[%s2716] ss:$2 sm:$0x7f]
      %s2718 = scalar_lea.vmem [#allocation2], 96
      %v2719 = vld [vmem:[%s2718] ss:$2 sm:$0x7f]
      %s2720 = scalar_lea.vmem [#allocation2], 1
      %v2721 = vld [vmem:[%s2720] ss:$2 sm:$0x7f]
      %s2722 = scalar_lea.vmem [#allocation2], 17
      %v2723 = vld [vmem:[%s2722] ss:$2 sm:$0x7f]
      %s2724 = scalar_lea.vmem [#allocation2], 33
      %v2725 = vld [vmem:[%s2724] ss:$2 sm:$0x7f]
      %s2726 = scalar_lea.vmem [#allocation2], 49
      %v2727 = vld [vmem:[%s2726] ss:$2 sm:$0x7f]
      %s2728 = scalar_lea.vmem [#allocation2], 65
      %v2729 = vld [vmem:[%s2728] ss:$2 sm:$0x7f]
      %s2730 = scalar_lea.vmem [#allocation2], 81
      %v2731 = vld [vmem:[%s2730] ss:$2 sm:$0x7f]
      %s2732 = scalar_lea.vmem [#allocation2], 97
      %v2733 = vld [vmem:[%s2732] ss:$2 sm:$0x7f]
      %v2734 = vmax.f32 %v2707, %v2721
      %v2735 = vmax.f32 %v2709, %v2723
      %v2736 = vmax.f32 %v2711, %v2725
      %v2737 = vmax.f32 %v2713, %v2727
      %v2738 = vmax.f32 %v2715, %v2729
      %v2739 = vmax.f32 %v2717, %v2731
      %v2740 = vmax.f32 %v2719, %v2733
      %2741 = vst [vmem:[%s170] sm:$0x7f] %v2734
      %2742 = vst [vmem:[%s170 + $0x8] sm:$0x7f] %v2735
      %2743 = vst [vmem:[%s170 + $0x10] sm:$0x7f] %v2736
      %2744 = vst [vmem:[%s170 + $0x18] sm:$0x7f] %v2737
      %2745 = vst [vmem:[%s170 + $0x20] sm:$0x7f] %v2738
      %2746 = vst [vmem:[%s170 + $0x28] sm:$0x7f] %v2739
      %2747 = vst [vmem:[%s170 + $0x30] sm:$0x7f] %v2740
      %p2748 = scmp.lt.s32.totalorder %s14, 1
      %s2749 = scalar_select %p2748, %s14, 1
      %s2750 = smul.addr %s2749, 7
      %s2751 = smul.addr %s2750, 8
      %s2752 = scalar_lea.vmem %s3, %s2751
      // Predicated region
      $region33: #{forward.4} parent=31 // pred_check
        %p2753 = pneg %p100
      $region34: #{forward.4} parent=31 // pred_check_branch
        %2755 = sbr.rel (%p2753) target = $region36
      $region35: #{forward.4} parent=31 // pred_region
        _
      $region36: #{forward.4} parent=31 // pred_fallthru
        _
    $region32: #{forward.4} parent=5 // pred_fallthru
      _
    %p2756 = scmp.le.s32.totalorder 2, %s9
    // Predicated region
    $region37: #{forward.4} parent=5 // pred_check
      %p2757 = pneg %p2756
    $region38: #{forward.4} parent=5 // pred_check_branch
      %2759 = sbr.rel (%p2757) target = $region40
    $region39: #{forward.4} parent=5 // pred_region
      %s2760 = ssub.s32 %s9, 2
      // Predicated region
      $region41: #{forward.4} parent=39 // pred_check
        %p2761 = pneg %p106
      $region42: #{forward.4} parent=39 // pred_check_branch
        %2763 = sbr.rel (%p2761) target = $region44
      $region43: #{forward.4} parent=39 // pred_region
        %p2764 = scmp.lt.s32.totalorder %s15, 1
        %s2765 = scalar_select %p2764, %s15, 1
        %s2766 = smul.addr %s2765, 7
        %s2767 = smul.addr %s2766, 8
        %s2768 = scalar_lea.vmem %s3, %s2767
      $region44: #{forward.4} parent=39 // pred_fallthru
        _
    $region40: #{forward.4} parent=5 // pred_fallthru
      _
  $region6: #{forward.4} parent=0 // loop_footer
    %s13 = sadd.s32 1, %s9
  $region7: #{forward.4} parent=0 // loop_footer_branch
    %8 = sbr.rel target = $region3
  $region8: #{forward.4} parent=0 // loop_exit
    _

// kernel: forward.5
$region0: #{forward.5}
  #allocation0 [shape = 'u32[]', space=smem, size = 0x4, offset = 0x4, fixed_abs, tag = 'smem constant byte address 0x4 - core index']
  #allocation1 [shape = 'u32[144,128]{1,0:T(1,128)}', space=vmem, size = 0x12000, scoped, tag = 'internal scratch']
  %s0 = inlined_call_operand.vmem [shape: f32[2,6272], index: 0, kind: input, shape index: {}]
  %s1 = inlined_call_operand.vmem [shape: f32[6272,256], index: 1, kind: input, shape index: {}]
  %s2 = inlined_call_operand.vmem [shape: f32[1,256], index: 2, kind: input, shape index: {}]
  %s3 = inlined_call_operand.vmem [shape: f32[256,256], index: 3, kind: input, shape index: {}]
  %s4 = inlined_call_operand.vmem [shape: f32[1,256], index: 4, kind: input, shape index: {}]
  %s5 = inlined_call_operand.vmem [shape: f32[256,128], index: 5, kind: input, shape index: {}]
  %s6 = inlined_call_operand.vmem [shape: f32[1,128], index: 6, kind: input, shape index: {}]
  %s7 = inlined_call_operand.hbm [shape: f32[2,128], index: 7, kind: output, shape index: {}]
  %s8 = sld [smem:[#allocation0]]
  $region38: #{forward.5} parent=0
    _
  %s10 = ssub.s32 1, %s8
  %s11 = scalar_select 0, %s10, %s8
  $region1: #{forward.5} parent=0
    #allocation2 [shape = 'u8[1024]{0}', space=vmem, size = 0x400, scoped, tag = 'output window, operand 0, single buffered']
    #allocation3 [shape = 's32[1]{0}', space=sflag, size = 0x4, scoped, tag = 'scoped memory for forward.5']
    %12 = vsyncpa [#allocation3], 0
    // Predicated region
    $region2: #{forward.5} parent=1 // pred_check
      _
    $region3: #{forward.5} parent=1 // pred_check_branch
      %14 = sbr.rel (0) target = $region5
    $region4: #{forward.5} parent=1 // pred_region
      _
    $region5: #{forward.5} parent=1 // pred_fallthru
      _
    // Predicated region
    $region6: #{forward.5} parent=1 // pred_check
      _
    $region7: #{forward.5} parent=1 // pred_check_branch
      %16 = sbr.rel (0) target = $region9
    $region8: #{forward.5} parent=1 // pred_region
      _
    $region9: #{forward.5} parent=1 // pred_fallthru
      _
    // Predicated region
    $region10: #{forward.5} parent=1 // pred_check
      _
    $region11: #{forward.5} parent=1 // pred_check_branch
      %18 = sbr.rel (0) target = $region13
    $region12: #{forward.5} parent=1 // pred_region
      _
    $region13: #{forward.5} parent=1 // pred_fallthru
      _
    // Predicated region
    $region14: #{forward.5} parent=1 // pred_check
      _
    $region15: #{forward.5} parent=1 // pred_check_branch
      %20 = sbr.rel (0) target = $region17
    $region16: #{forward.5} parent=1 // pred_region
      _
    $region17: #{forward.5} parent=1 // pred_fallthru
      _
    // Predicated region
    $region18: #{forward.5} parent=1 // pred_check
      _
    $region19: #{forward.5} parent=1 // pred_check_branch
      %22 = sbr.rel (0) target = $region21
    $region20: #{forward.5} parent=1 // pred_region
      _
    $region21: #{forward.5} parent=1 // pred_fallthru
      _
    // Predicated region
    $region22: #{forward.5} parent=1 // pred_check
      _
    $region23: #{forward.5} parent=1 // pred_check_branch
      %24 = sbr.rel (0) target = $region25
    $region24: #{forward.5} parent=1 // pred_region
      _
    $region25: #{forward.5} parent=1 // pred_fallthru
      _
    // Predicated region
    $region26: #{forward.5} parent=1 // pred_check
      _
    $region27: #{forward.5} parent=1 // pred_check_branch
      %26 = sbr.rel (0) target = $region29
    $region28: #{forward.5} parent=1 // pred_region
      _
    $region29: #{forward.5} parent=1 // pred_fallthru
      _
    %v27 = vld [vmem:[%s0] sm:$0xff]
    %v28 = vld [vmem:[%s0 + $0x8] sm:$0xff]
    %v29 = vld [vmem:[%s0 + $0x10] sm:$0xff]
    %v30 = vld [vmem:[%s0 + $0x18] sm:$0xff]
    %v31 = vld [vmem:[%s0 + $0x20] sm:$0xff]
    %v32 = vld [vmem:[%s0 + $0x28] sm:$0xff]
    %v33 = vld [vmem:[%s0 + $0x30] sm:$0xff]
    %v34 = vld [vmem:[%s0 + $0x38] sm:$0xff]
    %v35 = vld [vmem:[%s0 + $0x40] sm:$0xff]
    %v36 = vld [vmem:[%s0 + $0x48] sm:$0xff]
    %v37 = vld [vmem:[%s0 + $0x50] sm:$0xff]
    %v38 = vld [vmem:[%s0 + $0x58] sm:$0xff]
    %v39 = vld [vmem:[%s0 + $0x60] sm:$0x3]
    %v40 = vld [vmem:[%s1] sm:$0xff]
    %v41 = vld [vmem:[%s1 + $0x8] sm:$0xff]
    %v42 = vld [vmem:[%s1 + $0x10] sm:$0xff]
    %v43 = vld [vmem:[%s1 + $0x18] sm:$0xff]
    %v44 = vld [vmem:[%s1 + $0x20] sm:$0xff]
    %v45 = vld [vmem:[%s1 + $0x28] sm:$0xff]
    %v46 = vld [vmem:[%s1 + $0x30] sm:$0xff]
    %v47 = vld [vmem:[%s1 + $0x38] sm:$0xff]
    %v48 = vld [vmem:[%s1 + $0x40] sm:$0xff]
    %v49 = vld [vmem:[%s1 + $0x48] sm:$0xff]
    %v50 = vld [vmem:[%s1 + $0x50] sm:$0xff]
    %v51 = vld [vmem:[%s1 + $0x58] sm:$0xff]
    %v52 = vld [vmem:[%s1 + $0x60] sm:$0xff]
    %v53 = vld [vmem:[%s1 + $0x68] sm:$0xff]
    %v54 = vld [vmem:[%s1 + $0x70] sm:$0xff]
    %v55 = vld [vmem:[%s1 + $0x78] sm:$0xff]
    %v56 = vld [vmem:[%s1 + $0x80] sm:$0xff]
    %v57 = vld [vmem:[%s1 + $0x88] sm:$0xff]
    %v58 = vld [vmem:[%s1 + $0x90] sm:$0xff]
    %v59 = vld [vmem:[%s1 + $0x98] sm:$0xff]
    %v60 = vld [vmem:[%s1 + $0xa0] sm:$0xff]
    %v61 = vld [vmem:[%s1 + $0xa8] sm:$0xff]
    %v62 = vld [vmem:[%s1 + $0xb0] sm:$0xff]
    %v63 = vld [vmem:[%s1 + $0xb8] sm:$0xff]
    %v64 = vld [vmem:[%s1 + $0xc0] sm:$0xff]
    %v65 = vld [vmem:[%s1 + $0xc8] sm:$0xff]
    %v66 = vld [vmem:[%s1 + $0xd0] sm:$0xff]
    %v67 = vld [vmem:[%s1 + $0xd8] sm:$0xff]
    %v68 = vld [vmem:[%s1 + $0xe0] sm:$0xff]
    %v69 = vld [vmem:[%s1 + $0xe8] sm:$0xff]
    %v70 = vld [vmem:[%s1 + $0xf0] sm:$0xff]
    %v71 = vld [vmem:[%s1 + $0xf8] sm:$0xff]
    %v72 = vld [vmem:[%s1 + $0x100] sm:$0xff]
    %v73 = vld [vmem:[%s1 + $0x108] sm:$0xff]
    %v74 = vld [vmem:[%s1 + $0x110] sm:$0xff]
    %v75 = vld [vmem:[%s1 + $0x118] sm:$0xff]
    %v76 = vld [vmem:[%s1 + $0x120] sm:$0xff]
    %v77 = vld [vmem:[%s1 + $0x128] sm:$0xff]
    %v78 = vld [vmem:[%s1 + $0x130] sm:$0xff]
    %v79 = vld [vmem:[%s1 + $0x138] sm:$0xff]
    %v80 = vld [vmem:[%s1 + $0x140] sm:$0xff]
    %v81 = vld [vmem:[%s1 + $0x148] sm:$0xff]
    %v82 = vld [vmem:[%s1 + $0x150] sm:$0xff]
    %v83 = vld [vmem:[%s1 + $0x158] sm:$0xff]
    %v84 = vld [vmem:[%s1 + $0x160] sm:$0xff]
    %v85 = vld [vmem:[%s1 + $0x168] sm:$0xff]
    %v86 = vld [vmem:[%s1 + $0x170] sm:$0xff]
    %v87 = vld [vmem:[%s1 + $0x178] sm:$0xff]
    %v88 = vld [vmem:[%s1 + $0x180] sm:$0xff]
    %v89 = vld [vmem:[%s1 + $0x188] sm:$0xff]
    %v90 = vld [vmem:[%s1 + $0x190] sm:$0xff]
    %v91 = vld [vmem:[%s1 + $0x198] sm:$0xff]
    %v92 = vld [vmem:[%s1 + $0x1a0] sm:$0xff]
    %v93 = vld [vmem:[%s1 + $0x1a8] sm:$0xff]
    %v94 = vld [vmem:[%s1 + $0x1b0] sm:$0xff]
    %v95 = vld [vmem:[%s1 + $0x1b8] sm:$0xff]
    %v96 = vld [vmem:[%s1 + $0x1c0] sm:$0xff]
    %v97 = vld [vmem:[%s1 + $0x1c8] sm:$0xff]
    %v98 = vld [vmem:[%s1 + $0x1d0] sm:$0xff]
    %v99 = vld [vmem:[%s1 + $0x1d8] sm:$0xff]
    %v100 = vld [vmem:[%s1 + $0x1e0] sm:$0xff]
    %v101 = vld [vmem:[%s1 + $0x1e8] sm:$0xff]
    %v102 = vld [vmem:[%s1 + $0x1f0] sm:$0xff]
    %v103 = vld [vmem:[%s1 + $0x1f8] sm:$0xff]
    %v104 = vld [vmem:[%s1 + $0x200] sm:$0xff]
    %v105 = vld [vmem:[%s1 + $0x208] sm:$0xff]
    %v106 = vld [vmem:[%s1 + $0x210] sm:$0xff]
    %v107 = vld [vmem:[%s1 + $0x218] sm:$0xff]
    %v108 = vld [vmem:[%s1 + $0x220] sm:$0xff]
    %v109 = vld [vmem:[%s1 + $0x228] sm:$0xff]
    %v110 = vld [vmem:[%s1 + $0x230] sm:$0xff]
    %v111 = vld [vmem:[%s1 + $0x238] sm:$0xff]
    %v112 = vld [vmem:[%s1 + $0x240] sm:$0xff]
    %v113 = vld [vmem:[%s1 + $0x248] sm:$0xff]
    %v114 = vld [vmem:[%s1 + $0x250] sm:$0xff]
    %v115 = vld [vmem:[%s1 + $0x258] sm:$0xff]
    %v116 = vld [vmem:[%s1 + $0x260] sm:$0xff]
    %v117 = vld [vmem:[%s1 + $0x268] sm:$0xff]
    %v118 = vld [vmem:[%s1 + $0x270] sm:$0xff]
    %v119 = vld [vmem:[%s1 + $0x278] sm:$0xff]
    %v120 = vld [vmem:[%s1 + $0x280] sm:$0xff]
    %v121 = vld [vmem:[%s1 + $0x288] sm:$0xff]
    %v122 = vld [vmem:[%s1 + $0x290] sm:$0xff]
    %v123 = vld [vmem:[%s1 + $0x298] sm:$0xff]
    %v124 = vld [vmem:[%s1 + $0x2a0] sm:$0xff]
    %v125 = vld [vmem:[%s1 + $0x2a8] sm:$0xff]
    %v126 = vld [vmem:[%s1 + $0x2b0] sm:$0xff]
    %v127 = vld [vmem:[%s1 + $0x2b8] sm:$0xff]
    %v128 = vld [vmem:[%s1 + $0x2c0] sm:$0xff]
    %v129 = vld [vmem:[%s1 + $0x2c8] sm:$0xff]
    %v130 = vld [vmem:[%s1 + $0x2d0] sm:$0xff]
    %v131 = vld [vmem:[%s1 + $0x2d8] sm:$0xff]
    %v132 = vld [vmem:[%s1 + $0x2e0] sm:$0xff]
    %v133 = vld [vmem:[%s1 + $0x2e8] sm:$0xff]
    %v134 = vld [vmem:[%s1 + $0x2f0] sm:$0xff]
    %v135 = vld [vmem:[%s1 + $0x2f8] sm:$0xff]
    %v136 = vld [vmem:[%s1 + $0x300] sm:$0xff]
    %v137 = vld [vmem:[%s1 + $0x308] sm:$0xff]
    %v138 = vld [vmem:[%s1 + $0x310] sm:$0xff]
    %v139 = vld [vmem:[%s1 + $0x318] sm:$0xff]
    %v140 = vld [vmem:[%s1 + $0x320] sm:$0xff]
    %v141 = vld [vmem:[%s1 + $0x328] sm:$0xff]
    %v142 = vld [vmem:[%s1 + $0x330] sm:$0xff]
    %v143 = vld [vmem:[%s1 + $0x338] sm:$0xff]
    %v144 = vld [vmem:[%s1 + $0x340] sm:$0xff]
    %v145 = vld [vmem:[%s1 + $0x348] sm:$0xff]
    %v146 = vld [vmem:[%s1 + $0x350] sm:$0xff]
    %v147 = vld [vmem:[%s1 + $0x358] sm:$0xff]
    %v148 = vld [vmem:[%s1 + $0x360] sm:$0xff]
    %v149 = vld [vmem:[%s1 + $0x368] sm:$0xff]
    %v150 = vld [vmem:[%s1 + $0x370] sm:$0xff]
    %v151 = vld [vmem:[%s1 + $0x378] sm:$0xff]
    %v152 = vld [vmem:[%s1 + $0x380] sm:$0xff]
    %v153 = vld [vmem:[%s1 + $0x388] sm:$0xff]
    %v154 = vld [vmem:[%s1 + $0x390] sm:$0xff]
    %v155 = vld [vmem:[%s1 + $0x398] sm:$0xff]
    %v156 = vld [vmem:[%s1 + $0x3a0] sm:$0xff]
    %v157 = vld [vmem:[%s1 + $0x3a8] sm:$0xff]
    %v158 = vld [vmem:[%s1 + $0x3b0] sm:$0xff]
    %v159 = vld [vmem:[%s1 + $0x3b8] sm:$0xff]
    %v160 = vld [vmem:[%s1 + $0x3c0] sm:$0xff]
    %v161 = vld [vmem:[%s1 + $0x3c8] sm:$0xff]
    %v162 = vld [vmem:[%s1 + $0x3d0] sm:$0xff]
    %v163 = vld [vmem:[%s1 + $0x3d8] sm:$0xff]
    %v164 = vld [vmem:[%s1 + $0x3e0] sm:$0xff]
    %v165 = vld [vmem:[%s1 + $0x3e8] sm:$0xff]
    %v166 = vld [vmem:[%s1 + $0x3f0] sm:$0xff]
    %v167 = vld [vmem:[%s1 + $0x3f8] sm:$0xff]
    %v168 = vld [vmem:[%s1 + $0x400] sm:$0xff]
    %v169 = vld [vmem:[%s1 + $0x408] sm:$0xff]
    %v170 = vld [vmem:[%s1 + $0x410] sm:$0xff]
    %v171 = vld [vmem:[%s1 + $0x418] sm:$0xff]
    %v172 = vld [vmem:[%s1 + $0x420] sm:$0xff]
    %v173 = vld [vmem:[%s1 + $0x428] sm:$0xff]
    %v174 = vld [vmem:[%s1 + $0x430] sm:$0xff]
    %v175 = vld [vmem:[%s1 + $0x438] sm:$0xff]
    %v176 = vld [vmem:[%s1 + $0x440] sm:$0xff]
    %v177 = vld [vmem:[%s1 + $0x448] sm:$0xff]
    %v178 = vld [vmem:[%s1 + $0x450] sm:$0xff]
    %v179 = vld [vmem:[%s1 + $0x458] sm:$0xff]
    %v180 = vld [vmem:[%s1 + $0x460] sm:$0xff]
    %v181 = vld [vmem:[%s1 + $0x468] sm:$0xff]
    %v182 = vld [vmem:[%s1 + $0x470] sm:$0xff]
    %v183 = vld [vmem:[%s1 + $0x478] sm:$0xff]
    %v184 = vld [vmem:[%s1 + $0x480] sm:$0xff]
    %v185 = vld [vmem:[%s1 + $0x488] sm:$0xff]
    %v186 = vld [vmem:[%s1 + $0x490] sm:$0xff]
    %v187 = vld [vmem:[%s1 + $0x498] sm:$0xff]
    %v188 = vld [vmem:[%s1 + $0x4a0] sm:$0xff]
    %v189 = vld [vmem:[%s1 + $0x4a8] sm:$0xff]
    %v190 = vld [vmem:[%s1 + $0x4b0] sm:$0xff]
    %v191 = vld [vmem:[%s1 + $0x4b8] sm:$0xff]
    %v192 = vld [vmem:[%s1 + $0x4c0] sm:$0xff]
    %v193 = vld [vmem:[%s1 + $0x4c8] sm:$0xff]
    %v194 = vld [vmem:[%s1 + $0x4d0] sm:$0xff]
    %v195 = vld [vmem:[%s1 + $0x4d8] sm:$0xff]
    %v196 = vld [vmem:[%s1 + $0x4e0] sm:$0xff]
    %v197 = vld [vmem:[%s1 + $0x4e8] sm:$0xff]
    %v198 = vld [vmem:[%s1 + $0x4f0] sm:$0xff]
    %v199 = vld [vmem:[%s1 + $0x4f8] sm:$0xff]
    %v200 = vld [vmem:[%s1 + $0x500] sm:$0xff]
    %v201 = vld [vmem:[%s1 + $0x508] sm:$0xff]
    %v202 = vld [vmem:[%s1 + $0x510] sm:$0xff]
    %v203 = vld [vmem:[%s1 + $0x518] sm:$0xff]
    %v204 = vld [vmem:[%s1 + $0x520] sm:$0xff]
    %v205 = vld [vmem:[%s1 + $0x528] sm:$0xff]
    %v206 = vld [vmem:[%s1 + $0x530] sm:$0xff]
    %v207 = vld [vmem:[%s1 + $0x538] sm:$0xff]
    %v208 = vld [vmem:[%s1 + $0x540] sm:$0xff]
    %v209 = vld [vmem:[%s1 + $0x548] sm:$0xff]
    %v210 = vld [vmem:[%s1 + $0x550] sm:$0xff]
    %v211 = vld [vmem:[%s1 + $0x558] sm:$0xff]
    %v212 = vld [vmem:[%s1 + $0x560] sm:$0xff]
    %v213 = vld [vmem:[%s1 + $0x568] sm:$0xff]
    %v214 = vld [vmem:[%s1 + $0x570] sm:$0xff]
    %v215 = vld [vmem:[%s1 + $0x578] sm:$0xff]
    %v216 = vld [vmem:[%s1 + $0x580] sm:$0xff]
    %v217 = vld [vmem:[%s1 + $0x588] sm:$0xff]
    %v218 = vld [vmem:[%s1 + $0x590] sm:$0xff]
    %v219 = vld [vmem:[%s1 + $0x598] sm:$0xff]
    %v220 = vld [vmem:[%s1 + $0x5a0] sm:$0xff]
    %v221 = vld [vmem:[%s1 + $0x5a8] sm:$0xff]
    %v222 = vld [vmem:[%s1 + $0x5b0] sm:$0xff]
    %v223 = vld [vmem:[%s1 + $0x5b8] sm:$0xff]
    %v224 = vld [vmem:[%s1 + $0x5c0] sm:$0xff]
    %v225 = vld [vmem:[%s1 + $0x5c8] sm:$0xff]
    %v226 = vld [vmem:[%s1 + $0x5d0] sm:$0xff]
    %v227 = vld [vmem:[%s1 + $0x5d8] sm:$0xff]
    %v228 = vld [vmem:[%s1 + $0x5e0] sm:$0xff]
    %v229 = vld [vmem:[%s1 + $0x5e8] sm:$0xff]
    %v230 = vld [vmem:[%s1 + $0x5f0] sm:$0xff]
    %v231 = vld [vmem:[%s1 + $0x5f8] sm:$0xff]
    %v232 = vld [vmem:[%s1 + $0x600] sm:$0xff]
    %v233 = vld [vmem:[%s1 + $0x608] sm:$0xff]
    %v234 = vld [vmem:[%s1 + $0x610] sm:$0xff]
    %v235 = vld [vmem:[%s1 + $0x618] sm:$0xff]
    %v236 = vld [vmem:[%s1 + $0x620] sm:$0xff]
    %v237 = vld [vmem:[%s1 + $0x628] sm:$0xff]
    %v238 = vld [vmem:[%s1 + $0x630] sm:$0xff]
    %v239 = vld [vmem:[%s1 + $0x638] sm:$0xff]
    %v240 = vld [vmem:[%s1 + $0x640] sm:$0xff]
    %v241 = vld [vmem:[%s1 + $0x648] sm:$0xff]
    %v242 = vld [vmem:[%s1 + $0x650] sm:$0xff]
    %v243 = vld [vmem:[%s1 + $0x658] sm:$0xff]
    %v244 = vld [vmem:[%s1 + $0x660] sm:$0xff]
    %v245 = vld [vmem:[%s1 + $0x668] sm:$0xff]
    %v246 = vld [vmem:[%s1 + $0x670] sm:$0xff]
    %v247 = vld [vmem:[%s1 + $0x678] sm:$0xff]
    %v248 = vld [vmem:[%s1 + $0x680] sm:$0xff]
    %v249 = vld [vmem:[%s1 + $0x688] sm:$0xff]
    %v250 = vld [vmem:[%s1 + $0x690] sm:$0xff]
    %v251 = vld [vmem:[%s1 + $0x698] sm:$0xff]
    %v252 = vld [vmem:[%s1 + $0x6a0] sm:$0xff]
    %v253 = vld [vmem:[%s1 + $0x6a8] sm:$0xff]
    %v254 = vld [vmem:[%s1 + $0x6b0] sm:$0xff]
    %v255 = vld [vmem:[%s1 + $0x6b8] sm:$0xff]
    %v256 = vld [vmem:[%s1 + $0x6c0] sm:$0xff]
    %v257 = vld [vmem:[%s1 + $0x6c8] sm:$0xff]
    %v258 = vld [vmem:[%s1 + $0x6d0] sm:$0xff]
    %v259 = vld [vmem:[%s1 + $0x6d8] sm:$0xff]
    %v260 = vld [vmem:[%s1 + $0x6e0] sm:$0xff]
    %v261 = vld [vmem:[%s1 + $0x6e8] sm:$0xff]
    %v262 = vld [vmem:[%s1 + $0x6f0] sm:$0xff]
    %v263 = vld [vmem:[%s1 + $0x6f8] sm:$0xff]
    %v264 = vld [vmem:[%s1 + $0x700] sm:$0xff]
    %v265 = vld [vmem:[%s1 + $0x708] sm:$0xff]
    %v266 = vld [vmem:[%s1 + $0x710] sm:$0xff]
    %v267 = vld [vmem:[%s1 + $0x718] sm:$0xff]
    %v268 = vld [vmem:[%s1 + $0x720] sm:$0xff]
    %v269 = vld [vmem:[%s1 + $0x728] sm:$0xff]
    %v270 = vld [vmem:[%s1 + $0x730] sm:$0xff]
    %v271 = vld [vmem:[%s1 + $0x738] sm:$0xff]
    %v272 = vld [vmem:[%s1 + $0x740] sm:$0xff]
    %v273 = vld [vmem:[%s1 + $0x748] sm:$0xff]
    %v274 = vld [vmem:[%s1 + $0x750] sm:$0xff]
    %v275 = vld [vmem:[%s1 + $0x758] sm:$0xff]
    %v276 = vld [vmem:[%s1 + $0x760] sm:$0xff]
    %v277 = vld [vmem:[%s1 + $0x768] sm:$0xff]
    %v278 = vld [vmem:[%s1 + $0x770] sm:$0xff]
    %v279 = vld [vmem:[%s1 + $0x778] sm:$0xff]
    %v280 = vld [vmem:[%s1 + $0x780] sm:$0xff]
    %v281 = vld [vmem:[%s1 + $0x788] sm:$0xff]
    %v282 = vld [vmem:[%s1 + $0x790] sm:$0xff]
    %v283 = vld [vmem:[%s1 + $0x798] sm:$0xff]
    %v284 = vld [vmem:[%s1 + $0x7a0] sm:$0xff]
    %v285 = vld [vmem:[%s1 + $0x7a8] sm:$0xff]
    %v286 = vld [vmem:[%s1 + $0x7b0] sm:$0xff]
    %v287 = vld [vmem:[%s1 + $0x7b8] sm:$0xff]
    %v288 = vld [vmem:[%s1 + $0x7c0] sm:$0xff]
    %v289 = vld [vmem:[%s1 + $0x7c8] sm:$0xff]
    %v290 = vld [vmem:[%s1 + $0x7d0] sm:$0xff]
    %v291 = vld [vmem:[%s1 + $0x7d8] sm:$0xff]
    %v292 = vld [vmem:[%s1 + $0x7e0] sm:$0xff]
    %v293 = vld [vmem:[%s1 + $0x7e8] sm:$0xff]
    %v294 = vld [vmem:[%s1 + $0x7f0] sm:$0xff]
    %v295 = vld [vmem:[%s1 + $0x7f8] sm:$0xff]
    %v296 = vld [vmem:[%s1 + $0x800] sm:$0xff]
    %v297 = vld [vmem:[%s1 + $0x808] sm:$0xff]
    %v298 = vld [vmem:[%s1 + $0x810] sm:$0xff]
    %v299 = vld [vmem:[%s1 + $0x818] sm:$0xff]
    %v300 = vld [vmem:[%s1 + $0x820] sm:$0xff]
    %v301 = vld [vmem:[%s1 + $0x828] sm:$0xff]
    %v302 = vld [vmem:[%s1 + $0x830] sm:$0xff]
    %v303 = vld [vmem:[%s1 + $0x838] sm:$0xff]
    %v304 = vld [vmem:[%s1 + $0x840] sm:$0xff]
    %v305 = vld [vmem:[%s1 + $0x848] sm:$0xff]
    %v306 = vld [vmem:[%s1 + $0x850] sm:$0xff]
    %v307 = vld [vmem:[%s1 + $0x858] sm:$0xff]
    %v308 = vld [vmem:[%s1 + $0x860] sm:$0xff]
    %v309 = vld [vmem:[%s1 + $0x868] sm:$0xff]
    %v310 = vld [vmem:[%s1 + $0x870] sm:$0xff]
    %v311 = vld [vmem:[%s1 + $0x878] sm:$0xff]
    %v312 = vld [vmem:[%s1 + $0x880] sm:$0xff]
    %v313 = vld [vmem:[%s1 + $0x888] sm:$0xff]
    %v314 = vld [vmem:[%s1 + $0x890] sm:$0xff]
    %v315 = vld [vmem:[%s1 + $0x898] sm:$0xff]
    %v316 = vld [vmem:[%s1 + $0x8a0] sm:$0xff]
    %v317 = vld [vmem:[%s1 + $0x8a8] sm:$0xff]
    %v318 = vld [vmem:[%s1 + $0x8b0] sm:$0xff]
    %v319 = vld [vmem:[%s1 + $0x8b8] sm:$0xff]
    %v320 = vld [vmem:[%s1 + $0x8c0] sm:$0xff]
    %v321 = vld [vmem:[%s1 + $0x8c8] sm:$0xff]
    %v322 = vld [vmem:[%s1 + $0x8d0] sm:$0xff]
    %v323 = vld [vmem:[%s1 + $0x8d8] sm:$0xff]
    %v324 = vld [vmem:[%s1 + $0x8e0] sm:$0xff]
    %v325 = vld [vmem:[%s1 + $0x8e8] sm:$0xff]
    %v326 = vld [vmem:[%s1 + $0x8f0] sm:$0xff]
    %v327 = vld [vmem:[%s1 + $0x8f8] sm:$0xff]
    %v328 = vld [vmem:[%s1 + $0x900] sm:$0xff]
    %v329 = vld [vmem:[%s1 + $0x908] sm:$0xff]
    %v330 = vld [vmem:[%s1 + $0x910] sm:$0xff]
    %v331 = vld [vmem:[%s1 + $0x918] sm:$0xff]
    %v332 = vld [vmem:[%s1 + $0x920] sm:$0xff]
    %v333 = vld [vmem:[%s1 + $0x928] sm:$0xff]
    %v334 = vld [vmem:[%s1 + $0x930] sm:$0xff]
    %v335 = vld [vmem:[%s1 + $0x938] sm:$0xff]
    %v336 = vld [vmem:[%s1 + $0x940] sm:$0xff]
    %v337 = vld [vmem:[%s1 + $0x948] sm:$0xff]
    %v338 = vld [vmem:[%s1 + $0x950] sm:$0xff]
    %v339 = vld [vmem:[%s1 + $0x958] sm:$0xff]
    %v340 = vld [vmem:[%s1 + $0x960] sm:$0xff]
    %v341 = vld [vmem:[%s1 + $0x968] sm:$0xff]
    %v342 = vld [vmem:[%s1 + $0x970] sm:$0xff]
    %v343 = vld [vmem:[%s1 + $0x978] sm:$0xff]
    %v344 = vld [vmem:[%s1 + $0x980] sm:$0xff]
    %v345 = vld [vmem:[%s1 + $0x988] sm:$0xff]
    %v346 = vld [vmem:[%s1 + $0x990] sm:$0xff]
    %v347 = vld [vmem:[%s1 + $0x998] sm:$0xff]
    %v348 = vld [vmem:[%s1 + $0x9a0] sm:$0xff]
    %v349 = vld [vmem:[%s1 + $0x9a8] sm:$0xff]
    %v350 = vld [vmem:[%s1 + $0x9b0] sm:$0xff]
    %v351 = vld [vmem:[%s1 + $0x9b8] sm:$0xff]
    %v352 = vld [vmem:[%s1 + $0x9c0] sm:$0xff]
    %v353 = vld [vmem:[%s1 + $0x9c8] sm:$0xff]
    %v354 = vld [vmem:[%s1 + $0x9d0] sm:$0xff]
    %v355 = vld [vmem:[%s1 + $0x9d8] sm:$0xff]
    %v356 = vld [vmem:[%s1 + $0x9e0] sm:$0xff]
    %v357 = vld [vmem:[%s1 + $0x9e8] sm:$0xff]
    %v358 = vld [vmem:[%s1 + $0x9f0] sm:$0xff]
    %v359 = vld [vmem:[%s1 + $0x9f8] sm:$0xff]
    %v360 = vld [vmem:[%s1 + $0xa00] sm:$0xff]
    %v361 = vld [vmem:[%s1 + $0xa08] sm:$0xff]
    %v362 = vld [vmem:[%s1 + $0xa10] sm:$0xff]
    %v363 = vld [vmem:[%s1 + $0xa18] sm:$0xff]
    %v364 = vld [vmem:[%s1 + $0xa20] sm:$0xff]
    %v365 = vld [vmem:[%s1 + $0xa28] sm:$0xff]
    %v366 = vld [vmem:[%s1 + $0xa30] sm:$0xff]
    %v367 = vld [vmem:[%s1 + $0xa38] sm:$0xff]
    %v368 = vld [vmem:[%s1 + $0xa40] sm:$0xff]
    %v369 = vld [vmem:[%s1 + $0xa48] sm:$0xff]
    %v370 = vld [vmem:[%s1 + $0xa50] sm:$0xff]
    %v371 = vld [vmem:[%s1 + $0xa58] sm:$0xff]
    %v372 = vld [vmem:[%s1 + $0xa60] sm:$0xff]
    %v373 = vld [vmem:[%s1 + $0xa68] sm:$0xff]
    %v374 = vld [vmem:[%s1 + $0xa70] sm:$0xff]
    %v375 = vld [vmem:[%s1 + $0xa78] sm:$0xff]
    %v376 = vld [vmem:[%s1 + $0xa80] sm:$0xff]
    %v377 = vld [vmem:[%s1 + $0xa88] sm:$0xff]
    %v378 = vld [vmem:[%s1 + $0xa90] sm:$0xff]
    %v379 = vld [vmem:[%s1 + $0xa98] sm:$0xff]
    %v380 = vld [vmem:[%s1 + $0xaa0] sm:$0xff]
    %v381 = vld [vmem:[%s1 + $0xaa8] sm:$0xff]
    %v382 = vld [vmem:[%s1 + $0xab0] sm:$0xff]
    %v383 = vld [vmem:[%s1 + $0xab8] sm:$0xff]
    %v384 = vld [vmem:[%s1 + $0xac0] sm:$0xff]
    %v385 = vld [vmem:[%s1 + $0xac8] sm:$0xff]
    %v386 = vld [vmem:[%s1 + $0xad0] sm:$0xff]
    %v387 = vld [vmem:[%s1 + $0xad8] sm:$0xff]
    %v388 = vld [vmem:[%s1 + $0xae0] sm:$0xff]
    %v389 = vld [vmem:[%s1 + $0xae8] sm:$0xff]
    %v390 = vld [vmem:[%s1 + $0xaf0] sm:$0xff]
    %v391 = vld [vmem:[%s1 + $0xaf8] sm:$0xff]
    %v392 = vld [vmem:[%s1 + $0xb00] sm:$0xff]
    %v393 = vld [vmem:[%s1 + $0xb08] sm:$0xff]
    %v394 = vld [vmem:[%s1 + $0xb10] sm:$0xff]
    %v395 = vld [vmem:[%s1 + $0xb18] sm:$0xff]
    %v396 = vld [vmem:[%s1 + $0xb20] sm:$0xff]
    %v397 = vld [vmem:[%s1 + $0xb28] sm:$0xff]
    %v398 = vld [vmem:[%s1 + $0xb30] sm:$0xff]
    %v399 = vld [vmem:[%s1 + $0xb38] sm:$0xff]
    %v400 = vld [vmem:[%s1 + $0xb40] sm:$0xff]
    %v401 = vld [vmem:[%s1 + $0xb48] sm:$0xff]
    %v402 = vld [vmem:[%s1 + $0xb50] sm:$0xff]
    %v403 = vld [vmem:[%s1 + $0xb58] sm:$0xff]
    %v404 = vld [vmem:[%s1 + $0xb60] sm:$0xff]
    %v405 = vld [vmem:[%s1 + $0xb68] sm:$0xff]
    %v406 = vld [vmem:[%s1 + $0xb70] sm:$0xff]
    %v407 = vld [vmem:[%s1 + $0xb78] sm:$0xff]
    %v408 = vld [vmem:[%s1 + $0xb80] sm:$0xff]
    %v409 = vld [vmem:[%s1 + $0xb88] sm:$0xff]
    %v410 = vld [vmem:[%s1 + $0xb90] sm:$0xff]
    %v411 = vld [vmem:[%s1 + $0xb98] sm:$0xff]
    %v412 = vld [vmem:[%s1 + $0xba0] sm:$0xff]
    %v413 = vld [vmem:[%s1 + $0xba8] sm:$0xff]
    %v414 = vld [vmem:[%s1 + $0xbb0] sm:$0xff]
    %v415 = vld [vmem:[%s1 + $0xbb8] sm:$0xff]
    %v416 = vld [vmem:[%s1 + $0xbc0] sm:$0xff]
    %v417 = vld [vmem:[%s1 + $0xbc8] sm:$0xff]
    %v418 = vld [vmem:[%s1 + $0xbd0] sm:$0xff]
    %v419 = vld [vmem:[%s1 + $0xbd8] sm:$0xff]
    %v420 = vld [vmem:[%s1 + $0xbe0] sm:$0xff]
    %v421 = vld [vmem:[%s1 + $0xbe8] sm:$0xff]
    %v422 = vld [vmem:[%s1 + $0xbf0] sm:$0xff]
    %v423 = vld [vmem:[%s1 + $0xbf8] sm:$0xff]
    %v424 = vld [vmem:[%s1 + $0xc00] sm:$0xff]
    %v425 = vld [vmem:[%s1 + $0xc08] sm:$0xff]
    %v426 = vld [vmem:[%s1 + $0xc10] sm:$0xff]
    %v427 = vld [vmem:[%s1 + $0xc18] sm:$0xff]
    %v428 = vld [vmem:[%s1 + $0xc20] sm:$0xff]
    %v429 = vld [vmem:[%s1 + $0xc28] sm:$0xff]
    %v430 = vld [vmem:[%s1 + $0xc30] sm:$0xff]
    %v431 = vld [vmem:[%s1 + $0xc38] sm:$0xff]
    %v432 = vld [vmem:[%s1 + $0xc40] sm:$0xff]
    %v433 = vld [vmem:[%s1 + $0xc48] sm:$0xff]
    %v434 = vld [vmem:[%s1 + $0xc50] sm:$0xff]
    %v435 = vld [vmem:[%s1 + $0xc58] sm:$0xff]
    %v436 = vld [vmem:[%s1 + $0xc60] sm:$0xff]
    %v437 = vld [vmem:[%s1 + $0xc68] sm:$0xff]
    %v438 = vld [vmem:[%s1 + $0xc70] sm:$0xff]
    %v439 = vld [vmem:[%s1 + $0xc78] sm:$0xff]
    %v440 = vld [vmem:[%s1 + $0xc80] sm:$0xff]
    %v441 = vld [vmem:[%s1 + $0xc88] sm:$0xff]
    %v442 = vld [vmem:[%s1 + $0xc90] sm:$0xff]
    %v443 = vld [vmem:[%s1 + $0xc98] sm:$0xff]
    %v444 = vld [vmem:[%s1 + $0xca0] sm:$0xff]
    %v445 = vld [vmem:[%s1 + $0xca8] sm:$0xff]
    %v446 = vld [vmem:[%s1 + $0xcb0] sm:$0xff]
    %v447 = vld [vmem:[%s1 + $0xcb8] sm:$0xff]
    %v448 = vld [vmem:[%s1 + $0xcc0] sm:$0xff]
    %v449 = vld [vmem:[%s1 + $0xcc8] sm:$0xff]
    %v450 = vld [vmem:[%s1 + $0xcd0] sm:$0xff]
    %v451 = vld [vmem:[%s1 + $0xcd8] sm:$0xff]
    %v452 = vld [vmem:[%s1 + $0xce0] sm:$0xff]
    %v453 = vld [vmem:[%s1 + $0xce8] sm:$0xff]
    %v454 = vld [vmem:[%s1 + $0xcf0] sm:$0xff]
    %v455 = vld [vmem:[%s1 + $0xcf8] sm:$0xff]
    %v456 = vld [vmem:[%s1 + $0xd00] sm:$0xff]
    %v457 = vld [vmem:[%s1 + $0xd08] sm:$0xff]
    %v458 = vld [vmem:[%s1 + $0xd10] sm:$0xff]
    %v459 = vld [vmem:[%s1 + $0xd18] sm:$0xff]
    %v460 = vld [vmem:[%s1 + $0xd20] sm:$0xff]
    %v461 = vld [vmem:[%s1 + $0xd28] sm:$0xff]
    %v462 = vld [vmem:[%s1 + $0xd30] sm:$0xff]
    %v463 = vld [vmem:[%s1 + $0xd38] sm:$0xff]
    %v464 = vld [vmem:[%s1 + $0xd40] sm:$0xff]
    %v465 = vld [vmem:[%s1 + $0xd48] sm:$0xff]
    %v466 = vld [vmem:[%s1 + $0xd50] sm:$0xff]
    %v467 = vld [vmem:[%s1 + $0xd58] sm:$0xff]
    %v468 = vld [vmem:[%s1 + $0xd60] sm:$0xff]
    %v469 = vld [vmem:[%s1 + $0xd68] sm:$0xff]
    %v470 = vld [vmem:[%s1 + $0xd70] sm:$0xff]
    %v471 = vld [vmem:[%s1 + $0xd78] sm:$0xff]
    %v472 = vld [vmem:[%s1 + $0xd80] sm:$0xff]
    %v473 = vld [vmem:[%s1 + $0xd88] sm:$0xff]
    %v474 = vld [vmem:[%s1 + $0xd90] sm:$0xff]
    %v475 = vld [vmem:[%s1 + $0xd98] sm:$0xff]
    %v476 = vld [vmem:[%s1 + $0xda0] sm:$0xff]
    %v477 = vld [vmem:[%s1 + $0xda8] sm:$0xff]
    %v478 = vld [vmem:[%s1 + $0xdb0] sm:$0xff]
    %v479 = vld [vmem:[%s1 + $0xdb8] sm:$0xff]
    %v480 = vld [vmem:[%s1 + $0xdc0] sm:$0xff]
    %v481 = vld [vmem:[%s1 + $0xdc8] sm:$0xff]
    %v482 = vld [vmem:[%s1 + $0xdd0] sm:$0xff]
    %v483 = vld [vmem:[%s1 + $0xdd8] sm:$0xff]
    %v484 = vld [vmem:[%s1 + $0xde0] sm:$0xff]
    %v485 = vld [vmem:[%s1 + $0xde8] sm:$0xff]
    %v486 = vld [vmem:[%s1 + $0xdf0] sm:$0xff]
    %v487 = vld [vmem:[%s1 + $0xdf8] sm:$0xff]
    %v488 = vld [vmem:[%s1 + $0xe00] sm:$0xff]
    %v489 = vld [vmem:[%s1 + $0xe08] sm:$0xff]
    %v490 = vld [vmem:[%s1 + $0xe10] sm:$0xff]
    %v491 = vld [vmem:[%s1 + $0xe18] sm:$0xff]
    %v492 = vld [vmem:[%s1 + $0xe20] sm:$0xff]
    %v493 = vld [vmem:[%s1 + $0xe28] sm:$0xff]
    %v494 = vld [vmem:[%s1 + $0xe30] sm:$0xff]
    %v495 = vld [vmem:[%s1 + $0xe38] sm:$0xff]
    %v496 = vld [vmem:[%s1 + $0xe40] sm:$0xff]
    %v497 = vld [vmem:[%s1 + $0xe48] sm:$0xff]
    %v498 = vld [vmem:[%s1 + $0xe50] sm:$0xff]
    %v499 = vld [vmem:[%s1 + $0xe58] sm:$0xff]
    %v500 = vld [vmem:[%s1 + $0xe60] sm:$0xff]
    %v501 = vld [vmem:[%s1 + $0xe68] sm:$0xff]
    %v502 = vld [vmem:[%s1 + $0xe70] sm:$0xff]
    %v503 = vld [vmem:[%s1 + $0xe78] sm:$0xff]
    %v504 = vld [vmem:[%s1 + $0xe80] sm:$0xff]
    %v505 = vld [vmem:[%s1 + $0xe88] sm:$0xff]
    %v506 = vld [vmem:[%s1 + $0xe90] sm:$0xff]
    %v507 = vld [vmem:[%s1 + $0xe98] sm:$0xff]
    %v508 = vld [vmem:[%s1 + $0xea0] sm:$0xff]
    %v509 = vld [vmem:[%s1 + $0xea8] sm:$0xff]
    %v510 = vld [vmem:[%s1 + $0xeb0] sm:$0xff]
    %v511 = vld [vmem:[%s1 + $0xeb8] sm:$0xff]
    %v512 = vld [vmem:[%s1 + $0xec0] sm:$0xff]
    %v513 = vld [vmem:[%s1 + $0xec8] sm:$0xff]
    %v514 = vld [vmem:[%s1 + $0xed0] sm:$0xff]
    %v515 = vld [vmem:[%s1 + $0xed8] sm:$0xff]
    %v516 = vld [vmem:[%s1 + $0xee0] sm:$0xff]
    %v517 = vld [vmem:[%s1 + $0xee8] sm:$0xff]
    %v518 = vld [vmem:[%s1 + $0xef0] sm:$0xff]
    %v519 = vld [vmem:[%s1 + $0xef8] sm:$0xff]
    %v520 = vld [vmem:[%s1 + $0xf00] sm:$0xff]
    %v521 = vld [vmem:[%s1 + $0xf08] sm:$0xff]
    %v522 = vld [vmem:[%s1 + $0xf10] sm:$0xff]
    %v523 = vld [vmem:[%s1 + $0xf18] sm:$0xff]
    %v524 = vld [vmem:[%s1 + $0xf20] sm:$0xff]
    %v525 = vld [vmem:[%s1 + $0xf28] sm:$0xff]
    %v526 = vld [vmem:[%s1 + $0xf30] sm:$0xff]
    %v527 = vld [vmem:[%s1 + $0xf38] sm:$0xff]
    %v528 = vld [vmem:[%s1 + $0xf40] sm:$0xff]
    %v529 = vld [vmem:[%s1 + $0xf48] sm:$0xff]
    %v530 = vld [vmem:[%s1 + $0xf50] sm:$0xff]
    %v531 = vld [vmem:[%s1 + $0xf58] sm:$0xff]
    %v532 = vld [vmem:[%s1 + $0xf60] sm:$0xff]
    %v533 = vld [vmem:[%s1 + $0xf68] sm:$0xff]
    %v534 = vld [vmem:[%s1 + $0xf70] sm:$0xff]
    %v535 = vld [vmem:[%s1 + $0xf78] sm:$0xff]
    %v536 = vld [vmem:[%s1 + $0xf80] sm:$0xff]
    %v537 = vld [vmem:[%s1 + $0xf88] sm:$0xff]
    %v538 = vld [vmem:[%s1 + $0xf90] sm:$0xff]
    %v539 = vld [vmem:[%s1 + $0xf98] sm:$0xff]
    %v540 = vld [vmem:[%s1 + $0xfa0] sm:$0xff]
    %v541 = vld [vmem:[%s1 + $0xfa8] sm:$0xff]
    %v542 = vld [vmem:[%s1 + $0xfb0] sm:$0xff]
    %v543 = vld [vmem:[%s1 + $0xfb8] sm:$0xff]
    %v544 = vld [vmem:[%s1 + $0xfc0] sm:$0xff]
    %v545 = vld [vmem:[%s1 + $0xfc8] sm:$0xff]
    %v546 = vld [vmem:[%s1 + $0xfd0] sm:$0xff]
    %v547 = vld [vmem:[%s1 + $0xfd8] sm:$0xff]
    %v548 = vld [vmem:[%s1 + $0xfe0] sm:$0xff]
    %v549 = vld [vmem:[%s1 + $0xfe8] sm:$0xff]
    %v550 = vld [vmem:[%s1 + $0xff0] sm:$0xff]
    %v551 = vld [vmem:[%s1 + $0xff8] sm:$0xff]
    %v552 = vld [vmem:[%s1 + $0x1000] sm:$0xff]
    %v553 = vld [vmem:[%s1 + $0x1008] sm:$0xff]
    %v554 = vld [vmem:[%s1 + $0x1010] sm:$0xff]
    %v555 = vld [vmem:[%s1 + $0x1018] sm:$0xff]
    %v556 = vld [vmem:[%s1 + $0x1020] sm:$0xff]
    %v557 = vld [vmem:[%s1 + $0x1028] sm:$0xff]
    %v558 = vld [vmem:[%s1 + $0x1030] sm:$0xff]
    %v559 = vld [vmem:[%s1 + $0x1038] sm:$0xff]
    %v560 = vld [vmem:[%s1 + $0x1040] sm:$0xff]
    %v561 = vld [vmem:[%s1 + $0x1048] sm:$0xff]
    %v562 = vld [vmem:[%s1 + $0x1050] sm:$0xff]
    %v563 = vld [vmem:[%s1 + $0x1058] sm:$0xff]
    %v564 = vld [vmem:[%s1 + $0x1060] sm:$0xff]
    %v565 = vld [vmem:[%s1 + $0x1068] sm:$0xff]
    %v566 = vld [vmem:[%s1 + $0x1070] sm:$0xff]
    %v567 = vld [vmem:[%s1 + $0x1078] sm:$0xff]
    %v568 = vld [vmem:[%s1 + $0x1080] sm:$0xff]
    %v569 = vld [vmem:[%s1 + $0x1088] sm:$0xff]
    %v570 = vld [vmem:[%s1 + $0x1090] sm:$0xff]
    %v571 = vld [vmem:[%s1 + $0x1098] sm:$0xff]
    %v572 = vld [vmem:[%s1 + $0x10a0] sm:$0xff]
    %v573 = vld [vmem:[%s1 + $0x10a8] sm:$0xff]
    %v574 = vld [vmem:[%s1 + $0x10b0] sm:$0xff]
    %v575 = vld [vmem:[%s1 + $0x10b8] sm:$0xff]
    %v576 = vld [vmem:[%s1 + $0x10c0] sm:$0xff]
    %v577 = vld [vmem:[%s1 + $0x10c8] sm:$0xff]
    %v578 = vld [vmem:[%s1 + $0x10d0] sm:$0xff]
    %v579 = vld [vmem:[%s1 + $0x10d8] sm:$0xff]
    %v580 = vld [vmem:[%s1 + $0x10e0] sm:$0xff]
    %v581 = vld [vmem:[%s1 + $0x10e8] sm:$0xff]
    %v582 = vld [vmem:[%s1 + $0x10f0] sm:$0xff]
    %v583 = vld [vmem:[%s1 + $0x10f8] sm:$0xff]
    %v584 = vld [vmem:[%s1 + $0x1100] sm:$0xff]
    %v585 = vld [vmem:[%s1 + $0x1108] sm:$0xff]
    %v586 = vld [vmem:[%s1 + $0x1110] sm:$0xff]
    %v587 = vld [vmem:[%s1 + $0x1118] sm:$0xff]
    %v588 = vld [vmem:[%s1 + $0x1120] sm:$0xff]
    %v589 = vld [vmem:[%s1 + $0x1128] sm:$0xff]
    %v590 = vld [vmem:[%s1 + $0x1130] sm:$0xff]
    %v591 = vld [vmem:[%s1 + $0x1138] sm:$0xff]
    %v592 = vld [vmem:[%s1 + $0x1140] sm:$0xff]
    %v593 = vld [vmem:[%s1 + $0x1148] sm:$0xff]
    %v594 = vld [vmem:[%s1 + $0x1150] sm:$0xff]
    %v595 = vld [vmem:[%s1 + $0x1158] sm:$0xff]
    %v596 = vld [vmem:[%s1 + $0x1160] sm:$0xff]
    %v597 = vld [vmem:[%s1 + $0x1168] sm:$0xff]
    %v598 = vld [vmem:[%s1 + $0x1170] sm:$0xff]
    %v599 = vld [vmem:[%s1 + $0x1178] sm:$0xff]
    %v600 = vld [vmem:[%s1 + $0x1180] sm:$0xff]
    %v601 = vld [vmem:[%s1 + $0x1188] sm:$0xff]
    %v602 = vld [vmem:[%s1 + $0x1190] sm:$0xff]
    %v603 = vld [vmem:[%s1 + $0x1198] sm:$0xff]
    %v604 = vld [vmem:[%s1 + $0x11a0] sm:$0xff]
    %v605 = vld [vmem:[%s1 + $0x11a8] sm:$0xff]
    %v606 = vld [vmem:[%s1 + $0x11b0] sm:$0xff]
    %v607 = vld [vmem:[%s1 + $0x11b8] sm:$0xff]
    %v608 = vld [vmem:[%s1 + $0x11c0] sm:$0xff]
    %v609 = vld [vmem:[%s1 + $0x11c8] sm:$0xff]
    %v610 = vld [vmem:[%s1 + $0x11d0] sm:$0xff]
    %v611 = vld [vmem:[%s1 + $0x11d8] sm:$0xff]
    %v612 = vld [vmem:[%s1 + $0x11e0] sm:$0xff]
    %v613 = vld [vmem:[%s1 + $0x11e8] sm:$0xff]
    %v614 = vld [vmem:[%s1 + $0x11f0] sm:$0xff]
    %v615 = vld [vmem:[%s1 + $0x11f8] sm:$0xff]
    %v616 = vld [vmem:[%s1 + $0x1200] sm:$0xff]
    %v617 = vld [vmem:[%s1 + $0x1208] sm:$0xff]
    %v618 = vld [vmem:[%s1 + $0x1210] sm:$0xff]
    %v619 = vld [vmem:[%s1 + $0x1218] sm:$0xff]
    %v620 = vld [vmem:[%s1 + $0x1220] sm:$0xff]
    %v621 = vld [vmem:[%s1 + $0x1228] sm:$0xff]
    %v622 = vld [vmem:[%s1 + $0x1230] sm:$0xff]
    %v623 = vld [vmem:[%s1 + $0x1238] sm:$0xff]
    %v624 = vld [vmem:[%s1 + $0x1240] sm:$0xff]
    %v625 = vld [vmem:[%s1 + $0x1248] sm:$0xff]
    %v626 = vld [vmem:[%s1 + $0x1250] sm:$0xff]
    %v627 = vld [vmem:[%s1 + $0x1258] sm:$0xff]
    %v628 = vld [vmem:[%s1 + $0x1260] sm:$0xff]
    %v629 = vld [vmem:[%s1 + $0x1268] sm:$0xff]
    %v630 = vld [vmem:[%s1 + $0x1270] sm:$0xff]
    %v631 = vld [vmem:[%s1 + $0x1278] sm:$0xff]
    %v632 = vld [vmem:[%s1 + $0x1280] sm:$0xff]
    %v633 = vld [vmem:[%s1 + $0x1288] sm:$0xff]
    %v634 = vld [vmem:[%s1 + $0x1290] sm:$0xff]
    %v635 = vld [vmem:[%s1 + $0x1298] sm:$0xff]
    %v636 = vld [vmem:[%s1 + $0x12a0] sm:$0xff]
    %v637 = vld [vmem:[%s1 + $0x12a8] sm:$0xff]
    %v638 = vld [vmem:[%s1 + $0x12b0] sm:$0xff]
    %v639 = vld [vmem:[%s1 + $0x12b8] sm:$0xff]
    %v640 = vld [vmem:[%s1 + $0x12c0] sm:$0xff]
    %v641 = vld [vmem:[%s1 + $0x12c8] sm:$0xff]
    %v642 = vld [vmem:[%s1 + $0x12d0] sm:$0xff]
    %v643 = vld [vmem:[%s1 + $0x12d8] sm:$0xff]
    %v644 = vld [vmem:[%s1 + $0x12e0] sm:$0xff]
    %v645 = vld [vmem:[%s1 + $0x12e8] sm:$0xff]
    %v646 = vld [vmem:[%s1 + $0x12f0] sm:$0xff]
    %v647 = vld [vmem:[%s1 + $0x12f8] sm:$0xff]
    %v648 = vld [vmem:[%s1 + $0x1300] sm:$0xff]
    %v649 = vld [vmem:[%s1 + $0x1308] sm:$0xff]
    %v650 = vld [vmem:[%s1 + $0x1310] sm:$0xff]
    %v651 = vld [vmem:[%s1 + $0x1318] sm:$0xff]
    %v652 = vld [vmem:[%s1 + $0x1320] sm:$0xff]
    %v653 = vld [vmem:[%s1 + $0x1328] sm:$0xff]
    %v654 = vld [vmem:[%s1 + $0x1330] sm:$0xff]
    %v655 = vld [vmem:[%s1 + $0x1338] sm:$0xff]
    %v656 = vld [vmem:[%s1 + $0x1340] sm:$0xff]
    %v657 = vld [vmem:[%s1 + $0x1348] sm:$0xff]
    %v658 = vld [vmem:[%s1 + $0x1350] sm:$0xff]
    %v659 = vld [vmem:[%s1 + $0x1358] sm:$0xff]
    %v660 = vld [vmem:[%s1 + $0x1360] sm:$0xff]
    %v661 = vld [vmem:[%s1 + $0x1368] sm:$0xff]
    %v662 = vld [vmem:[%s1 + $0x1370] sm:$0xff]
    %v663 = vld [vmem:[%s1 + $0x1378] sm:$0xff]
    %v664 = vld [vmem:[%s1 + $0x1380] sm:$0xff]
    %v665 = vld [vmem:[%s1 + $0x1388] sm:$0xff]
    %v666 = vld [vmem:[%s1 + $0x1390] sm:$0xff]
    %v667 = vld [vmem:[%s1 + $0x1398] sm:$0xff]
    %v668 = vld [vmem:[%s1 + $0x13a0] sm:$0xff]
    %v669 = vld [vmem:[%s1 + $0x13a8] sm:$0xff]
    %v670 = vld [vmem:[%s1 + $0x13b0] sm:$0xff]
    %v671 = vld [vmem:[%s1 + $0x13b8] sm:$0xff]
    %v672 = vld [vmem:[%s1 + $0x13c0] sm:$0xff]
    %v673 = vld [vmem:[%s1 + $0x13c8] sm:$0xff]
    %v674 = vld [vmem:[%s1 + $0x13d0] sm:$0xff]
    %v675 = vld [vmem:[%s1 + $0x13d8] sm:$0xff]
    %v676 = vld [vmem:[%s1 + $0x13e0] sm:$0xff]
    %v677 = vld [vmem:[%s1 + $0x13e8] sm:$0xff]
    %v678 = vld [vmem:[%s1 + $0x13f0] sm:$0xff]
    %v679 = vld [vmem:[%s1 + $0x13f8] sm:$0xff]
    %v680 = vld [vmem:[%s1 + $0x1400] sm:$0xff]
    %v681 = vld [vmem:[%s1 + $0x1408] sm:$0xff]
    %v682 = vld [vmem:[%s1 + $0x1410] sm:$0xff]
    %v683 = vld [vmem:[%s1 + $0x1418] sm:$0xff]
    %v684 = vld [vmem:[%s1 + $0x1420] sm:$0xff]
    %v685 = vld [vmem:[%s1 + $0x1428] sm:$0xff]
    %v686 = vld [vmem:[%s1 + $0x1430] sm:$0xff]
    %v687 = vld [vmem:[%s1 + $0x1438] sm:$0xff]
    %v688 = vld [vmem:[%s1 + $0x1440] sm:$0xff]
    %v689 = vld [vmem:[%s1 + $0x1448] sm:$0xff]
    %v690 = vld [vmem:[%s1 + $0x1450] sm:$0xff]
    %v691 = vld [vmem:[%s1 + $0x1458] sm:$0xff]
    %v692 = vld [vmem:[%s1 + $0x1460] sm:$0xff]
    %v693 = vld [vmem:[%s1 + $0x1468] sm:$0xff]
    %v694 = vld [vmem:[%s1 + $0x1470] sm:$0xff]
    %v695 = vld [vmem:[%s1 + $0x1478] sm:$0xff]
    %v696 = vld [vmem:[%s1 + $0x1480] sm:$0xff]
    %v697 = vld [vmem:[%s1 + $0x1488] sm:$0xff]
    %v698 = vld [vmem:[%s1 + $0x1490] sm:$0xff]
    %v699 = vld [vmem:[%s1 + $0x1498] sm:$0xff]
    %v700 = vld [vmem:[%s1 + $0x14a0] sm:$0xff]
    %v701 = vld [vmem:[%s1 + $0x14a8] sm:$0xff]
    %v702 = vld [vmem:[%s1 + $0x14b0] sm:$0xff]
    %v703 = vld [vmem:[%s1 + $0x14b8] sm:$0xff]
    %v704 = vld [vmem:[%s1 + $0x14c0] sm:$0xff]
    %v705 = vld [vmem:[%s1 + $0x14c8] sm:$0xff]
    %v706 = vld [vmem:[%s1 + $0x14d0] sm:$0xff]
    %v707 = vld [vmem:[%s1 + $0x14d8] sm:$0xff]
    %v708 = vld [vmem:[%s1 + $0x14e0] sm:$0xff]
    %v709 = vld [vmem:[%s1 + $0x14e8] sm:$0xff]
    %v710 = vld [vmem:[%s1 + $0x14f0] sm:$0xff]
    %v711 = vld [vmem:[%s1 + $0x14f8] sm:$0xff]
    %v712 = vld [vmem:[%s1 + $0x1500] sm:$0xff]
    %v713 = vld [vmem:[%s1 + $0x1508] sm:$0xff]
    %v714 = vld [vmem:[%s1 + $0x1510] sm:$0xff]
    %v715 = vld [vmem:[%s1 + $0x1518] sm:$0xff]
    %v716 = vld [vmem:[%s1 + $0x1520] sm:$0xff]
    %v717 = vld [vmem:[%s1 + $0x1528] sm:$0xff]
    %v718 = vld [vmem:[%s1 + $0x1530] sm:$0xff]
    %v719 = vld [vmem:[%s1 + $0x1538] sm:$0xff]
    %v720 = vld [vmem:[%s1 + $0x1540] sm:$0xff]
    %v721 = vld [vmem:[%s1 + $0x1548] sm:$0xff]
    %v722 = vld [vmem:[%s1 + $0x1550] sm:$0xff]
    %v723 = vld [vmem:[%s1 + $0x1558] sm:$0xff]
    %v724 = vld [vmem:[%s1 + $0x1560] sm:$0xff]
    %v725 = vld [vmem:[%s1 + $0x1568] sm:$0xff]
    %v726 = vld [vmem:[%s1 + $0x1570] sm:$0xff]
    %v727 = vld [vmem:[%s1 + $0x1578] sm:$0xff]
    %v728 = vld [vmem:[%s1 + $0x1580] sm:$0xff]
    %v729 = vld [vmem:[%s1 + $0x1588] sm:$0xff]
    %v730 = vld [vmem:[%s1 + $0x1590] sm:$0xff]
    %v731 = vld [vmem:[%s1 + $0x1598] sm:$0xff]
    %v732 = vld [vmem:[%s1 + $0x15a0] sm:$0xff]
    %v733 = vld [vmem:[%s1 + $0x15a8] sm:$0xff]
    %v734 = vld [vmem:[%s1 + $0x15b0] sm:$0xff]
    %v735 = vld [vmem:[%s1 + $0x15b8] sm:$0xff]
    %v736 = vld [vmem:[%s1 + $0x15c0] sm:$0xff]
    %v737 = vld [vmem:[%s1 + $0x15c8] sm:$0xff]
    %v738 = vld [vmem:[%s1 + $0x15d0] sm:$0xff]
    %v739 = vld [vmem:[%s1 + $0x15d8] sm:$0xff]
    %v740 = vld [vmem:[%s1 + $0x15e0] sm:$0xff]
    %v741 = vld [vmem:[%s1 + $0x15e8] sm:$0xff]
    %v742 = vld [vmem:[%s1 + $0x15f0] sm:$0xff]
    %v743 = vld [vmem:[%s1 + $0x15f8] sm:$0xff]
    %v744 = vld [vmem:[%s1 + $0x1600] sm:$0xff]
    %v745 = vld [vmem:[%s1 + $0x1608] sm:$0xff]
    %v746 = vld [vmem:[%s1 + $0x1610] sm:$0xff]
    %v747 = vld [vmem:[%s1 + $0x1618] sm:$0xff]
    %v748 = vld [vmem:[%s1 + $0x1620] sm:$0xff]
    %v749 = vld [vmem:[%s1 + $0x1628] sm:$0xff]
    %v750 = vld [vmem:[%s1 + $0x1630] sm:$0xff]
    %v751 = vld [vmem:[%s1 + $0x1638] sm:$0xff]
    %v752 = vld [vmem:[%s1 + $0x1640] sm:$0xff]
    %v753 = vld [vmem:[%s1 + $0x1648] sm:$0xff]
    %v754 = vld [vmem:[%s1 + $0x1650] sm:$0xff]
    %v755 = vld [vmem:[%s1 + $0x1658] sm:$0xff]
    %v756 = vld [vmem:[%s1 + $0x1660] sm:$0xff]
    %v757 = vld [vmem:[%s1 + $0x1668] sm:$0xff]
    %v758 = vld [vmem:[%s1 + $0x1670] sm:$0xff]
    %v759 = vld [vmem:[%s1 + $0x1678] sm:$0xff]
    %v760 = vld [vmem:[%s1 + $0x1680] sm:$0xff]
    %v761 = vld [vmem:[%s1 + $0x1688] sm:$0xff]
    %v762 = vld [vmem:[%s1 + $0x1690] sm:$0xff]
    %v763 = vld [vmem:[%s1 + $0x1698] sm:$0xff]
    %v764 = vld [vmem:[%s1 + $0x16a0] sm:$0xff]
    %v765 = vld [vmem:[%s1 + $0x16a8] sm:$0xff]
    %v766 = vld [vmem:[%s1 + $0x16b0] sm:$0xff]
    %v767 = vld [vmem:[%s1 + $0x16b8] sm:$0xff]
    %v768 = vld [vmem:[%s1 + $0x16c0] sm:$0xff]
    %v769 = vld [vmem:[%s1 + $0x16c8] sm:$0xff]
    %v770 = vld [vmem:[%s1 + $0x16d0] sm:$0xff]
    %v771 = vld [vmem:[%s1 + $0x16d8] sm:$0xff]
    %v772 = vld [vmem:[%s1 + $0x16e0] sm:$0xff]
    %v773 = vld [vmem:[%s1 + $0x16e8] sm:$0xff]
    %v774 = vld [vmem:[%s1 + $0x16f0] sm:$0xff]
    %v775 = vld [vmem:[%s1 + $0x16f8] sm:$0xff]
    %v776 = vld [vmem:[%s1 + $0x1700] sm:$0xff]
    %v777 = vld [vmem:[%s1 + $0x1708] sm:$0xff]
    %v778 = vld [vmem:[%s1 + $0x1710] sm:$0xff]
    %v779 = vld [vmem:[%s1 + $0x1718] sm:$0xff]
    %v780 = vld [vmem:[%s1 + $0x1720] sm:$0xff]
    %v781 = vld [vmem:[%s1 + $0x1728] sm:$0xff]
    %v782 = vld [vmem:[%s1 + $0x1730] sm:$0xff]
    %v783 = vld [vmem:[%s1 + $0x1738] sm:$0xff]
    %v784 = vld [vmem:[%s1 + $0x1740] sm:$0xff]
    %v785 = vld [vmem:[%s1 + $0x1748] sm:$0xff]
    %v786 = vld [vmem:[%s1 + $0x1750] sm:$0xff]
    %v787 = vld [vmem:[%s1 + $0x1758] sm:$0xff]
    %v788 = vld [vmem:[%s1 + $0x1760] sm:$0xff]
    %v789 = vld [vmem:[%s1 + $0x1768] sm:$0xff]
    %v790 = vld [vmem:[%s1 + $0x1770] sm:$0xff]
    %v791 = vld [vmem:[%s1 + $0x1778] sm:$0xff]
    %v792 = vld [vmem:[%s1 + $0x1780] sm:$0xff]
    %v793 = vld [vmem:[%s1 + $0x1788] sm:$0xff]
    %v794 = vld [vmem:[%s1 + $0x1790] sm:$0xff]
    %v795 = vld [vmem:[%s1 + $0x1798] sm:$0xff]
    %v796 = vld [vmem:[%s1 + $0x17a0] sm:$0xff]
    %v797 = vld [vmem:[%s1 + $0x17a8] sm:$0xff]
    %v798 = vld [vmem:[%s1 + $0x17b0] sm:$0xff]
    %v799 = vld [vmem:[%s1 + $0x17b8] sm:$0xff]
    %v800 = vld [vmem:[%s1 + $0x17c0] sm:$0xff]
    %v801 = vld [vmem:[%s1 + $0x17c8] sm:$0xff]
    %v802 = vld [vmem:[%s1 + $0x17d0] sm:$0xff]
    %v803 = vld [vmem:[%s1 + $0x17d8] sm:$0xff]
    %v804 = vld [vmem:[%s1 + $0x17e0] sm:$0xff]
    %v805 = vld [vmem:[%s1 + $0x17e8] sm:$0xff]
    %v806 = vld [vmem:[%s1 + $0x17f0] sm:$0xff]
    %v807 = vld [vmem:[%s1 + $0x17f8] sm:$0xff]
    %v808 = vld [vmem:[%s1 + $0x1800] sm:$0xff]
    %v809 = vld [vmem:[%s1 + $0x1808] sm:$0xff]
    %v810 = vld [vmem:[%s1 + $0x1810] sm:$0xff]
    %v811 = vld [vmem:[%s1 + $0x1818] sm:$0xff]
    %v812 = vld [vmem:[%s1 + $0x1820] sm:$0xff]
    %v813 = vld [vmem:[%s1 + $0x1828] sm:$0xff]
    %v814 = vld [vmem:[%s1 + $0x1830] sm:$0xff]
    %v815 = vld [vmem:[%s1 + $0x1838] sm:$0xff]
    %v816 = vld [vmem:[%s1 + $0x1840] sm:$0xff]
    %v817 = vld [vmem:[%s1 + $0x1848] sm:$0xff]
    %v818 = vld [vmem:[%s1 + $0x1850] sm:$0xff]
    %v819 = vld [vmem:[%s1 + $0x1858] sm:$0xff]
    %v820 = vld [vmem:[%s1 + $0x1860] sm:$0xff]
    %v821 = vld [vmem:[%s1 + $0x1868] sm:$0xff]
    %v822 = vld [vmem:[%s1 + $0x1870] sm:$0xff]
    %v823 = vld [vmem:[%s1 + $0x1878] sm:$0xff]
    %v824 = vld [vmem:[%s1 + $0x1880] sm:$0xff]
    %v825 = vld [vmem:[%s1 + $0x1888] sm:$0xff]
    %v826 = vld [vmem:[%s1 + $0x1890] sm:$0xff]
    %v827 = vld [vmem:[%s1 + $0x1898] sm:$0xff]
    %v828 = vld [vmem:[%s1 + $0x18a0] sm:$0xff]
    %v829 = vld [vmem:[%s1 + $0x18a8] sm:$0xff]
    %v830 = vld [vmem:[%s1 + $0x18b0] sm:$0xff]
    %v831 = vld [vmem:[%s1 + $0x18b8] sm:$0xff]
    %v832 = vld [vmem:[%s1 + $0x18c0] sm:$0xff]
    %v833 = vld [vmem:[%s1 + $0x18c8] sm:$0xff]
    %v834 = vld [vmem:[%s1 + $0x18d0] sm:$0xff]
    %v835 = vld [vmem:[%s1 + $0x18d8] sm:$0xff]
    %v836 = vld [vmem:[%s1 + $0x18e0] sm:$0xff]
    %v837 = vld [vmem:[%s1 + $0x18e8] sm:$0xff]
    %v838 = vld [vmem:[%s1 + $0x18f0] sm:$0xff]
    %v839 = vld [vmem:[%s1 + $0x18f8] sm:$0xff]
    %v840 = vld [vmem:[%s1 + $0x1900] sm:$0xff]
    %v841 = vld [vmem:[%s1 + $0x1908] sm:$0xff]
    %v842 = vld [vmem:[%s1 + $0x1910] sm:$0xff]
    %v843 = vld [vmem:[%s1 + $0x1918] sm:$0xff]
    %v844 = vld [vmem:[%s1 + $0x1920] sm:$0xff]
    %v845 = vld [vmem:[%s1 + $0x1928] sm:$0xff]
    %v846 = vld [vmem:[%s1 + $0x1930] sm:$0xff]
    %v847 = vld [vmem:[%s1 + $0x1938] sm:$0xff]
    %v848 = vld [vmem:[%s1 + $0x1940] sm:$0xff]
    %v849 = vld [vmem:[%s1 + $0x1948] sm:$0xff]
    %v850 = vld [vmem:[%s1 + $0x1950] sm:$0xff]
    %v851 = vld [vmem:[%s1 + $0x1958] sm:$0xff]
    %v852 = vld [vmem:[%s1 + $0x1960] sm:$0xff]
    %v853 = vld [vmem:[%s1 + $0x1968] sm:$0xff]
    %v854 = vld [vmem:[%s1 + $0x1970] sm:$0xff]
    %v855 = vld [vmem:[%s1 + $0x1978] sm:$0xff]
    %v856 = vld [vmem:[%s1 + $0x1980] sm:$0xff]
    %v857 = vld [vmem:[%s1 + $0x1988] sm:$0xff]
    %v858 = vld [vmem:[%s1 + $0x1990] sm:$0xff]
    %v859 = vld [vmem:[%s1 + $0x1998] sm:$0xff]
    %v860 = vld [vmem:[%s1 + $0x19a0] sm:$0xff]
    %v861 = vld [vmem:[%s1 + $0x19a8] sm:$0xff]
    %v862 = vld [vmem:[%s1 + $0x19b0] sm:$0xff]
    %v863 = vld [vmem:[%s1 + $0x19b8] sm:$0xff]
    %v864 = vld [vmem:[%s1 + $0x19c0] sm:$0xff]
    %v865 = vld [vmem:[%s1 + $0x19c8] sm:$0xff]
    %v866 = vld [vmem:[%s1 + $0x19d0] sm:$0xff]
    %v867 = vld [vmem:[%s1 + $0x19d8] sm:$0xff]
    %v868 = vld [vmem:[%s1 + $0x19e0] sm:$0xff]
    %v869 = vld [vmem:[%s1 + $0x19e8] sm:$0xff]
    %v870 = vld [vmem:[%s1 + $0x19f0] sm:$0xff]
    %v871 = vld [vmem:[%s1 + $0x19f8] sm:$0xff]
    %v872 = vld [vmem:[%s1 + $0x1a00] sm:$0xff]
    %v873 = vld [vmem:[%s1 + $0x1a08] sm:$0xff]
    %v874 = vld [vmem:[%s1 + $0x1a10] sm:$0xff]
    %v875 = vld [vmem:[%s1 + $0x1a18] sm:$0xff]
    %v876 = vld [vmem:[%s1 + $0x1a20] sm:$0xff]
    %v877 = vld [vmem:[%s1 + $0x1a28] sm:$0xff]
    %v878 = vld [vmem:[%s1 + $0x1a30] sm:$0xff]
    %v879 = vld [vmem:[%s1 + $0x1a38] sm:$0xff]
    %v880 = vld [vmem:[%s1 + $0x1a40] sm:$0xff]
    %v881 = vld [vmem:[%s1 + $0x1a48] sm:$0xff]
    %v882 = vld [vmem:[%s1 + $0x1a50] sm:$0xff]
    %v883 = vld [vmem:[%s1 + $0x1a58] sm:$0xff]
    %v884 = vld [vmem:[%s1 + $0x1a60] sm:$0xff]
    %v885 = vld [vmem:[%s1 + $0x1a68] sm:$0xff]
    %v886 = vld [vmem:[%s1 + $0x1a70] sm:$0xff]
    %v887 = vld [vmem:[%s1 + $0x1a78] sm:$0xff]
    %v888 = vld [vmem:[%s1 + $0x1a80] sm:$0xff]
    %v889 = vld [vmem:[%s1 + $0x1a88] sm:$0xff]
    %v890 = vld [vmem:[%s1 + $0x1a90] sm:$0xff]
    %v891 = vld [vmem:[%s1 + $0x1a98] sm:$0xff]
    %v892 = vld [vmem:[%s1 + $0x1aa0] sm:$0xff]
    %v893 = vld [vmem:[%s1 + $0x1aa8] sm:$0xff]
    %v894 = vld [vmem:[%s1 + $0x1ab0] sm:$0xff]
    %v895 = vld [vmem:[%s1 + $0x1ab8] sm:$0xff]
    %v896 = vld [vmem:[%s1 + $0x1ac0] sm:$0xff]
    %v897 = vld [vmem:[%s1 + $0x1ac8] sm:$0xff]
    %v898 = vld [vmem:[%s1 + $0x1ad0] sm:$0xff]
    %v899 = vld [vmem:[%s1 + $0x1ad8] sm:$0xff]
    %v900 = vld [vmem:[%s1 + $0x1ae0] sm:$0xff]
    %v901 = vld [vmem:[%s1 + $0x1ae8] sm:$0xff]
    %v902 = vld [vmem:[%s1 + $0x1af0] sm:$0xff]
    %v903 = vld [vmem:[%s1 + $0x1af8] sm:$0xff]
    %v904 = vld [vmem:[%s1 + $0x1b00] sm:$0xff]
    %v905 = vld [vmem:[%s1 + $0x1b08] sm:$0xff]
    %v906 = vld [vmem:[%s1 + $0x1b10] sm:$0xff]
    %v907 = vld [vmem:[%s1 + $0x1b18] sm:$0xff]
    %v908 = vld [vmem:[%s1 + $0x1b20] sm:$0xff]
    %v909 = vld [vmem:[%s1 + $0x1b28] sm:$0xff]
    %v910 = vld [vmem:[%s1 + $0x1b30] sm:$0xff]
    %v911 = vld [vmem:[%s1 + $0x1b38] sm:$0xff]
    %v912 = vld [vmem:[%s1 + $0x1b40] sm:$0xff]
    %v913 = vld [vmem:[%s1 + $0x1b48] sm:$0xff]
    %v914 = vld [vmem:[%s1 + $0x1b50] sm:$0xff]
    %v915 = vld [vmem:[%s1 + $0x1b58] sm:$0xff]
    %v916 = vld [vmem:[%s1 + $0x1b60] sm:$0xff]
    %v917 = vld [vmem:[%s1 + $0x1b68] sm:$0xff]
    %v918 = vld [vmem:[%s1 + $0x1b70] sm:$0xff]
    %v919 = vld [vmem:[%s1 + $0x1b78] sm:$0xff]
    %v920 = vld [vmem:[%s1 + $0x1b80] sm:$0xff]
    %v921 = vld [vmem:[%s1 + $0x1b88] sm:$0xff]
    %v922 = vld [vmem:[%s1 + $0x1b90] sm:$0xff]
    %v923 = vld [vmem:[%s1 + $0x1b98] sm:$0xff]
    %v924 = vld [vmem:[%s1 + $0x1ba0] sm:$0xff]
    %v925 = vld [vmem:[%s1 + $0x1ba8] sm:$0xff]
    %v926 = vld [vmem:[%s1 + $0x1bb0] sm:$0xff]
    %v927 = vld [vmem:[%s1 + $0x1bb8] sm:$0xff]
    %v928 = vld [vmem:[%s1 + $0x1bc0] sm:$0xff]
    %v929 = vld [vmem:[%s1 + $0x1bc8] sm:$0xff]
    %v930 = vld [vmem:[%s1 + $0x1bd0] sm:$0xff]
    %v931 = vld [vmem:[%s1 + $0x1bd8] sm:$0xff]
    %v932 = vld [vmem:[%s1 + $0x1be0] sm:$0xff]
    %v933 = vld [vmem:[%s1 + $0x1be8] sm:$0xff]
    %v934 = vld [vmem:[%s1 + $0x1bf0] sm:$0xff]
    %v935 = vld [vmem:[%s1 + $0x1bf8] sm:$0xff]
    %v936 = vld [vmem:[%s1 + $0x1c00] sm:$0xff]
    %v937 = vld [vmem:[%s1 + $0x1c08] sm:$0xff]
    %v938 = vld [vmem:[%s1 + $0x1c10] sm:$0xff]
    %v939 = vld [vmem:[%s1 + $0x1c18] sm:$0xff]
    %v940 = vld [vmem:[%s1 + $0x1c20] sm:$0xff]
    %v941 = vld [vmem:[%s1 + $0x1c28] sm:$0xff]
    %v942 = vld [vmem:[%s1 + $0x1c30] sm:$0xff]
    %v943 = vld [vmem:[%s1 + $0x1c38] sm:$0xff]
    %v944 = vld [vmem:[%s1 + $0x1c40] sm:$0xff]
    %v945 = vld [vmem:[%s1 + $0x1c48] sm:$0xff]
    %v946 = vld [vmem:[%s1 + $0x1c50] sm:$0xff]
    %v947 = vld [vmem:[%s1 + $0x1c58] sm:$0xff]
    %v948 = vld [vmem:[%s1 + $0x1c60] sm:$0xff]
    %v949 = vld [vmem:[%s1 + $0x1c68] sm:$0xff]
    %v950 = vld [vmem:[%s1 + $0x1c70] sm:$0xff]
    %v951 = vld [vmem:[%s1 + $0x1c78] sm:$0xff]
    %v952 = vld [vmem:[%s1 + $0x1c80] sm:$0xff]
    %v953 = vld [vmem:[%s1 + $0x1c88] sm:$0xff]
    %v954 = vld [vmem:[%s1 + $0x1c90] sm:$0xff]
    %v955 = vld [vmem:[%s1 + $0x1c98] sm:$0xff]
    %v956 = vld [vmem:[%s1 + $0x1ca0] sm:$0xff]
    %v957 = vld [vmem:[%s1 + $0x1ca8] sm:$0xff]
    %v958 = vld [vmem:[%s1 + $0x1cb0] sm:$0xff]
    %v959 = vld [vmem:[%s1 + $0x1cb8] sm:$0xff]
    %v960 = vld [vmem:[%s1 + $0x1cc0] sm:$0xff]
    %v961 = vld [vmem:[%s1 + $0x1cc8] sm:$0xff]
    %v962 = vld [vmem:[%s1 + $0x1cd0] sm:$0xff]
    %v963 = vld [vmem:[%s1 + $0x1cd8] sm:$0xff]
    %v964 = vld [vmem:[%s1 + $0x1ce0] sm:$0xff]
    %v965 = vld [vmem:[%s1 + $0x1ce8] sm:$0xff]
    %v966 = vld [vmem:[%s1 + $0x1cf0] sm:$0xff]
    %v967 = vld [vmem:[%s1 + $0x1cf8] sm:$0xff]
    %v968 = vld [vmem:[%s1 + $0x1d00] sm:$0xff]
    %v969 = vld [vmem:[%s1 + $0x1d08] sm:$0xff]
    %v970 = vld [vmem:[%s1 + $0x1d10] sm:$0xff]
    %v971 = vld [vmem:[%s1 + $0x1d18] sm:$0xff]
    %v972 = vld [vmem:[%s1 + $0x1d20] sm:$0xff]
    %v973 = vld [vmem:[%s1 + $0x1d28] sm:$0xff]
    %v974 = vld [vmem:[%s1 + $0x1d30] sm:$0xff]
    %v975 = vld [vmem:[%s1 + $0x1d38] sm:$0xff]
    %v976 = vld [vmem:[%s1 + $0x1d40] sm:$0xff]
    %v977 = vld [vmem:[%s1 + $0x1d48] sm:$0xff]
    %v978 = vld [vmem:[%s1 + $0x1d50] sm:$0xff]
    %v979 = vld [vmem:[%s1 + $0x1d58] sm:$0xff]
    %v980 = vld [vmem:[%s1 + $0x1d60] sm:$0xff]
    %v981 = vld [vmem:[%s1 + $0x1d68] sm:$0xff]
    %v982 = vld [vmem:[%s1 + $0x1d70] sm:$0xff]
    %v983 = vld [vmem:[%s1 + $0x1d78] sm:$0xff]
    %v984 = vld [vmem:[%s1 + $0x1d80] sm:$0xff]
    %v985 = vld [vmem:[%s1 + $0x1d88] sm:$0xff]
    %v986 = vld [vmem:[%s1 + $0x1d90] sm:$0xff]
    %v987 = vld [vmem:[%s1 + $0x1d98] sm:$0xff]
    %v988 = vld [vmem:[%s1 + $0x1da0] sm:$0xff]
    %v989 = vld [vmem:[%s1 + $0x1da8] sm:$0xff]
    %v990 = vld [vmem:[%s1 + $0x1db0] sm:$0xff]
    %v991 = vld [vmem:[%s1 + $0x1db8] sm:$0xff]
    %v992 = vld [vmem:[%s1 + $0x1dc0] sm:$0xff]
    %v993 = vld [vmem:[%s1 + $0x1dc8] sm:$0xff]
    %v994 = vld [vmem:[%s1 + $0x1dd0] sm:$0xff]
    %v995 = vld [vmem:[%s1 + $0x1dd8] sm:$0xff]
    %v996 = vld [vmem:[%s1 + $0x1de0] sm:$0xff]
    %v997 = vld [vmem:[%s1 + $0x1de8] sm:$0xff]
    %v998 = vld [vmem:[%s1 + $0x1df0] sm:$0xff]
    %v999 = vld [vmem:[%s1 + $0x1df8] sm:$0xff]
    %v1000 = vld [vmem:[%s1 + $0x1e00] sm:$0xff]
    %v1001 = vld [vmem:[%s1 + $0x1e08] sm:$0xff]
    %v1002 = vld [vmem:[%s1 + $0x1e10] sm:$0xff]
    %v1003 = vld [vmem:[%s1 + $0x1e18] sm:$0xff]
    %v1004 = vld [vmem:[%s1 + $0x1e20] sm:$0xff]
    %v1005 = vld [vmem:[%s1 + $0x1e28] sm:$0xff]
    %v1006 = vld [vmem:[%s1 + $0x1e30] sm:$0xff]
    %v1007 = vld [vmem:[%s1 + $0x1e38] sm:$0xff]
    %v1008 = vld [vmem:[%s1 + $0x1e40] sm:$0xff]
    %v1009 = vld [vmem:[%s1 + $0x1e48] sm:$0xff]
    %v1010 = vld [vmem:[%s1 + $0x1e50] sm:$0xff]
    %v1011 = vld [vmem:[%s1 + $0x1e58] sm:$0xff]
    %v1012 = vld [vmem:[%s1 + $0x1e60] sm:$0xff]
    %v1013 = vld [vmem:[%s1 + $0x1e68] sm:$0xff]
    %v1014 = vld [vmem:[%s1 + $0x1e70] sm:$0xff]
    %v1015 = vld [vmem:[%s1 + $0x1e78] sm:$0xff]
    %v1016 = vld [vmem:[%s1 + $0x1e80] sm:$0xff]
    %v1017 = vld [vmem:[%s1 + $0x1e88] sm:$0xff]
    %v1018 = vld [vmem:[%s1 + $0x1e90] sm:$0xff]
    %v1019 = vld [vmem:[%s1 + $0x1e98] sm:$0xff]
    %v1020 = vld [vmem:[%s1 + $0x1ea0] sm:$0xff]
    %v1021 = vld [vmem:[%s1 + $0x1ea8] sm:$0xff]
    %v1022 = vld [vmem:[%s1 + $0x1eb0] sm:$0xff]
    %v1023 = vld [vmem:[%s1 + $0x1eb8] sm:$0xff]
    %v1024 = vld [vmem:[%s1 + $0x1ec0] sm:$0xff]
    %v1025 = vld [vmem:[%s1 + $0x1ec8] sm:$0xff]
    %v1026 = vld [vmem:[%s1 + $0x1ed0] sm:$0xff]
    %v1027 = vld [vmem:[%s1 + $0x1ed8] sm:$0xff]
    %v1028 = vld [vmem:[%s1 + $0x1ee0] sm:$0xff]
    %v1029 = vld [vmem:[%s1 + $0x1ee8] sm:$0xff]
    %v1030 = vld [vmem:[%s1 + $0x1ef0] sm:$0xff]
    %v1031 = vld [vmem:[%s1 + $0x1ef8] sm:$0xff]
    %v1032 = vld [vmem:[%s1 + $0x1f00] sm:$0xff]
    %v1033 = vld [vmem:[%s1 + $0x1f08] sm:$0xff]
    %v1034 = vld [vmem:[%s1 + $0x1f10] sm:$0xff]
    %v1035 = vld [vmem:[%s1 + $0x1f18] sm:$0xff]
    %v1036 = vld [vmem:[%s1 + $0x1f20] sm:$0xff]
    %v1037 = vld [vmem:[%s1 + $0x1f28] sm:$0xff]
    %v1038 = vld [vmem:[%s1 + $0x1f30] sm:$0xff]
    %v1039 = vld [vmem:[%s1 + $0x1f38] sm:$0xff]
    %v1040 = vld [vmem:[%s1 + $0x1f40] sm:$0xff]
    %v1041 = vld [vmem:[%s1 + $0x1f48] sm:$0xff]
    %v1042 = vld [vmem:[%s1 + $0x1f50] sm:$0xff]
    %v1043 = vld [vmem:[%s1 + $0x1f58] sm:$0xff]
    %v1044 = vld [vmem:[%s1 + $0x1f60] sm:$0xff]
    %v1045 = vld [vmem:[%s1 + $0x1f68] sm:$0xff]
    %v1046 = vld [vmem:[%s1 + $0x1f70] sm:$0xff]
    %v1047 = vld [vmem:[%s1 + $0x1f78] sm:$0xff]
    %v1048 = vld [vmem:[%s1 + $0x1f80] sm:$0xff]
    %v1049 = vld [vmem:[%s1 + $0x1f88] sm:$0xff]
    %v1050 = vld [vmem:[%s1 + $0x1f90] sm:$0xff]
    %v1051 = vld [vmem:[%s1 + $0x1f98] sm:$0xff]
    %v1052 = vld [vmem:[%s1 + $0x1fa0] sm:$0xff]
    %v1053 = vld [vmem:[%s1 + $0x1fa8] sm:$0xff]
    %v1054 = vld [vmem:[%s1 + $0x1fb0] sm:$0xff]
    %v1055 = vld [vmem:[%s1 + $0x1fb8] sm:$0xff]
    %v1056 = vld [vmem:[%s1 + $0x1fc0] sm:$0xff]
    %v1057 = vld [vmem:[%s1 + $0x1fc8] sm:$0xff]
    %v1058 = vld [vmem:[%s1 + $0x1fd0] sm:$0xff]
    %v1059 = vld [vmem:[%s1 + $0x1fd8] sm:$0xff]
    %v1060 = vld [vmem:[%s1 + $0x1fe0] sm:$0xff]
    %v1061 = vld [vmem:[%s1 + $0x1fe8] sm:$0xff]
    %v1062 = vld [vmem:[%s1 + $0x1ff0] sm:$0xff]
    %v1063 = vld [vmem:[%s1 + $0x1ff8] sm:$0xff]
    %v1064 = vld [vmem:[%s1 + $0x2000] sm:$0xff]
    %v1065 = vld [vmem:[%s1 + $0x2008] sm:$0xff]
    %v1066 = vld [vmem:[%s1 + $0x2010] sm:$0xff]
    %v1067 = vld [vmem:[%s1 + $0x2018] sm:$0xff]
    %v1068 = vld [vmem:[%s1 + $0x2020] sm:$0xff]
    %v1069 = vld [vmem:[%s1 + $0x2028] sm:$0xff]
    %v1070 = vld [vmem:[%s1 + $0x2030] sm:$0xff]
    %v1071 = vld [vmem:[%s1 + $0x2038] sm:$0xff]
    %v1072 = vld [vmem:[%s1 + $0x2040] sm:$0xff]
    %v1073 = vld [vmem:[%s1 + $0x2048] sm:$0xff]
    %v1074 = vld [vmem:[%s1 + $0x2050] sm:$0xff]
    %v1075 = vld [vmem:[%s1 + $0x2058] sm:$0xff]
    %v1076 = vld [vmem:[%s1 + $0x2060] sm:$0xff]
    %v1077 = vld [vmem:[%s1 + $0x2068] sm:$0xff]
    %v1078 = vld [vmem:[%s1 + $0x2070] sm:$0xff]
    %v1079 = vld [vmem:[%s1 + $0x2078] sm:$0xff]
    %v1080 = vld [vmem:[%s1 + $0x2080] sm:$0xff]
    %v1081 = vld [vmem:[%s1 + $0x2088] sm:$0xff]
    %v1082 = vld [vmem:[%s1 + $0x2090] sm:$0xff]
    %v1083 = vld [vmem:[%s1 + $0x2098] sm:$0xff]
    %v1084 = vld [vmem:[%s1 + $0x20a0] sm:$0xff]
    %v1085 = vld [vmem:[%s1 + $0x20a8] sm:$0xff]
    %v1086 = vld [vmem:[%s1 + $0x20b0] sm:$0xff]
    %v1087 = vld [vmem:[%s1 + $0x20b8] sm:$0xff]
    %v1088 = vld [vmem:[%s1 + $0x20c0] sm:$0xff]
    %v1089 = vld [vmem:[%s1 + $0x20c8] sm:$0xff]
    %v1090 = vld [vmem:[%s1 + $0x20d0] sm:$0xff]
    %v1091 = vld [vmem:[%s1 + $0x20d8] sm:$0xff]
    %v1092 = vld [vmem:[%s1 + $0x20e0] sm:$0xff]
    %v1093 = vld [vmem:[%s1 + $0x20e8] sm:$0xff]
    %v1094 = vld [vmem:[%s1 + $0x20f0] sm:$0xff]
    %v1095 = vld [vmem:[%s1 + $0x20f8] sm:$0xff]
    %v1096 = vld [vmem:[%s1 + $0x2100] sm:$0xff]
    %v1097 = vld [vmem:[%s1 + $0x2108] sm:$0xff]
    %v1098 = vld [vmem:[%s1 + $0x2110] sm:$0xff]
    %v1099 = vld [vmem:[%s1 + $0x2118] sm:$0xff]
    %v1100 = vld [vmem:[%s1 + $0x2120] sm:$0xff]
    %v1101 = vld [vmem:[%s1 + $0x2128] sm:$0xff]
    %v1102 = vld [vmem:[%s1 + $0x2130] sm:$0xff]
    %v1103 = vld [vmem:[%s1 + $0x2138] sm:$0xff]
    %v1104 = vld [vmem:[%s1 + $0x2140] sm:$0xff]
    %v1105 = vld [vmem:[%s1 + $0x2148] sm:$0xff]
    %v1106 = vld [vmem:[%s1 + $0x2150] sm:$0xff]
    %v1107 = vld [vmem:[%s1 + $0x2158] sm:$0xff]
    %v1108 = vld [vmem:[%s1 + $0x2160] sm:$0xff]
    %v1109 = vld [vmem:[%s1 + $0x2168] sm:$0xff]
    %v1110 = vld [vmem:[%s1 + $0x2170] sm:$0xff]
    %v1111 = vld [vmem:[%s1 + $0x2178] sm:$0xff]
    %v1112 = vld [vmem:[%s1 + $0x2180] sm:$0xff]
    %v1113 = vld [vmem:[%s1 + $0x2188] sm:$0xff]
    %v1114 = vld [vmem:[%s1 + $0x2190] sm:$0xff]
    %v1115 = vld [vmem:[%s1 + $0x2198] sm:$0xff]
    %v1116 = vld [vmem:[%s1 + $0x21a0] sm:$0xff]
    %v1117 = vld [vmem:[%s1 + $0x21a8] sm:$0xff]
    %v1118 = vld [vmem:[%s1 + $0x21b0] sm:$0xff]
    %v1119 = vld [vmem:[%s1 + $0x21b8] sm:$0xff]
    %v1120 = vld [vmem:[%s1 + $0x21c0] sm:$0xff]
    %v1121 = vld [vmem:[%s1 + $0x21c8] sm:$0xff]
    %v1122 = vld [vmem:[%s1 + $0x21d0] sm:$0xff]
    %v1123 = vld [vmem:[%s1 + $0x21d8] sm:$0xff]
    %v1124 = vld [vmem:[%s1 + $0x21e0] sm:$0xff]
    %v1125 = vld [vmem:[%s1 + $0x21e8] sm:$0xff]
    %v1126 = vld [vmem:[%s1 + $0x21f0] sm:$0xff]
    %v1127 = vld [vmem:[%s1 + $0x21f8] sm:$0xff]
    %v1128 = vld [vmem:[%s1 + $0x2200] sm:$0xff]
    %v1129 = vld [vmem:[%s1 + $0x2208] sm:$0xff]
    %v1130 = vld [vmem:[%s1 + $0x2210] sm:$0xff]
    %v1131 = vld [vmem:[%s1 + $0x2218] sm:$0xff]
    %v1132 = vld [vmem:[%s1 + $0x2220] sm:$0xff]
    %v1133 = vld [vmem:[%s1 + $0x2228] sm:$0xff]
    %v1134 = vld [vmem:[%s1 + $0x2230] sm:$0xff]
    %v1135 = vld [vmem:[%s1 + $0x2238] sm:$0xff]
    %v1136 = vld [vmem:[%s1 + $0x2240] sm:$0xff]
    %v1137 = vld [vmem:[%s1 + $0x2248] sm:$0xff]
    %v1138 = vld [vmem:[%s1 + $0x2250] sm:$0xff]
    %v1139 = vld [vmem:[%s1 + $0x2258] sm:$0xff]
    %v1140 = vld [vmem:[%s1 + $0x2260] sm:$0xff]
    %v1141 = vld [vmem:[%s1 + $0x2268] sm:$0xff]
    %v1142 = vld [vmem:[%s1 + $0x2270] sm:$0xff]
    %v1143 = vld [vmem:[%s1 + $0x2278] sm:$0xff]
    %v1144 = vld [vmem:[%s1 + $0x2280] sm:$0xff]
    %v1145 = vld [vmem:[%s1 + $0x2288] sm:$0xff]
    %v1146 = vld [vmem:[%s1 + $0x2290] sm:$0xff]
    %v1147 = vld [vmem:[%s1 + $0x2298] sm:$0xff]
    %v1148 = vld [vmem:[%s1 + $0x22a0] sm:$0xff]
    %v1149 = vld [vmem:[%s1 + $0x22a8] sm:$0xff]
    %v1150 = vld [vmem:[%s1 + $0x22b0] sm:$0xff]
    %v1151 = vld [vmem:[%s1 + $0x22b8] sm:$0xff]
    %v1152 = vld [vmem:[%s1 + $0x22c0] sm:$0xff]
    %v1153 = vld [vmem:[%s1 + $0x22c8] sm:$0xff]
    %v1154 = vld [vmem:[%s1 + $0x22d0] sm:$0xff]
    %v1155 = vld [vmem:[%s1 + $0x22d8] sm:$0xff]
    %v1156 = vld [vmem:[%s1 + $0x22e0] sm:$0xff]
    %v1157 = vld [vmem:[%s1 + $0x22e8] sm:$0xff]
    %v1158 = vld [vmem:[%s1 + $0x22f0] sm:$0xff]
    %v1159 = vld [vmem:[%s1 + $0x22f8] sm:$0xff]
    %v1160 = vld [vmem:[%s1 + $0x2300] sm:$0xff]
    %v1161 = vld [vmem:[%s1 + $0x2308] sm:$0xff]
    %v1162 = vld [vmem:[%s1 + $0x2310] sm:$0xff]
    %v1163 = vld [vmem:[%s1 + $0x2318] sm:$0xff]
    %v1164 = vld [vmem:[%s1 + $0x2320] sm:$0xff]
    %v1165 = vld [vmem:[%s1 + $0x2328] sm:$0xff]
    %v1166 = vld [vmem:[%s1 + $0x2330] sm:$0xff]
    %v1167 = vld [vmem:[%s1 + $0x2338] sm:$0xff]
    %v1168 = vld [vmem:[%s1 + $0x2340] sm:$0xff]
    %v1169 = vld [vmem:[%s1 + $0x2348] sm:$0xff]
    %v1170 = vld [vmem:[%s1 + $0x2350] sm:$0xff]
    %v1171 = vld [vmem:[%s1 + $0x2358] sm:$0xff]
    %v1172 = vld [vmem:[%s1 + $0x2360] sm:$0xff]
    %v1173 = vld [vmem:[%s1 + $0x2368] sm:$0xff]
    %v1174 = vld [vmem:[%s1 + $0x2370] sm:$0xff]
    %v1175 = vld [vmem:[%s1 + $0x2378] sm:$0xff]
    %v1176 = vld [vmem:[%s1 + $0x2380] sm:$0xff]
    %v1177 = vld [vmem:[%s1 + $0x2388] sm:$0xff]
    %v1178 = vld [vmem:[%s1 + $0x2390] sm:$0xff]
    %v1179 = vld [vmem:[%s1 + $0x2398] sm:$0xff]
    %v1180 = vld [vmem:[%s1 + $0x23a0] sm:$0xff]
    %v1181 = vld [vmem:[%s1 + $0x23a8] sm:$0xff]
    %v1182 = vld [vmem:[%s1 + $0x23b0] sm:$0xff]
    %v1183 = vld [vmem:[%s1 + $0x23b8] sm:$0xff]
    %v1184 = vld [vmem:[%s1 + $0x23c0] sm:$0xff]
    %v1185 = vld [vmem:[%s1 + $0x23c8] sm:$0xff]
    %v1186 = vld [vmem:[%s1 + $0x23d0] sm:$0xff]
    %v1187 = vld [vmem:[%s1 + $0x23d8] sm:$0xff]
    %v1188 = vld [vmem:[%s1 + $0x23e0] sm:$0xff]
    %v1189 = vld [vmem:[%s1 + $0x23e8] sm:$0xff]
    %v1190 = vld [vmem:[%s1 + $0x23f0] sm:$0xff]
    %v1191 = vld [vmem:[%s1 + $0x23f8] sm:$0xff]
    %v1192 = vld [vmem:[%s1 + $0x2400] sm:$0xff]
    %v1193 = vld [vmem:[%s1 + $0x2408] sm:$0xff]
    %v1194 = vld [vmem:[%s1 + $0x2410] sm:$0xff]
    %v1195 = vld [vmem:[%s1 + $0x2418] sm:$0xff]
    %v1196 = vld [vmem:[%s1 + $0x2420] sm:$0xff]
    %v1197 = vld [vmem:[%s1 + $0x2428] sm:$0xff]
    %v1198 = vld [vmem:[%s1 + $0x2430] sm:$0xff]
    %v1199 = vld [vmem:[%s1 + $0x2438] sm:$0xff]
    %v1200 = vld [vmem:[%s1 + $0x2440] sm:$0xff]
    %v1201 = vld [vmem:[%s1 + $0x2448] sm:$0xff]
    %v1202 = vld [vmem:[%s1 + $0x2450] sm:$0xff]
    %v1203 = vld [vmem:[%s1 + $0x2458] sm:$0xff]
    %v1204 = vld [vmem:[%s1 + $0x2460] sm:$0xff]
    %v1205 = vld [vmem:[%s1 + $0x2468] sm:$0xff]
    %v1206 = vld [vmem:[%s1 + $0x2470] sm:$0xff]
    %v1207 = vld [vmem:[%s1 + $0x2478] sm:$0xff]
    %v1208 = vld [vmem:[%s1 + $0x2480] sm:$0xff]
    %v1209 = vld [vmem:[%s1 + $0x2488] sm:$0xff]
    %v1210 = vld [vmem:[%s1 + $0x2490] sm:$0xff]
    %v1211 = vld [vmem:[%s1 + $0x2498] sm:$0xff]
    %v1212 = vld [vmem:[%s1 + $0x24a0] sm:$0xff]
    %v1213 = vld [vmem:[%s1 + $0x24a8] sm:$0xff]
    %v1214 = vld [vmem:[%s1 + $0x24b0] sm:$0xff]
    %v1215 = vld [vmem:[%s1 + $0x24b8] sm:$0xff]
    %v1216 = vld [vmem:[%s1 + $0x24c0] sm:$0xff]
    %v1217 = vld [vmem:[%s1 + $0x24c8] sm:$0xff]
    %v1218 = vld [vmem:[%s1 + $0x24d0] sm:$0xff]
    %v1219 = vld [vmem:[%s1 + $0x24d8] sm:$0xff]
    %v1220 = vld [vmem:[%s1 + $0x24e0] sm:$0xff]
    %v1221 = vld [vmem:[%s1 + $0x24e8] sm:$0xff]
    %v1222 = vld [vmem:[%s1 + $0x24f0] sm:$0xff]
    %v1223 = vld [vmem:[%s1 + $0x24f8] sm:$0xff]
    %v1224 = vld [vmem:[%s1 + $0x2500] sm:$0xff]
    %v1225 = vld [vmem:[%s1 + $0x2508] sm:$0xff]
    %v1226 = vld [vmem:[%s1 + $0x2510] sm:$0xff]
    %v1227 = vld [vmem:[%s1 + $0x2518] sm:$0xff]
    %v1228 = vld [vmem:[%s1 + $0x2520] sm:$0xff]
    %v1229 = vld [vmem:[%s1 + $0x2528] sm:$0xff]
    %v1230 = vld [vmem:[%s1 + $0x2530] sm:$0xff]
    %v1231 = vld [vmem:[%s1 + $0x2538] sm:$0xff]
    %v1232 = vld [vmem:[%s1 + $0x2540] sm:$0xff]
    %v1233 = vld [vmem:[%s1 + $0x2548] sm:$0xff]
    %v1234 = vld [vmem:[%s1 + $0x2550] sm:$0xff]
    %v1235 = vld [vmem:[%s1 + $0x2558] sm:$0xff]
    %v1236 = vld [vmem:[%s1 + $0x2560] sm:$0xff]
    %v1237 = vld [vmem:[%s1 + $0x2568] sm:$0xff]
    %v1238 = vld [vmem:[%s1 + $0x2570] sm:$0xff]
    %v1239 = vld [vmem:[%s1 + $0x2578] sm:$0xff]
    %v1240 = vld [vmem:[%s1 + $0x2580] sm:$0xff]
    %v1241 = vld [vmem:[%s1 + $0x2588] sm:$0xff]
    %v1242 = vld [vmem:[%s1 + $0x2590] sm:$0xff]
    %v1243 = vld [vmem:[%s1 + $0x2598] sm:$0xff]
    %v1244 = vld [vmem:[%s1 + $0x25a0] sm:$0xff]
    %v1245 = vld [vmem:[%s1 + $0x25a8] sm:$0xff]
    %v1246 = vld [vmem:[%s1 + $0x25b0] sm:$0xff]
    %v1247 = vld [vmem:[%s1 + $0x25b8] sm:$0xff]
    %v1248 = vld [vmem:[%s1 + $0x25c0] sm:$0xff]
    %v1249 = vld [vmem:[%s1 + $0x25c8] sm:$0xff]
    %v1250 = vld [vmem:[%s1 + $0x25d0] sm:$0xff]
    %v1251 = vld [vmem:[%s1 + $0x25d8] sm:$0xff]
    %v1252 = vld [vmem:[%s1 + $0x25e0] sm:$0xff]
    %v1253 = vld [vmem:[%s1 + $0x25e8] sm:$0xff]
    %v1254 = vld [vmem:[%s1 + $0x25f0] sm:$0xff]
    %v1255 = vld [vmem:[%s1 + $0x25f8] sm:$0xff]
    %v1256 = vld [vmem:[%s1 + $0x2600] sm:$0xff]
    %v1257 = vld [vmem:[%s1 + $0x2608] sm:$0xff]
    %v1258 = vld [vmem:[%s1 + $0x2610] sm:$0xff]
    %v1259 = vld [vmem:[%s1 + $0x2618] sm:$0xff]
    %v1260 = vld [vmem:[%s1 + $0x2620] sm:$0xff]
    %v1261 = vld [vmem:[%s1 + $0x2628] sm:$0xff]
    %v1262 = vld [vmem:[%s1 + $0x2630] sm:$0xff]
    %v1263 = vld [vmem:[%s1 + $0x2638] sm:$0xff]
    %v1264 = vld [vmem:[%s1 + $0x2640] sm:$0xff]
    %v1265 = vld [vmem:[%s1 + $0x2648] sm:$0xff]
    %v1266 = vld [vmem:[%s1 + $0x2650] sm:$0xff]
    %v1267 = vld [vmem:[%s1 + $0x2658] sm:$0xff]
    %v1268 = vld [vmem:[%s1 + $0x2660] sm:$0xff]
    %v1269 = vld [vmem:[%s1 + $0x2668] sm:$0xff]
    %v1270 = vld [vmem:[%s1 + $0x2670] sm:$0xff]
    %v1271 = vld [vmem:[%s1 + $0x2678] sm:$0xff]
    %v1272 = vld [vmem:[%s1 + $0x2680] sm:$0xff]
    %v1273 = vld [vmem:[%s1 + $0x2688] sm:$0xff]
    %v1274 = vld [vmem:[%s1 + $0x2690] sm:$0xff]
    %v1275 = vld [vmem:[%s1 + $0x2698] sm:$0xff]
    %v1276 = vld [vmem:[%s1 + $0x26a0] sm:$0xff]
    %v1277 = vld [vmem:[%s1 + $0x26a8] sm:$0xff]
    %v1278 = vld [vmem:[%s1 + $0x26b0] sm:$0xff]
    %v1279 = vld [vmem:[%s1 + $0x26b8] sm:$0xff]
    %v1280 = vld [vmem:[%s1 + $0x26c0] sm:$0xff]
    %v1281 = vld [vmem:[%s1 + $0x26c8] sm:$0xff]
    %v1282 = vld [vmem:[%s1 + $0x26d0] sm:$0xff]
    %v1283 = vld [vmem:[%s1 + $0x26d8] sm:$0xff]
    %v1284 = vld [vmem:[%s1 + $0x26e0] sm:$0xff]
    %v1285 = vld [vmem:[%s1 + $0x26e8] sm:$0xff]
    %v1286 = vld [vmem:[%s1 + $0x26f0] sm:$0xff]
    %v1287 = vld [vmem:[%s1 + $0x26f8] sm:$0xff]
    %v1288 = vld [vmem:[%s1 + $0x2700] sm:$0xff]
    %v1289 = vld [vmem:[%s1 + $0x2708] sm:$0xff]
    %v1290 = vld [vmem:[%s1 + $0x2710] sm:$0xff]
    %v1291 = vld [vmem:[%s1 + $0x2718] sm:$0xff]
    %v1292 = vld [vmem:[%s1 + $0x2720] sm:$0xff]
    %v1293 = vld [vmem:[%s1 + $0x2728] sm:$0xff]
    %v1294 = vld [vmem:[%s1 + $0x2730] sm:$0xff]
    %v1295 = vld [vmem:[%s1 + $0x2738] sm:$0xff]
    %v1296 = vld [vmem:[%s1 + $0x2740] sm:$0xff]
    %v1297 = vld [vmem:[%s1 + $0x2748] sm:$0xff]
    %v1298 = vld [vmem:[%s1 + $0x2750] sm:$0xff]
    %v1299 = vld [vmem:[%s1 + $0x2758] sm:$0xff]
    %v1300 = vld [vmem:[%s1 + $0x2760] sm:$0xff]
    %v1301 = vld [vmem:[%s1 + $0x2768] sm:$0xff]
    %v1302 = vld [vmem:[%s1 + $0x2770] sm:$0xff]
    %v1303 = vld [vmem:[%s1 + $0x2778] sm:$0xff]
    %v1304 = vld [vmem:[%s1 + $0x2780] sm:$0xff]
    %v1305 = vld [vmem:[%s1 + $0x2788] sm:$0xff]
    %v1306 = vld [vmem:[%s1 + $0x2790] sm:$0xff]
    %v1307 = vld [vmem:[%s1 + $0x2798] sm:$0xff]
    %v1308 = vld [vmem:[%s1 + $0x27a0] sm:$0xff]
    %v1309 = vld [vmem:[%s1 + $0x27a8] sm:$0xff]
    %v1310 = vld [vmem:[%s1 + $0x27b0] sm:$0xff]
    %v1311 = vld [vmem:[%s1 + $0x27b8] sm:$0xff]
    %v1312 = vld [vmem:[%s1 + $0x27c0] sm:$0xff]
    %v1313 = vld [vmem:[%s1 + $0x27c8] sm:$0xff]
    %v1314 = vld [vmem:[%s1 + $0x27d0] sm:$0xff]
    %v1315 = vld [vmem:[%s1 + $0x27d8] sm:$0xff]
    %v1316 = vld [vmem:[%s1 + $0x27e0] sm:$0xff]
    %v1317 = vld [vmem:[%s1 + $0x27e8] sm:$0xff]
    %v1318 = vld [vmem:[%s1 + $0x27f0] sm:$0xff]
    %v1319 = vld [vmem:[%s1 + $0x27f8] sm:$0xff]
    %v1320 = vld [vmem:[%s1 + $0x2800] sm:$0xff]
    %v1321 = vld [vmem:[%s1 + $0x2808] sm:$0xff]
    %v1322 = vld [vmem:[%s1 + $0x2810] sm:$0xff]
    %v1323 = vld [vmem:[%s1 + $0x2818] sm:$0xff]
    %v1324 = vld [vmem:[%s1 + $0x2820] sm:$0xff]
    %v1325 = vld [vmem:[%s1 + $0x2828] sm:$0xff]
    %v1326 = vld [vmem:[%s1 + $0x2830] sm:$0xff]
    %v1327 = vld [vmem:[%s1 + $0x2838] sm:$0xff]
    %v1328 = vld [vmem:[%s1 + $0x2840] sm:$0xff]
    %v1329 = vld [vmem:[%s1 + $0x2848] sm:$0xff]
    %v1330 = vld [vmem:[%s1 + $0x2850] sm:$0xff]
    %v1331 = vld [vmem:[%s1 + $0x2858] sm:$0xff]
    %v1332 = vld [vmem:[%s1 + $0x2860] sm:$0xff]
    %v1333 = vld [vmem:[%s1 + $0x2868] sm:$0xff]
    %v1334 = vld [vmem:[%s1 + $0x2870] sm:$0xff]
    %v1335 = vld [vmem:[%s1 + $0x2878] sm:$0xff]
    %v1336 = vld [vmem:[%s1 + $0x2880] sm:$0xff]
    %v1337 = vld [vmem:[%s1 + $0x2888] sm:$0xff]
    %v1338 = vld [vmem:[%s1 + $0x2890] sm:$0xff]
    %v1339 = vld [vmem:[%s1 + $0x2898] sm:$0xff]
    %v1340 = vld [vmem:[%s1 + $0x28a0] sm:$0xff]
    %v1341 = vld [vmem:[%s1 + $0x28a8] sm:$0xff]
    %v1342 = vld [vmem:[%s1 + $0x28b0] sm:$0xff]
    %v1343 = vld [vmem:[%s1 + $0x28b8] sm:$0xff]
    %v1344 = vld [vmem:[%s1 + $0x28c0] sm:$0xff]
    %v1345 = vld [vmem:[%s1 + $0x28c8] sm:$0xff]
    %v1346 = vld [vmem:[%s1 + $0x28d0] sm:$0xff]
    %v1347 = vld [vmem:[%s1 + $0x28d8] sm:$0xff]
    %v1348 = vld [vmem:[%s1 + $0x28e0] sm:$0xff]
    %v1349 = vld [vmem:[%s1 + $0x28e8] sm:$0xff]
    %v1350 = vld [vmem:[%s1 + $0x28f0] sm:$0xff]
    %v1351 = vld [vmem:[%s1 + $0x28f8] sm:$0xff]
    %v1352 = vld [vmem:[%s1 + $0x2900] sm:$0xff]
    %v1353 = vld [vmem:[%s1 + $0x2908] sm:$0xff]
    %v1354 = vld [vmem:[%s1 + $0x2910] sm:$0xff]
    %v1355 = vld [vmem:[%s1 + $0x2918] sm:$0xff]
    %v1356 = vld [vmem:[%s1 + $0x2920] sm:$0xff]
    %v1357 = vld [vmem:[%s1 + $0x2928] sm:$0xff]
    %v1358 = vld [vmem:[%s1 + $0x2930] sm:$0xff]
    %v1359 = vld [vmem:[%s1 + $0x2938] sm:$0xff]
    %v1360 = vld [vmem:[%s1 + $0x2940] sm:$0xff]
    %v1361 = vld [vmem:[%s1 + $0x2948] sm:$0xff]
    %v1362 = vld [vmem:[%s1 + $0x2950] sm:$0xff]
    %v1363 = vld [vmem:[%s1 + $0x2958] sm:$0xff]
    %v1364 = vld [vmem:[%s1 + $0x2960] sm:$0xff]
    %v1365 = vld [vmem:[%s1 + $0x2968] sm:$0xff]
    %v1366 = vld [vmem:[%s1 + $0x2970] sm:$0xff]
    %v1367 = vld [vmem:[%s1 + $0x2978] sm:$0xff]
    %v1368 = vld [vmem:[%s1 + $0x2980] sm:$0xff]
    %v1369 = vld [vmem:[%s1 + $0x2988] sm:$0xff]
    %v1370 = vld [vmem:[%s1 + $0x2990] sm:$0xff]
    %v1371 = vld [vmem:[%s1 + $0x2998] sm:$0xff]
    %v1372 = vld [vmem:[%s1 + $0x29a0] sm:$0xff]
    %v1373 = vld [vmem:[%s1 + $0x29a8] sm:$0xff]
    %v1374 = vld [vmem:[%s1 + $0x29b0] sm:$0xff]
    %v1375 = vld [vmem:[%s1 + $0x29b8] sm:$0xff]
    %v1376 = vld [vmem:[%s1 + $0x29c0] sm:$0xff]
    %v1377 = vld [vmem:[%s1 + $0x29c8] sm:$0xff]
    %v1378 = vld [vmem:[%s1 + $0x29d0] sm:$0xff]
    %v1379 = vld [vmem:[%s1 + $0x29d8] sm:$0xff]
    %v1380 = vld [vmem:[%s1 + $0x29e0] sm:$0xff]
    %v1381 = vld [vmem:[%s1 + $0x29e8] sm:$0xff]
    %v1382 = vld [vmem:[%s1 + $0x29f0] sm:$0xff]
    %v1383 = vld [vmem:[%s1 + $0x29f8] sm:$0xff]
    %v1384 = vld [vmem:[%s1 + $0x2a00] sm:$0xff]
    %v1385 = vld [vmem:[%s1 + $0x2a08] sm:$0xff]
    %v1386 = vld [vmem:[%s1 + $0x2a10] sm:$0xff]
    %v1387 = vld [vmem:[%s1 + $0x2a18] sm:$0xff]
    %v1388 = vld [vmem:[%s1 + $0x2a20] sm:$0xff]
    %v1389 = vld [vmem:[%s1 + $0x2a28] sm:$0xff]
    %v1390 = vld [vmem:[%s1 + $0x2a30] sm:$0xff]
    %v1391 = vld [vmem:[%s1 + $0x2a38] sm:$0xff]
    %v1392 = vld [vmem:[%s1 + $0x2a40] sm:$0xff]
    %v1393 = vld [vmem:[%s1 + $0x2a48] sm:$0xff]
    %v1394 = vld [vmem:[%s1 + $0x2a50] sm:$0xff]
    %v1395 = vld [vmem:[%s1 + $0x2a58] sm:$0xff]
    %v1396 = vld [vmem:[%s1 + $0x2a60] sm:$0xff]
    %v1397 = vld [vmem:[%s1 + $0x2a68] sm:$0xff]
    %v1398 = vld [vmem:[%s1 + $0x2a70] sm:$0xff]
    %v1399 = vld [vmem:[%s1 + $0x2a78] sm:$0xff]
    %v1400 = vld [vmem:[%s1 + $0x2a80] sm:$0xff]
    %v1401 = vld [vmem:[%s1 + $0x2a88] sm:$0xff]
    %v1402 = vld [vmem:[%s1 + $0x2a90] sm:$0xff]
    %v1403 = vld [vmem:[%s1 + $0x2a98] sm:$0xff]
    %v1404 = vld [vmem:[%s1 + $0x2aa0] sm:$0xff]
    %v1405 = vld [vmem:[%s1 + $0x2aa8] sm:$0xff]
    %v1406 = vld [vmem:[%s1 + $0x2ab0] sm:$0xff]
    %v1407 = vld [vmem:[%s1 + $0x2ab8] sm:$0xff]
    %v1408 = vld [vmem:[%s1 + $0x2ac0] sm:$0xff]
    %v1409 = vld [vmem:[%s1 + $0x2ac8] sm:$0xff]
    %v1410 = vld [vmem:[%s1 + $0x2ad0] sm:$0xff]
    %v1411 = vld [vmem:[%s1 + $0x2ad8] sm:$0xff]
    %v1412 = vld [vmem:[%s1 + $0x2ae0] sm:$0xff]
    %v1413 = vld [vmem:[%s1 + $0x2ae8] sm:$0xff]
    %v1414 = vld [vmem:[%s1 + $0x2af0] sm:$0xff]
    %v1415 = vld [vmem:[%s1 + $0x2af8] sm:$0xff]
    %v1416 = vld [vmem:[%s1 + $0x2b00] sm:$0xff]
    %v1417 = vld [vmem:[%s1 + $0x2b08] sm:$0xff]
    %v1418 = vld [vmem:[%s1 + $0x2b10] sm:$0xff]
    %v1419 = vld [vmem:[%s1 + $0x2b18] sm:$0xff]
    %v1420 = vld [vmem:[%s1 + $0x2b20] sm:$0xff]
    %v1421 = vld [vmem:[%s1 + $0x2b28] sm:$0xff]
    %v1422 = vld [vmem:[%s1 + $0x2b30] sm:$0xff]
    %v1423 = vld [vmem:[%s1 + $0x2b38] sm:$0xff]
    %v1424 = vld [vmem:[%s1 + $0x2b40] sm:$0xff]
    %v1425 = vld [vmem:[%s1 + $0x2b48] sm:$0xff]
    %v1426 = vld [vmem:[%s1 + $0x2b50] sm:$0xff]
    %v1427 = vld [vmem:[%s1 + $0x2b58] sm:$0xff]
    %v1428 = vld [vmem:[%s1 + $0x2b60] sm:$0xff]
    %v1429 = vld [vmem:[%s1 + $0x2b68] sm:$0xff]
    %v1430 = vld [vmem:[%s1 + $0x2b70] sm:$0xff]
    %v1431 = vld [vmem:[%s1 + $0x2b78] sm:$0xff]
    %v1432 = vld [vmem:[%s1 + $0x2b80] sm:$0xff]
    %v1433 = vld [vmem:[%s1 + $0x2b88] sm:$0xff]
    %v1434 = vld [vmem:[%s1 + $0x2b90] sm:$0xff]
    %v1435 = vld [vmem:[%s1 + $0x2b98] sm:$0xff]
    %v1436 = vld [vmem:[%s1 + $0x2ba0] sm:$0xff]
    %v1437 = vld [vmem:[%s1 + $0x2ba8] sm:$0xff]
    %v1438 = vld [vmem:[%s1 + $0x2bb0] sm:$0xff]
    %v1439 = vld [vmem:[%s1 + $0x2bb8] sm:$0xff]
    %v1440 = vld [vmem:[%s1 + $0x2bc0] sm:$0xff]
    %v1441 = vld [vmem:[%s1 + $0x2bc8] sm:$0xff]
    %v1442 = vld [vmem:[%s1 + $0x2bd0] sm:$0xff]
    %v1443 = vld [vmem:[%s1 + $0x2bd8] sm:$0xff]
    %v1444 = vld [vmem:[%s1 + $0x2be0] sm:$0xff]
    %v1445 = vld [vmem:[%s1 + $0x2be8] sm:$0xff]
    %v1446 = vld [vmem:[%s1 + $0x2bf0] sm:$0xff]
    %v1447 = vld [vmem:[%s1 + $0x2bf8] sm:$0xff]
    %v1448 = vld [vmem:[%s1 + $0x2c00] sm:$0xff]
    %v1449 = vld [vmem:[%s1 + $0x2c08] sm:$0xff]
    %v1450 = vld [vmem:[%s1 + $0x2c10] sm:$0xff]
    %v1451 = vld [vmem:[%s1 + $0x2c18] sm:$0xff]
    %v1452 = vld [vmem:[%s1 + $0x2c20] sm:$0xff]
    %v1453 = vld [vmem:[%s1 + $0x2c28] sm:$0xff]
    %v1454 = vld [vmem:[%s1 + $0x2c30] sm:$0xff]
    %v1455 = vld [vmem:[%s1 + $0x2c38] sm:$0xff]
    %v1456 = vld [vmem:[%s1 + $0x2c40] sm:$0xff]
    %v1457 = vld [vmem:[%s1 + $0x2c48] sm:$0xff]
    %v1458 = vld [vmem:[%s1 + $0x2c50] sm:$0xff]
    %v1459 = vld [vmem:[%s1 + $0x2c58] sm:$0xff]
    %v1460 = vld [vmem:[%s1 + $0x2c60] sm:$0xff]
    %v1461 = vld [vmem:[%s1 + $0x2c68] sm:$0xff]
    %v1462 = vld [vmem:[%s1 + $0x2c70] sm:$0xff]
    %v1463 = vld [vmem:[%s1 + $0x2c78] sm:$0xff]
    %v1464 = vld [vmem:[%s1 + $0x2c80] sm:$0xff]
    %v1465 = vld [vmem:[%s1 + $0x2c88] sm:$0xff]
    %v1466 = vld [vmem:[%s1 + $0x2c90] sm:$0xff]
    %v1467 = vld [vmem:[%s1 + $0x2c98] sm:$0xff]
    %v1468 = vld [vmem:[%s1 + $0x2ca0] sm:$0xff]
    %v1469 = vld [vmem:[%s1 + $0x2ca8] sm:$0xff]
    %v1470 = vld [vmem:[%s1 + $0x2cb0] sm:$0xff]
    %v1471 = vld [vmem:[%s1 + $0x2cb8] sm:$0xff]
    %v1472 = vld [vmem:[%s1 + $0x2cc0] sm:$0xff]
    %v1473 = vld [vmem:[%s1 + $0x2cc8] sm:$0xff]
    %v1474 = vld [vmem:[%s1 + $0x2cd0] sm:$0xff]
    %v1475 = vld [vmem:[%s1 + $0x2cd8] sm:$0xff]
    %v1476 = vld [vmem:[%s1 + $0x2ce0] sm:$0xff]
    %v1477 = vld [vmem:[%s1 + $0x2ce8] sm:$0xff]
    %v1478 = vld [vmem:[%s1 + $0x2cf0] sm:$0xff]
    %v1479 = vld [vmem:[%s1 + $0x2cf8] sm:$0xff]
    %v1480 = vld [vmem:[%s1 + $0x2d00] sm:$0xff]
    %v1481 = vld [vmem:[%s1 + $0x2d08] sm:$0xff]
    %v1482 = vld [vmem:[%s1 + $0x2d10] sm:$0xff]
    %v1483 = vld [vmem:[%s1 + $0x2d18] sm:$0xff]
    %v1484 = vld [vmem:[%s1 + $0x2d20] sm:$0xff]
    %v1485 = vld [vmem:[%s1 + $0x2d28] sm:$0xff]
    %v1486 = vld [vmem:[%s1 + $0x2d30] sm:$0xff]
    %v1487 = vld [vmem:[%s1 + $0x2d38] sm:$0xff]
    %v1488 = vld [vmem:[%s1 + $0x2d40] sm:$0xff]
    %v1489 = vld [vmem:[%s1 + $0x2d48] sm:$0xff]
    %v1490 = vld [vmem:[%s1 + $0x2d50] sm:$0xff]
    %v1491 = vld [vmem:[%s1 + $0x2d58] sm:$0xff]
    %v1492 = vld [vmem:[%s1 + $0x2d60] sm:$0xff]
    %v1493 = vld [vmem:[%s1 + $0x2d68] sm:$0xff]
    %v1494 = vld [vmem:[%s1 + $0x2d70] sm:$0xff]
    %v1495 = vld [vmem:[%s1 + $0x2d78] sm:$0xff]
    %v1496 = vld [vmem:[%s1 + $0x2d80] sm:$0xff]
    %v1497 = vld [vmem:[%s1 + $0x2d88] sm:$0xff]
    %v1498 = vld [vmem:[%s1 + $0x2d90] sm:$0xff]
    %v1499 = vld [vmem:[%s1 + $0x2d98] sm:$0xff]
    %v1500 = vld [vmem:[%s1 + $0x2da0] sm:$0xff]
    %v1501 = vld [vmem:[%s1 + $0x2da8] sm:$0xff]
    %v1502 = vld [vmem:[%s1 + $0x2db0] sm:$0xff]
    %v1503 = vld [vmem:[%s1 + $0x2db8] sm:$0xff]
    %v1504 = vld [vmem:[%s1 + $0x2dc0] sm:$0xff]
    %v1505 = vld [vmem:[%s1 + $0x2dc8] sm:$0xff]
    %v1506 = vld [vmem:[%s1 + $0x2dd0] sm:$0xff]
    %v1507 = vld [vmem:[%s1 + $0x2dd8] sm:$0xff]
    %v1508 = vld [vmem:[%s1 + $0x2de0] sm:$0xff]
    %v1509 = vld [vmem:[%s1 + $0x2de8] sm:$0xff]
    %v1510 = vld [vmem:[%s1 + $0x2df0] sm:$0xff]
    %v1511 = vld [vmem:[%s1 + $0x2df8] sm:$0xff]
    %v1512 = vld [vmem:[%s1 + $0x2e00] sm:$0xff]
    %v1513 = vld [vmem:[%s1 + $0x2e08] sm:$0xff]
    %v1514 = vld [vmem:[%s1 + $0x2e10] sm:$0xff]
    %v1515 = vld [vmem:[%s1 + $0x2e18] sm:$0xff]
    %v1516 = vld [vmem:[%s1 + $0x2e20] sm:$0xff]
    %v1517 = vld [vmem:[%s1 + $0x2e28] sm:$0xff]
    %v1518 = vld [vmem:[%s1 + $0x2e30] sm:$0xff]
    %v1519 = vld [vmem:[%s1 + $0x2e38] sm:$0xff]
    %v1520 = vld [vmem:[%s1 + $0x2e40] sm:$0xff]
    %v1521 = vld [vmem:[%s1 + $0x2e48] sm:$0xff]
    %v1522 = vld [vmem:[%s1 + $0x2e50] sm:$0xff]
    %v1523 = vld [vmem:[%s1 + $0x2e58] sm:$0xff]
    %v1524 = vld [vmem:[%s1 + $0x2e60] sm:$0xff]
    %v1525 = vld [vmem:[%s1 + $0x2e68] sm:$0xff]
    %v1526 = vld [vmem:[%s1 + $0x2e70] sm:$0xff]
    %v1527 = vld [vmem:[%s1 + $0x2e78] sm:$0xff]
    %v1528 = vld [vmem:[%s1 + $0x2e80] sm:$0xff]
    %v1529 = vld [vmem:[%s1 + $0x2e88] sm:$0xff]
    %v1530 = vld [vmem:[%s1 + $0x2e90] sm:$0xff]
    %v1531 = vld [vmem:[%s1 + $0x2e98] sm:$0xff]
    %v1532 = vld [vmem:[%s1 + $0x2ea0] sm:$0xff]
    %v1533 = vld [vmem:[%s1 + $0x2ea8] sm:$0xff]
    %v1534 = vld [vmem:[%s1 + $0x2eb0] sm:$0xff]
    %v1535 = vld [vmem:[%s1 + $0x2eb8] sm:$0xff]
    %v1536 = vld [vmem:[%s1 + $0x2ec0] sm:$0xff]
    %v1537 = vld [vmem:[%s1 + $0x2ec8] sm:$0xff]
    %v1538 = vld [vmem:[%s1 + $0x2ed0] sm:$0xff]
    %v1539 = vld [vmem:[%s1 + $0x2ed8] sm:$0xff]
    %v1540 = vld [vmem:[%s1 + $0x2ee0] sm:$0xff]
    %v1541 = vld [vmem:[%s1 + $0x2ee8] sm:$0xff]
    %v1542 = vld [vmem:[%s1 + $0x2ef0] sm:$0xff]
    %v1543 = vld [vmem:[%s1 + $0x2ef8] sm:$0xff]
    %v1544 = vld [vmem:[%s1 + $0x2f00] sm:$0xff]
    %v1545 = vld [vmem:[%s1 + $0x2f08] sm:$0xff]
    %v1546 = vld [vmem:[%s1 + $0x2f10] sm:$0xff]
    %v1547 = vld [vmem:[%s1 + $0x2f18] sm:$0xff]
    %v1548 = vld [vmem:[%s1 + $0x2f20] sm:$0xff]
    %v1549 = vld [vmem:[%s1 + $0x2f28] sm:$0xff]
    %v1550 = vld [vmem:[%s1 + $0x2f30] sm:$0xff]
    %v1551 = vld [vmem:[%s1 + $0x2f38] sm:$0xff]
    %v1552 = vld [vmem:[%s1 + $0x2f40] sm:$0xff]
    %v1553 = vld [vmem:[%s1 + $0x2f48] sm:$0xff]
    %v1554 = vld [vmem:[%s1 + $0x2f50] sm:$0xff]
    %v1555 = vld [vmem:[%s1 + $0x2f58] sm:$0xff]
    %v1556 = vld [vmem:[%s1 + $0x2f60] sm:$0xff]
    %v1557 = vld [vmem:[%s1 + $0x2f68] sm:$0xff]
    %v1558 = vld [vmem:[%s1 + $0x2f70] sm:$0xff]
    %v1559 = vld [vmem:[%s1 + $0x2f78] sm:$0xff]
    %v1560 = vld [vmem:[%s1 + $0x2f80] sm:$0xff]
    %v1561 = vld [vmem:[%s1 + $0x2f88] sm:$0xff]
    %v1562 = vld [vmem:[%s1 + $0x2f90] sm:$0xff]
    %v1563 = vld [vmem:[%s1 + $0x2f98] sm:$0xff]
    %v1564 = vld [vmem:[%s1 + $0x2fa0] sm:$0xff]
    %v1565 = vld [vmem:[%s1 + $0x2fa8] sm:$0xff]
    %v1566 = vld [vmem:[%s1 + $0x2fb0] sm:$0xff]
    %v1567 = vld [vmem:[%s1 + $0x2fb8] sm:$0xff]
    %v1568 = vld [vmem:[%s1 + $0x2fc0] sm:$0xff]
    %v1569 = vld [vmem:[%s1 + $0x2fc8] sm:$0xff]
    %v1570 = vld [vmem:[%s1 + $0x2fd0] sm:$0xff]
    %v1571 = vld [vmem:[%s1 + $0x2fd8] sm:$0xff]
    %v1572 = vld [vmem:[%s1 + $0x2fe0] sm:$0xff]
    %v1573 = vld [vmem:[%s1 + $0x2fe8] sm:$0xff]
    %v1574 = vld [vmem:[%s1 + $0x2ff0] sm:$0xff]
    %v1575 = vld [vmem:[%s1 + $0x2ff8] sm:$0xff]
    %v1576 = vld [vmem:[%s1 + $0x3000] sm:$0xff]
    %v1577 = vld [vmem:[%s1 + $0x3008] sm:$0xff]
    %v1578 = vld [vmem:[%s1 + $0x3010] sm:$0xff]
    %v1579 = vld [vmem:[%s1 + $0x3018] sm:$0xff]
    %v1580 = vld [vmem:[%s1 + $0x3020] sm:$0xff]
    %v1581 = vld [vmem:[%s1 + $0x3028] sm:$0xff]
    %v1582 = vld [vmem:[%s1 + $0x3030] sm:$0xff]
    %v1583 = vld [vmem:[%s1 + $0x3038] sm:$0xff]
    %v1584 = vld [vmem:[%s1 + $0x3040] sm:$0xff]
    %v1585 = vld [vmem:[%s1 + $0x3048] sm:$0xff]
    %v1586 = vld [vmem:[%s1 + $0x3050] sm:$0xff]
    %v1587 = vld [vmem:[%s1 + $0x3058] sm:$0xff]
    %v1588 = vld [vmem:[%s1 + $0x3060] sm:$0xff]
    %v1589 = vld [vmem:[%s1 + $0x3068] sm:$0xff]
    %v1590 = vld [vmem:[%s1 + $0x3070] sm:$0xff]
    %v1591 = vld [vmem:[%s1 + $0x3078] sm:$0xff]
    %v1592 = vld [vmem:[%s1 + $0x3080] sm:$0xff]
    %v1593 = vld [vmem:[%s1 + $0x3088] sm:$0xff]
    %v1594 = vld [vmem:[%s1 + $0x3090] sm:$0xff]
    %v1595 = vld [vmem:[%s1 + $0x3098] sm:$0xff]
    %v1596 = vld [vmem:[%s1 + $0x30a0] sm:$0xff]
    %v1597 = vld [vmem:[%s1 + $0x30a8] sm:$0xff]
    %v1598 = vld [vmem:[%s1 + $0x30b0] sm:$0xff]
    %v1599 = vld [vmem:[%s1 + $0x30b8] sm:$0xff]
    %v1600 = vld [vmem:[%s1 + $0x30c0] sm:$0xff]
    %v1601 = vld [vmem:[%s1 + $0x30c8] sm:$0xff]
    %v1602 = vld [vmem:[%s1 + $0x30d0] sm:$0xff]
    %v1603 = vld [vmem:[%s1 + $0x30d8] sm:$0xff]
    %v1604 = vld [vmem:[%s1 + $0x30e0] sm:$0xff]
    %v1605 = vld [vmem:[%s1 + $0x30e8] sm:$0xff]
    %v1606 = vld [vmem:[%s1 + $0x30f0] sm:$0xff]
    %v1607 = vld [vmem:[%s1 + $0x30f8] sm:$0xff]
    %v1608 = vld [vmem:[%s2] sm:$0x3]
    %v1610 = vlaneseq
    %v1611 = vshrl.u32 %v1610, 7
    %v1612 = vsub.s32 0, %v1611
    %v1613 = vrot.slane %v1608, %v1612
    %v1614 = vlaneseq
    %v1615 = vshrl.u32 %v1614, 7
    %v1616 = vsub.s32 1, %v1615
    %v1617 = vrot.slane %v1608, %v1616
    %v1633 = vcombine.high %v27, %v27
    %v1635 = vunpack.c.l.s4 1983009808
    %v1636 = vunpack.c.0.s8 %v1635
    %v1637 = vlaneseq
    %v1638 = vshrl.u32 %v1637, 7
    %v1639 = vsub.s32 %v1636, %v1638
    %v1640 = vrot.slane %v27, %v1639
    %v1642 = vunpack.c.l.s4 1983009808
    %v1643 = vunpack.c.0.s8 %v1642
    %v1644 = vlaneseq
    %v1645 = vshrl.u32 %v1644, 7
    %v1646 = vsub.s32 %v1643, %v1645
    %v1647 = vrot.slane %v1633, %v1646
    %v1648 = vcombine.high %v1640, %v1640
    %v1649 = vcombine.high %v1647, %v1647
    %v1650 = vcombine.high %v28, %v28
    %v1652 = vunpack.c.l.s4 1983009808
    %v1653 = vunpack.c.0.s8 %v1652
    %v1654 = vlaneseq
    %v1655 = vshrl.u32 %v1654, 7
    %v1656 = vsub.s32 %v1653, %v1655
    %v1657 = vrot.slane %v28, %v1656
    %v1659 = vunpack.c.l.s4 1983009808
    %v1660 = vunpack.c.0.s8 %v1659
    %v1661 = vlaneseq
    %v1662 = vshrl.u32 %v1661, 7
    %v1663 = vsub.s32 %v1660, %v1662
    %v1664 = vrot.slane %v1650, %v1663
    %v1665 = vcombine.high %v1657, %v1657
    %v1666 = vcombine.high %v1664, %v1664
    %v1667 = vcombine.high %v29, %v29
    %v1669 = vunpack.c.l.s4 1983009808
    %v1670 = vunpack.c.0.s8 %v1669
    %v1671 = vlaneseq
    %v1672 = vshrl.u32 %v1671, 7
    %v1673 = vsub.s32 %v1670, %v1672
    %v1674 = vrot.slane %v29, %v1673
    %v1676 = vunpack.c.l.s4 1983009808
    %v1677 = vunpack.c.0.s8 %v1676
    %v1678 = vlaneseq
    %v1679 = vshrl.u32 %v1678, 7
    %v1680 = vsub.s32 %v1677, %v1679
    %v1681 = vrot.slane %v1667, %v1680
    %v1682 = vcombine.high %v1674, %v1674
    %v1683 = vcombine.high %v1681, %v1681
    %v1684 = vcombine.high %v30, %v30
    %v1686 = vunpack.c.l.s4 1983009808
    %v1687 = vunpack.c.0.s8 %v1686
    %v1688 = vlaneseq
    %v1689 = vshrl.u32 %v1688, 7
    %v1690 = vsub.s32 %v1687, %v1689
    %v1691 = vrot.slane %v30, %v1690
    %v1693 = vunpack.c.l.s4 1983009808
    %v1694 = vunpack.c.0.s8 %v1693
    %v1695 = vlaneseq
    %v1696 = vshrl.u32 %v1695, 7
    %v1697 = vsub.s32 %v1694, %v1696
    %v1698 = vrot.slane %v1684, %v1697
    %v1699 = vcombine.high %v1691, %v1691
    %v1700 = vcombine.high %v1698, %v1698
    %v1701 = vcombine.high %v31, %v31
    %v1703 = vunpack.c.l.s4 1983009808
    %v1704 = vunpack.c.0.s8 %v1703
    %v1705 = vlaneseq
    %v1706 = vshrl.u32 %v1705, 7
    %v1707 = vsub.s32 %v1704, %v1706
    %v1708 = vrot.slane %v31, %v1707
    %v1710 = vunpack.c.l.s4 1983009808
    %v1711 = vunpack.c.0.s8 %v1710
    %v1712 = vlaneseq
    %v1713 = vshrl.u32 %v1712, 7
    %v1714 = vsub.s32 %v1711, %v1713
    %v1715 = vrot.slane %v1701, %v1714
    %v1716 = vcombine.high %v1708, %v1708
    %v1717 = vcombine.high %v1715, %v1715
    %v1718 = vcombine.high %v32, %v32
    %v1720 = vunpack.c.l.s4 1983009808
    %v1721 = vunpack.c.0.s8 %v1720
    %v1722 = vlaneseq
    %v1723 = vshrl.u32 %v1722, 7
    %v1724 = vsub.s32 %v1721, %v1723
    %v1725 = vrot.slane %v32, %v1724
    %v1727 = vunpack.c.l.s4 1983009808
    %v1728 = vunpack.c.0.s8 %v1727
    %v1729 = vlaneseq
    %v1730 = vshrl.u32 %v1729, 7
    %v1731 = vsub.s32 %v1728, %v1730
    %v1732 = vrot.slane %v1718, %v1731
    %v1733 = vcombine.high %v1725, %v1725
    %v1734 = vcombine.high %v1732, %v1732
    %v1735 = vcombine.high %v33, %v33
    %v1737 = vunpack.c.l.s4 1983009808
    %v1738 = vunpack.c.0.s8 %v1737
    %v1739 = vlaneseq
    %v1740 = vshrl.u32 %v1739, 7
    %v1741 = vsub.s32 %v1738, %v1740
    %v1742 = vrot.slane %v33, %v1741
    %v1744 = vunpack.c.l.s4 1983009808
    %v1745 = vunpack.c.0.s8 %v1744
    %v1746 = vlaneseq
    %v1747 = vshrl.u32 %v1746, 7
    %v1748 = vsub.s32 %v1745, %v1747
    %v1749 = vrot.slane %v1735, %v1748
    %v1750 = vcombine.high %v1742, %v1742
    %v1751 = vcombine.high %v1749, %v1749
    %v1752 = vcombine.high %v34, %v34
    %v1754 = vunpack.c.l.s4 1983009808
    %v1755 = vunpack.c.0.s8 %v1754
    %v1756 = vlaneseq
    %v1757 = vshrl.u32 %v1756, 7
    %v1758 = vsub.s32 %v1755, %v1757
    %v1759 = vrot.slane %v34, %v1758
    %v1761 = vunpack.c.l.s4 1983009808
    %v1762 = vunpack.c.0.s8 %v1761
    %v1763 = vlaneseq
    %v1764 = vshrl.u32 %v1763, 7
    %v1765 = vsub.s32 %v1762, %v1764
    %v1766 = vrot.slane %v1752, %v1765
    %v1767 = vcombine.high %v1759, %v1759
    %v1768 = vcombine.high %v1766, %v1766
    %v1769 = vcombine.high %v35, %v35
    %v1771 = vunpack.c.l.s4 1983009808
    %v1772 = vunpack.c.0.s8 %v1771
    %v1773 = vlaneseq
    %v1774 = vshrl.u32 %v1773, 7
    %v1775 = vsub.s32 %v1772, %v1774
    %v1776 = vrot.slane %v35, %v1775
    %v1778 = vunpack.c.l.s4 1983009808
    %v1779 = vunpack.c.0.s8 %v1778
    %v1780 = vlaneseq
    %v1781 = vshrl.u32 %v1780, 7
    %v1782 = vsub.s32 %v1779, %v1781
    %v1783 = vrot.slane %v1769, %v1782
    %v1784 = vcombine.high %v1776, %v1776
    %v1785 = vcombine.high %v1783, %v1783
    %v1786 = vcombine.high %v36, %v36
    %v1788 = vunpack.c.l.s4 1983009808
    %v1789 = vunpack.c.0.s8 %v1788
    %v1790 = vlaneseq
    %v1791 = vshrl.u32 %v1790, 7
    %v1792 = vsub.s32 %v1789, %v1791
    %v1793 = vrot.slane %v36, %v1792
    %v1795 = vunpack.c.l.s4 1983009808
    %v1796 = vunpack.c.0.s8 %v1795
    %v1797 = vlaneseq
    %v1798 = vshrl.u32 %v1797, 7
    %v1799 = vsub.s32 %v1796, %v1798
    %v1800 = vrot.slane %v1786, %v1799
    %v1801 = vcombine.high %v1793, %v1793
    %v1802 = vcombine.high %v1800, %v1800
    %v1803 = vcombine.high %v37, %v37
    %v1805 = vunpack.c.l.s4 1983009808
    %v1806 = vunpack.c.0.s8 %v1805
    %v1807 = vlaneseq
    %v1808 = vshrl.u32 %v1807, 7
    %v1809 = vsub.s32 %v1806, %v1808
    %v1810 = vrot.slane %v37, %v1809
    %v1812 = vunpack.c.l.s4 1983009808
    %v1813 = vunpack.c.0.s8 %v1812
    %v1814 = vlaneseq
    %v1815 = vshrl.u32 %v1814, 7
    %v1816 = vsub.s32 %v1813, %v1815
    %v1817 = vrot.slane %v1803, %v1816
    %v1818 = vcombine.high %v1810, %v1810
    %v1819 = vcombine.high %v1817, %v1817
    %v1820 = vcombine.high %v38, %v38
    %v1822 = vunpack.c.l.s4 1983009808
    %v1823 = vunpack.c.0.s8 %v1822
    %v1824 = vlaneseq
    %v1825 = vshrl.u32 %v1824, 7
    %v1826 = vsub.s32 %v1823, %v1825
    %v1827 = vrot.slane %v38, %v1826
    %v1829 = vunpack.c.l.s4 1983009808
    %v1830 = vunpack.c.0.s8 %v1829
    %v1831 = vlaneseq
    %v1832 = vshrl.u32 %v1831, 7
    %v1833 = vsub.s32 %v1830, %v1832
    %v1834 = vrot.slane %v1820, %v1833
    %v1835 = vcombine.high %v1827, %v1827
    %v1836 = vcombine.high %v1834, %v1834
    %v1838 = vunpack.c.l.s4 1983009808
    %v1839 = vunpack.c.0.s8 %v1838
    %v1840 = vlaneseq
    %v1841 = vshrl.u32 %v1840, 7
    %v1842 = vsub.s32 %v1839, %v1841
    %v1843 = vrot.slane %v39, %v1842
    %1893 = vmatprep.subr.mxu0 %v71
    %1894 = vmatpush1.msra.mxu0 %v70
    %1895 = vmatprep.subr.mxu0 %v69
    %1896 = vmatpush1.msra.mxu0 %v68
    %1897 = vmatprep.subr.mxu0 %v67
    %1898 = vmatpush1.msra.mxu0 %v66
    %1899 = vmatprep.subr.mxu0 %v65
    %1900 = vmatpush1.msra.mxu0 %v64
    %1901 = vmatprep.subr.mxu0 %v63
    %1902 = vmatpush1.msra.mxu0 %v62
    %1903 = vmatprep.subr.mxu0 %v61
    %1904 = vmatpush1.msra.mxu0 %v60
    %1905 = vmatprep.subr.mxu0 %v59
    %1906 = vmatpush1.msra.mxu0 %v58
    %1907 = vmatprep.subr.mxu0 %v57
    %1908 = vmatpush1.msra.mxu0 %v56
    %1909 = vmatprep.subr.mxu0 %v55
    %1910 = vmatpush1.msra.mxu0 %v54
    %1911 = vmatprep.subr.mxu0 %v53
    %1912 = vmatpush1.msra.mxu0 %v52
    %1913 = vmatprep.subr.mxu0 %v51
    %1914 = vmatpush1.msra.mxu0 %v50
    %1915 = vmatprep.subr.mxu0 %v49
    %1916 = vmatpush1.msra.mxu0 %v48
    %1917 = vmatprep.subr.mxu0 %v47
    %1918 = vmatpush1.msra.mxu0 %v46
    %1919 = vmatprep.subr.mxu0 %v45
    %1920 = vmatpush1.msra.mxu0 %v44
    %1921 = vmatprep.subr.mxu0 %v43
    %1922 = vmatpush1.msra.mxu0 %v42
    %1923 = vmatprep.subr.mxu0 %v41
    %1924 = vmatpush1.msra.mxu0 %v40
    %1925 = vmatprep.subr.mxu0 %v103
    %1926 = vmatpush2.msra.mxu0 %v102
    %1927 = vmatprep.subr.mxu0 %v101
    %1928 = vmatpush2.msra.mxu0 %v100
    %1929 = vmatprep.subr.mxu0 %v99
    %1930 = vmatpush2.msra.mxu0 %v98
    %1931 = vmatprep.subr.mxu0 %v97
    %1932 = vmatpush2.msra.mxu0 %v96
    %1933 = vmatprep.subr.mxu0 %v95
    %1934 = vmatpush2.msra.mxu0 %v94
    %1935 = vmatprep.subr.mxu0 %v93
    %1936 = vmatpush2.msra.mxu0 %v92
    %1937 = vmatprep.subr.mxu0 %v91
    %1938 = vmatpush2.msra.mxu0 %v90
    %1939 = vmatprep.subr.mxu0 %v89
    %1940 = vmatpush2.msra.mxu0 %v88
    %1941 = vmatprep.subr.mxu0 %v87
    %1942 = vmatpush2.msra.mxu0 %v86
    %1943 = vmatprep.subr.mxu0 %v85
    %1944 = vmatpush2.msra.mxu0 %v84
    %1945 = vmatprep.subr.mxu0 %v83
    %1946 = vmatpush2.msra.mxu0 %v82
    %1947 = vmatprep.subr.mxu0 %v81
    %1948 = vmatpush2.msra.mxu0 %v80
    %1949 = vmatprep.subr.mxu0 %v79
    %1950 = vmatpush2.msra.mxu0 %v78
    %1951 = vmatprep.subr.mxu0 %v77
    %1952 = vmatpush2.msra.mxu0 %v76
    %1953 = vmatprep.subr.mxu0 %v75
    %1954 = vmatpush2.msra.mxu0 %v74
    %1955 = vmatprep.subr.mxu0 %v73
    %1956 = vmatpush2.msra.mxu0 %v72
    %1957 = vmatprep.mubr.f32.mxu0 %v1648
    %1958 = vmatmul.mubr.f32.gmra.mxu0 %v1640
    %v1959 = vpop.f32.mrf.mxu0
    %v1960 = vadd.f32 %v1613, %v1959
    %v1961 = vpop.f32.mrf.mxu0
    %v1962 = vadd.f32 %v1617, %v1961
    %1963 = vdwg.mxu0
    %1964 = vmatprep.subr.mxu0 %v135
    %1965 = vmatpush1.msra.mxu0 %v134
    %1966 = vmatprep.subr.mxu0 %v133
    %1967 = vmatpush1.msra.mxu0 %v132
    %1968 = vmatprep.subr.mxu0 %v131
    %1969 = vmatpush1.msra.mxu0 %v130
    %1970 = vmatprep.subr.mxu0 %v129
    %1971 = vmatpush1.msra.mxu0 %v128
    %1972 = vmatprep.subr.mxu0 %v127
    %1973 = vmatpush1.msra.mxu0 %v126
    %1974 = vmatprep.subr.mxu0 %v125
    %1975 = vmatpush1.msra.mxu0 %v124
    %1976 = vmatprep.subr.mxu0 %v123
    %1977 = vmatpush1.msra.mxu0 %v122
    %1978 = vmatprep.subr.mxu0 %v121
    %1979 = vmatpush1.msra.mxu0 %v120
    %1980 = vmatprep.subr.mxu0 %v119
    %1981 = vmatpush1.msra.mxu0 %v118
    %1982 = vmatprep.subr.mxu0 %v117
    %1983 = vmatpush1.msra.mxu0 %v116
    %1984 = vmatprep.subr.mxu0 %v115
    %1985 = vmatpush1.msra.mxu0 %v114
    %1986 = vmatprep.subr.mxu0 %v113
    %1987 = vmatpush1.msra.mxu0 %v112
    %1988 = vmatprep.subr.mxu0 %v111
    %1989 = vmatpush1.msra.mxu0 %v110
    %1990 = vmatprep.subr.mxu0 %v109
    %1991 = vmatpush1.msra.mxu0 %v108
    %1992 = vmatprep.subr.mxu0 %v107
    %1993 = vmatpush1.msra.mxu0 %v106
    %1994 = vmatprep.subr.mxu0 %v105
    %1995 = vmatpush1.msra.mxu0 %v104
    %1996 = vmatprep.subr.mxu0 %v167
    %1997 = vmatpush2.msra.mxu0 %v166
    %1998 = vmatprep.subr.mxu0 %v165
    %1999 = vmatpush2.msra.mxu0 %v164
    %2000 = vmatprep.subr.mxu0 %v163
    %2001 = vmatpush2.msra.mxu0 %v162
    %2002 = vmatprep.subr.mxu0 %v161
    %2003 = vmatpush2.msra.mxu0 %v160
    %2004 = vmatprep.subr.mxu0 %v159
    %2005 = vmatpush2.msra.mxu0 %v158
    %2006 = vmatprep.subr.mxu0 %v157
    %2007 = vmatpush2.msra.mxu0 %v156
    %2008 = vmatprep.subr.mxu0 %v155
    %2009 = vmatpush2.msra.mxu0 %v154
    %2010 = vmatprep.subr.mxu0 %v153
    %2011 = vmatpush2.msra.mxu0 %v152
    %2012 = vmatprep.subr.mxu0 %v151
    %2013 = vmatpush2.msra.mxu0 %v150
    %2014 = vmatprep.subr.mxu0 %v149
    %2015 = vmatpush2.msra.mxu0 %v148
    %2016 = vmatprep.subr.mxu0 %v147
    %2017 = vmatpush2.msra.mxu0 %v146
    %2018 = vmatprep.subr.mxu0 %v145
    %2019 = vmatpush2.msra.mxu0 %v144
    %2020 = vmatprep.subr.mxu0 %v143
    %2021 = vmatpush2.msra.mxu0 %v142
    %2022 = vmatprep.subr.mxu0 %v141
    %2023 = vmatpush2.msra.mxu0 %v140
    %2024 = vmatprep.subr.mxu0 %v139
    %2025 = vmatpush2.msra.mxu0 %v138
    %2026 = vmatprep.subr.mxu0 %v137
    %2027 = vmatpush2.msra.mxu0 %v136
    %2028 = vmatprep.mubr.f32.mxu0 %v1649
    %2029 = vmatmul.mubr.f32.gmra.mxu0 %v1647
    %v2030 = vpop.f32.mrf.mxu0
    %v2031 = vadd.f32 %v1960, %v2030
    %v2032 = vpop.f32.mrf.mxu0
    %v2033 = vadd.f32 %v1962, %v2032
    %2034 = vdwg.mxu0
    %2035 = vmatprep.subr.mxu0 %v199
    %2036 = vmatpush1.msra.mxu0 %v198
    %2037 = vmatprep.subr.mxu0 %v197
    %2038 = vmatpush1.msra.mxu0 %v196
    %2039 = vmatprep.subr.mxu0 %v195
    %2040 = vmatpush1.msra.mxu0 %v194
    %2041 = vmatprep.subr.mxu0 %v193
    %2042 = vmatpush1.msra.mxu0 %v192
    %2043 = vmatprep.subr.mxu0 %v191
    %2044 = vmatpush1.msra.mxu0 %v190
    %2045 = vmatprep.subr.mxu0 %v189
    %2046 = vmatpush1.msra.mxu0 %v188
    %2047 = vmatprep.subr.mxu0 %v187
    %2048 = vmatpush1.msra.mxu0 %v186
    %2049 = vmatprep.subr.mxu0 %v185
    %2050 = vmatpush1.msra.mxu0 %v184
    %2051 = vmatprep.subr.mxu0 %v183
    %2052 = vmatpush1.msra.mxu0 %v182
    %2053 = vmatprep.subr.mxu0 %v181
    %2054 = vmatpush1.msra.mxu0 %v180
    %2055 = vmatprep.subr.mxu0 %v179
    %2056 = vmatpush1.msra.mxu0 %v178
    %2057 = vmatprep.subr.mxu0 %v177
    %2058 = vmatpush1.msra.mxu0 %v176
    %2059 = vmatprep.subr.mxu0 %v175
    %2060 = vmatpush1.msra.mxu0 %v174
    %2061 = vmatprep.subr.mxu0 %v173
    %2062 = vmatpush1.msra.mxu0 %v172
    %2063 = vmatprep.subr.mxu0 %v171
    %2064 = vmatpush1.msra.mxu0 %v170
    %2065 = vmatprep.subr.mxu0 %v169
    %2066 = vmatpush1.msra.mxu0 %v168
    %2067 = vmatprep.subr.mxu0 %v231
    %2068 = vmatpush2.msra.mxu0 %v230
    %2069 = vmatprep.subr.mxu0 %v229
    %2070 = vmatpush2.msra.mxu0 %v228
    %2071 = vmatprep.subr.mxu0 %v227
    %2072 = vmatpush2.msra.mxu0 %v226
    %2073 = vmatprep.subr.mxu0 %v225
    %2074 = vmatpush2.msra.mxu0 %v224
    %2075 = vmatprep.subr.mxu0 %v223
    %2076 = vmatpush2.msra.mxu0 %v222
    %2077 = vmatprep.subr.mxu0 %v221
    %2078 = vmatpush2.msra.mxu0 %v220
    %2079 = vmatprep.subr.mxu0 %v219
    %2080 = vmatpush2.msra.mxu0 %v218
    %2081 = vmatprep.subr.mxu0 %v217
    %2082 = vmatpush2.msra.mxu0 %v216
    %2083 = vmatprep.subr.mxu0 %v215
    %2084 = vmatpush2.msra.mxu0 %v214
    %2085 = vmatprep.subr.mxu0 %v213
    %2086 = vmatpush2.msra.mxu0 %v212
    %2087 = vmatprep.subr.mxu0 %v211
    %2088 = vmatpush2.msra.mxu0 %v210
    %2089 = vmatprep.subr.mxu0 %v209
    %2090 = vmatpush2.msra.mxu0 %v208
    %2091 = vmatprep.subr.mxu0 %v207
    %2092 = vmatpush2.msra.mxu0 %v206
    %2093 = vmatprep.subr.mxu0 %v205
    %2094 = vmatpush2.msra.mxu0 %v204
    %2095 = vmatprep.subr.mxu0 %v203
    %2096 = vmatpush2.msra.mxu0 %v202
    %2097 = vmatprep.subr.mxu0 %v201
    %2098 = vmatpush2.msra.mxu0 %v200
    %2099 = vmatprep.mubr.f32.mxu0 %v1665
    %2100 = vmatmul.mubr.f32.gmra.mxu0 %v1657
    %v2101 = vpop.f32.mrf.mxu0
    %v2102 = vadd.f32 %v2031, %v2101
    %v2103 = vpop.f32.mrf.mxu0
    %v2104 = vadd.f32 %v2033, %v2103
    %2105 = vdwg.mxu0
    %2106 = vmatprep.subr.mxu0 %v263
    %2107 = vmatpush1.msra.mxu0 %v262
    %2108 = vmatprep.subr.mxu0 %v261
    %2109 = vmatpush1.msra.mxu0 %v260
    %2110 = vmatprep.subr.mxu0 %v259
    %2111 = vmatpush1.msra.mxu0 %v258
    %2112 = vmatprep.subr.mxu0 %v257
    %2113 = vmatpush1.msra.mxu0 %v256
    %2114 = vmatprep.subr.mxu0 %v255
    %2115 = vmatpush1.msra.mxu0 %v254
    %2116 = vmatprep.subr.mxu0 %v253
    %2117 = vmatpush1.msra.mxu0 %v252
    %2118 = vmatprep.subr.mxu0 %v251
    %2119 = vmatpush1.msra.mxu0 %v250
    %2120 = vmatprep.subr.mxu0 %v249
    %2121 = vmatpush1.msra.mxu0 %v248
    %2122 = vmatprep.subr.mxu0 %v247
    %2123 = vmatpush1.msra.mxu0 %v246
    %2124 = vmatprep.subr.mxu0 %v245
    %2125 = vmatpush1.msra.mxu0 %v244
    %2126 = vmatprep.subr.mxu0 %v243
    %2127 = vmatpush1.msra.mxu0 %v242
    %2128 = vmatprep.subr.mxu0 %v241
    %2129 = vmatpush1.msra.mxu0 %v240
    %2130 = vmatprep.subr.mxu0 %v239
    %2131 = vmatpush1.msra.mxu0 %v238
    %2132 = vmatprep.subr.mxu0 %v237
    %2133 = vmatpush1.msra.mxu0 %v236
    %2134 = vmatprep.subr.mxu0 %v235
    %2135 = vmatpush1.msra.mxu0 %v234
    %2136 = vmatprep.subr.mxu0 %v233
    %2137 = vmatpush1.msra.mxu0 %v232
    %2138 = vmatprep.subr.mxu0 %v295
    %2139 = vmatpush2.msra.mxu0 %v294
    %2140 = vmatprep.subr.mxu0 %v293
    %2141 = vmatpush2.msra.mxu0 %v292
    %2142 = vmatprep.subr.mxu0 %v291
    %2143 = vmatpush2.msra.mxu0 %v290
    %2144 = vmatprep.subr.mxu0 %v289
    %2145 = vmatpush2.msra.mxu0 %v288
    %2146 = vmatprep.subr.mxu0 %v287
    %2147 = vmatpush2.msra.mxu0 %v286
    %2148 = vmatprep.subr.mxu0 %v285
    %2149 = vmatpush2.msra.mxu0 %v284
    %2150 = vmatprep.subr.mxu0 %v283
    %2151 = vmatpush2.msra.mxu0 %v282
    %2152 = vmatprep.subr.mxu0 %v281
    %2153 = vmatpush2.msra.mxu0 %v280
    %2154 = vmatprep.subr.mxu0 %v279
    %2155 = vmatpush2.msra.mxu0 %v278
    %2156 = vmatprep.subr.mxu0 %v277
    %2157 = vmatpush2.msra.mxu0 %v276
    %2158 = vmatprep.subr.mxu0 %v275
    %2159 = vmatpush2.msra.mxu0 %v274
    %2160 = vmatprep.subr.mxu0 %v273
    %2161 = vmatpush2.msra.mxu0 %v272
    %2162 = vmatprep.subr.mxu0 %v271
    %2163 = vmatpush2.msra.mxu0 %v270
    %2164 = vmatprep.subr.mxu0 %v269
    %2165 = vmatpush2.msra.mxu0 %v268
    %2166 = vmatprep.subr.mxu0 %v267
    %2167 = vmatpush2.msra.mxu0 %v266
    %2168 = vmatprep.subr.mxu0 %v265
    %2169 = vmatpush2.msra.mxu0 %v264
    %2170 = vmatprep.mubr.f32.mxu0 %v1666
    %2171 = vmatmul.mubr.f32.gmra.mxu0 %v1664
    %v2172 = vpop.f32.mrf.mxu0
    %v2173 = vadd.f32 %v2102, %v2172
    %v2174 = vpop.f32.mrf.mxu0
    %v2175 = vadd.f32 %v2104, %v2174
    %2176 = vdwg.mxu0
    %2177 = vmatprep.subr.mxu0 %v327
    %2178 = vmatpush1.msra.mxu0 %v326
    %2179 = vmatprep.subr.mxu0 %v325
    %2180 = vmatpush1.msra.mxu0 %v324
    %2181 = vmatprep.subr.mxu0 %v323
    %2182 = vmatpush1.msra.mxu0 %v322
    %2183 = vmatprep.subr.mxu0 %v321
    %2184 = vmatpush1.msra.mxu0 %v320
    %2185 = vmatprep.subr.mxu0 %v319
    %2186 = vmatpush1.msra.mxu0 %v318
    %2187 = vmatprep.subr.mxu0 %v317
    %2188 = vmatpush1.msra.mxu0 %v316
    %2189 = vmatprep.subr.mxu0 %v315
    %2190 = vmatpush1.msra.mxu0 %v314
    %2191 = vmatprep.subr.mxu0 %v313
    %2192 = vmatpush1.msra.mxu0 %v312
    %2193 = vmatprep.subr.mxu0 %v311
    %2194 = vmatpush1.msra.mxu0 %v310
    %2195 = vmatprep.subr.mxu0 %v309
    %2196 = vmatpush1.msra.mxu0 %v308
    %2197 = vmatprep.subr.mxu0 %v307
    %2198 = vmatpush1.msra.mxu0 %v306
    %2199 = vmatprep.subr.mxu0 %v305
    %2200 = vmatpush1.msra.mxu0 %v304
    %2201 = vmatprep.subr.mxu0 %v303
    %2202 = vmatpush1.msra.mxu0 %v302
    %2203 = vmatprep.subr.mxu0 %v301
    %2204 = vmatpush1.msra.mxu0 %v300
    %2205 = vmatprep.subr.mxu0 %v299
    %2206 = vmatpush1.msra.mxu0 %v298
    %2207 = vmatprep.subr.mxu0 %v297
    %2208 = vmatpush1.msra.mxu0 %v296
    %2209 = vmatprep.subr.mxu0 %v359
    %2210 = vmatpush2.msra.mxu0 %v358
    %2211 = vmatprep.subr.mxu0 %v357
    %2212 = vmatpush2.msra.mxu0 %v356
    %2213 = vmatprep.subr.mxu0 %v355
    %2214 = vmatpush2.msra.mxu0 %v354
    %2215 = vmatprep.subr.mxu0 %v353
    %2216 = vmatpush2.msra.mxu0 %v352
    %2217 = vmatprep.subr.mxu0 %v351
    %2218 = vmatpush2.msra.mxu0 %v350
    %2219 = vmatprep.subr.mxu0 %v349
    %2220 = vmatpush2.msra.mxu0 %v348
    %2221 = vmatprep.subr.mxu0 %v347
    %2222 = vmatpush2.msra.mxu0 %v346
    %2223 = vmatprep.subr.mxu0 %v345
    %2224 = vmatpush2.msra.mxu0 %v344
    %2225 = vmatprep.subr.mxu0 %v343
    %2226 = vmatpush2.msra.mxu0 %v342
    %2227 = vmatprep.subr.mxu0 %v341
    %2228 = vmatpush2.msra.mxu0 %v340
    %2229 = vmatprep.subr.mxu0 %v339
    %2230 = vmatpush2.msra.mxu0 %v338
    %2231 = vmatprep.subr.mxu0 %v337
    %2232 = vmatpush2.msra.mxu0 %v336
    %2233 = vmatprep.subr.mxu0 %v335
    %2234 = vmatpush2.msra.mxu0 %v334
    %2235 = vmatprep.subr.mxu0 %v333
    %2236 = vmatpush2.msra.mxu0 %v332
    %2237 = vmatprep.subr.mxu0 %v331
    %2238 = vmatpush2.msra.mxu0 %v330
    %2239 = vmatprep.subr.mxu0 %v329
    %2240 = vmatpush2.msra.mxu0 %v328
    %2241 = vmatprep.mubr.f32.mxu0 %v1682
    %2242 = vmatmul.mubr.f32.gmra.mxu0 %v1674
    %v2243 = vpop.f32.mrf.mxu0
    %v2244 = vadd.f32 %v2173, %v2243
    %v2245 = vpop.f32.mrf.mxu0
    %v2246 = vadd.f32 %v2175, %v2245
    %2247 = vdwg.mxu0
    %2248 = vmatprep.subr.mxu0 %v391
    %2249 = vmatpush1.msra.mxu0 %v390
    %2250 = vmatprep.subr.mxu0 %v389
    %2251 = vmatpush1.msra.mxu0 %v388
    %2252 = vmatprep.subr.mxu0 %v387
    %2253 = vmatpush1.msra.mxu0 %v386
    %2254 = vmatprep.subr.mxu0 %v385
    %2255 = vmatpush1.msra.mxu0 %v384
    %2256 = vmatprep.subr.mxu0 %v383
    %2257 = vmatpush1.msra.mxu0 %v382
    %2258 = vmatprep.subr.mxu0 %v381
    %2259 = vmatpush1.msra.mxu0 %v380
    %2260 = vmatprep.subr.mxu0 %v379
    %2261 = vmatpush1.msra.mxu0 %v378
    %2262 = vmatprep.subr.mxu0 %v377
    %2263 = vmatpush1.msra.mxu0 %v376
    %2264 = vmatprep.subr.mxu0 %v375
    %2265 = vmatpush1.msra.mxu0 %v374
    %2266 = vmatprep.subr.mxu0 %v373
    %2267 = vmatpush1.msra.mxu0 %v372
    %2268 = vmatprep.subr.mxu0 %v371
    %2269 = vmatpush1.msra.mxu0 %v370
    %2270 = vmatprep.subr.mxu0 %v369
    %2271 = vmatpush1.msra.mxu0 %v368
    %2272 = vmatprep.subr.mxu0 %v367
    %2273 = vmatpush1.msra.mxu0 %v366
    %2274 = vmatprep.subr.mxu0 %v365
    %2275 = vmatpush1.msra.mxu0 %v364
    %2276 = vmatprep.subr.mxu0 %v363
    %2277 = vmatpush1.msra.mxu0 %v362
    %2278 = vmatprep.subr.mxu0 %v361
    %2279 = vmatpush1.msra.mxu0 %v360
    %2280 = vmatprep.subr.mxu0 %v423
    %2281 = vmatpush2.msra.mxu0 %v422
    %2282 = vmatprep.subr.mxu0 %v421
    %2283 = vmatpush2.msra.mxu0 %v420
    %2284 = vmatprep.subr.mxu0 %v419
    %2285 = vmatpush2.msra.mxu0 %v418
    %2286 = vmatprep.subr.mxu0 %v417
    %2287 = vmatpush2.msra.mxu0 %v416
    %2288 = vmatprep.subr.mxu0 %v415
    %2289 = vmatpush2.msra.mxu0 %v414
    %2290 = vmatprep.subr.mxu0 %v413
    %2291 = vmatpush2.msra.mxu0 %v412
    %2292 = vmatprep.subr.mxu0 %v411
    %2293 = vmatpush2.msra.mxu0 %v410
    %2294 = vmatprep.subr.mxu0 %v409
    %2295 = vmatpush2.msra.mxu0 %v408
    %2296 = vmatprep.subr.mxu0 %v407
    %2297 = vmatpush2.msra.mxu0 %v406
    %2298 = vmatprep.subr.mxu0 %v405
    %2299 = vmatpush2.msra.mxu0 %v404
    %2300 = vmatprep.subr.mxu0 %v403
    %2301 = vmatpush2.msra.mxu0 %v402
    %2302 = vmatprep.subr.mxu0 %v401
    %2303 = vmatpush2.msra.mxu0 %v400
    %2304 = vmatprep.subr.mxu0 %v399
    %2305 = vmatpush2.msra.mxu0 %v398
    %2306 = vmatprep.subr.mxu0 %v397
    %2307 = vmatpush2.msra.mxu0 %v396
    %2308 = vmatprep.subr.mxu0 %v395
    %2309 = vmatpush2.msra.mxu0 %v394
    %2310 = vmatprep.subr.mxu0 %v393
    %2311 = vmatpush2.msra.mxu0 %v392
    %2312 = vmatprep.mubr.f32.mxu0 %v1683
    %2313 = vmatmul.mubr.f32.gmra.mxu0 %v1681
    %v2314 = vpop.f32.mrf.mxu0
    %v2315 = vadd.f32 %v2244, %v2314
    %v2316 = vpop.f32.mrf.mxu0
    %v2317 = vadd.f32 %v2246, %v2316
    %2318 = vdwg.mxu0
    %2319 = vmatprep.subr.mxu0 %v455
    %2320 = vmatpush1.msra.mxu0 %v454
    %2321 = vmatprep.subr.mxu0 %v453
    %2322 = vmatpush1.msra.mxu0 %v452
    %2323 = vmatprep.subr.mxu0 %v451
    %2324 = vmatpush1.msra.mxu0 %v450
    %2325 = vmatprep.subr.mxu0 %v449
    %2326 = vmatpush1.msra.mxu0 %v448
    %2327 = vmatprep.subr.mxu0 %v447
    %2328 = vmatpush1.msra.mxu0 %v446
    %2329 = vmatprep.subr.mxu0 %v445
    %2330 = vmatpush1.msra.mxu0 %v444
    %2331 = vmatprep.subr.mxu0 %v443
    %2332 = vmatpush1.msra.mxu0 %v442
    %2333 = vmatprep.subr.mxu0 %v441
    %2334 = vmatpush1.msra.mxu0 %v440
    %2335 = vmatprep.subr.mxu0 %v439
    %2336 = vmatpush1.msra.mxu0 %v438
    %2337 = vmatprep.subr.mxu0 %v437
    %2338 = vmatpush1.msra.mxu0 %v436
    %2339 = vmatprep.subr.mxu0 %v435
    %2340 = vmatpush1.msra.mxu0 %v434
    %2341 = vmatprep.subr.mxu0 %v433
    %2342 = vmatpush1.msra.mxu0 %v432
    %2343 = vmatprep.subr.mxu0 %v431
    %2344 = vmatpush1.msra.mxu0 %v430
    %2345 = vmatprep.subr.mxu0 %v429
    %2346 = vmatpush1.msra.mxu0 %v428
    %2347 = vmatprep.subr.mxu0 %v427
    %2348 = vmatpush1.msra.mxu0 %v426
    %2349 = vmatprep.subr.mxu0 %v425
    %2350 = vmatpush1.msra.mxu0 %v424
    %2351 = vmatprep.subr.mxu0 %v487
    %2352 = vmatpush2.msra.mxu0 %v486
    %2353 = vmatprep.subr.mxu0 %v485
    %2354 = vmatpush2.msra.mxu0 %v484
    %2355 = vmatprep.subr.mxu0 %v483
    %2356 = vmatpush2.msra.mxu0 %v482
    %2357 = vmatprep.subr.mxu0 %v481
    %2358 = vmatpush2.msra.mxu0 %v480
    %2359 = vmatprep.subr.mxu0 %v479
    %2360 = vmatpush2.msra.mxu0 %v478
    %2361 = vmatprep.subr.mxu0 %v477
    %2362 = vmatpush2.msra.mxu0 %v476
    %2363 = vmatprep.subr.mxu0 %v475
    %2364 = vmatpush2.msra.mxu0 %v474
    %2365 = vmatprep.subr.mxu0 %v473
    %2366 = vmatpush2.msra.mxu0 %v472
    %2367 = vmatprep.subr.mxu0 %v471
    %2368 = vmatpush2.msra.mxu0 %v470
    %2369 = vmatprep.subr.mxu0 %v469
    %2370 = vmatpush2.msra.mxu0 %v468
    %2371 = vmatprep.subr.mxu0 %v467
    %2372 = vmatpush2.msra.mxu0 %v466
    %2373 = vmatprep.subr.mxu0 %v465
    %2374 = vmatpush2.msra.mxu0 %v464
    %2375 = vmatprep.subr.mxu0 %v463
    %2376 = vmatpush2.msra.mxu0 %v462
    %2377 = vmatprep.subr.mxu0 %v461
    %2378 = vmatpush2.msra.mxu0 %v460
    %2379 = vmatprep.subr.mxu0 %v459
    %2380 = vmatpush2.msra.mxu0 %v458
    %2381 = vmatprep.subr.mxu0 %v457
    %2382 = vmatpush2.msra.mxu0 %v456
    %2383 = vmatprep.mubr.f32.mxu0 %v1699
    %2384 = vmatmul.mubr.f32.gmra.mxu0 %v1691
    %v2385 = vpop.f32.mrf.mxu0
    %v2386 = vadd.f32 %v2315, %v2385
    %v2387 = vpop.f32.mrf.mxu0
    %v2388 = vadd.f32 %v2317, %v2387
    %2389 = vdwg.mxu0
    %2390 = vmatprep.subr.mxu0 %v519
    %2391 = vmatpush1.msra.mxu0 %v518
    %2392 = vmatprep.subr.mxu0 %v517
    %2393 = vmatpush1.msra.mxu0 %v516
    %2394 = vmatprep.subr.mxu0 %v515
    %2395 = vmatpush1.msra.mxu0 %v514
    %2396 = vmatprep.subr.mxu0 %v513
    %2397 = vmatpush1.msra.mxu0 %v512
    %2398 = vmatprep.subr.mxu0 %v511
    %2399 = vmatpush1.msra.mxu0 %v510
    %2400 = vmatprep.subr.mxu0 %v509
    %2401 = vmatpush1.msra.mxu0 %v508
    %2402 = vmatprep.subr.mxu0 %v507
    %2403 = vmatpush1.msra.mxu0 %v506
    %2404 = vmatprep.subr.mxu0 %v505
    %2405 = vmatpush1.msra.mxu0 %v504
    %2406 = vmatprep.subr.mxu0 %v503
    %2407 = vmatpush1.msra.mxu0 %v502
    %2408 = vmatprep.subr.mxu0 %v501
    %2409 = vmatpush1.msra.mxu0 %v500
    %2410 = vmatprep.subr.mxu0 %v499
    %2411 = vmatpush1.msra.mxu0 %v498
    %2412 = vmatprep.subr.mxu0 %v497
    %2413 = vmatpush1.msra.mxu0 %v496
    %2414 = vmatprep.subr.mxu0 %v495
    %2415 = vmatpush1.msra.mxu0 %v494
    %2416 = vmatprep.subr.mxu0 %v493
    %2417 = vmatpush1.msra.mxu0 %v492
    %2418 = vmatprep.subr.mxu0 %v491
    %2419 = vmatpush1.msra.mxu0 %v490
    %2420 = vmatprep.subr.mxu0 %v489
    %2421 = vmatpush1.msra.mxu0 %v488
    %2422 = vmatprep.subr.mxu0 %v551
    %2423 = vmatpush2.msra.mxu0 %v550
    %2424 = vmatprep.subr.mxu0 %v549
    %2425 = vmatpush2.msra.mxu0 %v548
    %2426 = vmatprep.subr.mxu0 %v547
    %2427 = vmatpush2.msra.mxu0 %v546
    %2428 = vmatprep.subr.mxu0 %v545
    %2429 = vmatpush2.msra.mxu0 %v544
    %2430 = vmatprep.subr.mxu0 %v543
    %2431 = vmatpush2.msra.mxu0 %v542
    %2432 = vmatprep.subr.mxu0 %v541
    %2433 = vmatpush2.msra.mxu0 %v540
    %2434 = vmatprep.subr.mxu0 %v539
    %2435 = vmatpush2.msra.mxu0 %v538
    %2436 = vmatprep.subr.mxu0 %v537
    %2437 = vmatpush2.msra.mxu0 %v536
    %2438 = vmatprep.subr.mxu0 %v535
    %2439 = vmatpush2.msra.mxu0 %v534
    %2440 = vmatprep.subr.mxu0 %v533
    %2441 = vmatpush2.msra.mxu0 %v532
    %2442 = vmatprep.subr.mxu0 %v531
    %2443 = vmatpush2.msra.mxu0 %v530
    %2444 = vmatprep.subr.mxu0 %v529
    %2445 = vmatpush2.msra.mxu0 %v528
    %2446 = vmatprep.subr.mxu0 %v527
    %2447 = vmatpush2.msra.mxu0 %v526
    %2448 = vmatprep.subr.mxu0 %v525
    %2449 = vmatpush2.msra.mxu0 %v524
    %2450 = vmatprep.subr.mxu0 %v523
    %2451 = vmatpush2.msra.mxu0 %v522
    %2452 = vmatprep.subr.mxu0 %v521
    %2453 = vmatpush2.msra.mxu0 %v520
    %2454 = vmatprep.mubr.f32.mxu0 %v1700
    %2455 = vmatmul.mubr.f32.gmra.mxu0 %v1698
    %v2456 = vpop.f32.mrf.mxu0
    %v2457 = vadd.f32 %v2386, %v2456
    %v2458 = vpop.f32.mrf.mxu0
    %v2459 = vadd.f32 %v2388, %v2458
    %2460 = vdwg.mxu0
    %2461 = vmatprep.subr.mxu0 %v583
    %2462 = vmatpush1.msra.mxu0 %v582
    %2463 = vmatprep.subr.mxu0 %v581
    %2464 = vmatpush1.msra.mxu0 %v580
    %2465 = vmatprep.subr.mxu0 %v579
    %2466 = vmatpush1.msra.mxu0 %v578
    %2467 = vmatprep.subr.mxu0 %v577
    %2468 = vmatpush1.msra.mxu0 %v576
    %2469 = vmatprep.subr.mxu0 %v575
    %2470 = vmatpush1.msra.mxu0 %v574
    %2471 = vmatprep.subr.mxu0 %v573
    %2472 = vmatpush1.msra.mxu0 %v572
    %2473 = vmatprep.subr.mxu0 %v571
    %2474 = vmatpush1.msra.mxu0 %v570
    %2475 = vmatprep.subr.mxu0 %v569
    %2476 = vmatpush1.msra.mxu0 %v568
    %2477 = vmatprep.subr.mxu0 %v567
    %2478 = vmatpush1.msra.mxu0 %v566
    %2479 = vmatprep.subr.mxu0 %v565
    %2480 = vmatpush1.msra.mxu0 %v564
    %2481 = vmatprep.subr.mxu0 %v563
    %2482 = vmatpush1.msra.mxu0 %v562
    %2483 = vmatprep.subr.mxu0 %v561
    %2484 = vmatpush1.msra.mxu0 %v560
    %2485 = vmatprep.subr.mxu0 %v559
    %2486 = vmatpush1.msra.mxu0 %v558
    %2487 = vmatprep.subr.mxu0 %v557
    %2488 = vmatpush1.msra.mxu0 %v556
    %2489 = vmatprep.subr.mxu0 %v555
    %2490 = vmatpush1.msra.mxu0 %v554
    %2491 = vmatprep.subr.mxu0 %v553
    %2492 = vmatpush1.msra.mxu0 %v552
    %2493 = vmatprep.subr.mxu0 %v615
    %2494 = vmatpush2.msra.mxu0 %v614
    %2495 = vmatprep.subr.mxu0 %v613
    %2496 = vmatpush2.msra.mxu0 %v612
    %2497 = vmatprep.subr.mxu0 %v611
    %2498 = vmatpush2.msra.mxu0 %v610
    %2499 = vmatprep.subr.mxu0 %v609
    %2500 = vmatpush2.msra.mxu0 %v608
    %2501 = vmatprep.subr.mxu0 %v607
    %2502 = vmatpush2.msra.mxu0 %v606
    %2503 = vmatprep.subr.mxu0 %v605
    %2504 = vmatpush2.msra.mxu0 %v604
    %2505 = vmatprep.subr.mxu0 %v603
    %2506 = vmatpush2.msra.mxu0 %v602
    %2507 = vmatprep.subr.mxu0 %v601
    %2508 = vmatpush2.msra.mxu0 %v600
    %2509 = vmatprep.subr.mxu0 %v599
    %2510 = vmatpush2.msra.mxu0 %v598
    %2511 = vmatprep.subr.mxu0 %v597
    %2512 = vmatpush2.msra.mxu0 %v596
    %2513 = vmatprep.subr.mxu0 %v595
    %2514 = vmatpush2.msra.mxu0 %v594
    %2515 = vmatprep.subr.mxu0 %v593
    %2516 = vmatpush2.msra.mxu0 %v592
    %2517 = vmatprep.subr.mxu0 %v591
    %2518 = vmatpush2.msra.mxu0 %v590
    %2519 = vmatprep.subr.mxu0 %v589
    %2520 = vmatpush2.msra.mxu0 %v588
    %2521 = vmatprep.subr.mxu0 %v587
    %2522 = vmatpush2.msra.mxu0 %v586
    %2523 = vmatprep.subr.mxu0 %v585
    %2524 = vmatpush2.msra.mxu0 %v584
    %2525 = vmatprep.mubr.f32.mxu0 %v1716
    %2526 = vmatmul.mubr.f32.gmra.mxu0 %v1708
    %v2527 = vpop.f32.mrf.mxu0
    %v2528 = vadd.f32 %v2457, %v2527
    %v2529 = vpop.f32.mrf.mxu0
    %v2530 = vadd.f32 %v2459, %v2529
    %2531 = vdwg.mxu0
    %2532 = vmatprep.subr.mxu0 %v647
    %2533 = vmatpush1.msra.mxu0 %v646
    %2534 = vmatprep.subr.mxu0 %v645
    %2535 = vmatpush1.msra.mxu0 %v644
    %2536 = vmatprep.subr.mxu0 %v643
    %2537 = vmatpush1.msra.mxu0 %v642
    %2538 = vmatprep.subr.mxu0 %v641
    %2539 = vmatpush1.msra.mxu0 %v640
    %2540 = vmatprep.subr.mxu0 %v639
    %2541 = vmatpush1.msra.mxu0 %v638
    %2542 = vmatprep.subr.mxu0 %v637
    %2543 = vmatpush1.msra.mxu0 %v636
    %2544 = vmatprep.subr.mxu0 %v635
    %2545 = vmatpush1.msra.mxu0 %v634
    %2546 = vmatprep.subr.mxu0 %v633
    %2547 = vmatpush1.msra.mxu0 %v632
    %2548 = vmatprep.subr.mxu0 %v631
    %2549 = vmatpush1.msra.mxu0 %v630
    %2550 = vmatprep.subr.mxu0 %v629
    %2551 = vmatpush1.msra.mxu0 %v628
    %2552 = vmatprep.subr.mxu0 %v627
    %2553 = vmatpush1.msra.mxu0 %v626
    %2554 = vmatprep.subr.mxu0 %v625
    %2555 = vmatpush1.msra.mxu0 %v624
    %2556 = vmatprep.subr.mxu0 %v623
    %2557 = vmatpush1.msra.mxu0 %v622
    %2558 = vmatprep.subr.mxu0 %v621
    %2559 = vmatpush1.msra.mxu0 %v620
    %2560 = vmatprep.subr.mxu0 %v619
    %2561 = vmatpush1.msra.mxu0 %v618
    %2562 = vmatprep.subr.mxu0 %v617
    %2563 = vmatpush1.msra.mxu0 %v616
    %2564 = vmatprep.subr.mxu0 %v679
    %2565 = vmatpush2.msra.mxu0 %v678
    %2566 = vmatprep.subr.mxu0 %v677
    %2567 = vmatpush2.msra.mxu0 %v676
    %2568 = vmatprep.subr.mxu0 %v675
    %2569 = vmatpush2.msra.mxu0 %v674
    %2570 = vmatprep.subr.mxu0 %v673
    %2571 = vmatpush2.msra.mxu0 %v672
    %2572 = vmatprep.subr.mxu0 %v671
    %2573 = vmatpush2.msra.mxu0 %v670
    %2574 = vmatprep.subr.mxu0 %v669
    %2575 = vmatpush2.msra.mxu0 %v668
    %2576 = vmatprep.subr.mxu0 %v667
    %2577 = vmatpush2.msra.mxu0 %v666
    %2578 = vmatprep.subr.mxu0 %v665
    %2579 = vmatpush2.msra.mxu0 %v664
    %2580 = vmatprep.subr.mxu0 %v663
    %2581 = vmatpush2.msra.mxu0 %v662
    %2582 = vmatprep.subr.mxu0 %v661
    %2583 = vmatpush2.msra.mxu0 %v660
    %2584 = vmatprep.subr.mxu0 %v659
    %2585 = vmatpush2.msra.mxu0 %v658
    %2586 = vmatprep.subr.mxu0 %v657
    %2587 = vmatpush2.msra.mxu0 %v656
    %2588 = vmatprep.subr.mxu0 %v655
    %2589 = vmatpush2.msra.mxu0 %v654
    %2590 = vmatprep.subr.mxu0 %v653
    %2591 = vmatpush2.msra.mxu0 %v652
    %2592 = vmatprep.subr.mxu0 %v651
    %2593 = vmatpush2.msra.mxu0 %v650
    %2594 = vmatprep.subr.mxu0 %v649
    %2595 = vmatpush2.msra.mxu0 %v648
    %2596 = vmatprep.mubr.f32.mxu0 %v1717
    %2597 = vmatmul.mubr.f32.gmra.mxu0 %v1715
    %v2598 = vpop.f32.mrf.mxu0
    %v2599 = vadd.f32 %v2528, %v2598
    %v2600 = vpop.f32.mrf.mxu0
    %v2601 = vadd.f32 %v2530, %v2600
    %2602 = vdwg.mxu0
    %2603 = vmatprep.subr.mxu0 %v711
    %2604 = vmatpush1.msra.mxu0 %v710
    %2605 = vmatprep.subr.mxu0 %v709
    %2606 = vmatpush1.msra.mxu0 %v708
    %2607 = vmatprep.subr.mxu0 %v707
    %2608 = vmatpush1.msra.mxu0 %v706
    %2609 = vmatprep.subr.mxu0 %v705
    %2610 = vmatpush1.msra.mxu0 %v704
    %2611 = vmatprep.subr.mxu0 %v703
    %2612 = vmatpush1.msra.mxu0 %v702
    %2613 = vmatprep.subr.mxu0 %v701
    %2614 = vmatpush1.msra.mxu0 %v700
    %2615 = vmatprep.subr.mxu0 %v699
    %2616 = vmatpush1.msra.mxu0 %v698
    %2617 = vmatprep.subr.mxu0 %v697
    %2618 = vmatpush1.msra.mxu0 %v696
    %2619 = vmatprep.subr.mxu0 %v695
    %2620 = vmatpush1.msra.mxu0 %v694
    %2621 = vmatprep.subr.mxu0 %v693
    %2622 = vmatpush1.msra.mxu0 %v692
    %2623 = vmatprep.subr.mxu0 %v691
    %2624 = vmatpush1.msra.mxu0 %v690
    %2625 = vmatprep.subr.mxu0 %v689
    %2626 = vmatpush1.msra.mxu0 %v688
    %2627 = vmatprep.subr.mxu0 %v687
    %2628 = vmatpush1.msra.mxu0 %v686
    %2629 = vmatprep.subr.mxu0 %v685
    %2630 = vmatpush1.msra.mxu0 %v684
    %2631 = vmatprep.subr.mxu0 %v683
    %2632 = vmatpush1.msra.mxu0 %v682
    %2633 = vmatprep.subr.mxu0 %v681
    %2634 = vmatpush1.msra.mxu0 %v680
    %2635 = vmatprep.subr.mxu0 %v743
    %2636 = vmatpush2.msra.mxu0 %v742
    %2637 = vmatprep.subr.mxu0 %v741
    %2638 = vmatpush2.msra.mxu0 %v740
    %2639 = vmatprep.subr.mxu0 %v739
    %2640 = vmatpush2.msra.mxu0 %v738
    %2641 = vmatprep.subr.mxu0 %v737
    %2642 = vmatpush2.msra.mxu0 %v736
    %2643 = vmatprep.subr.mxu0 %v735
    %2644 = vmatpush2.msra.mxu0 %v734
    %2645 = vmatprep.subr.mxu0 %v733
    %2646 = vmatpush2.msra.mxu0 %v732
    %2647 = vmatprep.subr.mxu0 %v731
    %2648 = vmatpush2.msra.mxu0 %v730
    %2649 = vmatprep.subr.mxu0 %v729
    %2650 = vmatpush2.msra.mxu0 %v728
    %2651 = vmatprep.subr.mxu0 %v727
    %2652 = vmatpush2.msra.mxu0 %v726
    %2653 = vmatprep.subr.mxu0 %v725
    %2654 = vmatpush2.msra.mxu0 %v724
    %2655 = vmatprep.subr.mxu0 %v723
    %2656 = vmatpush2.msra.mxu0 %v722
    %2657 = vmatprep.subr.mxu0 %v721
    %2658 = vmatpush2.msra.mxu0 %v720
    %2659 = vmatprep.subr.mxu0 %v719
    %2660 = vmatpush2.msra.mxu0 %v718
    %2661 = vmatprep.subr.mxu0 %v717
    %2662 = vmatpush2.msra.mxu0 %v716
    %2663 = vmatprep.subr.mxu0 %v715
    %2664 = vmatpush2.msra.mxu0 %v714
    %2665 = vmatprep.subr.mxu0 %v713
    %2666 = vmatpush2.msra.mxu0 %v712
    %2667 = vmatprep.mubr.f32.mxu0 %v1733
    %2668 = vmatmul.mubr.f32.gmra.mxu0 %v1725
    %v2669 = vpop.f32.mrf.mxu0
    %v2670 = vadd.f32 %v2599, %v2669
    %v2671 = vpop.f32.mrf.mxu0
    %v2672 = vadd.f32 %v2601, %v2671
    %2673 = vdwg.mxu0
    %2674 = vmatprep.subr.mxu0 %v775
    %2675 = vmatpush1.msra.mxu0 %v774
    %2676 = vmatprep.subr.mxu0 %v773
    %2677 = vmatpush1.msra.mxu0 %v772
    %2678 = vmatprep.subr.mxu0 %v771
    %2679 = vmatpush1.msra.mxu0 %v770
    %2680 = vmatprep.subr.mxu0 %v769
    %2681 = vmatpush1.msra.mxu0 %v768
    %2682 = vmatprep.subr.mxu0 %v767
    %2683 = vmatpush1.msra.mxu0 %v766
    %2684 = vmatprep.subr.mxu0 %v765
    %2685 = vmatpush1.msra.mxu0 %v764
    %2686 = vmatprep.subr.mxu0 %v763
    %2687 = vmatpush1.msra.mxu0 %v762
    %2688 = vmatprep.subr.mxu0 %v761
    %2689 = vmatpush1.msra.mxu0 %v760
    %2690 = vmatprep.subr.mxu0 %v759
    %2691 = vmatpush1.msra.mxu0 %v758
    %2692 = vmatprep.subr.mxu0 %v757
    %2693 = vmatpush1.msra.mxu0 %v756
    %2694 = vmatprep.subr.mxu0 %v755
    %2695 = vmatpush1.msra.mxu0 %v754
    %2696 = vmatprep.subr.mxu0 %v753
    %2697 = vmatpush1.msra.mxu0 %v752
    %2698 = vmatprep.subr.mxu0 %v751
    %2699 = vmatpush1.msra.mxu0 %v750
    %2700 = vmatprep.subr.mxu0 %v749
    %2701 = vmatpush1.msra.mxu0 %v748
    %2702 = vmatprep.subr.mxu0 %v747
    %2703 = vmatpush1.msra.mxu0 %v746
    %2704 = vmatprep.subr.mxu0 %v745
    %2705 = vmatpush1.msra.mxu0 %v744
    %2706 = vmatprep.subr.mxu0 %v807
    %2707 = vmatpush2.msra.mxu0 %v806
    %2708 = vmatprep.subr.mxu0 %v805
    %2709 = vmatpush2.msra.mxu0 %v804
    %2710 = vmatprep.subr.mxu0 %v803
    %2711 = vmatpush2.msra.mxu0 %v802
    %2712 = vmatprep.subr.mxu0 %v801
    %2713 = vmatpush2.msra.mxu0 %v800
    %2714 = vmatprep.subr.mxu0 %v799
    %2715 = vmatpush2.msra.mxu0 %v798
    %2716 = vmatprep.subr.mxu0 %v797
    %2717 = vmatpush2.msra.mxu0 %v796
    %2718 = vmatprep.subr.mxu0 %v795
    %2719 = vmatpush2.msra.mxu0 %v794
    %2720 = vmatprep.subr.mxu0 %v793
    %2721 = vmatpush2.msra.mxu0 %v792
    %2722 = vmatprep.subr.mxu0 %v791
    %2723 = vmatpush2.msra.mxu0 %v790
    %2724 = vmatprep.subr.mxu0 %v789
    %2725 = vmatpush2.msra.mxu0 %v788
    %2726 = vmatprep.subr.mxu0 %v787
    %2727 = vmatpush2.msra.mxu0 %v786
    %2728 = vmatprep.subr.mxu0 %v785
    %2729 = vmatpush2.msra.mxu0 %v784
    %2730 = vmatprep.subr.mxu0 %v783
    %2731 = vmatpush2.msra.mxu0 %v782
    %2732 = vmatprep.subr.mxu0 %v781
    %2733 = vmatpush2.msra.mxu0 %v780
    %2734 = vmatprep.subr.mxu0 %v779
    %2735 = vmatpush2.msra.mxu0 %v778
    %2736 = vmatprep.subr.mxu0 %v777
    %2737 = vmatpush2.msra.mxu0 %v776
    %2738 = vmatprep.mubr.f32.mxu0 %v1734
    %2739 = vmatmul.mubr.f32.gmra.mxu0 %v1732
    %v2740 = vpop.f32.mrf.mxu0
    %v2741 = vadd.f32 %v2670, %v2740
    %v2742 = vpop.f32.mrf.mxu0
    %v2743 = vadd.f32 %v2672, %v2742
    %2744 = vdwg.mxu0
    %2745 = vmatprep.subr.mxu0 %v839
    %2746 = vmatpush1.msra.mxu0 %v838
    %2747 = vmatprep.subr.mxu0 %v837
    %2748 = vmatpush1.msra.mxu0 %v836
    %2749 = vmatprep.subr.mxu0 %v835
    %2750 = vmatpush1.msra.mxu0 %v834
    %2751 = vmatprep.subr.mxu0 %v833
    %2752 = vmatpush1.msra.mxu0 %v832
    %2753 = vmatprep.subr.mxu0 %v831
    %2754 = vmatpush1.msra.mxu0 %v830
    %2755 = vmatprep.subr.mxu0 %v829
    %2756 = vmatpush1.msra.mxu0 %v828
    %2757 = vmatprep.subr.mxu0 %v827
    %2758 = vmatpush1.msra.mxu0 %v826
    %2759 = vmatprep.subr.mxu0 %v825
    %2760 = vmatpush1.msra.mxu0 %v824
    %2761 = vmatprep.subr.mxu0 %v823
    %2762 = vmatpush1.msra.mxu0 %v822
    %2763 = vmatprep.subr.mxu0 %v821
    %2764 = vmatpush1.msra.mxu0 %v820
    %2765 = vmatprep.subr.mxu0 %v819
    %2766 = vmatpush1.msra.mxu0 %v818
    %2767 = vmatprep.subr.mxu0 %v817
    %2768 = vmatpush1.msra.mxu0 %v816
    %2769 = vmatprep.subr.mxu0 %v815
    %2770 = vmatpush1.msra.mxu0 %v814
    %2771 = vmatprep.subr.mxu0 %v813
    %2772 = vmatpush1.msra.mxu0 %v812
    %2773 = vmatprep.subr.mxu0 %v811
    %2774 = vmatpush1.msra.mxu0 %v810
    %2775 = vmatprep.subr.mxu0 %v809
    %2776 = vmatpush1.msra.mxu0 %v808
    %2777 = vmatprep.subr.mxu0 %v871
    %2778 = vmatpush2.msra.mxu0 %v870
    %2779 = vmatprep.subr.mxu0 %v869
    %2780 = vmatpush2.msra.mxu0 %v868
    %2781 = vmatprep.subr.mxu0 %v867
    %2782 = vmatpush2.msra.mxu0 %v866
    %2783 = vmatprep.subr.mxu0 %v865
    %2784 = vmatpush2.msra.mxu0 %v864
    %2785 = vmatprep.subr.mxu0 %v863
    %2786 = vmatpush2.msra.mxu0 %v862
    %2787 = vmatprep.subr.mxu0 %v861
    %2788 = vmatpush2.msra.mxu0 %v860
    %2789 = vmatprep.subr.mxu0 %v859
    %2790 = vmatpush2.msra.mxu0 %v858
    %2791 = vmatprep.subr.mxu0 %v857
    %2792 = vmatpush2.msra.mxu0 %v856
    %2793 = vmatprep.subr.mxu0 %v855
    %2794 = vmatpush2.msra.mxu0 %v854
    %2795 = vmatprep.subr.mxu0 %v853
    %2796 = vmatpush2.msra.mxu0 %v852
    %2797 = vmatprep.subr.mxu0 %v851
    %2798 = vmatpush2.msra.mxu0 %v850
    %2799 = vmatprep.subr.mxu0 %v849
    %2800 = vmatpush2.msra.mxu0 %v848
    %2801 = vmatprep.subr.mxu0 %v847
    %2802 = vmatpush2.msra.mxu0 %v846
    %2803 = vmatprep.subr.mxu0 %v845
    %2804 = vmatpush2.msra.mxu0 %v844
    %2805 = vmatprep.subr.mxu0 %v843
    %2806 = vmatpush2.msra.mxu0 %v842
    %2807 = vmatprep.subr.mxu0 %v841
    %2808 = vmatpush2.msra.mxu0 %v840
    %2809 = vmatprep.mubr.f32.mxu0 %v1750
    %2810 = vmatmul.mubr.f32.gmra.mxu0 %v1742
    %v2811 = vpop.f32.mrf.mxu0
    %v2812 = vadd.f32 %v2741, %v2811
    %v2813 = vpop.f32.mrf.mxu0
    %v2814 = vadd.f32 %v2743, %v2813
    %2815 = vdwg.mxu0
    %2816 = vmatprep.subr.mxu0 %v903
    %2817 = vmatpush1.msra.mxu0 %v902
    %2818 = vmatprep.subr.mxu0 %v901
    %2819 = vmatpush1.msra.mxu0 %v900
    %2820 = vmatprep.subr.mxu0 %v899
    %2821 = vmatpush1.msra.mxu0 %v898
    %2822 = vmatprep.subr.mxu0 %v897
    %2823 = vmatpush1.msra.mxu0 %v896
    %2824 = vmatprep.subr.mxu0 %v895
    %2825 = vmatpush1.msra.mxu0 %v894
    %2826 = vmatprep.subr.mxu0 %v893
    %2827 = vmatpush1.msra.mxu0 %v892
    %2828 = vmatprep.subr.mxu0 %v891
    %2829 = vmatpush1.msra.mxu0 %v890
    %2830 = vmatprep.subr.mxu0 %v889
    %2831 = vmatpush1.msra.mxu0 %v888
    %2832 = vmatprep.subr.mxu0 %v887
    %2833 = vmatpush1.msra.mxu0 %v886
    %2834 = vmatprep.subr.mxu0 %v885
    %2835 = vmatpush1.msra.mxu0 %v884
    %2836 = vmatprep.subr.mxu0 %v883
    %2837 = vmatpush1.msra.mxu0 %v882
    %2838 = vmatprep.subr.mxu0 %v881
    %2839 = vmatpush1.msra.mxu0 %v880
    %2840 = vmatprep.subr.mxu0 %v879
    %2841 = vmatpush1.msra.mxu0 %v878
    %2842 = vmatprep.subr.mxu0 %v877
    %2843 = vmatpush1.msra.mxu0 %v876
    %2844 = vmatprep.subr.mxu0 %v875
    %2845 = vmatpush1.msra.mxu0 %v874
    %2846 = vmatprep.subr.mxu0 %v873
    %2847 = vmatpush1.msra.mxu0 %v872
    %2848 = vmatprep.subr.mxu0 %v935
    %2849 = vmatpush2.msra.mxu0 %v934
    %2850 = vmatprep.subr.mxu0 %v933
    %2851 = vmatpush2.msra.mxu0 %v932
    %2852 = vmatprep.subr.mxu0 %v931
    %2853 = vmatpush2.msra.mxu0 %v930
    %2854 = vmatprep.subr.mxu0 %v929
    %2855 = vmatpush2.msra.mxu0 %v928
    %2856 = vmatprep.subr.mxu0 %v927
    %2857 = vmatpush2.msra.mxu0 %v926
    %2858 = vmatprep.subr.mxu0 %v925
    %2859 = vmatpush2.msra.mxu0 %v924
    %2860 = vmatprep.subr.mxu0 %v923
    %2861 = vmatpush2.msra.mxu0 %v922
    %2862 = vmatprep.subr.mxu0 %v921
    %2863 = vmatpush2.msra.mxu0 %v920
    %2864 = vmatprep.subr.mxu0 %v919
    %2865 = vmatpush2.msra.mxu0 %v918
    %2866 = vmatprep.subr.mxu0 %v917
    %2867 = vmatpush2.msra.mxu0 %v916
    %2868 = vmatprep.subr.mxu0 %v915
    %2869 = vmatpush2.msra.mxu0 %v914
    %2870 = vmatprep.subr.mxu0 %v913
    %2871 = vmatpush2.msra.mxu0 %v912
    %2872 = vmatprep.subr.mxu0 %v911
    %2873 = vmatpush2.msra.mxu0 %v910
    %2874 = vmatprep.subr.mxu0 %v909
    %2875 = vmatpush2.msra.mxu0 %v908
    %2876 = vmatprep.subr.mxu0 %v907
    %2877 = vmatpush2.msra.mxu0 %v906
    %2878 = vmatprep.subr.mxu0 %v905
    %2879 = vmatpush2.msra.mxu0 %v904
    %2880 = vmatprep.mubr.f32.mxu0 %v1751
    %2881 = vmatmul.mubr.f32.gmra.mxu0 %v1749
    %v2882 = vpop.f32.mrf.mxu0
    %v2883 = vadd.f32 %v2812, %v2882
    %v2884 = vpop.f32.mrf.mxu0
    %v2885 = vadd.f32 %v2814, %v2884
    %2886 = vdwg.mxu0
    %2887 = vmatprep.subr.mxu0 %v967
    %2888 = vmatpush1.msra.mxu0 %v966
    %2889 = vmatprep.subr.mxu0 %v965
    %2890 = vmatpush1.msra.mxu0 %v964
    %2891 = vmatprep.subr.mxu0 %v963
    %2892 = vmatpush1.msra.mxu0 %v962
    %2893 = vmatprep.subr.mxu0 %v961
    %2894 = vmatpush1.msra.mxu0 %v960
    %2895 = vmatprep.subr.mxu0 %v959
    %2896 = vmatpush1.msra.mxu0 %v958
    %2897 = vmatprep.subr.mxu0 %v957
    %2898 = vmatpush1.msra.mxu0 %v956
    %2899 = vmatprep.subr.mxu0 %v955
    %2900 = vmatpush1.msra.mxu0 %v954
    %2901 = vmatprep.subr.mxu0 %v953
    %2902 = vmatpush1.msra.mxu0 %v952
    %2903 = vmatprep.subr.mxu0 %v951
    %2904 = vmatpush1.msra.mxu0 %v950
    %2905 = vmatprep.subr.mxu0 %v949
    %2906 = vmatpush1.msra.mxu0 %v948
    %2907 = vmatprep.subr.mxu0 %v947
    %2908 = vmatpush1.msra.mxu0 %v946
    %2909 = vmatprep.subr.mxu0 %v945
    %2910 = vmatpush1.msra.mxu0 %v944
    %2911 = vmatprep.subr.mxu0 %v943
    %2912 = vmatpush1.msra.mxu0 %v942
    %2913 = vmatprep.subr.mxu0 %v941
    %2914 = vmatpush1.msra.mxu0 %v940
    %2915 = vmatprep.subr.mxu0 %v939
    %2916 = vmatpush1.msra.mxu0 %v938
    %2917 = vmatprep.subr.mxu0 %v937
    %2918 = vmatpush1.msra.mxu0 %v936
    %2919 = vmatprep.subr.mxu0 %v999
    %2920 = vmatpush2.msra.mxu0 %v998
    %2921 = vmatprep.subr.mxu0 %v997
    %2922 = vmatpush2.msra.mxu0 %v996
    %2923 = vmatprep.subr.mxu0 %v995
    %2924 = vmatpush2.msra.mxu0 %v994
    %2925 = vmatprep.subr.mxu0 %v993
    %2926 = vmatpush2.msra.mxu0 %v992
    %2927 = vmatprep.subr.mxu0 %v991
    %2928 = vmatpush2.msra.mxu0 %v990
    %2929 = vmatprep.subr.mxu0 %v989
    %2930 = vmatpush2.msra.mxu0 %v988
    %2931 = vmatprep.subr.mxu0 %v987
    %2932 = vmatpush2.msra.mxu0 %v986
    %2933 = vmatprep.subr.mxu0 %v985
    %2934 = vmatpush2.msra.mxu0 %v984
    %2935 = vmatprep.subr.mxu0 %v983
    %2936 = vmatpush2.msra.mxu0 %v982
    %2937 = vmatprep.subr.mxu0 %v981
    %2938 = vmatpush2.msra.mxu0 %v980
    %2939 = vmatprep.subr.mxu0 %v979
    %2940 = vmatpush2.msra.mxu0 %v978
    %2941 = vmatprep.subr.mxu0 %v977
    %2942 = vmatpush2.msra.mxu0 %v976
    %2943 = vmatprep.subr.mxu0 %v975
    %2944 = vmatpush2.msra.mxu0 %v974
    %2945 = vmatprep.subr.mxu0 %v973
    %2946 = vmatpush2.msra.mxu0 %v972
    %2947 = vmatprep.subr.mxu0 %v971
    %2948 = vmatpush2.msra.mxu0 %v970
    %2949 = vmatprep.subr.mxu0 %v969
    %2950 = vmatpush2.msra.mxu0 %v968
    %2951 = vmatprep.mubr.f32.mxu0 %v1767
    %2952 = vmatmul.mubr.f32.gmra.mxu0 %v1759
    %v2953 = vpop.f32.mrf.mxu0
    %v2954 = vadd.f32 %v2883, %v2953
    %v2955 = vpop.f32.mrf.mxu0
    %v2956 = vadd.f32 %v2885, %v2955
    %2957 = vdwg.mxu0
    %2958 = vmatprep.subr.mxu0 %v1031
    %2959 = vmatpush1.msra.mxu0 %v1030
    %2960 = vmatprep.subr.mxu0 %v1029
    %2961 = vmatpush1.msra.mxu0 %v1028
    %2962 = vmatprep.subr.mxu0 %v1027
    %2963 = vmatpush1.msra.mxu0 %v1026
    %2964 = vmatprep.subr.mxu0 %v1025
    %2965 = vmatpush1.msra.mxu0 %v1024
    %2966 = vmatprep.subr.mxu0 %v1023
    %2967 = vmatpush1.msra.mxu0 %v1022
    %2968 = vmatprep.subr.mxu0 %v1021
    %2969 = vmatpush1.msra.mxu0 %v1020
    %2970 = vmatprep.subr.mxu0 %v1019
    %2971 = vmatpush1.msra.mxu0 %v1018
    %2972 = vmatprep.subr.mxu0 %v1017
    %2973 = vmatpush1.msra.mxu0 %v1016
    %2974 = vmatprep.subr.mxu0 %v1015
    %2975 = vmatpush1.msra.mxu0 %v1014
    %2976 = vmatprep.subr.mxu0 %v1013
    %2977 = vmatpush1.msra.mxu0 %v1012
    %2978 = vmatprep.subr.mxu0 %v1011
    %2979 = vmatpush1.msra.mxu0 %v1010
    %2980 = vmatprep.subr.mxu0 %v1009
    %2981 = vmatpush1.msra.mxu0 %v1008
    %2982 = vmatprep.subr.mxu0 %v1007
    %2983 = vmatpush1.msra.mxu0 %v1006
    %2984 = vmatprep.subr.mxu0 %v1005
    %2985 = vmatpush1.msra.mxu0 %v1004
    %2986 = vmatprep.subr.mxu0 %v1003
    %2987 = vmatpush1.msra.mxu0 %v1002
    %2988 = vmatprep.subr.mxu0 %v1001
    %2989 = vmatpush1.msra.mxu0 %v1000
    %2990 = vmatprep.subr.mxu0 %v1063
    %2991 = vmatpush2.msra.mxu0 %v1062
    %2992 = vmatprep.subr.mxu0 %v1061
    %2993 = vmatpush2.msra.mxu0 %v1060
    %2994 = vmatprep.subr.mxu0 %v1059
    %2995 = vmatpush2.msra.mxu0 %v1058
    %2996 = vmatprep.subr.mxu0 %v1057
    %2997 = vmatpush2.msra.mxu0 %v1056
    %2998 = vmatprep.subr.mxu0 %v1055
    %2999 = vmatpush2.msra.mxu0 %v1054
    %3000 = vmatprep.subr.mxu0 %v1053
    %3001 = vmatpush2.msra.mxu0 %v1052
    %3002 = vmatprep.subr.mxu0 %v1051
    %3003 = vmatpush2.msra.mxu0 %v1050
    %3004 = vmatprep.subr.mxu0 %v1049
    %3005 = vmatpush2.msra.mxu0 %v1048
    %3006 = vmatprep.subr.mxu0 %v1047
    %3007 = vmatpush2.msra.mxu0 %v1046
    %3008 = vmatprep.subr.mxu0 %v1045
    %3009 = vmatpush2.msra.mxu0 %v1044
    %3010 = vmatprep.subr.mxu0 %v1043
    %3011 = vmatpush2.msra.mxu0 %v1042
    %3012 = vmatprep.subr.mxu0 %v1041
    %3013 = vmatpush2.msra.mxu0 %v1040
    %3014 = vmatprep.subr.mxu0 %v1039
    %3015 = vmatpush2.msra.mxu0 %v1038
    %3016 = vmatprep.subr.mxu0 %v1037
    %3017 = vmatpush2.msra.mxu0 %v1036
    %3018 = vmatprep.subr.mxu0 %v1035
    %3019 = vmatpush2.msra.mxu0 %v1034
    %3020 = vmatprep.subr.mxu0 %v1033
    %3021 = vmatpush2.msra.mxu0 %v1032
    %3022 = vmatprep.mubr.f32.mxu0 %v1768
    %3023 = vmatmul.mubr.f32.gmra.mxu0 %v1766
    %v3024 = vpop.f32.mrf.mxu0
    %v3025 = vadd.f32 %v2954, %v3024
    %v3026 = vpop.f32.mrf.mxu0
    %v3027 = vadd.f32 %v2956, %v3026
    %3028 = vdwg.mxu0
    %3029 = vmatprep.subr.mxu0 %v1095
    %3030 = vmatpush1.msra.mxu0 %v1094
    %3031 = vmatprep.subr.mxu0 %v1093
    %3032 = vmatpush1.msra.mxu0 %v1092
    %3033 = vmatprep.subr.mxu0 %v1091
    %3034 = vmatpush1.msra.mxu0 %v1090
    %3035 = vmatprep.subr.mxu0 %v1089
    %3036 = vmatpush1.msra.mxu0 %v1088
    %3037 = vmatprep.subr.mxu0 %v1087
    %3038 = vmatpush1.msra.mxu0 %v1086
    %3039 = vmatprep.subr.mxu0 %v1085
    %3040 = vmatpush1.msra.mxu0 %v1084
    %3041 = vmatprep.subr.mxu0 %v1083
    %3042 = vmatpush1.msra.mxu0 %v1082
    %3043 = vmatprep.subr.mxu0 %v1081
    %3044 = vmatpush1.msra.mxu0 %v1080
    %3045 = vmatprep.subr.mxu0 %v1079
    %3046 = vmatpush1.msra.mxu0 %v1078
    %3047 = vmatprep.subr.mxu0 %v1077
    %3048 = vmatpush1.msra.mxu0 %v1076
    %3049 = vmatprep.subr.mxu0 %v1075
    %3050 = vmatpush1.msra.mxu0 %v1074
    %3051 = vmatprep.subr.mxu0 %v1073
    %3052 = vmatpush1.msra.mxu0 %v1072
    %3053 = vmatprep.subr.mxu0 %v1071
    %3054 = vmatpush1.msra.mxu0 %v1070
    %3055 = vmatprep.subr.mxu0 %v1069
    %3056 = vmatpush1.msra.mxu0 %v1068
    %3057 = vmatprep.subr.mxu0 %v1067
    %3058 = vmatpush1.msra.mxu0 %v1066
    %3059 = vmatprep.subr.mxu0 %v1065
    %3060 = vmatpush1.msra.mxu0 %v1064
    %3061 = vmatprep.subr.mxu0 %v1127
    %3062 = vmatpush2.msra.mxu0 %v1126
    %3063 = vmatprep.subr.mxu0 %v1125
    %3064 = vmatpush2.msra.mxu0 %v1124
    %3065 = vmatprep.subr.mxu0 %v1123
    %3066 = vmatpush2.msra.mxu0 %v1122
    %3067 = vmatprep.subr.mxu0 %v1121
    %3068 = vmatpush2.msra.mxu0 %v1120
    %3069 = vmatprep.subr.mxu0 %v1119
    %3070 = vmatpush2.msra.mxu0 %v1118
    %3071 = vmatprep.subr.mxu0 %v1117
    %3072 = vmatpush2.msra.mxu0 %v1116
    %3073 = vmatprep.subr.mxu0 %v1115
    %3074 = vmatpush2.msra.mxu0 %v1114
    %3075 = vmatprep.subr.mxu0 %v1113
    %3076 = vmatpush2.msra.mxu0 %v1112
    %3077 = vmatprep.subr.mxu0 %v1111
    %3078 = vmatpush2.msra.mxu0 %v1110
    %3079 = vmatprep.subr.mxu0 %v1109
    %3080 = vmatpush2.msra.mxu0 %v1108
    %3081 = vmatprep.subr.mxu0 %v1107
    %3082 = vmatpush2.msra.mxu0 %v1106
    %3083 = vmatprep.subr.mxu0 %v1105
    %3084 = vmatpush2.msra.mxu0 %v1104
    %3085 = vmatprep.subr.mxu0 %v1103
    %3086 = vmatpush2.msra.mxu0 %v1102
    %3087 = vmatprep.subr.mxu0 %v1101
    %3088 = vmatpush2.msra.mxu0 %v1100
    %3089 = vmatprep.subr.mxu0 %v1099
    %3090 = vmatpush2.msra.mxu0 %v1098
    %3091 = vmatprep.subr.mxu0 %v1097
    %3092 = vmatpush2.msra.mxu0 %v1096
    %3093 = vmatprep.mubr.f32.mxu0 %v1784
    %3094 = vmatmul.mubr.f32.gmra.mxu0 %v1776
    %v3095 = vpop.f32.mrf.mxu0
    %v3096 = vadd.f32 %v3025, %v3095
    %v3097 = vpop.f32.mrf.mxu0
    %v3098 = vadd.f32 %v3027, %v3097
    %3099 = vdwg.mxu0
    %3100 = vmatprep.subr.mxu0 %v1159
    %3101 = vmatpush1.msra.mxu0 %v1158
    %3102 = vmatprep.subr.mxu0 %v1157
    %3103 = vmatpush1.msra.mxu0 %v1156
    %3104 = vmatprep.subr.mxu0 %v1155
    %3105 = vmatpush1.msra.mxu0 %v1154
    %3106 = vmatprep.subr.mxu0 %v1153
    %3107 = vmatpush1.msra.mxu0 %v1152
    %3108 = vmatprep.subr.mxu0 %v1151
    %3109 = vmatpush1.msra.mxu0 %v1150
    %3110 = vmatprep.subr.mxu0 %v1149
    %3111 = vmatpush1.msra.mxu0 %v1148
    %3112 = vmatprep.subr.mxu0 %v1147
    %3113 = vmatpush1.msra.mxu0 %v1146
    %3114 = vmatprep.subr.mxu0 %v1145
    %3115 = vmatpush1.msra.mxu0 %v1144
    %3116 = vmatprep.subr.mxu0 %v1143
    %3117 = vmatpush1.msra.mxu0 %v1142
    %3118 = vmatprep.subr.mxu0 %v1141
    %3119 = vmatpush1.msra.mxu0 %v1140
    %3120 = vmatprep.subr.mxu0 %v1139
    %3121 = vmatpush1.msra.mxu0 %v1138
    %3122 = vmatprep.subr.mxu0 %v1137
    %3123 = vmatpush1.msra.mxu0 %v1136
    %3124 = vmatprep.subr.mxu0 %v1135
    %3125 = vmatpush1.msra.mxu0 %v1134
    %3126 = vmatprep.subr.mxu0 %v1133
    %3127 = vmatpush1.msra.mxu0 %v1132
    %3128 = vmatprep.subr.mxu0 %v1131
    %3129 = vmatpush1.msra.mxu0 %v1130
    %3130 = vmatprep.subr.mxu0 %v1129
    %3131 = vmatpush1.msra.mxu0 %v1128
    %3132 = vmatprep.subr.mxu0 %v1191
    %3133 = vmatpush2.msra.mxu0 %v1190
    %3134 = vmatprep.subr.mxu0 %v1189
    %3135 = vmatpush2.msra.mxu0 %v1188
    %3136 = vmatprep.subr.mxu0 %v1187
    %3137 = vmatpush2.msra.mxu0 %v1186
    %3138 = vmatprep.subr.mxu0 %v1185
    %3139 = vmatpush2.msra.mxu0 %v1184
    %3140 = vmatprep.subr.mxu0 %v1183
    %3141 = vmatpush2.msra.mxu0 %v1182
    %3142 = vmatprep.subr.mxu0 %v1181
    %3143 = vmatpush2.msra.mxu0 %v1180
    %3144 = vmatprep.subr.mxu0 %v1179
    %3145 = vmatpush2.msra.mxu0 %v1178
    %3146 = vmatprep.subr.mxu0 %v1177
    %3147 = vmatpush2.msra.mxu0 %v1176
    %3148 = vmatprep.subr.mxu0 %v1175
    %3149 = vmatpush2.msra.mxu0 %v1174
    %3150 = vmatprep.subr.mxu0 %v1173
    %3151 = vmatpush2.msra.mxu0 %v1172
    %3152 = vmatprep.subr.mxu0 %v1171
    %3153 = vmatpush2.msra.mxu0 %v1170
    %3154 = vmatprep.subr.mxu0 %v1169
    %3155 = vmatpush2.msra.mxu0 %v1168
    %3156 = vmatprep.subr.mxu0 %v1167
    %3157 = vmatpush2.msra.mxu0 %v1166
    %3158 = vmatprep.subr.mxu0 %v1165
    %3159 = vmatpush2.msra.mxu0 %v1164
    %3160 = vmatprep.subr.mxu0 %v1163
    %3161 = vmatpush2.msra.mxu0 %v1162
    %3162 = vmatprep.subr.mxu0 %v1161
    %3163 = vmatpush2.msra.mxu0 %v1160
    %3164 = vmatprep.mubr.f32.mxu0 %v1785
    %3165 = vmatmul.mubr.f32.gmra.mxu0 %v1783
    %v3166 = vpop.f32.mrf.mxu0
    %v3167 = vadd.f32 %v3096, %v3166
    %v3168 = vpop.f32.mrf.mxu0
    %v3169 = vadd.f32 %v3098, %v3168
    %3170 = vdwg.mxu0
    %3171 = vmatprep.subr.mxu0 %v1223
    %3172 = vmatpush1.msra.mxu0 %v1222
    %3173 = vmatprep.subr.mxu0 %v1221
    %3174 = vmatpush1.msra.mxu0 %v1220
    %3175 = vmatprep.subr.mxu0 %v1219
    %3176 = vmatpush1.msra.mxu0 %v1218
    %3177 = vmatprep.subr.mxu0 %v1217
    %3178 = vmatpush1.msra.mxu0 %v1216
    %3179 = vmatprep.subr.mxu0 %v1215
    %3180 = vmatpush1.msra.mxu0 %v1214
    %3181 = vmatprep.subr.mxu0 %v1213
    %3182 = vmatpush1.msra.mxu0 %v1212
    %3183 = vmatprep.subr.mxu0 %v1211
    %3184 = vmatpush1.msra.mxu0 %v1210
    %3185 = vmatprep.subr.mxu0 %v1209
    %3186 = vmatpush1.msra.mxu0 %v1208
    %3187 = vmatprep.subr.mxu0 %v1207
    %3188 = vmatpush1.msra.mxu0 %v1206
    %3189 = vmatprep.subr.mxu0 %v1205
    %3190 = vmatpush1.msra.mxu0 %v1204
    %3191 = vmatprep.subr.mxu0 %v1203
    %3192 = vmatpush1.msra.mxu0 %v1202
    %3193 = vmatprep.subr.mxu0 %v1201
    %3194 = vmatpush1.msra.mxu0 %v1200
    %3195 = vmatprep.subr.mxu0 %v1199
    %3196 = vmatpush1.msra.mxu0 %v1198
    %3197 = vmatprep.subr.mxu0 %v1197
    %3198 = vmatpush1.msra.mxu0 %v1196
    %3199 = vmatprep.subr.mxu0 %v1195
    %3200 = vmatpush1.msra.mxu0 %v1194
    %3201 = vmatprep.subr.mxu0 %v1193
    %3202 = vmatpush1.msra.mxu0 %v1192
    %3203 = vmatprep.subr.mxu0 %v1255
    %3204 = vmatpush2.msra.mxu0 %v1254
    %3205 = vmatprep.subr.mxu0 %v1253
    %3206 = vmatpush2.msra.mxu0 %v1252
    %3207 = vmatprep.subr.mxu0 %v1251
    %3208 = vmatpush2.msra.mxu0 %v1250
    %3209 = vmatprep.subr.mxu0 %v1249
    %3210 = vmatpush2.msra.mxu0 %v1248
    %3211 = vmatprep.subr.mxu0 %v1247
    %3212 = vmatpush2.msra.mxu0 %v1246
    %3213 = vmatprep.subr.mxu0 %v1245
    %3214 = vmatpush2.msra.mxu0 %v1244
    %3215 = vmatprep.subr.mxu0 %v1243
    %3216 = vmatpush2.msra.mxu0 %v1242
    %3217 = vmatprep.subr.mxu0 %v1241
    %3218 = vmatpush2.msra.mxu0 %v1240
    %3219 = vmatprep.subr.mxu0 %v1239
    %3220 = vmatpush2.msra.mxu0 %v1238
    %3221 = vmatprep.subr.mxu0 %v1237
    %3222 = vmatpush2.msra.mxu0 %v1236
    %3223 = vmatprep.subr.mxu0 %v1235
    %3224 = vmatpush2.msra.mxu0 %v1234
    %3225 = vmatprep.subr.mxu0 %v1233
    %3226 = vmatpush2.msra.mxu0 %v1232
    %3227 = vmatprep.subr.mxu0 %v1231
    %3228 = vmatpush2.msra.mxu0 %v1230
    %3229 = vmatprep.subr.mxu0 %v1229
    %3230 = vmatpush2.msra.mxu0 %v1228
    %3231 = vmatprep.subr.mxu0 %v1227
    %3232 = vmatpush2.msra.mxu0 %v1226
    %3233 = vmatprep.subr.mxu0 %v1225
    %3234 = vmatpush2.msra.mxu0 %v1224
    %3235 = vmatprep.mubr.f32.mxu0 %v1801
    %3236 = vmatmul.mubr.f32.gmra.mxu0 %v1793
    %v3237 = vpop.f32.mrf.mxu0
    %v3238 = vadd.f32 %v3167, %v3237
    %v3239 = vpop.f32.mrf.mxu0
    %v3240 = vadd.f32 %v3169, %v3239
    %3241 = vdwg.mxu0
    %3242 = vmatprep.subr.mxu0 %v1287
    %3243 = vmatpush1.msra.mxu0 %v1286
    %3244 = vmatprep.subr.mxu0 %v1285
    %3245 = vmatpush1.msra.mxu0 %v1284
    %3246 = vmatprep.subr.mxu0 %v1283
    %3247 = vmatpush1.msra.mxu0 %v1282
    %3248 = vmatprep.subr.mxu0 %v1281
    %3249 = vmatpush1.msra.mxu0 %v1280
    %3250 = vmatprep.subr.mxu0 %v1279
    %3251 = vmatpush1.msra.mxu0 %v1278
    %3252 = vmatprep.subr.mxu0 %v1277
    %3253 = vmatpush1.msra.mxu0 %v1276
    %3254 = vmatprep.subr.mxu0 %v1275
    %3255 = vmatpush1.msra.mxu0 %v1274
    %3256 = vmatprep.subr.mxu0 %v1273
    %3257 = vmatpush1.msra.mxu0 %v1272
    %3258 = vmatprep.subr.mxu0 %v1271
    %3259 = vmatpush1.msra.mxu0 %v1270
    %3260 = vmatprep.subr.mxu0 %v1269
    %3261 = vmatpush1.msra.mxu0 %v1268
    %3262 = vmatprep.subr.mxu0 %v1267
    %3263 = vmatpush1.msra.mxu0 %v1266
    %3264 = vmatprep.subr.mxu0 %v1265
    %3265 = vmatpush1.msra.mxu0 %v1264
    %3266 = vmatprep.subr.mxu0 %v1263
    %3267 = vmatpush1.msra.mxu0 %v1262
    %3268 = vmatprep.subr.mxu0 %v1261
    %3269 = vmatpush1.msra.mxu0 %v1260
    %3270 = vmatprep.subr.mxu0 %v1259
    %3271 = vmatpush1.msra.mxu0 %v1258
    %3272 = vmatprep.subr.mxu0 %v1257
    %3273 = vmatpush1.msra.mxu0 %v1256
    %3274 = vmatprep.subr.mxu0 %v1319
    %3275 = vmatpush2.msra.mxu0 %v1318
    %3276 = vmatprep.subr.mxu0 %v1317
    %3277 = vmatpush2.msra.mxu0 %v1316
    %3278 = vmatprep.subr.mxu0 %v1315
    %3279 = vmatpush2.msra.mxu0 %v1314
    %3280 = vmatprep.subr.mxu0 %v1313
    %3281 = vmatpush2.msra.mxu0 %v1312
    %3282 = vmatprep.subr.mxu0 %v1311
    %3283 = vmatpush2.msra.mxu0 %v1310
    %3284 = vmatprep.subr.mxu0 %v1309
    %3285 = vmatpush2.msra.mxu0 %v1308
    %3286 = vmatprep.subr.mxu0 %v1307
    %3287 = vmatpush2.msra.mxu0 %v1306
    %3288 = vmatprep.subr.mxu0 %v1305
    %3289 = vmatpush2.msra.mxu0 %v1304
    %3290 = vmatprep.subr.mxu0 %v1303
    %3291 = vmatpush2.msra.mxu0 %v1302
    %3292 = vmatprep.subr.mxu0 %v1301
    %3293 = vmatpush2.msra.mxu0 %v1300
    %3294 = vmatprep.subr.mxu0 %v1299
    %3295 = vmatpush2.msra.mxu0 %v1298
    %3296 = vmatprep.subr.mxu0 %v1297
    %3297 = vmatpush2.msra.mxu0 %v1296
    %3298 = vmatprep.subr.mxu0 %v1295
    %3299 = vmatpush2.msra.mxu0 %v1294
    %3300 = vmatprep.subr.mxu0 %v1293
    %3301 = vmatpush2.msra.mxu0 %v1292
    %3302 = vmatprep.subr.mxu0 %v1291
    %3303 = vmatpush2.msra.mxu0 %v1290
    %3304 = vmatprep.subr.mxu0 %v1289
    %3305 = vmatpush2.msra.mxu0 %v1288
    %3306 = vmatprep.mubr.f32.mxu0 %v1802
    %3307 = vmatmul.mubr.f32.gmra.mxu0 %v1800
    %v3308 = vpop.f32.mrf.mxu0
    %v3309 = vadd.f32 %v3238, %v3308
    %v3310 = vpop.f32.mrf.mxu0
    %v3311 = vadd.f32 %v3240, %v3310
    %3312 = vdwg.mxu0
    %3313 = vmatprep.subr.mxu0 %v1351
    %3314 = vmatpush1.msra.mxu0 %v1350
    %3315 = vmatprep.subr.mxu0 %v1349
    %3316 = vmatpush1.msra.mxu0 %v1348
    %3317 = vmatprep.subr.mxu0 %v1347
    %3318 = vmatpush1.msra.mxu0 %v1346
    %3319 = vmatprep.subr.mxu0 %v1345
    %3320 = vmatpush1.msra.mxu0 %v1344
    %3321 = vmatprep.subr.mxu0 %v1343
    %3322 = vmatpush1.msra.mxu0 %v1342
    %3323 = vmatprep.subr.mxu0 %v1341
    %3324 = vmatpush1.msra.mxu0 %v1340
    %3325 = vmatprep.subr.mxu0 %v1339
    %3326 = vmatpush1.msra.mxu0 %v1338
    %3327 = vmatprep.subr.mxu0 %v1337
    %3328 = vmatpush1.msra.mxu0 %v1336
    %3329 = vmatprep.subr.mxu0 %v1335
    %3330 = vmatpush1.msra.mxu0 %v1334
    %3331 = vmatprep.subr.mxu0 %v1333
    %3332 = vmatpush1.msra.mxu0 %v1332
    %3333 = vmatprep.subr.mxu0 %v1331
    %3334 = vmatpush1.msra.mxu0 %v1330
    %3335 = vmatprep.subr.mxu0 %v1329
    %3336 = vmatpush1.msra.mxu0 %v1328
    %3337 = vmatprep.subr.mxu0 %v1327
    %3338 = vmatpush1.msra.mxu0 %v1326
    %3339 = vmatprep.subr.mxu0 %v1325
    %3340 = vmatpush1.msra.mxu0 %v1324
    %3341 = vmatprep.subr.mxu0 %v1323
    %3342 = vmatpush1.msra.mxu0 %v1322
    %3343 = vmatprep.subr.mxu0 %v1321
    %3344 = vmatpush1.msra.mxu0 %v1320
    %3345 = vmatprep.subr.mxu0 %v1383
    %3346 = vmatpush2.msra.mxu0 %v1382
    %3347 = vmatprep.subr.mxu0 %v1381
    %3348 = vmatpush2.msra.mxu0 %v1380
    %3349 = vmatprep.subr.mxu0 %v1379
    %3350 = vmatpush2.msra.mxu0 %v1378
    %3351 = vmatprep.subr.mxu0 %v1377
    %3352 = vmatpush2.msra.mxu0 %v1376
    %3353 = vmatprep.subr.mxu0 %v1375
    %3354 = vmatpush2.msra.mxu0 %v1374
    %3355 = vmatprep.subr.mxu0 %v1373
    %3356 = vmatpush2.msra.mxu0 %v1372
    %3357 = vmatprep.subr.mxu0 %v1371
    %3358 = vmatpush2.msra.mxu0 %v1370
    %3359 = vmatprep.subr.mxu0 %v1369
    %3360 = vmatpush2.msra.mxu0 %v1368
    %3361 = vmatprep.subr.mxu0 %v1367
    %3362 = vmatpush2.msra.mxu0 %v1366
    %3363 = vmatprep.subr.mxu0 %v1365
    %3364 = vmatpush2.msra.mxu0 %v1364
    %3365 = vmatprep.subr.mxu0 %v1363
    %3366 = vmatpush2.msra.mxu0 %v1362
    %3367 = vmatprep.subr.mxu0 %v1361
    %3368 = vmatpush2.msra.mxu0 %v1360
    %3369 = vmatprep.subr.mxu0 %v1359
    %3370 = vmatpush2.msra.mxu0 %v1358
    %3371 = vmatprep.subr.mxu0 %v1357
    %3372 = vmatpush2.msra.mxu0 %v1356
    %3373 = vmatprep.subr.mxu0 %v1355
    %3374 = vmatpush2.msra.mxu0 %v1354
    %3375 = vmatprep.subr.mxu0 %v1353
    %3376 = vmatpush2.msra.mxu0 %v1352
    %3377 = vmatprep.mubr.f32.mxu0 %v1818
    %3378 = vmatmul.mubr.f32.gmra.mxu0 %v1810
    %v3379 = vpop.f32.mrf.mxu0
    %v3380 = vadd.f32 %v3309, %v3379
    %v3381 = vpop.f32.mrf.mxu0
    %v3382 = vadd.f32 %v3311, %v3381
    %3383 = vdwg.mxu0
    %3384 = vmatprep.subr.mxu0 %v1415
    %3385 = vmatpush1.msra.mxu0 %v1414
    %3386 = vmatprep.subr.mxu0 %v1413
    %3387 = vmatpush1.msra.mxu0 %v1412
    %3388 = vmatprep.subr.mxu0 %v1411
    %3389 = vmatpush1.msra.mxu0 %v1410
    %3390 = vmatprep.subr.mxu0 %v1409
    %3391 = vmatpush1.msra.mxu0 %v1408
    %3392 = vmatprep.subr.mxu0 %v1407
    %3393 = vmatpush1.msra.mxu0 %v1406
    %3394 = vmatprep.subr.mxu0 %v1405
    %3395 = vmatpush1.msra.mxu0 %v1404
    %3396 = vmatprep.subr.mxu0 %v1403
    %3397 = vmatpush1.msra.mxu0 %v1402
    %3398 = vmatprep.subr.mxu0 %v1401
    %3399 = vmatpush1.msra.mxu0 %v1400
    %3400 = vmatprep.subr.mxu0 %v1399
    %3401 = vmatpush1.msra.mxu0 %v1398
    %3402 = vmatprep.subr.mxu0 %v1397
    %3403 = vmatpush1.msra.mxu0 %v1396
    %3404 = vmatprep.subr.mxu0 %v1395
    %3405 = vmatpush1.msra.mxu0 %v1394
    %3406 = vmatprep.subr.mxu0 %v1393
    %3407 = vmatpush1.msra.mxu0 %v1392
    %3408 = vmatprep.subr.mxu0 %v1391
    %3409 = vmatpush1.msra.mxu0 %v1390
    %3410 = vmatprep.subr.mxu0 %v1389
    %3411 = vmatpush1.msra.mxu0 %v1388
    %3412 = vmatprep.subr.mxu0 %v1387
    %3413 = vmatpush1.msra.mxu0 %v1386
    %3414 = vmatprep.subr.mxu0 %v1385
    %3415 = vmatpush1.msra.mxu0 %v1384
    %3416 = vmatprep.subr.mxu0 %v1447
    %3417 = vmatpush2.msra.mxu0 %v1446
    %3418 = vmatprep.subr.mxu0 %v1445
    %3419 = vmatpush2.msra.mxu0 %v1444
    %3420 = vmatprep.subr.mxu0 %v1443
    %3421 = vmatpush2.msra.mxu0 %v1442
    %3422 = vmatprep.subr.mxu0 %v1441
    %3423 = vmatpush2.msra.mxu0 %v1440
    %3424 = vmatprep.subr.mxu0 %v1439
    %3425 = vmatpush2.msra.mxu0 %v1438
    %3426 = vmatprep.subr.mxu0 %v1437
    %3427 = vmatpush2.msra.mxu0 %v1436
    %3428 = vmatprep.subr.mxu0 %v1435
    %3429 = vmatpush2.msra.mxu0 %v1434
    %3430 = vmatprep.subr.mxu0 %v1433
    %3431 = vmatpush2.msra.mxu0 %v1432
    %3432 = vmatprep.subr.mxu0 %v1431
    %3433 = vmatpush2.msra.mxu0 %v1430
    %3434 = vmatprep.subr.mxu0 %v1429
    %3435 = vmatpush2.msra.mxu0 %v1428
    %3436 = vmatprep.subr.mxu0 %v1427
    %3437 = vmatpush2.msra.mxu0 %v1426
    %3438 = vmatprep.subr.mxu0 %v1425
    %3439 = vmatpush2.msra.mxu0 %v1424
    %3440 = vmatprep.subr.mxu0 %v1423
    %3441 = vmatpush2.msra.mxu0 %v1422
    %3442 = vmatprep.subr.mxu0 %v1421
    %3443 = vmatpush2.msra.mxu0 %v1420
    %3444 = vmatprep.subr.mxu0 %v1419
    %3445 = vmatpush2.msra.mxu0 %v1418
    %3446 = vmatprep.subr.mxu0 %v1417
    %3447 = vmatpush2.msra.mxu0 %v1416
    %3448 = vmatprep.mubr.f32.mxu0 %v1819
    %3449 = vmatmul.mubr.f32.gmra.mxu0 %v1817
    %v3450 = vpop.f32.mrf.mxu0
    %v3451 = vadd.f32 %v3380, %v3450
    %v3452 = vpop.f32.mrf.mxu0
    %v3453 = vadd.f32 %v3382, %v3452
    %3454 = vdwg.mxu0
    %3455 = vmatprep.subr.mxu0 %v1479
    %3456 = vmatpush1.msra.mxu0 %v1478
    %3457 = vmatprep.subr.mxu0 %v1477
    %3458 = vmatpush1.msra.mxu0 %v1476
    %3459 = vmatprep.subr.mxu0 %v1475
    %3460 = vmatpush1.msra.mxu0 %v1474
    %3461 = vmatprep.subr.mxu0 %v1473
    %3462 = vmatpush1.msra.mxu0 %v1472
    %3463 = vmatprep.subr.mxu0 %v1471
    %3464 = vmatpush1.msra.mxu0 %v1470
    %3465 = vmatprep.subr.mxu0 %v1469
    %3466 = vmatpush1.msra.mxu0 %v1468
    %3467 = vmatprep.subr.mxu0 %v1467
    %3468 = vmatpush1.msra.mxu0 %v1466
    %3469 = vmatprep.subr.mxu0 %v1465
    %3470 = vmatpush1.msra.mxu0 %v1464
    %3471 = vmatprep.subr.mxu0 %v1463
    %3472 = vmatpush1.msra.mxu0 %v1462
    %3473 = vmatprep.subr.mxu0 %v1461
    %3474 = vmatpush1.msra.mxu0 %v1460
    %3475 = vmatprep.subr.mxu0 %v1459
    %3476 = vmatpush1.msra.mxu0 %v1458
    %3477 = vmatprep.subr.mxu0 %v1457
    %3478 = vmatpush1.msra.mxu0 %v1456
    %3479 = vmatprep.subr.mxu0 %v1455
    %3480 = vmatpush1.msra.mxu0 %v1454
    %3481 = vmatprep.subr.mxu0 %v1453
    %3482 = vmatpush1.msra.mxu0 %v1452
    %3483 = vmatprep.subr.mxu0 %v1451
    %3484 = vmatpush1.msra.mxu0 %v1450
    %3485 = vmatprep.subr.mxu0 %v1449
    %3486 = vmatpush1.msra.mxu0 %v1448
    %3487 = vmatprep.subr.mxu0 %v1511
    %3488 = vmatpush2.msra.mxu0 %v1510
    %3489 = vmatprep.subr.mxu0 %v1509
    %3490 = vmatpush2.msra.mxu0 %v1508
    %3491 = vmatprep.subr.mxu0 %v1507
    %3492 = vmatpush2.msra.mxu0 %v1506
    %3493 = vmatprep.subr.mxu0 %v1505
    %3494 = vmatpush2.msra.mxu0 %v1504
    %3495 = vmatprep.subr.mxu0 %v1503
    %3496 = vmatpush2.msra.mxu0 %v1502
    %3497 = vmatprep.subr.mxu0 %v1501
    %3498 = vmatpush2.msra.mxu0 %v1500
    %3499 = vmatprep.subr.mxu0 %v1499
    %3500 = vmatpush2.msra.mxu0 %v1498
    %3501 = vmatprep.subr.mxu0 %v1497
    %3502 = vmatpush2.msra.mxu0 %v1496
    %3503 = vmatprep.subr.mxu0 %v1495
    %3504 = vmatpush2.msra.mxu0 %v1494
    %3505 = vmatprep.subr.mxu0 %v1493
    %3506 = vmatpush2.msra.mxu0 %v1492
    %3507 = vmatprep.subr.mxu0 %v1491
    %3508 = vmatpush2.msra.mxu0 %v1490
    %3509 = vmatprep.subr.mxu0 %v1489
    %3510 = vmatpush2.msra.mxu0 %v1488
    %3511 = vmatprep.subr.mxu0 %v1487
    %3512 = vmatpush2.msra.mxu0 %v1486
    %3513 = vmatprep.subr.mxu0 %v1485
    %3514 = vmatpush2.msra.mxu0 %v1484
    %3515 = vmatprep.subr.mxu0 %v1483
    %3516 = vmatpush2.msra.mxu0 %v1482
    %3517 = vmatprep.subr.mxu0 %v1481
    %3518 = vmatpush2.msra.mxu0 %v1480
    %3519 = vmatprep.mubr.f32.mxu0 %v1835
    %3520 = vmatmul.mubr.f32.gmra.mxu0 %v1827
    %v3521 = vpop.f32.mrf.mxu0
    %v3522 = vadd.f32 %v3451, %v3521
    %v3523 = vpop.f32.mrf.mxu0
    %v3524 = vadd.f32 %v3453, %v3523
    %3525 = vdwg.mxu0
    %3526 = vmatprep.subr.mxu0 %v1543
    %3527 = vmatpush1.msra.mxu0 %v1542
    %3528 = vmatprep.subr.mxu0 %v1541
    %3529 = vmatpush1.msra.mxu0 %v1540
    %3530 = vmatprep.subr.mxu0 %v1539
    %3531 = vmatpush1.msra.mxu0 %v1538
    %3532 = vmatprep.subr.mxu0 %v1537
    %3533 = vmatpush1.msra.mxu0 %v1536
    %3534 = vmatprep.subr.mxu0 %v1535
    %3535 = vmatpush1.msra.mxu0 %v1534
    %3536 = vmatprep.subr.mxu0 %v1533
    %3537 = vmatpush1.msra.mxu0 %v1532
    %3538 = vmatprep.subr.mxu0 %v1531
    %3539 = vmatpush1.msra.mxu0 %v1530
    %3540 = vmatprep.subr.mxu0 %v1529
    %3541 = vmatpush1.msra.mxu0 %v1528
    %3542 = vmatprep.subr.mxu0 %v1527
    %3543 = vmatpush1.msra.mxu0 %v1526
    %3544 = vmatprep.subr.mxu0 %v1525
    %3545 = vmatpush1.msra.mxu0 %v1524
    %3546 = vmatprep.subr.mxu0 %v1523
    %3547 = vmatpush1.msra.mxu0 %v1522
    %3548 = vmatprep.subr.mxu0 %v1521
    %3549 = vmatpush1.msra.mxu0 %v1520
    %3550 = vmatprep.subr.mxu0 %v1519
    %3551 = vmatpush1.msra.mxu0 %v1518
    %3552 = vmatprep.subr.mxu0 %v1517
    %3553 = vmatpush1.msra.mxu0 %v1516
    %3554 = vmatprep.subr.mxu0 %v1515
    %3555 = vmatpush1.msra.mxu0 %v1514
    %3556 = vmatprep.subr.mxu0 %v1513
    %3557 = vmatpush1.msra.mxu0 %v1512
    %3558 = vmatprep.subr.mxu0 %v1575
    %3559 = vmatpush2.msra.mxu0 %v1574
    %3560 = vmatprep.subr.mxu0 %v1573
    %3561 = vmatpush2.msra.mxu0 %v1572
    %3562 = vmatprep.subr.mxu0 %v1571
    %3563 = vmatpush2.msra.mxu0 %v1570
    %3564 = vmatprep.subr.mxu0 %v1569
    %3565 = vmatpush2.msra.mxu0 %v1568
    %3566 = vmatprep.subr.mxu0 %v1567
    %3567 = vmatpush2.msra.mxu0 %v1566
    %3568 = vmatprep.subr.mxu0 %v1565
    %3569 = vmatpush2.msra.mxu0 %v1564
    %3570 = vmatprep.subr.mxu0 %v1563
    %3571 = vmatpush2.msra.mxu0 %v1562
    %3572 = vmatprep.subr.mxu0 %v1561
    %3573 = vmatpush2.msra.mxu0 %v1560
    %3574 = vmatprep.subr.mxu0 %v1559
    %3575 = vmatpush2.msra.mxu0 %v1558
    %3576 = vmatprep.subr.mxu0 %v1557
    %3577 = vmatpush2.msra.mxu0 %v1556
    %3578 = vmatprep.subr.mxu0 %v1555
    %3579 = vmatpush2.msra.mxu0 %v1554
    %3580 = vmatprep.subr.mxu0 %v1553
    %3581 = vmatpush2.msra.mxu0 %v1552
    %3582 = vmatprep.subr.mxu0 %v1551
    %3583 = vmatpush2.msra.mxu0 %v1550
    %3584 = vmatprep.subr.mxu0 %v1549
    %3585 = vmatpush2.msra.mxu0 %v1548
    %3586 = vmatprep.subr.mxu0 %v1547
    %3587 = vmatpush2.msra.mxu0 %v1546
    %3588 = vmatprep.subr.mxu0 %v1545
    %3589 = vmatpush2.msra.mxu0 %v1544
    %3590 = vmatprep.mubr.f32.mxu0 %v1836
    %3591 = vmatmul.mubr.f32.gmra.mxu0 %v1834
    %v3592 = vpop.f32.mrf.mxu0
    %v3593 = vadd.f32 %v3522, %v3592
    %v3594 = vpop.f32.mrf.mxu0
    %v3595 = vadd.f32 %v3524, %v3594
    %3596 = vdwg.mxu0
    %3597 = vmatprep.subr.mxu0 %v1607
    %3598 = vmatpush1.msra.mxu0 %v1606
    %3599 = vmatprep.subr.mxu0 %v1605
    %3600 = vmatpush1.msra.mxu0 %v1604
    %3601 = vmatprep.subr.mxu0 %v1603
    %3602 = vmatpush1.msra.mxu0 %v1602
    %3603 = vmatprep.subr.mxu0 %v1601
    %3604 = vmatpush1.msra.mxu0 %v1600
    %3605 = vmatprep.subr.mxu0 %v1599
    %3606 = vmatpush1.msra.mxu0 %v1598
    %3607 = vmatprep.subr.mxu0 %v1597
    %3608 = vmatpush1.msra.mxu0 %v1596
    %3609 = vmatprep.subr.mxu0 %v1595
    %3610 = vmatpush1.msra.mxu0 %v1594
    %3611 = vmatprep.subr.mxu0 %v1593
    %3612 = vmatpush1.msra.mxu0 %v1592
    %3613 = vmatprep.subr.mxu0 %v1591
    %3614 = vmatpush1.msra.mxu0 %v1590
    %3615 = vmatprep.subr.mxu0 %v1589
    %3616 = vmatpush1.msra.mxu0 %v1588
    %3617 = vmatprep.subr.mxu0 %v1587
    %3618 = vmatpush1.msra.mxu0 %v1586
    %3619 = vmatprep.subr.mxu0 %v1585
    %3620 = vmatpush1.msra.mxu0 %v1584
    %3621 = vmatprep.subr.mxu0 %v1583
    %3622 = vmatpush1.msra.mxu0 %v1582
    %3623 = vmatprep.subr.mxu0 %v1581
    %3624 = vmatpush1.msra.mxu0 %v1580
    %3625 = vmatprep.subr.mxu0 %v1579
    %3626 = vmatpush1.msra.mxu0 %v1578
    %3627 = vmatprep.subr.mxu0 %v1577
    %3628 = vmatpush1.msra.mxu0 %v1576
    %3629 = vmatprep.subr.mxu0 0.0
    %3630 = vmatpush2.msra.mxu0 0.0
    %3631 = vmatprep.subr.mxu0 0.0
    %3632 = vmatpush2.msra.mxu0 0.0
    %3633 = vmatprep.subr.mxu0 0.0
    %3634 = vmatpush2.msra.mxu0 0.0
    %3635 = vmatprep.subr.mxu0 0.0
    %3636 = vmatpush2.msra.mxu0 0.0
    %3637 = vmatprep.subr.mxu0 0.0
    %3638 = vmatpush2.msra.mxu0 0.0
    %3639 = vmatprep.subr.mxu0 0.0
    %3640 = vmatpush2.msra.mxu0 0.0
    %3641 = vmatprep.subr.mxu0 0.0
    %3642 = vmatpush2.msra.mxu0 0.0
    %3643 = vmatprep.subr.mxu0 0.0
    %3644 = vmatpush2.msra.mxu0 0.0
    %3645 = vmatprep.subr.mxu0 0.0
    %3646 = vmatpush2.msra.mxu0 0.0
    %3647 = vmatprep.subr.mxu0 0.0
    %3648 = vmatpush2.msra.mxu0 0.0
    %3649 = vmatprep.subr.mxu0 0.0
    %3650 = vmatpush2.msra.mxu0 0.0
    %3651 = vmatprep.subr.mxu0 0.0
    %3652 = vmatpush2.msra.mxu0 0.0
    %3653 = vmatprep.subr.mxu0 0.0
    %3654 = vmatpush2.msra.mxu0 0.0
    %3655 = vmatprep.subr.mxu0 0.0
    %3656 = vmatpush2.msra.mxu0 0.0
    %3657 = vmatprep.subr.mxu0 0.0
    %3658 = vmatpush2.msra.mxu0 0.0
    %3659 = vmatprep.subr.mxu0 0.0
    %3660 = vmatpush2.msra.mxu0 0.0
    %3661 = vmatprep.mubr.f32.mxu0 0.0
    %3662 = vmatmul.mubr.f32.gmra.mxu0 %v1843
    %v3663 = vpop.f32.mrf.mxu0
    %v3664 = vadd.f32 %v3593, %v3663
    %v3665 = vpop.f32.mrf.mxu0
    %v3666 = vadd.f32 %v3595, %v3665
    %3667 = vdwg.mxu0
    %v3668 = vmax.f32 %v3664, 0.0
    %v3669 = vmax.f32 %v3666, 0.0
    %v3670 = vld [vmem:[%s3] sm:$0xff]
    %v3671 = vld [vmem:[%s3 + $0x8] sm:$0xff]
    %v3672 = vld [vmem:[%s3 + $0x10] sm:$0xff]
    %v3673 = vld [vmem:[%s3 + $0x18] sm:$0xff]
    %v3674 = vld [vmem:[%s3 + $0x20] sm:$0xff]
    %v3675 = vld [vmem:[%s3 + $0x28] sm:$0xff]
    %v3676 = vld [vmem:[%s3 + $0x30] sm:$0xff]
    %v3677 = vld [vmem:[%s3 + $0x38] sm:$0xff]
    %v3678 = vld [vmem:[%s3 + $0x40] sm:$0xff]
    %v3679 = vld [vmem:[%s3 + $0x48] sm:$0xff]
    %v3680 = vld [vmem:[%s3 + $0x50] sm:$0xff]
    %v3681 = vld [vmem:[%s3 + $0x58] sm:$0xff]
    %v3682 = vld [vmem:[%s3 + $0x60] sm:$0xff]
    %v3683 = vld [vmem:[%s3 + $0x68] sm:$0xff]
    %v3684 = vld [vmem:[%s3 + $0x70] sm:$0xff]
    %v3685 = vld [vmem:[%s3 + $0x78] sm:$0xff]
    %v3686 = vld [vmem:[%s3 + $0x80] sm:$0xff]
    %v3687 = vld [vmem:[%s3 + $0x88] sm:$0xff]
    %v3688 = vld [vmem:[%s3 + $0x90] sm:$0xff]
    %v3689 = vld [vmem:[%s3 + $0x98] sm:$0xff]
    %v3690 = vld [vmem:[%s3 + $0xa0] sm:$0xff]
    %v3691 = vld [vmem:[%s3 + $0xa8] sm:$0xff]
    %v3692 = vld [vmem:[%s3 + $0xb0] sm:$0xff]
    %v3693 = vld [vmem:[%s3 + $0xb8] sm:$0xff]
    %v3694 = vld [vmem:[%s3 + $0xc0] sm:$0xff]
    %v3695 = vld [vmem:[%s3 + $0xc8] sm:$0xff]
    %v3696 = vld [vmem:[%s3 + $0xd0] sm:$0xff]
    %v3697 = vld [vmem:[%s3 + $0xd8] sm:$0xff]
    %v3698 = vld [vmem:[%s3 + $0xe0] sm:$0xff]
    %v3699 = vld [vmem:[%s3 + $0xe8] sm:$0xff]
    %v3700 = vld [vmem:[%s3 + $0xf0] sm:$0xff]
    %v3701 = vld [vmem:[%s3 + $0xf8] sm:$0xff]
    %v3702 = vld [vmem:[%s3 + $0x100] sm:$0xff]
    %v3703 = vld [vmem:[%s3 + $0x108] sm:$0xff]
    %v3704 = vld [vmem:[%s3 + $0x110] sm:$0xff]
    %v3705 = vld [vmem:[%s3 + $0x118] sm:$0xff]
    %v3706 = vld [vmem:[%s3 + $0x120] sm:$0xff]
    %v3707 = vld [vmem:[%s3 + $0x128] sm:$0xff]
    %v3708 = vld [vmem:[%s3 + $0x130] sm:$0xff]
    %v3709 = vld [vmem:[%s3 + $0x138] sm:$0xff]
    %v3710 = vld [vmem:[%s3 + $0x140] sm:$0xff]
    %v3711 = vld [vmem:[%s3 + $0x148] sm:$0xff]
    %v3712 = vld [vmem:[%s3 + $0x150] sm:$0xff]
    %v3713 = vld [vmem:[%s3 + $0x158] sm:$0xff]
    %v3714 = vld [vmem:[%s3 + $0x160] sm:$0xff]
    %v3715 = vld [vmem:[%s3 + $0x168] sm:$0xff]
    %v3716 = vld [vmem:[%s3 + $0x170] sm:$0xff]
    %v3717 = vld [vmem:[%s3 + $0x178] sm:$0xff]
    %v3718 = vld [vmem:[%s3 + $0x180] sm:$0xff]
    %v3719 = vld [vmem:[%s3 + $0x188] sm:$0xff]
    %v3720 = vld [vmem:[%s3 + $0x190] sm:$0xff]
    %v3721 = vld [vmem:[%s3 + $0x198] sm:$0xff]
    %v3722 = vld [vmem:[%s3 + $0x1a0] sm:$0xff]
    %v3723 = vld [vmem:[%s3 + $0x1a8] sm:$0xff]
    %v3724 = vld [vmem:[%s3 + $0x1b0] sm:$0xff]
    %v3725 = vld [vmem:[%s3 + $0x1b8] sm:$0xff]
    %v3726 = vld [vmem:[%s3 + $0x1c0] sm:$0xff]
    %v3727 = vld [vmem:[%s3 + $0x1c8] sm:$0xff]
    %v3728 = vld [vmem:[%s3 + $0x1d0] sm:$0xff]
    %v3729 = vld [vmem:[%s3 + $0x1d8] sm:$0xff]
    %v3730 = vld [vmem:[%s3 + $0x1e0] sm:$0xff]
    %v3731 = vld [vmem:[%s3 + $0x1e8] sm:$0xff]
    %v3732 = vld [vmem:[%s3 + $0x1f0] sm:$0xff]
    %v3733 = vld [vmem:[%s3 + $0x1f8] sm:$0xff]
    %v3734 = vld [vmem:[%s4] sm:$0x3]
    %v3736 = vlaneseq
    %v3737 = vshrl.u32 %v3736, 7
    %v3738 = vsub.s32 0, %v3737
    %v3739 = vrot.slane %v3734, %v3738
    %v3740 = vlaneseq
    %v3741 = vshrl.u32 %v3740, 7
    %v3742 = vsub.s32 1, %v3741
    %v3743 = vrot.slane %v3734, %v3742
    %3746 = vmatprep.subr.mxu0 %v3701
    %3747 = vmatpush1.msra.mxu0 %v3700
    %3748 = vmatprep.subr.mxu0 %v3699
    %3749 = vmatpush1.msra.mxu0 %v3698
    %3750 = vmatprep.subr.mxu0 %v3697
    %3751 = vmatpush1.msra.mxu0 %v3696
    %3752 = vmatprep.subr.mxu0 %v3695
    %3753 = vmatpush1.msra.mxu0 %v3694
    %3754 = vmatprep.subr.mxu0 %v3693
    %3755 = vmatpush1.msra.mxu0 %v3692
    %3756 = vmatprep.subr.mxu0 %v3691
    %3757 = vmatpush1.msra.mxu0 %v3690
    %3758 = vmatprep.subr.mxu0 %v3689
    %3759 = vmatpush1.msra.mxu0 %v3688
    %3760 = vmatprep.subr.mxu0 %v3687
    %3761 = vmatpush1.msra.mxu0 %v3686
    %3762 = vmatprep.subr.mxu0 %v3685
    %3763 = vmatpush1.msra.mxu0 %v3684
    %3764 = vmatprep.subr.mxu0 %v3683
    %3765 = vmatpush1.msra.mxu0 %v3682
    %3766 = vmatprep.subr.mxu0 %v3681
    %3767 = vmatpush1.msra.mxu0 %v3680
    %3768 = vmatprep.subr.mxu0 %v3679
    %3769 = vmatpush1.msra.mxu0 %v3678
    %3770 = vmatprep.subr.mxu0 %v3677
    %3771 = vmatpush1.msra.mxu0 %v3676
    %3772 = vmatprep.subr.mxu0 %v3675
    %3773 = vmatpush1.msra.mxu0 %v3674
    %3774 = vmatprep.subr.mxu0 %v3673
    %3775 = vmatpush1.msra.mxu0 %v3672
    %3776 = vmatprep.subr.mxu0 %v3671
    %3777 = vmatpush1.msra.mxu0 %v3670
    %3778 = vmatprep.subr.mxu0 %v3733
    %3779 = vmatpush2.msra.mxu0 %v3732
    %3780 = vmatprep.subr.mxu0 %v3731
    %3781 = vmatpush2.msra.mxu0 %v3730
    %3782 = vmatprep.subr.mxu0 %v3729
    %3783 = vmatpush2.msra.mxu0 %v3728
    %3784 = vmatprep.subr.mxu0 %v3727
    %3785 = vmatpush2.msra.mxu0 %v3726
    %3786 = vmatprep.subr.mxu0 %v3725
    %3787 = vmatpush2.msra.mxu0 %v3724
    %3788 = vmatprep.subr.mxu0 %v3723
    %3789 = vmatpush2.msra.mxu0 %v3722
    %3790 = vmatprep.subr.mxu0 %v3721
    %3791 = vmatpush2.msra.mxu0 %v3720
    %3792 = vmatprep.subr.mxu0 %v3719
    %3793 = vmatpush2.msra.mxu0 %v3718
    %3794 = vmatprep.subr.mxu0 %v3717
    %3795 = vmatpush2.msra.mxu0 %v3716
    %3796 = vmatprep.subr.mxu0 %v3715
    %3797 = vmatpush2.msra.mxu0 %v3714
    %3798 = vmatprep.subr.mxu0 %v3713
    %3799 = vmatpush2.msra.mxu0 %v3712
    %3800 = vmatprep.subr.mxu0 %v3711
    %3801 = vmatpush2.msra.mxu0 %v3710
    %3802 = vmatprep.subr.mxu0 %v3709
    %3803 = vmatpush2.msra.mxu0 %v3708
    %3804 = vmatprep.subr.mxu0 %v3707
    %3805 = vmatpush2.msra.mxu0 %v3706
    %3806 = vmatprep.subr.mxu0 %v3705
    %3807 = vmatpush2.msra.mxu0 %v3704
    %3808 = vmatprep.subr.mxu0 %v3703
    %3809 = vmatpush2.msra.mxu0 %v3702
    %3810 = vmatprep.mubr.f32.mxu0 %v3669
    %3811 = vmatmul.mubr.f32.gmra.mxu0 %v3668
    %v3812 = vpop.f32.mrf.mxu0
    %v3813 = vadd.f32 %v3739, %v3812
    %v3814 = vpop.f32.mrf.mxu0
    %v3815 = vadd.f32 %v3743, %v3814
    %3816 = vdwg.mxu0
    %v3817 = vmax.f32 %v3813, 0.0
    %v3818 = vmax.f32 %v3815, 0.0
    %v3819 = vld [vmem:[%s5] sm:$0xff]
    %v3820 = vld [vmem:[%s5 + $0x8] sm:$0xff]
    %v3821 = vld [vmem:[%s5 + $0x10] sm:$0xff]
    %v3822 = vld [vmem:[%s5 + $0x18] sm:$0xff]
    %v3823 = vld [vmem:[%s5 + $0x20] sm:$0xff]
    %v3824 = vld [vmem:[%s5 + $0x28] sm:$0xff]
    %v3825 = vld [vmem:[%s5 + $0x30] sm:$0xff]
    %v3826 = vld [vmem:[%s5 + $0x38] sm:$0xff]
    %v3827 = vld [vmem:[%s5 + $0x40] sm:$0xff]
    %v3828 = vld [vmem:[%s5 + $0x48] sm:$0xff]
    %v3829 = vld [vmem:[%s5 + $0x50] sm:$0xff]
    %v3830 = vld [vmem:[%s5 + $0x58] sm:$0xff]
    %v3831 = vld [vmem:[%s5 + $0x60] sm:$0xff]
    %v3832 = vld [vmem:[%s5 + $0x68] sm:$0xff]
    %v3833 = vld [vmem:[%s5 + $0x70] sm:$0xff]
    %v3834 = vld [vmem:[%s5 + $0x78] sm:$0xff]
    %v3835 = vld [vmem:[%s5 + $0x80] sm:$0xff]
    %v3836 = vld [vmem:[%s5 + $0x88] sm:$0xff]
    %v3837 = vld [vmem:[%s5 + $0x90] sm:$0xff]
    %v3838 = vld [vmem:[%s5 + $0x98] sm:$0xff]
    %v3839 = vld [vmem:[%s5 + $0xa0] sm:$0xff]
    %v3840 = vld [vmem:[%s5 + $0xa8] sm:$0xff]
    %v3841 = vld [vmem:[%s5 + $0xb0] sm:$0xff]
    %v3842 = vld [vmem:[%s5 + $0xb8] sm:$0xff]
    %v3843 = vld [vmem:[%s5 + $0xc0] sm:$0xff]
    %v3844 = vld [vmem:[%s5 + $0xc8] sm:$0xff]
    %v3845 = vld [vmem:[%s5 + $0xd0] sm:$0xff]
    %v3846 = vld [vmem:[%s5 + $0xd8] sm:$0xff]
    %v3847 = vld [vmem:[%s5 + $0xe0] sm:$0xff]
    %v3848 = vld [vmem:[%s5 + $0xe8] sm:$0xff]
    %v3849 = vld [vmem:[%s5 + $0xf0] sm:$0xff]
    %v3850 = vld [vmem:[%s5 + $0xf8] sm:$0xff]
    %v3851 = vld [vmem:[%s6] sm:$0x1]
    %v3853 = vlaneseq
    %v3854 = vshrl.u32 %v3853, 7
    %v3855 = vsub.s32 0, %v3854
    %v3856 = vrot.slane %v3851, %v3855
    %3858 = vmatprep.subr.mxu0 0.0
    %3859 = vmatpush1.msra.mxu0 %v3834
    %3860 = vmatprep.subr.mxu0 0.0
    %3861 = vmatpush1.msra.mxu0 %v3833
    %3862 = vmatprep.subr.mxu0 0.0
    %3863 = vmatpush1.msra.mxu0 %v3832
    %3864 = vmatprep.subr.mxu0 0.0
    %3865 = vmatpush1.msra.mxu0 %v3831
    %3866 = vmatprep.subr.mxu0 0.0
    %3867 = vmatpush1.msra.mxu0 %v3830
    %3868 = vmatprep.subr.mxu0 0.0
    %3869 = vmatpush1.msra.mxu0 %v3829
    %3870 = vmatprep.subr.mxu0 0.0
    %3871 = vmatpush1.msra.mxu0 %v3828
    %3872 = vmatprep.subr.mxu0 0.0
    %3873 = vmatpush1.msra.mxu0 %v3827
    %3874 = vmatprep.subr.mxu0 0.0
    %3875 = vmatpush1.msra.mxu0 %v3826
    %3876 = vmatprep.subr.mxu0 0.0
    %3877 = vmatpush1.msra.mxu0 %v3825
    %3878 = vmatprep.subr.mxu0 0.0
    %3879 = vmatpush1.msra.mxu0 %v3824
    %3880 = vmatprep.subr.mxu0 0.0
    %3881 = vmatpush1.msra.mxu0 %v3823
    %3882 = vmatprep.subr.mxu0 0.0
    %3883 = vmatpush1.msra.mxu0 %v3822
    %3884 = vmatprep.subr.mxu0 0.0
    %3885 = vmatpush1.msra.mxu0 %v3821
    %3886 = vmatprep.subr.mxu0 0.0
    %3887 = vmatpush1.msra.mxu0 %v3820
    %3888 = vmatprep.subr.mxu0 0.0
    %3889 = vmatpush1.msra.mxu0 %v3819
    %3890 = vmatprep.subr.mxu0 0.0
    %3891 = vmatpush2.msra.mxu0 %v3850
    %3892 = vmatprep.subr.mxu0 0.0
    %3893 = vmatpush2.msra.mxu0 %v3849
    %3894 = vmatprep.subr.mxu0 0.0
    %3895 = vmatpush2.msra.mxu0 %v3848
    %3896 = vmatprep.subr.mxu0 0.0
    %3897 = vmatpush2.msra.mxu0 %v3847
    %3898 = vmatprep.subr.mxu0 0.0
    %3899 = vmatpush2.msra.mxu0 %v3846
    %3900 = vmatprep.subr.mxu0 0.0
    %3901 = vmatpush2.msra.mxu0 %v3845
    %3902 = vmatprep.subr.mxu0 0.0
    %3903 = vmatpush2.msra.mxu0 %v3844
    %3904 = vmatprep.subr.mxu0 0.0
    %3905 = vmatpush2.msra.mxu0 %v3843
    %3906 = vmatprep.subr.mxu0 0.0
    %3907 = vmatpush2.msra.mxu0 %v3842
    %3908 = vmatprep.subr.mxu0 0.0
    %3909 = vmatpush2.msra.mxu0 %v3841
    %3910 = vmatprep.subr.mxu0 0.0
    %3911 = vmatpush2.msra.mxu0 %v3840
    %3912 = vmatprep.subr.mxu0 0.0
    %3913 = vmatpush2.msra.mxu0 %v3839
    %3914 = vmatprep.subr.mxu0 0.0
    %3915 = vmatpush2.msra.mxu0 %v3838
    %3916 = vmatprep.subr.mxu0 0.0
    %3917 = vmatpush2.msra.mxu0 %v3837
    %3918 = vmatprep.subr.mxu0 0.0
    %3919 = vmatpush2.msra.mxu0 %v3836
    %3920 = vmatprep.subr.mxu0 0.0
    %3921 = vmatpush2.msra.mxu0 %v3835
    %3922 = vmatprep.mubr.f32.mxu0 %v3818
    %3923 = vmatmul.mubr.f32.gmra.mxu0 %v3817
    %v3924 = vpop.f32.mrf.mxu0
    %v3925 = vadd.f32 %v3856, %v3924
    %v3926 = vpop.f32.mrf.mxu0
    %3927 = vdwg.mxu0
    %3928 = vst [vmem:[#allocation2] sm:$0x3] %v3925
    // Predicated region
    $region30: #{forward.5} parent=1 // pred_check
      _
    $region31: #{forward.5} parent=1 // pred_check_branch
      %3930 = sbr.rel (0) target = $region33
    $region32: #{forward.5} parent=1 // pred_region
      %s3932 = ssub.s32 32, 32
      %3933 = vsyncadd [#allocation3], %s3932
      %s3935 = sshll.u32 [#allocation2], 4
      %s3936 = int_to_ptr.vmem [resolvable:$true] %s3935
      %3938 = dma.vmem_to_hbm [thread:$0]  %s3936, 32, %s7, [#allocation3]
    $region33: #{forward.5} parent=1 // pred_fallthru
      _
    // Predicated region
    $region34: #{forward.5} parent=1 // pred_check
      _
    $region35: #{forward.5} parent=1 // pred_check_branch
      %3940 = sbr.rel (0) target = $region37
    $region36: #{forward.5} parent=1 // pred_region
      %3941 = dma.done [#allocation3], 32
    $region37: #{forward.5} parent=1 // pred_fallthru
      _
    %3942 = vsyncpa [#allocation3], 1

</llo_original>
